<compile_context>
chip_gen: v6e
topology: v6e:2x2x1
jax: 0.10.0
libtpu: 0.0.40
codegen_flags: <defaults>
</compile_context>

<pallas_src>
import jax
import jax.numpy as jnp
from jax import lax
from jax.experimental import pallas as pl
from jax.experimental.pallas import tpu as pltpu


def _make_fused_kernel(H, W, Cin, C1, C2, C3):
    P = H * W

    def conv3x3(pad_ref, w_ref, b_ref, relu, cin):
        """3x3 'SAME' conv over a zero-padded VMEM buffer.

        One accumulated MXU dot per tap (bf16 operands, f32 accumulation);
        no im2col slab is materialized.
        """
        acc = None
        for t in range(9):
            dy, dx = divmod(t, 3)
            xt = pad_ref[dy:dy + H, dx:dx + W, :cin]            # (H, W, cin) f32
            xt = xt.reshape(P, cin).astype(jnp.bfloat16)        # (P, cin) bf16
            part = jnp.dot(xt, w_ref[t],                        # (cin, cout) bf16
                           preferred_element_type=jnp.float32)  # f32 accumulation
            acc = part if acc is None else acc + part
        acc = acc + b_ref[...]                                  # f32 bias
        if relu:
            acc = jnp.maximum(acc, 0.0)                         # f32 ReLU
        return acc                                              # (P, cout) f32

    def kernel(x_cp_ref, x_hwc_ref, w1_ref, b1_ref, w2_ref, b2_ref,
               w3_ref, b3_ref, out_ref, pad_in, pad_mid):
        # Halos must be zero; interiors are fully overwritten below.  Scratch
        # persists across grid steps AND cores, so zero unconditionally (do
        # not gate on program_id -- a core may never see step 0).
        pad_in[...] = jnp.zeros_like(pad_in)
        pad_mid[...] = jnp.zeros_like(pad_mid)

        # ---- conv1 + relu1 ----
        pad_in[1:H + 1, 1:W + 1, :] = x_hwc_ref[0]              # (H, W, Cin)
        y = conv3x3(pad_in, w1_ref, b1_ref, True, Cin)          # (P, C1)

        # ---- conv2 + relu2 (pad_mid reused for conv2 and conv3 inputs) ----
        pad_mid[1:H + 1, 1:W + 1, :C1] = y.reshape(H, W, C1)
        y = conv3x3(pad_mid, w2_ref, b2_ref, True, C1)          # (P, C2)

        # ---- conv3 (no relu: relu3 is unused in the reference forward) ----
        pad_mid[1:H + 1, 1:W + 1, :C2] = y.reshape(H, W, C2)
        y = conv3x3(pad_mid, w3_ref, b3_ref, False, C2)         # (P, C3)

        # ---- torch.cat((rgbd, x), dim=1): channels-first, lane-dense store ----
        y_cp = jnp.transpose(y)                                 # (C3, P)
        out = jnp.concatenate([x_cp_ref[0], y_cp], axis=0)      # (Cin+C3, P)
        out_ref[0] = out.astype(out_ref.dtype)

    return kernel


def init_params(key, in_channels=3, dtype=jnp.float32):
    """Deterministic synthetic params; shapes follow the PyTorch module (HWIO)."""
    specs = [
        (in_channels, 32),  # conv1
        (32, 32),           # conv2
        (32, 8),            # conv3
    ]
    params = {}
    for i, (cin, cout) in enumerate(specs, start=1):
        key, kw, kb = jax.random.split(key, 3)
        fan_in = cin * 9
        bound = 1.0 / jnp.sqrt(fan_in)
        params[f"w{i}"] = jax.random.uniform(
            kw, (3, 3, cin, cout), dtype, minval=-bound, maxval=bound)
        params[f"b{i}"] = jax.random.uniform(
            kb, (1, cout), dtype, minval=-bound, maxval=bound)
    return params


@jax.jit
def feature_extraction_net(rgbd_nchw, params):
    N, Cin, H, W = rgbd_nchw.shape
    P = H * W
    C1 = params["w1"].shape[-1]
    C2 = params["w2"].shape[-1]
    C3 = params["w3"].shape[-1]
    C_total = Cin + C3
    Cmid = max(C1, C2)

    # Two tiny views of the input: channels-first flat for the lane-dense
    # passthrough/concat (free reshape), NHWC for the conv path (tiny one-off
    # transpose).
    x_cp = rgbd_nchw.reshape(N, Cin, P)
    x_hwc = jnp.transpose(rgbd_nchw, (0, 2, 3, 1))

    # Per-tap weight matrices (9, Cin, Cout) in bf16 (MXU operands); biases f32.
    w1 = params["w1"].reshape(9, Cin, C1).astype(jnp.bfloat16)
    w2 = params["w2"].reshape(9, C1, C2).astype(jnp.bfloat16)
    w3 = params["w3"].reshape(9, C2, C3).astype(jnp.bfloat16)
    b1, b2, b3 = params["b1"], params["b2"], params["b3"]

    kernel = _make_fused_kernel(H, W, Cin, C1, C2, C3)
    out_flat = pl.pallas_call(
        kernel,
        out_shape=jax.ShapeDtypeStruct((N, C_total, P), rgbd_nchw.dtype),
        grid=(N,),
        in_specs=[
            pl.BlockSpec((1, Cin, P), lambda n: (n, 0, 0)),
            pl.BlockSpec((1, H, W, Cin), lambda n: (n, 0, 0, 0)),
            pl.BlockSpec((9, Cin, C1), lambda n: (0, 0, 0)),
            pl.BlockSpec((1, C1), lambda n: (0, 0)),
            pl.BlockSpec((9, C1, C2), lambda n: (0, 0, 0)),
            pl.BlockSpec((1, C2), lambda n: (0, 0)),
            pl.BlockSpec((9, C2, C3), lambda n: (0, 0, 0)),
            pl.BlockSpec((1, C3), lambda n: (0, 0)),
        ],
        out_specs=pl.BlockSpec((1, C_total, P), lambda n: (n, 0, 0)),
        scratch_shapes=[
            pltpu.VMEM((H + 2, W + 2, Cin), jnp.float32),   # padded conv1 input
            pltpu.VMEM((H + 2, W + 2, Cmid), jnp.float32),  # shared conv2/conv3 input
        ],
        compiler_params=pltpu.CompilerParams(
            dimension_semantics=("parallel",)),
    )(x_cp, x_hwc, w1, b1, w2, b2, w3, b3)

    # (N, C_total, H*W) -> (N, C_total, H, W): metadata-only reshape.
    return out_flat.reshape(N, C_total, H, W)


def _reference(rgbd_nchw, params, *, bf16_operands):
    """Pure-JAX reference. bf16_operands=True mirrors the kernel's MXU precision."""
    x = jnp.transpose(rgbd_nchw, (0, 2, 3, 1))

    def conv(x, w, b, relu):
        if bf16_operands:
            y = lax.conv_general_dilated(
                x.astype(jnp.bfloat16), w.astype(jnp.bfloat16),
                window_strides=(1, 1), padding="SAME",
                dimension_numbers=("NHWC", "HWIO", "NHWC"),
                preferred_element_type=jnp.float32) + b[0]
        else:
            y = lax.conv_general_dilated(
                x, w, window_strides=(1, 1), padding="SAME",
                dimension_numbers=("NHWC", "HWIO", "NHWC"),
                precision=lax.Precision.HIGHEST) + b[0]
        return jnp.maximum(y, 0.0) if relu else y

    h = conv(x, params["w1"], params["b1"], True)
    h = conv(h, params["w2"], params["b2"], True)
    h = conv(h, params["w3"], params["b3"], False)
    return jnp.transpose(jnp.concatenate([x, h], axis=-1), (0, 3, 1, 2))


if __name__ == "__main__":
    key = jax.random.PRNGKey(0)
    kx, kp = jax.random.split(key)

    N, C, H, W = 2, 3, 16, 16
    rgbd = jax.random.normal(kx, (N, C, H, W), jnp.float32)
    params = init_params(kp, in_channels=C)

    out = jax.block_until_ready(feature_extraction_net(rgbd, params))
    assert out.shape == (N, C + 8, H, W), out.shape

    # Structural check: reference with the same (bf16 operand, f32 accum) precision.
    ref_bf16 = jax.block_until_ready(_reference(rgbd, params, bf16_operands=True))
    err_b = float(jnp.max(jnp.abs(out - ref_bf16)))
    assert jnp.allclose(out, ref_bf16, atol=2e-3, rtol=2e-3), err_b

    # Numerical sanity check against the full-f32 (HIGHEST) reference.
    ref_f32 = jax.block_until_ready(_reference(rgbd, params, bf16_operands=False))
    err_f = float(jnp.max(jnp.abs(out - ref_f32)))
    assert jnp.allclose(out, ref_f32, atol=2e-2, rtol=2e-2), err_f

    print("KERNEL_OK")
</pallas_src>

<mosaic_0001>
module attributes {stable_mosaic.version = 11 : i64} {
  func.func @kernel(%arg0: i32, %arg1: memref<1x3x256xf32, #tpu.memory_space<vmem>>, %arg2: memref<1x16x16x3xf32, #tpu.memory_space<vmem>>, %arg3: memref<9x3x32xbf16, #tpu.memory_space<vmem>>, %arg4: memref<1x32xf32, #tpu.memory_space<vmem>>, %arg5: memref<9x32x32xbf16, #tpu.memory_space<vmem>>, %arg6: memref<1x32xf32, #tpu.memory_space<vmem>>, %arg7: memref<9x32x8xbf16, #tpu.memory_space<vmem>>, %arg8: memref<1x8xf32, #tpu.memory_space<vmem>>, %arg9: memref<1x11x256xf32, #tpu.memory_space<vmem>>, %arg10: memref<18x18x3xf32, #tpu.memory_space<vmem>>, %arg11: memref<18x18x32xf32, #tpu.memory_space<vmem>>) attributes {dimension_semantics = [#tpu.dimension_semantics<parallel>], iteration_bounds = array<i64: 2>, scalar_prefetch = 0 : i64, scratch_operands = 2 : i64, tpu.core_type = #tpu.core_type<tc>, window_params = [{transform_indices = @transform_0, window_bounds = array<i64: 1, 3, 256>}, {transform_indices = @transform_1, window_bounds = array<i64: 1, 16, 16, 3>}, {pipeline_mode = #tpu.pipeline_mode<synchronous>, transform_indices = @transform_2, window_bounds = array<i64: 9, 3, 32>}, {pipeline_mode = #tpu.pipeline_mode<synchronous>, transform_indices = @transform_3, window_bounds = array<i64: 1, 32>}, {pipeline_mode = #tpu.pipeline_mode<synchronous>, transform_indices = @transform_4, window_bounds = array<i64: 9, 32, 32>}, {pipeline_mode = #tpu.pipeline_mode<synchronous>, transform_indices = @transform_5, window_bounds = array<i64: 1, 32>}, {pipeline_mode = #tpu.pipeline_mode<synchronous>, transform_indices = @transform_6, window_bounds = array<i64: 9, 32, 8>}, {pipeline_mode = #tpu.pipeline_mode<synchronous>, transform_indices = @transform_7, window_bounds = array<i64: 1, 8>}, {transform_indices = @transform_8, window_bounds = array<i64: 1, 11, 256>}]} {
    %cst = arith.constant 0.000000e+00 : f32
    %0 = vector.broadcast %cst : f32 to vector<18x18x3xf32>
    %c0 = arith.constant 0 : index
    %c0_0 = arith.constant 0 : index
    %c0_1 = arith.constant 0 : index
    %1 = vector.load %arg10[%c0, %c0_0, %c0_1] : memref<18x18x3xf32, #tpu.memory_space<vmem>>, vector<18x18x3xf32>
    tpu.vector_store %arg10[%c0, %c0_0, %c0_1], %0 {strides = array<i32>} : memref<18x18x3xf32, #tpu.memory_space<vmem>>, vector<18x18x3xf32>,
    %cst_2 = arith.constant 0.000000e+00 : f32
    %2 = vector.broadcast %cst_2 : f32 to vector<18x18x32xf32>
    %c0_3 = arith.constant 0 : index
    %c0_4 = arith.constant 0 : index
    %c0_5 = arith.constant 0 : index
    %3 = vector.load %arg11[%c0_3, %c0_4, %c0_5] : memref<18x18x32xf32, #tpu.memory_space<vmem>>, vector<18x18x32xf32>
    tpu.vector_store %arg11[%c0_3, %c0_4, %c0_5], %2 {strides = array<i32>} : memref<18x18x32xf32, #tpu.memory_space<vmem>>, vector<18x18x32xf32>,
    %c0_6 = arith.constant 0 : index
    %c0_7 = arith.constant 0 : index
    %c0_8 = arith.constant 0 : index
    %c0_9 = arith.constant 0 : index
    %4 = vector.load %arg2[%c0_6, %c0_7, %c0_8, %c0_9] : memref<1x16x16x3xf32, #tpu.memory_space<vmem>>, vector<1x16x16x3xf32>
    %5 = vector.shape_cast %4 : vector<1x16x16x3xf32> to vector<16x16x3xf32>
    %c1 = arith.constant 1 : index
    %c1_10 = arith.constant 1 : index
    %c0_11 = arith.constant 0 : index
    %6 = vector.load %arg10[%c1, %c1_10, %c0_11] : memref<18x18x3xf32, #tpu.memory_space<vmem>>, vector<16x16x3xf32>
    tpu.vector_store %arg10[%c1, %c1_10, %c0_11], %5 {strides = array<i32>} : memref<18x18x3xf32, #tpu.memory_space<vmem>>, vector<16x16x3xf32>,
    %c0_12 = arith.constant 0 : index
    %c0_13 = arith.constant 0 : index
    %c0_14 = arith.constant 0 : index
    %7 = vector.load %arg10[%c0_12, %c0_13, %c0_14] : memref<18x18x3xf32, #tpu.memory_space<vmem>>, vector<16x16x3xf32>
    %8 = vector.shape_cast %7 : vector<16x16x3xf32> to vector<256x3xf32>
    %9 = arith.truncf %8 : vector<256x3xf32> to vector<256x3xbf16>
    %c0_15 = arith.constant 0 : index
    %c0_16 = arith.constant 0 : index
    %c0_17 = arith.constant 0 : index
    %10 = vector.load %arg3[%c0_15, %c0_16, %c0_17] : memref<9x3x32xbf16, #tpu.memory_space<vmem>>, vector<1x3x32xbf16>
    %11 = vector.shape_cast %10 : vector<1x3x32xbf16> to vector<3x32xbf16>
    %cst_18 = arith.constant dense<0.000000e+00> : vector<256x32xf32>
    %12 = tpu.matmul %9, %11, %cst_18 {dimension_numbers = #tpu.dot_dimension_numbers<[1], [0], [0], [1], [0, 0, 1, 1], [], []>} : vector<256x3xbf16>, vector<3x32xbf16>, vector<256x32xf32> -> vector<256x32xf32>
    %c0_19 = arith.constant 0 : index
    %c1_20 = arith.constant 1 : index
    %c0_21 = arith.constant 0 : index
    %13 = vector.load %arg10[%c0_19, %c1_20, %c0_21] : memref<18x18x3xf32, #tpu.memory_space<vmem>>, vector<16x16x3xf32>
    %14 = vector.shape_cast %13 : vector<16x16x3xf32> to vector<256x3xf32>
    %15 = arith.truncf %14 : vector<256x3xf32> to vector<256x3xbf16>
    %c1_22 = arith.constant 1 : index
    %c0_23 = arith.constant 0 : index
    %c0_24 = arith.constant 0 : index
    %16 = vector.load %arg3[%c1_22, %c0_23, %c0_24] : memref<9x3x32xbf16, #tpu.memory_space<vmem>>, vector<1x3x32xbf16>
    %17 = vector.shape_cast %16 : vector<1x3x32xbf16> to vector<3x32xbf16>
    %cst_25 = arith.constant dense<0.000000e+00> : vector<256x32xf32>
    %18 = tpu.matmul %15, %17, %cst_25 {dimension_numbers = #tpu.dot_dimension_numbers<[1], [0], [0], [1], [0, 0, 1, 1], [], []>} : vector<256x3xbf16>, vector<3x32xbf16>, vector<256x32xf32> -> vector<256x32xf32>
    %19 = arith.addf %12, %18 : vector<256x32xf32>
    %c0_26 = arith.constant 0 : index
    %c2 = arith.constant 2 : index
    %c0_27 = arith.constant 0 : index
    %20 = vector.load %arg10[%c0_26, %c2, %c0_27] : memref<18x18x3xf32, #tpu.memory_space<vmem>>, vector<16x16x3xf32>
    %21 = vector.shape_cast %20 : vector<16x16x3xf32> to vector<256x3xf32>
    %22 = arith.truncf %21 : vector<256x3xf32> to vector<256x3xbf16>
    %c2_28 = arith.constant 2 : index
    %c0_29 = arith.constant 0 : index
    %c0_30 = arith.constant 0 : index
    %23 = vector.load %arg3[%c2_28, %c0_29, %c0_30] : memref<9x3x32xbf16, #tpu.memory_space<vmem>>, vector<1x3x32xbf16>
    %24 = vector.shape_cast %23 : vector<1x3x32xbf16> to vector<3x32xbf16>
    %cst_31 = arith.constant dense<0.000000e+00> : vector<256x32xf32>
    %25 = tpu.matmul %22, %24, %cst_31 {dimension_numbers = #tpu.dot_dimension_numbers<[1], [0], [0], [1], [0, 0, 1, 1], [], []>} : vector<256x3xbf16>, vector<3x32xbf16>, vector<256x32xf32> -> vector<256x32xf32>
    %26 = arith.addf %19, %25 : vector<256x32xf32>
    %c1_32 = arith.constant 1 : index
    %c0_33 = arith.constant 0 : index
    %c0_34 = arith.constant 0 : index
    %27 = vector.load %arg10[%c1_32, %c0_33, %c0_34] : memref<18x18x3xf32, #tpu.memory_space<vmem>>, vector<16x16x3xf32>
    %28 = vector.shape_cast %27 : vector<16x16x3xf32> to vector<256x3xf32>
    %29 = arith.truncf %28 : vector<256x3xf32> to vector<256x3xbf16>
    %c3 = arith.constant 3 : index
    %c0_35 = arith.constant 0 : index
    %c0_36 = arith.constant 0 : index
    %30 = vector.load %arg3[%c3, %c0_35, %c0_36] : memref<9x3x32xbf16, #tpu.memory_space<vmem>>, vector<1x3x32xbf16>
    %31 = vector.shape_cast %30 : vector<1x3x32xbf16> to vector<3x32xbf16>
    %cst_37 = arith.constant dense<0.000000e+00> : vector<256x32xf32>
    %32 = tpu.matmul %29, %31, %cst_37 {dimension_numbers = #tpu.dot_dimension_numbers<[1], [0], [0], [1], [0, 0, 1, 1], [], []>} : vector<256x3xbf16>, vector<3x32xbf16>, vector<256x32xf32> -> vector<256x32xf32>
    %33 = arith.addf %26, %32 : vector<256x32xf32>
    %c1_38 = arith.constant 1 : index
    %c1_39 = arith.constant 1 : index
    %c0_40 = arith.constant 0 : index
    %34 = vector.load %arg10[%c1_38, %c1_39, %c0_40] : memref<18x18x3xf32, #tpu.memory_space<vmem>>, vector<16x16x3xf32>
    %35 = vector.shape_cast %34 : vector<16x16x3xf32> to vector<256x3xf32>
    %36 = arith.truncf %35 : vector<256x3xf32> to vector<256x3xbf16>
    %c4 = arith.constant 4 : index
    %c0_41 = arith.constant 0 : index
    %c0_42 = arith.constant 0 : index
    %37 = vector.load %arg3[%c4, %c0_41, %c0_42] : memref<9x3x32xbf16, #tpu.memory_space<vmem>>, vector<1x3x32xbf16>
    %38 = vector.shape_cast %37 : vector<1x3x32xbf16> to vector<3x32xbf16>
    %cst_43 = arith.constant dense<0.000000e+00> : vector<256x32xf32>
    %39 = tpu.matmul %36, %38, %cst_43 {dimension_numbers = #tpu.dot_dimension_numbers<[1], [0], [0], [1], [0, 0, 1, 1], [], []>} : vector<256x3xbf16>, vector<3x32xbf16>, vector<256x32xf32> -> vector<256x32xf32>
    %40 = arith.addf %33, %39 : vector<256x32xf32>
    %c1_44 = arith.constant 1 : index
    %c2_45 = arith.constant 2 : index
    %c0_46 = arith.constant 0 : index
    %41 = vector.load %arg10[%c1_44, %c2_45, %c0_46] : memref<18x18x3xf32, #tpu.memory_space<vmem>>, vector<16x16x3xf32>
    %42 = vector.shape_cast %41 : vector<16x16x3xf32> to vector<256x3xf32>
    %43 = arith.truncf %42 : vector<256x3xf32> to vector<256x3xbf16>
    %c5 = arith.constant 5 : index
    %c0_47 = arith.constant 0 : index
    %c0_48 = arith.constant 0 : index
    %44 = vector.load %arg3[%c5, %c0_47, %c0_48] : memref<9x3x32xbf16, #tpu.memory_space<vmem>>, vector<1x3x32xbf16>
    %45 = vector.shape_cast %44 : vector<1x3x32xbf16> to vector<3x32xbf16>
    %cst_49 = arith.constant dense<0.000000e+00> : vector<256x32xf32>
    %46 = tpu.matmul %43, %45, %cst_49 {dimension_numbers = #tpu.dot_dimension_numbers<[1], [0], [0], [1], [0, 0, 1, 1], [], []>} : vector<256x3xbf16>, vector<3x32xbf16>, vector<256x32xf32> -> vector<256x32xf32>
    %47 = arith.addf %40, %46 : vector<256x32xf32>
    %c2_50 = arith.constant 2 : index
    %c0_51 = arith.constant 0 : index
    %c0_52 = arith.constant 0 : index
    %48 = vector.load %arg10[%c2_50, %c0_51, %c0_52] : memref<18x18x3xf32, #tpu.memory_space<vmem>>, vector<16x16x3xf32>
    %49 = vector.shape_cast %48 : vector<16x16x3xf32> to vector<256x3xf32>
    %50 = arith.truncf %49 : vector<256x3xf32> to vector<256x3xbf16>
    %c6 = arith.constant 6 : index
    %c0_53 = arith.constant 0 : index
    %c0_54 = arith.constant 0 : index
    %51 = vector.load %arg3[%c6, %c0_53, %c0_54] : memref<9x3x32xbf16, #tpu.memory_space<vmem>>, vector<1x3x32xbf16>
    %52 = vector.shape_cast %51 : vector<1x3x32xbf16> to vector<3x32xbf16>
    %cst_55 = arith.constant dense<0.000000e+00> : vector<256x32xf32>
    %53 = tpu.matmul %50, %52, %cst_55 {dimension_numbers = #tpu.dot_dimension_numbers<[1], [0], [0], [1], [0, 0, 1, 1], [], []>} : vector<256x3xbf16>, vector<3x32xbf16>, vector<256x32xf32> -> vector<256x32xf32>
    %54 = arith.addf %47, %53 : vector<256x32xf32>
    %c2_56 = arith.constant 2 : index
    %c1_57 = arith.constant 1 : index
    %c0_58 = arith.constant 0 : index
    %55 = vector.load %arg10[%c2_56, %c1_57, %c0_58] : memref<18x18x3xf32, #tpu.memory_space<vmem>>, vector<16x16x3xf32>
    %56 = vector.shape_cast %55 : vector<16x16x3xf32> to vector<256x3xf32>
    %57 = arith.truncf %56 : vector<256x3xf32> to vector<256x3xbf16>
    %c7 = arith.constant 7 : index
    %c0_59 = arith.constant 0 : index
    %c0_60 = arith.constant 0 : index
    %58 = vector.load %arg3[%c7, %c0_59, %c0_60] : memref<9x3x32xbf16, #tpu.memory_space<vmem>>, vector<1x3x32xbf16>
    %59 = vector.shape_cast %58 : vector<1x3x32xbf16> to vector<3x32xbf16>
    %cst_61 = arith.constant dense<0.000000e+00> : vector<256x32xf32>
    %60 = tpu.matmul %57, %59, %cst_61 {dimension_numbers = #tpu.dot_dimension_numbers<[1], [0], [0], [1], [0, 0, 1, 1], [], []>} : vector<256x3xbf16>, vector<3x32xbf16>, vector<256x32xf32> -> vector<256x32xf32>
    %61 = arith.addf %54, %60 : vector<256x32xf32>
    %c2_62 = arith.constant 2 : index
    %c2_63 = arith.constant 2 : index
    %c0_64 = arith.constant 0 : index
    %62 = vector.load %arg10[%c2_62, %c2_63, %c0_64] : memref<18x18x3xf32, #tpu.memory_space<vmem>>, vector<16x16x3xf32>
    %63 = vector.shape_cast %62 : vector<16x16x3xf32> to vector<256x3xf32>
    %64 = arith.truncf %63 : vector<256x3xf32> to vector<256x3xbf16>
    %c8 = arith.constant 8 : index
    %c0_65 = arith.constant 0 : index
    %c0_66 = arith.constant 0 : index
    %65 = vector.load %arg3[%c8, %c0_65, %c0_66] : memref<9x3x32xbf16, #tpu.memory_space<vmem>>, vector<1x3x32xbf16>
    %66 = vector.shape_cast %65 : vector<1x3x32xbf16> to vector<3x32xbf16>
    %cst_67 = arith.constant dense<0.000000e+00> : vector<256x32xf32>
    %67 = tpu.matmul %64, %66, %cst_67 {dimension_numbers = #tpu.dot_dimension_numbers<[1], [0], [0], [1], [0, 0, 1, 1], [], []>} : vector<256x3xbf16>, vector<3x32xbf16>, vector<256x32xf32> -> vector<256x32xf32>
    %68 = arith.addf %61, %67 : vector<256x32xf32>
    %c0_68 = arith.constant 0 : index
    %c0_69 = arith.constant 0 : index
    %69 = vector.load %arg4[%c0_68, %c0_69] : memref<1x32xf32, #tpu.memory_space<vmem>>, vector<1x32xf32>
    %70 = vector.broadcast %69 : vector<1x32xf32> to vector<256x32xf32>
    %71 = arith.addf %68, %70 : vector<256x32xf32>
    %cst_70 = arith.constant 0.000000e+00 : f32
    %72 = vector.broadcast %cst_70 : f32 to vector<256x32xf32>
    %73 = arith.maximumf %71, %72 : vector<256x32xf32>
    %74 = vector.shape_cast %73 : vector<256x32xf32> to vector<16x16x32xf32>
    %c1_71 = arith.constant 1 : index
    %c1_72 = arith.constant 1 : index
    %c0_73 = arith.constant 0 : index
    %75 = vector.load %arg11[%c1_71, %c1_72, %c0_73] : memref<18x18x32xf32, #tpu.memory_space<vmem>>, vector<16x16x32xf32>
    tpu.vector_store %arg11[%c1_71, %c1_72, %c0_73], %74 {strides = array<i32>} : memref<18x18x32xf32, #tpu.memory_space<vmem>>, vector<16x16x32xf32>,
    %c0_74 = arith.constant 0 : index
    %c0_75 = arith.constant 0 : index
    %c0_76 = arith.constant 0 : index
    %76 = vector.load %arg11[%c0_74, %c0_75, %c0_76] : memref<18x18x32xf32, #tpu.memory_space<vmem>>, vector<16x16x32xf32>
    %77 = vector.shape_cast %76 : vector<16x16x32xf32> to vector<256x32xf32>
    %78 = arith.truncf %77 : vector<256x32xf32> to vector<256x32xbf16>
    %c0_77 = arith.constant 0 : index
    %c0_78 = arith.constant 0 : index
    %c0_79 = arith.constant 0 : index
    %79 = vector.load %arg5[%c0_77, %c0_78, %c0_79] : memref<9x32x32xbf16, #tpu.memory_space<vmem>>, vector<1x32x32xbf16>
    %80 = vector.shape_cast %79 : vector<1x32x32xbf16> to vector<32x32xbf16>
    %cst_80 = arith.constant dense<0.000000e+00> : vector<256x32xf32>
    %81 = tpu.matmul %78, %80, %cst_80 {dimension_numbers = #tpu.dot_dimension_numbers<[1], [0], [0], [1], [0, 0, 1, 1], [], []>} : vector<256x32xbf16>, vector<32x32xbf16>, vector<256x32xf32> -> vector<256x32xf32>
    %c0_81 = arith.constant 0 : index
    %c1_82 = arith.constant 1 : index
    %c0_83 = arith.constant 0 : index
    %82 = vector.load %arg11[%c0_81, %c1_82, %c0_83] : memref<18x18x32xf32, #tpu.memory_space<vmem>>, vector<16x16x32xf32>
    %83 = vector.shape_cast %82 : vector<16x16x32xf32> to vector<256x32xf32>
    %84 = arith.truncf %83 : vector<256x32xf32> to vector<256x32xbf16>
    %c1_84 = arith.constant 1 : index
    %c0_85 = arith.constant 0 : index
    %c0_86 = arith.constant 0 : index
    %85 = vector.load %arg5[%c1_84, %c0_85, %c0_86] : memref<9x32x32xbf16, #tpu.memory_space<vmem>>, vector<1x32x32xbf16>
    %86 = vector.shape_cast %85 : vector<1x32x32xbf16> to vector<32x32xbf16>
    %cst_87 = arith.constant dense<0.000000e+00> : vector<256x32xf32>
    %87 = tpu.matmul %84, %86, %cst_87 {dimension_numbers = #tpu.dot_dimension_numbers<[1], [0], [0], [1], [0, 0, 1, 1], [], []>} : vector<256x32xbf16>, vector<32x32xbf16>, vector<256x32xf32> -> vector<256x32xf32>
    %88 = arith.addf %81, %87 : vector<256x32xf32>
    %c0_88 = arith.constant 0 : index
    %c2_89 = arith.constant 2 : index
    %c0_90 = arith.constant 0 : index
    %89 = vector.load %arg11[%c0_88, %c2_89, %c0_90] : memref<18x18x32xf32, #tpu.memory_space<vmem>>, vector<16x16x32xf32>
    %90 = vector.shape_cast %89 : vector<16x16x32xf32> to vector<256x32xf32>
    %91 = arith.truncf %90 : vector<256x32xf32> to vector<256x32xbf16>
    %c2_91 = arith.constant 2 : index
    %c0_92 = arith.constant 0 : index
    %c0_93 = arith.constant 0 : index
    %92 = vector.load %arg5[%c2_91, %c0_92, %c0_93] : memref<9x32x32xbf16, #tpu.memory_space<vmem>>, vector<1x32x32xbf16>
    %93 = vector.shape_cast %92 : vector<1x32x32xbf16> to vector<32x32xbf16>
    %cst_94 = arith.constant dense<0.000000e+00> : vector<256x32xf32>
    %94 = tpu.matmul %91, %93, %cst_94 {dimension_numbers = #tpu.dot_dimension_numbers<[1], [0], [0], [1], [0, 0, 1, 1], [], []>} : vector<256x32xbf16>, vector<32x32xbf16>, vector<256x32xf32> -> vector<256x32xf32>
    %95 = arith.addf %88, %94 : vector<256x32xf32>
    %c1_95 = arith.constant 1 : index
    %c0_96 = arith.constant 0 : index
    %c0_97 = arith.constant 0 : index
    %96 = vector.load %arg11[%c1_95, %c0_96, %c0_97] : memref<18x18x32xf32, #tpu.memory_space<vmem>>, vector<16x16x32xf32>
    %97 = vector.shape_cast %96 : vector<16x16x32xf32> to vector<256x32xf32>
    %98 = arith.truncf %97 : vector<256x32xf32> to vector<256x32xbf16>
    %c3_98 = arith.constant 3 : index
    %c0_99 = arith.constant 0 : index
    %c0_100 = arith.constant 0 : index
    %99 = vector.load %arg5[%c3_98, %c0_99, %c0_100] : memref<9x32x32xbf16, #tpu.memory_space<vmem>>, vector<1x32x32xbf16>
    %100 = vector.shape_cast %99 : vector<1x32x32xbf16> to vector<32x32xbf16>
    %cst_101 = arith.constant dense<0.000000e+00> : vector<256x32xf32>
    %101 = tpu.matmul %98, %100, %cst_101 {dimension_numbers = #tpu.dot_dimension_numbers<[1], [0], [0], [1], [0, 0, 1, 1], [], []>} : vector<256x32xbf16>, vector<32x32xbf16>, vector<256x32xf32> -> vector<256x32xf32>
    %102 = arith.addf %95, %101 : vector<256x32xf32>
    %c1_102 = arith.constant 1 : index
    %c1_103 = arith.constant 1 : index
    %c0_104 = arith.constant 0 : index
    %103 = vector.load %arg11[%c1_102, %c1_103, %c0_104] : memref<18x18x32xf32, #tpu.memory_space<vmem>>, vector<16x16x32xf32>
    %104 = vector.shape_cast %103 : vector<16x16x32xf32> to vector<256x32xf32>
    %105 = arith.truncf %104 : vector<256x32xf32> to vector<256x32xbf16>
    %c4_105 = arith.constant 4 : index
    %c0_106 = arith.constant 0 : index
    %c0_107 = arith.constant 0 : index
    %106 = vector.load %arg5[%c4_105, %c0_106, %c0_107] : memref<9x32x32xbf16, #tpu.memory_space<vmem>>, vector<1x32x32xbf16>
    %107 = vector.shape_cast %106 : vector<1x32x32xbf16> to vector<32x32xbf16>
    %cst_108 = arith.constant dense<0.000000e+00> : vector<256x32xf32>
    %108 = tpu.matmul %105, %107, %cst_108 {dimension_numbers = #tpu.dot_dimension_numbers<[1], [0], [0], [1], [0, 0, 1, 1], [], []>} : vector<256x32xbf16>, vector<32x32xbf16>, vector<256x32xf32> -> vector<256x32xf32>
    %109 = arith.addf %102, %108 : vector<256x32xf32>
    %c1_109 = arith.constant 1 : index
    %c2_110 = arith.constant 2 : index
    %c0_111 = arith.constant 0 : index
    %110 = vector.load %arg11[%c1_109, %c2_110, %c0_111] : memref<18x18x32xf32, #tpu.memory_space<vmem>>, vector<16x16x32xf32>
    %111 = vector.shape_cast %110 : vector<16x16x32xf32> to vector<256x32xf32>
    %112 = arith.truncf %111 : vector<256x32xf32> to vector<256x32xbf16>
    %c5_112 = arith.constant 5 : index
    %c0_113 = arith.constant 0 : index
    %c0_114 = arith.constant 0 : index
    %113 = vector.load %arg5[%c5_112, %c0_113, %c0_114] : memref<9x32x32xbf16, #tpu.memory_space<vmem>>, vector<1x32x32xbf16>
    %114 = vector.shape_cast %113 : vector<1x32x32xbf16> to vector<32x32xbf16>
    %cst_115 = arith.constant dense<0.000000e+00> : vector<256x32xf32>
    %115 = tpu.matmul %112, %114, %cst_115 {dimension_numbers = #tpu.dot_dimension_numbers<[1], [0], [0], [1], [0, 0, 1, 1], [], []>} : vector<256x32xbf16>, vector<32x32xbf16>, vector<256x32xf32> -> vector<256x32xf32>
    %116 = arith.addf %109, %115 : vector<256x32xf32>
    %c2_116 = arith.constant 2 : index
    %c0_117 = arith.constant 0 : index
    %c0_118 = arith.constant 0 : index
    %117 = vector.load %arg11[%c2_116, %c0_117, %c0_118] : memref<18x18x32xf32, #tpu.memory_space<vmem>>, vector<16x16x32xf32>
    %118 = vector.shape_cast %117 : vector<16x16x32xf32> to vector<256x32xf32>
    %119 = arith.truncf %118 : vector<256x32xf32> to vector<256x32xbf16>
    %c6_119 = arith.constant 6 : index
    %c0_120 = arith.constant 0 : index
    %c0_121 = arith.constant 0 : index
    %120 = vector.load %arg5[%c6_119, %c0_120, %c0_121] : memref<9x32x32xbf16, #tpu.memory_space<vmem>>, vector<1x32x32xbf16>
    %121 = vector.shape_cast %120 : vector<1x32x32xbf16> to vector<32x32xbf16>
    %cst_122 = arith.constant dense<0.000000e+00> : vector<256x32xf32>
    %122 = tpu.matmul %119, %121, %cst_122 {dimension_numbers = #tpu.dot_dimension_numbers<[1], [0], [0], [1], [0, 0, 1, 1], [], []>} : vector<256x32xbf16>, vector<32x32xbf16>, vector<256x32xf32> -> vector<256x32xf32>
    %123 = arith.addf %116, %122 : vector<256x32xf32>
    %c2_123 = arith.constant 2 : index
    %c1_124 = arith.constant 1 : index
    %c0_125 = arith.constant 0 : index
    %124 = vector.load %arg11[%c2_123, %c1_124, %c0_125] : memref<18x18x32xf32, #tpu.memory_space<vmem>>, vector<16x16x32xf32>
    %125 = vector.shape_cast %124 : vector<16x16x32xf32> to vector<256x32xf32>
    %126 = arith.truncf %125 : vector<256x32xf32> to vector<256x32xbf16>
    %c7_126 = arith.constant 7 : index
    %c0_127 = arith.constant 0 : index
    %c0_128 = arith.constant 0 : index
    %127 = vector.load %arg5[%c7_126, %c0_127, %c0_128] : memref<9x32x32xbf16, #tpu.memory_space<vmem>>, vector<1x32x32xbf16>
    %128 = vector.shape_cast %127 : vector<1x32x32xbf16> to vector<32x32xbf16>
    %cst_129 = arith.constant dense<0.000000e+00> : vector<256x32xf32>
    %129 = tpu.matmul %126, %128, %cst_129 {dimension_numbers = #tpu.dot_dimension_numbers<[1], [0], [0], [1], [0, 0, 1, 1], [], []>} : vector<256x32xbf16>, vector<32x32xbf16>, vector<256x32xf32> -> vector<256x32xf32>
    %130 = arith.addf %123, %129 : vector<256x32xf32>
    %c2_130 = arith.constant 2 : index
    %c2_131 = arith.constant 2 : index
    %c0_132 = arith.constant 0 : index
    %131 = vector.load %arg11[%c2_130, %c2_131, %c0_132] : memref<18x18x32xf32, #tpu.memory_space<vmem>>, vector<16x16x32xf32>
    %132 = vector.shape_cast %131 : vector<16x16x32xf32> to vector<256x32xf32>
    %133 = arith.truncf %132 : vector<256x32xf32> to vector<256x32xbf16>
    %c8_133 = arith.constant 8 : index
    %c0_134 = arith.constant 0 : index
    %c0_135 = arith.constant 0 : index
    %134 = vector.load %arg5[%c8_133, %c0_134, %c0_135] : memref<9x32x32xbf16, #tpu.memory_space<vmem>>, vector<1x32x32xbf16>
    %135 = vector.shape_cast %134 : vector<1x32x32xbf16> to vector<32x32xbf16>
    %cst_136 = arith.constant dense<0.000000e+00> : vector<256x32xf32>
    %136 = tpu.matmul %133, %135, %cst_136 {dimension_numbers = #tpu.dot_dimension_numbers<[1], [0], [0], [1], [0, 0, 1, 1], [], []>} : vector<256x32xbf16>, vector<32x32xbf16>, vector<256x32xf32> -> vector<256x32xf32>
    %137 = arith.addf %130, %136 : vector<256x32xf32>
    %c0_137 = arith.constant 0 : index
    %c0_138 = arith.constant 0 : index
    %138 = vector.load %arg6[%c0_137, %c0_138] : memref<1x32xf32, #tpu.memory_space<vmem>>, vector<1x32xf32>
    %139 = vector.broadcast %138 : vector<1x32xf32> to vector<256x32xf32>
    %140 = arith.addf %137, %139 : vector<256x32xf32>
    %cst_139 = arith.constant 0.000000e+00 : f32
    %141 = vector.broadcast %cst_139 : f32 to vector<256x32xf32>
    %142 = arith.maximumf %140, %141 : vector<256x32xf32>
    %143 = vector.shape_cast %142 : vector<256x32xf32> to vector<16x16x32xf32>
    %c1_140 = arith.constant 1 : index
    %c1_141 = arith.constant 1 : index
    %c0_142 = arith.constant 0 : index
    %144 = vector.load %arg11[%c1_140, %c1_141, %c0_142] : memref<18x18x32xf32, #tpu.memory_space<vmem>>, vector<16x16x32xf32>
    tpu.vector_store %arg11[%c1_140, %c1_141, %c0_142], %143 {strides = array<i32>} : memref<18x18x32xf32, #tpu.memory_space<vmem>>, vector<16x16x32xf32>,
    %c0_143 = arith.constant 0 : index
    %c0_144 = arith.constant 0 : index
    %c0_145 = arith.constant 0 : index
    %145 = vector.load %arg11[%c0_143, %c0_144, %c0_145] : memref<18x18x32xf32, #tpu.memory_space<vmem>>, vector<16x16x32xf32>
    %146 = vector.shape_cast %145 : vector<16x16x32xf32> to vector<256x32xf32>
    %147 = arith.truncf %146 : vector<256x32xf32> to vector<256x32xbf16>
    %c0_146 = arith.constant 0 : index
    %c0_147 = arith.constant 0 : index
    %c0_148 = arith.constant 0 : index
    %148 = vector.load %arg7[%c0_146, %c0_147, %c0_148] : memref<9x32x8xbf16, #tpu.memory_space<vmem>>, vector<1x32x8xbf16>
    %149 = vector.shape_cast %148 : vector<1x32x8xbf16> to vector<32x8xbf16>
    %cst_149 = arith.constant dense<0.000000e+00> : vector<256x8xf32>
    %150 = tpu.matmul %147, %149, %cst_149 {dimension_numbers = #tpu.dot_dimension_numbers<[1], [0], [0], [1], [0, 0, 1, 1], [], []>} : vector<256x32xbf16>, vector<32x8xbf16>, vector<256x8xf32> -> vector<256x8xf32>
    %c0_150 = arith.constant 0 : index
    %c1_151 = arith.constant 1 : index
    %c0_152 = arith.constant 0 : index
    %151 = vector.load %arg11[%c0_150, %c1_151, %c0_152] : memref<18x18x32xf32, #tpu.memory_space<vmem>>, vector<16x16x32xf32>
    %152 = vector.shape_cast %151 : vector<16x16x32xf32> to vector<256x32xf32>
    %153 = arith.truncf %152 : vector<256x32xf32> to vector<256x32xbf16>
    %c1_153 = arith.constant 1 : index
    %c0_154 = arith.constant 0 : index
    %c0_155 = arith.constant 0 : index
    %154 = vector.load %arg7[%c1_153, %c0_154, %c0_155] : memref<9x32x8xbf16, #tpu.memory_space<vmem>>, vector<1x32x8xbf16>
    %155 = vector.shape_cast %154 : vector<1x32x8xbf16> to vector<32x8xbf16>
    %cst_156 = arith.constant dense<0.000000e+00> : vector<256x8xf32>
    %156 = tpu.matmul %153, %155, %cst_156 {dimension_numbers = #tpu.dot_dimension_numbers<[1], [0], [0], [1], [0, 0, 1, 1], [], []>} : vector<256x32xbf16>, vector<32x8xbf16>, vector<256x8xf32> -> vector<256x8xf32>
    %157 = arith.addf %150, %156 : vector<256x8xf32>
    %c0_157 = arith.constant 0 : index
    %c2_158 = arith.constant 2 : index
    %c0_159 = arith.constant 0 : index
    %158 = vector.load %arg11[%c0_157, %c2_158, %c0_159] : memref<18x18x32xf32, #tpu.memory_space<vmem>>, vector<16x16x32xf32>
    %159 = vector.shape_cast %158 : vector<16x16x32xf32> to vector<256x32xf32>
    %160 = arith.truncf %159 : vector<256x32xf32> to vector<256x32xbf16>
    %c2_160 = arith.constant 2 : index
    %c0_161 = arith.constant 0 : index
    %c0_162 = arith.constant 0 : index
    %161 = vector.load %arg7[%c2_160, %c0_161, %c0_162] : memref<9x32x8xbf16, #tpu.memory_space<vmem>>, vector<1x32x8xbf16>
    %162 = vector.shape_cast %161 : vector<1x32x8xbf16> to vector<32x8xbf16>
    %cst_163 = arith.constant dense<0.000000e+00> : vector<256x8xf32>
    %163 = tpu.matmul %160, %162, %cst_163 {dimension_numbers = #tpu.dot_dimension_numbers<[1], [0], [0], [1], [0, 0, 1, 1], [], []>} : vector<256x32xbf16>, vector<32x8xbf16>, vector<256x8xf32> -> vector<256x8xf32>
    %164 = arith.addf %157, %163 : vector<256x8xf32>
    %c1_164 = arith.constant 1 : index
    %c0_165 = arith.constant 0 : index
    %c0_166 = arith.constant 0 : index
    %165 = vector.load %arg11[%c1_164, %c0_165, %c0_166] : memref<18x18x32xf32, #tpu.memory_space<vmem>>, vector<16x16x32xf32>
    %166 = vector.shape_cast %165 : vector<16x16x32xf32> to vector<256x32xf32>
    %167 = arith.truncf %166 : vector<256x32xf32> to vector<256x32xbf16>
    %c3_167 = arith.constant 3 : index
    %c0_168 = arith.constant 0 : index
    %c0_169 = arith.constant 0 : index
    %168 = vector.load %arg7[%c3_167, %c0_168, %c0_169] : memref<9x32x8xbf16, #tpu.memory_space<vmem>>, vector<1x32x8xbf16>
    %169 = vector.shape_cast %168 : vector<1x32x8xbf16> to vector<32x8xbf16>
    %cst_170 = arith.constant dense<0.000000e+00> : vector<256x8xf32>
    %170 = tpu.matmul %167, %169, %cst_170 {dimension_numbers = #tpu.dot_dimension_numbers<[1], [0], [0], [1], [0, 0, 1, 1], [], []>} : vector<256x32xbf16>, vector<32x8xbf16>, vector<256x8xf32> -> vector<256x8xf32>
    %171 = arith.addf %164, %170 : vector<256x8xf32>
    %c1_171 = arith.constant 1 : index
    %c1_172 = arith.constant 1 : index
    %c0_173 = arith.constant 0 : index
    %172 = vector.load %arg11[%c1_171, %c1_172, %c0_173] : memref<18x18x32xf32, #tpu.memory_space<vmem>>, vector<16x16x32xf32>
    %173 = vector.shape_cast %172 : vector<16x16x32xf32> to vector<256x32xf32>
    %174 = arith.truncf %173 : vector<256x32xf32> to vector<256x32xbf16>
    %c4_174 = arith.constant 4 : index
    %c0_175 = arith.constant 0 : index
    %c0_176 = arith.constant 0 : index
    %175 = vector.load %arg7[%c4_174, %c0_175, %c0_176] : memref<9x32x8xbf16, #tpu.memory_space<vmem>>, vector<1x32x8xbf16>
    %176 = vector.shape_cast %175 : vector<1x32x8xbf16> to vector<32x8xbf16>
    %cst_177 = arith.constant dense<0.000000e+00> : vector<256x8xf32>
    %177 = tpu.matmul %174, %176, %cst_177 {dimension_numbers = #tpu.dot_dimension_numbers<[1], [0], [0], [1], [0, 0, 1, 1], [], []>} : vector<256x32xbf16>, vector<32x8xbf16>, vector<256x8xf32> -> vector<256x8xf32>
    %178 = arith.addf %171, %177 : vector<256x8xf32>
    %c1_178 = arith.constant 1 : index
    %c2_179 = arith.constant 2 : index
    %c0_180 = arith.constant 0 : index
    %179 = vector.load %arg11[%c1_178, %c2_179, %c0_180] : memref<18x18x32xf32, #tpu.memory_space<vmem>>, vector<16x16x32xf32>
    %180 = vector.shape_cast %179 : vector<16x16x32xf32> to vector<256x32xf32>
    %181 = arith.truncf %180 : vector<256x32xf32> to vector<256x32xbf16>
    %c5_181 = arith.constant 5 : index
    %c0_182 = arith.constant 0 : index
    %c0_183 = arith.constant 0 : index
    %182 = vector.load %arg7[%c5_181, %c0_182, %c0_183] : memref<9x32x8xbf16, #tpu.memory_space<vmem>>, vector<1x32x8xbf16>
    %183 = vector.shape_cast %182 : vector<1x32x8xbf16> to vector<32x8xbf16>
    %cst_184 = arith.constant dense<0.000000e+00> : vector<256x8xf32>
    %184 = tpu.matmul %181, %183, %cst_184 {dimension_numbers = #tpu.dot_dimension_numbers<[1], [0], [0], [1], [0, 0, 1, 1], [], []>} : vector<256x32xbf16>, vector<32x8xbf16>, vector<256x8xf32> -> vector<256x8xf32>
    %185 = arith.addf %178, %184 : vector<256x8xf32>
    %c2_185 = arith.constant 2 : index
    %c0_186 = arith.constant 0 : index
    %c0_187 = arith.constant 0 : index
    %186 = vector.load %arg11[%c2_185, %c0_186, %c0_187] : memref<18x18x32xf32, #tpu.memory_space<vmem>>, vector<16x16x32xf32>
    %187 = vector.shape_cast %186 : vector<16x16x32xf32> to vector<256x32xf32>
    %188 = arith.truncf %187 : vector<256x32xf32> to vector<256x32xbf16>
    %c6_188 = arith.constant 6 : index
    %c0_189 = arith.constant 0 : index
    %c0_190 = arith.constant 0 : index
    %189 = vector.load %arg7[%c6_188, %c0_189, %c0_190] : memref<9x32x8xbf16, #tpu.memory_space<vmem>>, vector<1x32x8xbf16>
    %190 = vector.shape_cast %189 : vector<1x32x8xbf16> to vector<32x8xbf16>
    %cst_191 = arith.constant dense<0.000000e+00> : vector<256x8xf32>
    %191 = tpu.matmul %188, %190, %cst_191 {dimension_numbers = #tpu.dot_dimension_numbers<[1], [0], [0], [1], [0, 0, 1, 1], [], []>} : vector<256x32xbf16>, vector<32x8xbf16>, vector<256x8xf32> -> vector<256x8xf32>
    %192 = arith.addf %185, %191 : vector<256x8xf32>
    %c2_192 = arith.constant 2 : index
    %c1_193 = arith.constant 1 : index
    %c0_194 = arith.constant 0 : index
    %193 = vector.load %arg11[%c2_192, %c1_193, %c0_194] : memref<18x18x32xf32, #tpu.memory_space<vmem>>, vector<16x16x32xf32>
    %194 = vector.shape_cast %193 : vector<16x16x32xf32> to vector<256x32xf32>
    %195 = arith.truncf %194 : vector<256x32xf32> to vector<256x32xbf16>
    %c7_195 = arith.constant 7 : index
    %c0_196 = arith.constant 0 : index
    %c0_197 = arith.constant 0 : index
    %196 = vector.load %arg7[%c7_195, %c0_196, %c0_197] : memref<9x32x8xbf16, #tpu.memory_space<vmem>>, vector<1x32x8xbf16>
    %197 = vector.shape_cast %196 : vector<1x32x8xbf16> to vector<32x8xbf16>
    %cst_198 = arith.constant dense<0.000000e+00> : vector<256x8xf32>
    %198 = tpu.matmul %195, %197, %cst_198 {dimension_numbers = #tpu.dot_dimension_numbers<[1], [0], [0], [1], [0, 0, 1, 1], [], []>} : vector<256x32xbf16>, vector<32x8xbf16>, vector<256x8xf32> -> vector<256x8xf32>
    %199 = arith.addf %192, %198 : vector<256x8xf32>
    %c2_199 = arith.constant 2 : index
    %c2_200 = arith.constant 2 : index
    %c0_201 = arith.constant 0 : index
    %200 = vector.load %arg11[%c2_199, %c2_200, %c0_201] : memref<18x18x32xf32, #tpu.memory_space<vmem>>, vector<16x16x32xf32>
    %201 = vector.shape_cast %200 : vector<16x16x32xf32> to vector<256x32xf32>
    %202 = arith.truncf %201 : vector<256x32xf32> to vector<256x32xbf16>
    %c8_202 = arith.constant 8 : index
    %c0_203 = arith.constant 0 : index
    %c0_204 = arith.constant 0 : index
    %203 = vector.load %arg7[%c8_202, %c0_203, %c0_204] : memref<9x32x8xbf16, #tpu.memory_space<vmem>>, vector<1x32x8xbf16>
    %204 = vector.shape_cast %203 : vector<1x32x8xbf16> to vector<32x8xbf16>
    %cst_205 = arith.constant dense<0.000000e+00> : vector<256x8xf32>
    %205 = tpu.matmul %202, %204, %cst_205 {dimension_numbers = #tpu.dot_dimension_numbers<[1], [0], [0], [1], [0, 0, 1, 1], [], []>} : vector<256x32xbf16>, vector<32x8xbf16>, vector<256x8xf32> -> vector<256x8xf32>
    %206 = arith.addf %199, %205 : vector<256x8xf32>
    %c0_206 = arith.constant 0 : index
    %c0_207 = arith.constant 0 : index
    %207 = vector.load %arg8[%c0_206, %c0_207] : memref<1x8xf32, #tpu.memory_space<vmem>>, vector<1x8xf32>
    %208 = vector.broadcast %207 : vector<1x8xf32> to vector<256x8xf32>
    %209 = arith.addf %206, %208 : vector<256x8xf32>
    %210 = tpu.transpose %209, [1, 0] : vector<256x8xf32> -> vector<8x256xf32>
    %c0_208 = arith.constant 0 : index
    %c0_209 = arith.constant 0 : index
    %c0_210 = arith.constant 0 : index
    %211 = vector.load %arg1[%c0_208, %c0_209, %c0_210] : memref<1x3x256xf32, #tpu.memory_space<vmem>>, vector<1x3x256xf32>
    %212 = vector.shape_cast %211 : vector<1x3x256xf32> to vector<3x256xf32>
    %213 = tpu.concatenate %212, %210 in 0 : vector<3x256xf32>, vector<8x256xf32> -> vector<11x256xf32>
    %c0_211 = arith.constant 0 : index
    %c0_212 = arith.constant 0 : index
    %c0_213 = arith.constant 0 : index
    %214 = vector.load %arg9[%c0_211, %c0_212, %c0_213] : memref<1x11x256xf32, #tpu.memory_space<vmem>>, vector<1x11x256xf32>
    %215 = vector.shape_cast %214 : vector<1x11x256xf32> to vector<11x256xf32>
    %216 = vector.shape_cast %213 : vector<11x256xf32> to vector<1x11x256xf32>
    tpu.vector_store %arg9[%c0_211, %c0_212, %c0_213], %216 {strides = array<i32>} : memref<1x11x256xf32, #tpu.memory_space<vmem>>, vector<1x11x256xf32>,
    return
  }
  func.func @transform_0(%arg0: i32) -> (i32, i32, i32) {
    %c0_i32 = arith.constant 0 : i32
    %c0_i32_0 = arith.constant 0 : i32
    %c0_i32_1 = arith.constant 0 : i32
    return %arg0, %c0_i32, %c0_i32_0 : i32, i32, i32
  }
  func.func @transform_1(%arg0: i32) -> (i32, i32, i32, i32) {
    %c0_i32 = arith.constant 0 : i32
    %c0_i32_0 = arith.constant 0 : i32
    %c0_i32_1 = arith.constant 0 : i32
    %c0_i32_2 = arith.constant 0 : i32
    return %arg0, %c0_i32, %c0_i32_0, %c0_i32_1 : i32, i32, i32, i32
  }
  func.func @transform_2(%arg0: i32) -> (i32, i32, i32) {
    %c0_i32 = arith.constant 0 : i32
    %c0_i32_0 = arith.constant 0 : i32
    %c0_i32_1 = arith.constant 0 : i32
    %c0_i32_2 = arith.constant 0 : i32
    return %c0_i32, %c0_i32_0, %c0_i32_1 : i32, i32, i32
  }
  func.func @transform_3(%arg0: i32) -> (i32, i32) {
    %c0_i32 = arith.constant 0 : i32
    %c0_i32_0 = arith.constant 0 : i32
    %c0_i32_1 = arith.constant 0 : i32
    return %c0_i32, %c0_i32_0 : i32, i32
  }
  func.func @transform_4(%arg0: i32) -> (i32, i32, i32) {
    %c0_i32 = arith.constant 0 : i32
    %c0_i32_0 = arith.constant 0 : i32
    %c0_i32_1 = arith.constant 0 : i32
    %c0_i32_2 = arith.constant 0 : i32
    return %c0_i32, %c0_i32_0, %c0_i32_1 : i32, i32, i32
  }
  func.func @transform_5(%arg0: i32) -> (i32, i32) {
    %c0_i32 = arith.constant 0 : i32
    %c0_i32_0 = arith.constant 0 : i32
    %c0_i32_1 = arith.constant 0 : i32
    return %c0_i32, %c0_i32_0 : i32, i32
  }
  func.func @transform_6(%arg0: i32) -> (i32, i32, i32) {
    %c0_i32 = arith.constant 0 : i32
    %c0_i32_0 = arith.constant 0 : i32
    %c0_i32_1 = arith.constant 0 : i32
    %c0_i32_2 = arith.constant 0 : i32
    return %c0_i32, %c0_i32_0, %c0_i32_1 : i32, i32, i32
  }
  func.func @transform_7(%arg0: i32) -> (i32, i32) {
    %c0_i32 = arith.constant 0 : i32
    %c0_i32_0 = arith.constant 0 : i32
    %c0_i32_1 = arith.constant 0 : i32
    return %c0_i32, %c0_i32_0 : i32, i32
  }
  func.func @transform_8(%arg0: i32) -> (i32, i32, i32) {
    %c0_i32 = arith.constant 0 : i32
    %c0_i32_0 = arith.constant 0 : i32
    %c0_i32_1 = arith.constant 0 : i32
    return %arg0, %c0_i32, %c0_i32_0 : i32, i32, i32
  }
}

</mosaic_0001>

<llo_original>
// kernel: feature_extraction_net.1
$region0: #{feature_extraction_net.1}
  #allocation0 [shape = 'u32[]', space=smem, size = 0x4, offset = 0x4, fixed_abs, tag = 'smem constant byte address 0x4 - core index']
  #allocation1 [shape = 'u32[144,128]{1,0:T(1,128)}', space=vmem, size = 0x12000, scoped, tag = 'internal scratch']
  #allocation2 [shape = 'f32[18,18,3]{2,1,0:T(8,128)}', space=vmem, size = 0x36000, scoped, tag = 'scratch operand']
  #allocation3 [shape = 'f32[18,18,32]{2,1,0:T(8,128)}', space=vmem, size = 0x36000, scoped, tag = 'scratch operand']
  %s0 = inlined_call_operand.vmem [shape: f32[2,3,256], index: 0, kind: input, shape index: {}]
  %s1 = inlined_call_operand.vmem [shape: f32[2,16,16,3], index: 1, kind: input, shape index: {}]
  %s2 = inlined_call_operand.vmem [shape: bf16[9,3,32], index: 2, kind: input, shape index: {}]
  %s3 = inlined_call_operand.vmem [shape: f32[1,32], index: 3, kind: input, shape index: {}]
  %s4 = inlined_call_operand.vmem [shape: bf16[9,32,32], index: 4, kind: input, shape index: {}]
  %s5 = inlined_call_operand.vmem [shape: f32[1,32], index: 5, kind: input, shape index: {}]
  %s6 = inlined_call_operand.vmem [shape: bf16[9,32,8], index: 6, kind: input, shape index: {}]
  %s7 = inlined_call_operand.vmem [shape: f32[1,8], index: 7, kind: input, shape index: {}]
  %s8 = inlined_call_operand.vmem [shape: f32[2,11,256], index: 8, kind: output, shape index: {}]
  %s9 = sld [smem:[#allocation0]]
  $region65: #{feature_extraction_net.1} parent=0
    _
  %s11 = ssub.s32 1, %s9
  %s12 = scalar_select 0, %s11, %s9
  loop: start=0, step=1, limit=4
  $region2: #{feature_extraction_net.1} parent=0 // loop_pre_header
    _
  $region3: #{feature_extraction_net.1} parent=0 // loop_header
    %s14 = sphi 0, %s18
    %p15 = scmp.ge.s32.totalorder %s14, 4
    %s24 = sphi 0, %s26
    %s27 = sphi 0, %s24
    %s28 = sphi 0, %s27
    %s44 = sphi 0, %s28
    %s50 = sphi 0, %s52
    %s53 = sphi 0, %s50
    %s54 = sphi 0, %s53
    %s70 = sphi 0, %s54
    %s74 = sphi 0, %s74
    %s76 = sphi 0, %s74
    %s77 = sphi 0, %s76
    %s91 = sphi 0, %s77
    %s95 = sphi 0, %s95
    %s97 = sphi 0, %s95
    %s98 = sphi 0, %s97
    %s112 = sphi 0, %s98
    %s116 = sphi 0, %s116
    %s118 = sphi 0, %s116
    %s119 = sphi 0, %s118
    %s133 = sphi 0, %s119
    %s137 = sphi 0, %s137
    %s139 = sphi 0, %s137
    %s140 = sphi 0, %s139
    %s154 = sphi 0, %s140
    %s158 = sphi 0, %s158
    %s160 = sphi 0, %s158
    %s161 = sphi 0, %s160
    %s175 = sphi 0, %s161
    %s179 = sphi 0, %s179
    %s181 = sphi 0, %s179
    %s182 = sphi 0, %s181
    %s196 = sphi 0, %s182
    %s202 = sphi 0, %s204
    %s205 = sphi 0, %s202
    %s206 = sphi 0, %s205
    %s222 = sphi 0, %s206
  $region4: #{feature_extraction_net.1} parent=0 // loop_header_branch
    %17 = sbr.rel (%p15) target = $region8
  $region5: #{feature_extraction_net.1} parent=0 // loop_body
    %s19 = ssub.s32 %s14, 1
    %s20 = ssub.s32 %s14, 2
    %s21 = sadd.s32 %s14, 1
    %s22 = ssub.s32 %s14, %s21
    %p23 = scmp.eq.s32.totalorder %s22, 0
    %s25 = sadd.s32 %s24, 1
    %s26 = scalar_select %p23, %s24, %s25
    %p29 = pneg %p23
    %p30 = scmp.eq.s32.totalorder %s14, 1
    %p31 = por %p29, %p30
    %p32 = scmp.ne.s32.totalorder %s24, %s27
    %p33 = scmp.eq.s32.totalorder %s14, 0
    %p34 = por %p32, %p33
    %p35 = scmp.ne.s32.totalorder %s24, %s27
    %p36 = scmp.eq.s32.totalorder %s19, 1
    %p37 = por %p35, %p36
    %p38 = scmp.ne.s32.totalorder %s27, %s28
    %p39 = scmp.eq.s32.totalorder %s19, 0
    %p40 = por %p38, %p39
    %p41 = scmp.ne.s32.totalorder %s27, %s28
    %p42 = scmp.eq.s32.totalorder %s20, 1
    %p43 = por %p41, %p42
    %p45 = scmp.ne.s32.totalorder %s28, %s44
    %p46 = scmp.eq.s32.totalorder %s20, 0
    %p47 = por %p45, %p46
    %s48 = ssub.s32 %s14, %s21
    %p49 = scmp.eq.s32.totalorder %s48, 0
    %s51 = sadd.s32 %s50, 1
    %s52 = scalar_select %p49, %s50, %s51
    %p55 = pneg %p49
    %p56 = scmp.eq.s32.totalorder %s14, 1
    %p57 = por %p55, %p56
    %p58 = scmp.ne.s32.totalorder %s50, %s53
    %p59 = scmp.eq.s32.totalorder %s14, 0
    %p60 = por %p58, %p59
    %p61 = scmp.ne.s32.totalorder %s50, %s53
    %p62 = scmp.eq.s32.totalorder %s19, 1
    %p63 = por %p61, %p62
    %p64 = scmp.ne.s32.totalorder %s53, %s54
    %p65 = scmp.eq.s32.totalorder %s19, 0
    %p66 = por %p64, %p65
    %p67 = scmp.ne.s32.totalorder %s53, %s54
    %p68 = scmp.eq.s32.totalorder %s20, 1
    %p69 = por %p67, %p68
    %p71 = scmp.ne.s32.totalorder %s54, %s70
    %p72 = scmp.eq.s32.totalorder %s20, 0
    %p73 = por %p71, %p72
    %s75 = sadd.s32 %s74, 1
    %p78 = scmp.eq.s32.totalorder %s14, 1
    %p79 = scmp.ne.s32.totalorder %s74, %s76
    %p80 = scmp.eq.s32.totalorder %s14, 0
    %p81 = por %p79, %p80
    %p82 = scmp.ne.s32.totalorder %s74, %s76
    %p83 = scmp.eq.s32.totalorder %s19, 1
    %p84 = por %p82, %p83
    %p85 = scmp.ne.s32.totalorder %s76, %s77
    %p86 = scmp.eq.s32.totalorder %s19, 0
    %p87 = por %p85, %p86
    %p88 = scmp.ne.s32.totalorder %s76, %s77
    %p89 = scmp.eq.s32.totalorder %s20, 1
    %p90 = por %p88, %p89
    %p92 = scmp.ne.s32.totalorder %s77, %s91
    %p93 = scmp.eq.s32.totalorder %s20, 0
    %p94 = por %p92, %p93
    %s96 = sadd.s32 %s95, 1
    %p99 = scmp.eq.s32.totalorder %s14, 1
    %p100 = scmp.ne.s32.totalorder %s95, %s97
    %p101 = scmp.eq.s32.totalorder %s14, 0
    %p102 = por %p100, %p101
    %p103 = scmp.ne.s32.totalorder %s95, %s97
    %p104 = scmp.eq.s32.totalorder %s19, 1
    %p105 = por %p103, %p104
    %p106 = scmp.ne.s32.totalorder %s97, %s98
    %p107 = scmp.eq.s32.totalorder %s19, 0
    %p108 = por %p106, %p107
    %p109 = scmp.ne.s32.totalorder %s97, %s98
    %p110 = scmp.eq.s32.totalorder %s20, 1
    %p111 = por %p109, %p110
    %p113 = scmp.ne.s32.totalorder %s98, %s112
    %p114 = scmp.eq.s32.totalorder %s20, 0
    %p115 = por %p113, %p114
    %s117 = sadd.s32 %s116, 1
    %p120 = scmp.eq.s32.totalorder %s14, 1
    %p121 = scmp.ne.s32.totalorder %s116, %s118
    %p122 = scmp.eq.s32.totalorder %s14, 0
    %p123 = por %p121, %p122
    %p124 = scmp.ne.s32.totalorder %s116, %s118
    %p125 = scmp.eq.s32.totalorder %s19, 1
    %p126 = por %p124, %p125
    %p127 = scmp.ne.s32.totalorder %s118, %s119
    %p128 = scmp.eq.s32.totalorder %s19, 0
    %p129 = por %p127, %p128
    %p130 = scmp.ne.s32.totalorder %s118, %s119
    %p131 = scmp.eq.s32.totalorder %s20, 1
    %p132 = por %p130, %p131
    %p134 = scmp.ne.s32.totalorder %s119, %s133
    %p135 = scmp.eq.s32.totalorder %s20, 0
    %p136 = por %p134, %p135
    %s138 = sadd.s32 %s137, 1
    %p141 = scmp.eq.s32.totalorder %s14, 1
    %p142 = scmp.ne.s32.totalorder %s137, %s139
    %p143 = scmp.eq.s32.totalorder %s14, 0
    %p144 = por %p142, %p143
    %p145 = scmp.ne.s32.totalorder %s137, %s139
    %p146 = scmp.eq.s32.totalorder %s19, 1
    %p147 = por %p145, %p146
    %p148 = scmp.ne.s32.totalorder %s139, %s140
    %p149 = scmp.eq.s32.totalorder %s19, 0
    %p150 = por %p148, %p149
    %p151 = scmp.ne.s32.totalorder %s139, %s140
    %p152 = scmp.eq.s32.totalorder %s20, 1
    %p153 = por %p151, %p152
    %p155 = scmp.ne.s32.totalorder %s140, %s154
    %p156 = scmp.eq.s32.totalorder %s20, 0
    %p157 = por %p155, %p156
    %s159 = sadd.s32 %s158, 1
    %p162 = scmp.eq.s32.totalorder %s14, 1
    %p163 = scmp.ne.s32.totalorder %s158, %s160
    %p164 = scmp.eq.s32.totalorder %s14, 0
    %p165 = por %p163, %p164
    %p166 = scmp.ne.s32.totalorder %s158, %s160
    %p167 = scmp.eq.s32.totalorder %s19, 1
    %p168 = por %p166, %p167
    %p169 = scmp.ne.s32.totalorder %s160, %s161
    %p170 = scmp.eq.s32.totalorder %s19, 0
    %p171 = por %p169, %p170
    %p172 = scmp.ne.s32.totalorder %s160, %s161
    %p173 = scmp.eq.s32.totalorder %s20, 1
    %p174 = por %p172, %p173
    %p176 = scmp.ne.s32.totalorder %s161, %s175
    %p177 = scmp.eq.s32.totalorder %s20, 0
    %p178 = por %p176, %p177
    %s180 = sadd.s32 %s179, 1
    %p183 = scmp.eq.s32.totalorder %s14, 1
    %p184 = scmp.ne.s32.totalorder %s179, %s181
    %p185 = scmp.eq.s32.totalorder %s14, 0
    %p186 = por %p184, %p185
    %p187 = scmp.ne.s32.totalorder %s179, %s181
    %p188 = scmp.eq.s32.totalorder %s19, 1
    %p189 = por %p187, %p188
    %p190 = scmp.ne.s32.totalorder %s181, %s182
    %p191 = scmp.eq.s32.totalorder %s19, 0
    %p192 = por %p190, %p191
    %p193 = scmp.ne.s32.totalorder %s181, %s182
    %p194 = scmp.eq.s32.totalorder %s20, 1
    %p195 = por %p193, %p194
    %p197 = scmp.ne.s32.totalorder %s182, %s196
    %p198 = scmp.eq.s32.totalorder %s20, 0
    %p199 = por %p197, %p198
    %s200 = ssub.s32 %s14, %s21
    %p201 = scmp.eq.s32.totalorder %s200, 0
    %s203 = sadd.s32 %s202, 1
    %s204 = scalar_select %p201, %s202, %s203
    %p207 = pneg %p201
    %p208 = scmp.eq.s32.totalorder %s14, 1
    %p209 = por %p207, %p208
    %p210 = scmp.ne.s32.totalorder %s202, %s205
    %p211 = scmp.eq.s32.totalorder %s14, 0
    %p212 = por %p210, %p211
    %p213 = scmp.ne.s32.totalorder %s202, %s205
    %p214 = scmp.eq.s32.totalorder %s19, 1
    %p215 = por %p213, %p214
    %p216 = scmp.ne.s32.totalorder %s205, %s206
    %p217 = scmp.eq.s32.totalorder %s19, 0
    %p218 = por %p216, %p217
    %p219 = scmp.ne.s32.totalorder %s205, %s206
    %p220 = scmp.eq.s32.totalorder %s20, 1
    %p221 = por %p219, %p220
    %p223 = scmp.ne.s32.totalorder %s206, %s222
    %p224 = scmp.eq.s32.totalorder %s20, 0
    %p225 = por %p223, %p224
    %p226 = scmp.le.s32.totalorder 1, %s14
    %p227 = scmp.lt.s32.totalorder %s14, 3
    %p228 = pnand %p226, %p227
    %p229 = pneg %p228
    // Predicated region
    $region9: #{feature_extraction_net.1} parent=5 // pred_check
      _
    $region10: #{feature_extraction_net.1} parent=5 // pred_check_branch
      %231 = sbr.rel (%p228) target = $region12
    $region11: #{feature_extraction_net.1} parent=5 // pred_region
      %s232 = ssub.s32 %s14, 1
      // Predicated region
      $region13: #{feature_extraction_net.1} parent=11 // pred_check
        %p233 = pneg %p87
      $region14: #{feature_extraction_net.1} parent=11 // pred_check_branch
        %235 = sbr.rel (%p233) target = $region16
      $region15: #{feature_extraction_net.1} parent=11 // pred_region
        _
      $region16: #{feature_extraction_net.1} parent=11 // pred_fallthru
        _
      // Predicated region
      $region17: #{feature_extraction_net.1} parent=11 // pred_check
        %p236 = pneg %p108
      $region18: #{feature_extraction_net.1} parent=11 // pred_check_branch
        %238 = sbr.rel (%p236) target = $region20
      $region19: #{feature_extraction_net.1} parent=11 // pred_region
        _
      $region20: #{feature_extraction_net.1} parent=11 // pred_fallthru
        _
      // Predicated region
      $region21: #{feature_extraction_net.1} parent=11 // pred_check
        %p239 = pneg %p129
      $region22: #{feature_extraction_net.1} parent=11 // pred_check_branch
        %241 = sbr.rel (%p239) target = $region24
      $region23: #{feature_extraction_net.1} parent=11 // pred_region
        _
      $region24: #{feature_extraction_net.1} parent=11 // pred_fallthru
        _
      // Predicated region
      $region25: #{feature_extraction_net.1} parent=11 // pred_check
        %p242 = pneg %p150
      $region26: #{feature_extraction_net.1} parent=11 // pred_check_branch
        %244 = sbr.rel (%p242) target = $region28
      $region27: #{feature_extraction_net.1} parent=11 // pred_region
        _
      $region28: #{feature_extraction_net.1} parent=11 // pred_fallthru
        _
      // Predicated region
      $region29: #{feature_extraction_net.1} parent=11 // pred_check
        %p245 = pneg %p171
      $region30: #{feature_extraction_net.1} parent=11 // pred_check_branch
        %247 = sbr.rel (%p245) target = $region32
      $region31: #{feature_extraction_net.1} parent=11 // pred_region
        _
      $region32: #{feature_extraction_net.1} parent=11 // pred_fallthru
        _
      // Predicated region
      $region33: #{feature_extraction_net.1} parent=11 // pred_check
        %p248 = pneg %p192
      $region34: #{feature_extraction_net.1} parent=11 // pred_check_branch
        %250 = sbr.rel (%p248) target = $region36
      $region35: #{feature_extraction_net.1} parent=11 // pred_region
        _
      $region36: #{feature_extraction_net.1} parent=11 // pred_fallthru
        _
    $region12: #{feature_extraction_net.1} parent=5 // pred_fallthru
      _
    %p251 = scmp.lt.s32.totalorder %s14, 2
    // Predicated region
    $region37: #{feature_extraction_net.1} parent=5 // pred_check
      %p252 = pneg %p251
    $region38: #{feature_extraction_net.1} parent=5 // pred_check_branch
      %254 = sbr.rel (%p252) target = $region40
    $region39: #{feature_extraction_net.1} parent=5 // pred_region
      // Predicated region
      $region41: #{feature_extraction_net.1} parent=39 // pred_check
        %p255 = pneg %p34
      $region42: #{feature_extraction_net.1} parent=39 // pred_check_branch
        %257 = sbr.rel (%p255) target = $region44
      $region43: #{feature_extraction_net.1} parent=39 // pred_region
        %p258 = scmp.lt.s32.totalorder %s14, 1
        %s259 = scalar_select %p258, %s14, 1
        %s260 = smul.addr %s259, 2
        %s261 = smul.addr %s260, 4
        %s262 = scalar_lea.vmem %s0, %s261
      $region44: #{feature_extraction_net.1} parent=39 // pred_fallthru
        _
      // Predicated region
      $region45: #{feature_extraction_net.1} parent=39 // pred_check
        %p263 = pneg %p60
      $region46: #{feature_extraction_net.1} parent=39 // pred_check_branch
        %265 = sbr.rel (%p263) target = $region48
      $region47: #{feature_extraction_net.1} parent=39 // pred_region
        %p266 = scmp.lt.s32.totalorder %s14, 1
        %s267 = scalar_select %p266, %s14, 1
        %s268 = smul.addr %s267, 32
        %s269 = smul.addr %s268, 8
        %s270 = scalar_lea.vmem %s1, %s269
      $region48: #{feature_extraction_net.1} parent=39 // pred_fallthru
        _
    $region40: #{feature_extraction_net.1} parent=5 // pred_fallthru
      _
    %p271 = scmp.le.s32.totalorder 1, %s14
    %p272 = scmp.lt.s32.totalorder %s14, 3
    %p273 = pnand %p271, %p272
    %p274 = pneg %p273
    // Predicated region
    $region49: #{feature_extraction_net.1} parent=5 // pred_check
      _
    $region50: #{feature_extraction_net.1} parent=5 // pred_check_branch
      %276 = sbr.rel (%p273) target = $region52
    $region51: #{feature_extraction_net.1} parent=5 // pred_region
      %s277 = ssub.s32 %s14, 1
      %p278 = scmp.lt.s32.totalorder %s19, 1
      %s279 = scalar_select %p278, %s19, 1
      %s280 = smul.addr %s279, 2
      %s281 = smul.addr %s280, 4
      %s282 = scalar_lea.vmem %s0, %s281
      %p283 = pneg %p40
      %p284 = pneg %p37
      %p285 = scmp.lt.s32.totalorder %s19, 1
      %s286 = scalar_select %p285, %s19, 1
      %s287 = smul.addr %s286, 32
      %s288 = smul.addr %s287, 8
      %s289 = scalar_lea.vmem %s1, %s288
      %p290 = pneg %p66
      %p291 = pneg %p63
      %p292 = pneg %p87
      %p293 = pneg %p84
      %p294 = pneg %p108
      %p295 = pneg %p105
      %p296 = pneg %p129
      %p297 = pneg %p126
      %p298 = pneg %p150
      %p299 = pneg %p147
      %p300 = pneg %p171
      %p301 = pneg %p168
      %p302 = pneg %p192
      %p303 = pneg %p189
      %p304 = pneg %p218
      %p305 = pneg %p215
      %p306 = scmp.lt.s32.totalorder %s19, 1
      %s307 = scalar_select %p306, %s19, 1
      %s308 = smul.addr %s307, 4
      %s309 = smul.addr %s308, 8
      %s310 = scalar_lea.vmem %s8, %s309
      %p311 = scmp.lt.s32.totalorder %s19, 1
      %s312 = scalar_select %p311, %s19, 1
      %s313 = smul.addr %s312, 2
      %s314 = smul.addr %s313, 4
      %s315 = scalar_lea.vmem %s0, %s314
      %p316 = scmp.lt.s32.totalorder %s19, 1
      %s317 = scalar_select %p316, %s19, 1
      %s318 = smul.addr %s317, 32
      %s319 = smul.addr %s318, 8
      %s320 = scalar_lea.vmem %s1, %s319
      %p321 = scmp.lt.s32.totalorder %s19, 1
      %s322 = scalar_select %p321, %s19, 1
      %s323 = smul.addr %s322, 4
      %s324 = smul.addr %s323, 8
      %s325 = scalar_lea.vmem %s8, %s324
      %vm327 = vcmask 23552
      %328 = vst.msk [vmem:[#allocation2] sm:$0xff] %vm327, 0.0
      %329 = vst.msk [vmem:[#allocation2 + $0x8] sm:$0xff] %vm327, 0.0
      %vm330 = vcmask 17408
      %331 = vst.msk [vmem:[#allocation2 + $0x10] sm:$0x3] %vm330, 0.0
      %332 = vst.msk [vmem:[#allocation2 + $0x18] sm:$0xff] %vm327, 0.0
      %333 = vst.msk [vmem:[#allocation2 + $0x20] sm:$0xff] %vm327, 0.0
      %334 = vst.msk [vmem:[#allocation2 + $0x28] sm:$0x3] %vm330, 0.0
      %335 = vst.msk [vmem:[#allocation2 + $0x30] sm:$0xff] %vm327, 0.0
      %336 = vst.msk [vmem:[#allocation2 + $0x38] sm:$0xff] %vm327, 0.0
      %337 = vst.msk [vmem:[#allocation2 + $0x40] sm:$0x3] %vm330, 0.0
      %338 = vst.msk [vmem:[#allocation2 + $0x48] sm:$0xff] %vm327, 0.0
      %339 = vst.msk [vmem:[#allocation2 + $0x50] sm:$0xff] %vm327, 0.0
      %340 = vst.msk [vmem:[#allocation2 + $0x58] sm:$0x3] %vm330, 0.0
      %341 = vst.msk [vmem:[#allocation2 + $0x60] sm:$0xff] %vm327, 0.0
      %342 = vst.msk [vmem:[#allocation2 + $0x68] sm:$0xff] %vm327, 0.0
      %343 = vst.msk [vmem:[#allocation2 + $0x70] sm:$0x3] %vm330, 0.0
      %344 = vst.msk [vmem:[#allocation2 + $0x78] sm:$0xff] %vm327, 0.0
      %345 = vst.msk [vmem:[#allocation2 + $0x80] sm:$0xff] %vm327, 0.0
      %346 = vst.msk [vmem:[#allocation2 + $0x88] sm:$0x3] %vm330, 0.0
      %347 = vst.msk [vmem:[#allocation2 + $0x90] sm:$0xff] %vm327, 0.0
      %348 = vst.msk [vmem:[#allocation2 + $0x98] sm:$0xff] %vm327, 0.0
      %349 = vst.msk [vmem:[#allocation2 + $0xa0] sm:$0x3] %vm330, 0.0
      %350 = vst.msk [vmem:[#allocation2 + $0xa8] sm:$0xff] %vm327, 0.0
      %351 = vst.msk [vmem:[#allocation2 + $0xb0] sm:$0xff] %vm327, 0.0
      %352 = vst.msk [vmem:[#allocation2 + $0xb8] sm:$0x3] %vm330, 0.0
      %353 = vst.msk [vmem:[#allocation2 + $0xc0] sm:$0xff] %vm327, 0.0
      %354 = vst.msk [vmem:[#allocation2 + $0xc8] sm:$0xff] %vm327, 0.0
      %355 = vst.msk [vmem:[#allocation2 + $0xd0] sm:$0x3] %vm330, 0.0
      %356 = vst.msk [vmem:[#allocation2 + $0xd8] sm:$0xff] %vm327, 0.0
      %357 = vst.msk [vmem:[#allocation2 + $0xe0] sm:$0xff] %vm327, 0.0
      %358 = vst.msk [vmem:[#allocation2 + $0xe8] sm:$0x3] %vm330, 0.0
      %359 = vst.msk [vmem:[#allocation2 + $0xf0] sm:$0xff] %vm327, 0.0
      %360 = vst.msk [vmem:[#allocation2 + $0xf8] sm:$0xff] %vm327, 0.0
      %361 = vst.msk [vmem:[#allocation2 + $0x100] sm:$0x3] %vm330, 0.0
      %362 = vst.msk [vmem:[#allocation2 + $0x108] sm:$0xff] %vm327, 0.0
      %363 = vst.msk [vmem:[#allocation2 + $0x110] sm:$0xff] %vm327, 0.0
      %364 = vst.msk [vmem:[#allocation2 + $0x118] sm:$0x3] %vm330, 0.0
      %365 = vst.msk [vmem:[#allocation2 + $0x120] sm:$0xff] %vm327, 0.0
      %366 = vst.msk [vmem:[#allocation2 + $0x128] sm:$0xff] %vm327, 0.0
      %367 = vst.msk [vmem:[#allocation2 + $0x130] sm:$0x3] %vm330, 0.0
      %368 = vst.msk [vmem:[#allocation2 + $0x138] sm:$0xff] %vm327, 0.0
      %369 = vst.msk [vmem:[#allocation2 + $0x140] sm:$0xff] %vm327, 0.0
      %370 = vst.msk [vmem:[#allocation2 + $0x148] sm:$0x3] %vm330, 0.0
      %371 = vst.msk [vmem:[#allocation2 + $0x150] sm:$0xff] %vm327, 0.0
      %372 = vst.msk [vmem:[#allocation2 + $0x158] sm:$0xff] %vm327, 0.0
      %373 = vst.msk [vmem:[#allocation2 + $0x160] sm:$0x3] %vm330, 0.0
      %374 = vst.msk [vmem:[#allocation2 + $0x168] sm:$0xff] %vm327, 0.0
      %375 = vst.msk [vmem:[#allocation2 + $0x170] sm:$0xff] %vm327, 0.0
      %376 = vst.msk [vmem:[#allocation2 + $0x178] sm:$0x3] %vm330, 0.0
      %377 = vst.msk [vmem:[#allocation2 + $0x180] sm:$0xff] %vm327, 0.0
      %378 = vst.msk [vmem:[#allocation2 + $0x188] sm:$0xff] %vm327, 0.0
      %379 = vst.msk [vmem:[#allocation2 + $0x190] sm:$0x3] %vm330, 0.0
      %380 = vst.msk [vmem:[#allocation2 + $0x198] sm:$0xff] %vm327, 0.0
      %381 = vst.msk [vmem:[#allocation2 + $0x1a0] sm:$0xff] %vm327, 0.0
      %382 = vst.msk [vmem:[#allocation2 + $0x1a8] sm:$0x3] %vm330, 0.0
      %vm383 = vcmask 261120
      %384 = vst.msk [vmem:[#allocation3] sm:$0xff] %vm383, 0.0
      %385 = vst.msk [vmem:[#allocation3 + $0x8] sm:$0xff] %vm383, 0.0
      %vm386 = vcmask 254976
      %387 = vst.msk [vmem:[#allocation3 + $0x10] sm:$0x3] %vm386, 0.0
      %388 = vst.msk [vmem:[#allocation3 + $0x18] sm:$0xff] %vm383, 0.0
      %389 = vst.msk [vmem:[#allocation3 + $0x20] sm:$0xff] %vm383, 0.0
      %390 = vst.msk [vmem:[#allocation3 + $0x28] sm:$0x3] %vm386, 0.0
      %391 = vst.msk [vmem:[#allocation3 + $0x30] sm:$0xff] %vm383, 0.0
      %392 = vst.msk [vmem:[#allocation3 + $0x38] sm:$0xff] %vm383, 0.0
      %393 = vst.msk [vmem:[#allocation3 + $0x40] sm:$0x3] %vm386, 0.0
      %394 = vst.msk [vmem:[#allocation3 + $0x48] sm:$0xff] %vm383, 0.0
      %395 = vst.msk [vmem:[#allocation3 + $0x50] sm:$0xff] %vm383, 0.0
      %396 = vst.msk [vmem:[#allocation3 + $0x58] sm:$0x3] %vm386, 0.0
      %397 = vst.msk [vmem:[#allocation3 + $0x60] sm:$0xff] %vm383, 0.0
      %398 = vst.msk [vmem:[#allocation3 + $0x68] sm:$0xff] %vm383, 0.0
      %399 = vst.msk [vmem:[#allocation3 + $0x70] sm:$0x3] %vm386, 0.0
      %400 = vst.msk [vmem:[#allocation3 + $0x78] sm:$0xff] %vm383, 0.0
      %401 = vst.msk [vmem:[#allocation3 + $0x80] sm:$0xff] %vm383, 0.0
      %402 = vst.msk [vmem:[#allocation3 + $0x88] sm:$0x3] %vm386, 0.0
      %403 = vst.msk [vmem:[#allocation3 + $0x90] sm:$0xff] %vm383, 0.0
      %404 = vst.msk [vmem:[#allocation3 + $0x98] sm:$0xff] %vm383, 0.0
      %405 = vst.msk [vmem:[#allocation3 + $0xa0] sm:$0x3] %vm386, 0.0
      %406 = vst.msk [vmem:[#allocation3 + $0xa8] sm:$0xff] %vm383, 0.0
      %407 = vst.msk [vmem:[#allocation3 + $0xb0] sm:$0xff] %vm383, 0.0
      %408 = vst.msk [vmem:[#allocation3 + $0xb8] sm:$0x3] %vm386, 0.0
      %409 = vst.msk [vmem:[#allocation3 + $0xc0] sm:$0xff] %vm383, 0.0
      %410 = vst.msk [vmem:[#allocation3 + $0xc8] sm:$0xff] %vm383, 0.0
      %411 = vst.msk [vmem:[#allocation3 + $0xd0] sm:$0x3] %vm386, 0.0
      %412 = vst.msk [vmem:[#allocation3 + $0xd8] sm:$0xff] %vm383, 0.0
      %413 = vst.msk [vmem:[#allocation3 + $0xe0] sm:$0xff] %vm383, 0.0
      %414 = vst.msk [vmem:[#allocation3 + $0xe8] sm:$0x3] %vm386, 0.0
      %415 = vst.msk [vmem:[#allocation3 + $0xf0] sm:$0xff] %vm383, 0.0
      %416 = vst.msk [vmem:[#allocation3 + $0xf8] sm:$0xff] %vm383, 0.0
      %417 = vst.msk [vmem:[#allocation3 + $0x100] sm:$0x3] %vm386, 0.0
      %418 = vst.msk [vmem:[#allocation3 + $0x108] sm:$0xff] %vm383, 0.0
      %419 = vst.msk [vmem:[#allocation3 + $0x110] sm:$0xff] %vm383, 0.0
      %420 = vst.msk [vmem:[#allocation3 + $0x118] sm:$0x3] %vm386, 0.0
      %421 = vst.msk [vmem:[#allocation3 + $0x120] sm:$0xff] %vm383, 0.0
      %422 = vst.msk [vmem:[#allocation3 + $0x128] sm:$0xff] %vm383, 0.0
      %423 = vst.msk [vmem:[#allocation3 + $0x130] sm:$0x3] %vm386, 0.0
      %424 = vst.msk [vmem:[#allocation3 + $0x138] sm:$0xff] %vm383, 0.0
      %425 = vst.msk [vmem:[#allocation3 + $0x140] sm:$0xff] %vm383, 0.0
      %426 = vst.msk [vmem:[#allocation3 + $0x148] sm:$0x3] %vm386, 0.0
      %427 = vst.msk [vmem:[#allocation3 + $0x150] sm:$0xff] %vm383, 0.0
      %428 = vst.msk [vmem:[#allocation3 + $0x158] sm:$0xff] %vm383, 0.0
      %429 = vst.msk [vmem:[#allocation3 + $0x160] sm:$0x3] %vm386, 0.0
      %430 = vst.msk [vmem:[#allocation3 + $0x168] sm:$0xff] %vm383, 0.0
      %431 = vst.msk [vmem:[#allocation3 + $0x170] sm:$0xff] %vm383, 0.0
      %432 = vst.msk [vmem:[#allocation3 + $0x178] sm:$0x3] %vm386, 0.0
      %433 = vst.msk [vmem:[#allocation3 + $0x180] sm:$0xff] %vm383, 0.0
      %434 = vst.msk [vmem:[#allocation3 + $0x188] sm:$0xff] %vm383, 0.0
      %435 = vst.msk [vmem:[#allocation3 + $0x190] sm:$0x3] %vm386, 0.0
      %436 = vst.msk [vmem:[#allocation3 + $0x198] sm:$0xff] %vm383, 0.0
      %437 = vst.msk [vmem:[#allocation3 + $0x1a0] sm:$0xff] %vm383, 0.0
      %438 = vst.msk [vmem:[#allocation3 + $0x1a8] sm:$0x3] %vm386, 0.0
      %v439 = vld [vmem:[%s320] sm:$0xff]
      %v440 = vld [vmem:[%s320 + $0x8] sm:$0xff]
      %v441 = vld [vmem:[%s320 + $0x10] sm:$0xff]
      %v442 = vld [vmem:[%s320 + $0x18] sm:$0xff]
      %v443 = vld [vmem:[%s320 + $0x20] sm:$0xff]
      %v444 = vld [vmem:[%s320 + $0x28] sm:$0xff]
      %v445 = vld [vmem:[%s320 + $0x30] sm:$0xff]
      %v446 = vld [vmem:[%s320 + $0x38] sm:$0xff]
      %v447 = vld [vmem:[%s320 + $0x40] sm:$0xff]
      %v448 = vld [vmem:[%s320 + $0x48] sm:$0xff]
      %v449 = vld [vmem:[%s320 + $0x50] sm:$0xff]
      %v450 = vld [vmem:[%s320 + $0x58] sm:$0xff]
      %v451 = vld [vmem:[%s320 + $0x60] sm:$0xff]
      %v452 = vld [vmem:[%s320 + $0x68] sm:$0xff]
      %v453 = vld [vmem:[%s320 + $0x70] sm:$0xff]
      %v454 = vld [vmem:[%s320 + $0x78] sm:$0xff]
      %v455 = vld [vmem:[%s320 + $0x80] sm:$0xff]
      %v456 = vld [vmem:[%s320 + $0x88] sm:$0xff]
      %v457 = vld [vmem:[%s320 + $0x90] sm:$0xff]
      %v458 = vld [vmem:[%s320 + $0x98] sm:$0xff]
      %v459 = vld [vmem:[%s320 + $0xa0] sm:$0xff]
      %v460 = vld [vmem:[%s320 + $0xa8] sm:$0xff]
      %v461 = vld [vmem:[%s320 + $0xb0] sm:$0xff]
      %v462 = vld [vmem:[%s320 + $0xb8] sm:$0xff]
      %v463 = vld [vmem:[%s320 + $0xc0] sm:$0xff]
      %v464 = vld [vmem:[%s320 + $0xc8] sm:$0xff]
      %v465 = vld [vmem:[%s320 + $0xd0] sm:$0xff]
      %v466 = vld [vmem:[%s320 + $0xd8] sm:$0xff]
      %v467 = vld [vmem:[%s320 + $0xe0] sm:$0xff]
      %v468 = vld [vmem:[%s320 + $0xe8] sm:$0xff]
      %v469 = vld [vmem:[%s320 + $0xf0] sm:$0xff]
      %v470 = vld [vmem:[%s320 + $0xf8] sm:$0xff]
      %s471 = scalar_lea.vmem [#allocation2], 24
      %472 = vst.msk [vmem:[%s471 + $0x1] sm:$0xff] %vm327, %v439
      %473 = vst.msk [vmem:[%s471 + $0x9] sm:$0xff] %vm327, %v440
      %474 = vst.msk [vmem:[%s471 + $0x19] sm:$0xff] %vm327, %v441
      %475 = vst.msk [vmem:[%s471 + $0x21] sm:$0xff] %vm327, %v442
      %476 = vst.msk [vmem:[%s471 + $0x31] sm:$0xff] %vm327, %v443
      %477 = vst.msk [vmem:[%s471 + $0x39] sm:$0xff] %vm327, %v444
      %478 = vst.msk [vmem:[%s471 + $0x49] sm:$0xff] %vm327, %v445
      %479 = vst.msk [vmem:[%s471 + $0x51] sm:$0xff] %vm327, %v446
      %480 = vst.msk [vmem:[%s471 + $0x61] sm:$0xff] %vm327, %v447
      %481 = vst.msk [vmem:[%s471 + $0x69] sm:$0xff] %vm327, %v448
      %482 = vst.msk [vmem:[%s471 + $0x79] sm:$0xff] %vm327, %v449
      %483 = vst.msk [vmem:[%s471 + $0x81] sm:$0xff] %vm327, %v450
      %484 = vst.msk [vmem:[%s471 + $0x91] sm:$0xff] %vm327, %v451
      %485 = vst.msk [vmem:[%s471 + $0x99] sm:$0xff] %vm327, %v452
      %486 = vst.msk [vmem:[%s471 + $0xa9] sm:$0xff] %vm327, %v453
      %487 = vst.msk [vmem:[%s471 + $0xb1] sm:$0xff] %vm327, %v454
      %488 = vst.msk [vmem:[%s471 + $0xc1] sm:$0xff] %vm327, %v455
      %489 = vst.msk [vmem:[%s471 + $0xc9] sm:$0xff] %vm327, %v456
      %490 = vst.msk [vmem:[%s471 + $0xd9] sm:$0xff] %vm327, %v457
      %491 = vst.msk [vmem:[%s471 + $0xe1] sm:$0xff] %vm327, %v458
      %492 = vst.msk [vmem:[%s471 + $0xf1] sm:$0xff] %vm327, %v459
      %493 = vst.msk [vmem:[%s471 + $0xf9] sm:$0xff] %vm327, %v460
      %494 = vst.msk [vmem:[%s471 + $0x109] sm:$0xff] %vm327, %v461
      %495 = vst.msk [vmem:[%s471 + $0x111] sm:$0xff] %vm327, %v462
      %496 = vst.msk [vmem:[%s471 + $0x121] sm:$0xff] %vm327, %v463
      %497 = vst.msk [vmem:[%s471 + $0x129] sm:$0xff] %vm327, %v464
      %498 = vst.msk [vmem:[%s471 + $0x139] sm:$0xff] %vm327, %v465
      %499 = vst.msk [vmem:[%s471 + $0x141] sm:$0xff] %vm327, %v466
      %500 = vst.msk [vmem:[%s471 + $0x151] sm:$0xff] %vm327, %v467
      %501 = vst.msk [vmem:[%s471 + $0x159] sm:$0xff] %vm327, %v468
      %502 = vst.msk [vmem:[%s471 + $0x169] sm:$0xff] %vm327, %v469
      %503 = vst.msk [vmem:[%s471 + $0x171] sm:$0xff] %vm327, %v470
      %v504 = vld [vmem:[#allocation2] sm:$0xff]
      %v505 = vld [vmem:[#allocation2 + $0x8] sm:$0xff]
      %v506 = vld [vmem:[#allocation2 + $0x18] sm:$0xff]
      %v507 = vld [vmem:[#allocation2 + $0x20] sm:$0xff]
      %v508 = vld [vmem:[#allocation2 + $0x30] sm:$0xff]
      %v509 = vld [vmem:[#allocation2 + $0x38] sm:$0xff]
      %v510 = vld [vmem:[#allocation2 + $0x48] sm:$0xff]
      %v511 = vld [vmem:[#allocation2 + $0x50] sm:$0xff]
      %v512 = vld [vmem:[#allocation2 + $0x60] sm:$0xff]
      %v513 = vld [vmem:[#allocation2 + $0x68] sm:$0xff]
      %v514 = vld [vmem:[#allocation2 + $0x78] sm:$0xff]
      %v515 = vld [vmem:[#allocation2 + $0x80] sm:$0xff]
      %v516 = vld [vmem:[#allocation2 + $0x90] sm:$0xff]
      %v517 = vld [vmem:[#allocation2 + $0x98] sm:$0xff]
      %v518 = vld [vmem:[#allocation2 + $0xa8] sm:$0xff]
      %v519 = vld [vmem:[#allocation2 + $0xb0] sm:$0xff]
      %v520 = vld [vmem:[#allocation2 + $0xc0] sm:$0xff]
      %v521 = vld [vmem:[#allocation2 + $0xc8] sm:$0xff]
      %v522 = vld [vmem:[#allocation2 + $0xd8] sm:$0xff]
      %v523 = vld [vmem:[#allocation2 + $0xe0] sm:$0xff]
      %v524 = vld [vmem:[#allocation2 + $0xf0] sm:$0xff]
      %v525 = vld [vmem:[#allocation2 + $0xf8] sm:$0xff]
      %v526 = vld [vmem:[#allocation2 + $0x108] sm:$0xff]
      %v527 = vld [vmem:[#allocation2 + $0x110] sm:$0xff]
      %v528 = vld [vmem:[#allocation2 + $0x120] sm:$0xff]
      %v529 = vld [vmem:[#allocation2 + $0x128] sm:$0xff]
      %v530 = vld [vmem:[#allocation2 + $0x138] sm:$0xff]
      %v531 = vld [vmem:[#allocation2 + $0x140] sm:$0xff]
      %v532 = vld [vmem:[#allocation2 + $0x150] sm:$0xff]
      %v533 = vld [vmem:[#allocation2 + $0x158] sm:$0xff]
      %v534 = vld [vmem:[#allocation2 + $0x168] sm:$0xff]
      %v535 = vld [vmem:[#allocation2 + $0x170] sm:$0xff]
      %v536 = vpack.c.bf16 %v505, %v504
      %v537 = vpack.c.bf16 %v507, %v506
      %v538 = vpack.c.bf16 %v509, %v508
      %v539 = vpack.c.bf16 %v511, %v510
      %v540 = vpack.c.bf16 %v513, %v512
      %v541 = vpack.c.bf16 %v515, %v514
      %v542 = vpack.c.bf16 %v517, %v516
      %v543 = vpack.c.bf16 %v519, %v518
      %v544 = vpack.c.bf16 %v521, %v520
      %v545 = vpack.c.bf16 %v523, %v522
      %v546 = vpack.c.bf16 %v525, %v524
      %v547 = vpack.c.bf16 %v527, %v526
      %v548 = vpack.c.bf16 %v529, %v528
      %v549 = vpack.c.bf16 %v531, %v530
      %v550 = vpack.c.bf16 %v533, %v532
      %v551 = vpack.c.bf16 %v535, %v534
      %v552 = vld [vmem:[%s2] sm:$0x3]
      %v553 = vld [vmem:[#allocation2 + $0x1] sm:$0xff]
      %v554 = vld [vmem:[#allocation2 + $0x9] sm:$0xff]
      %v555 = vld [vmem:[#allocation2 + $0x19] sm:$0xff]
      %v556 = vld [vmem:[#allocation2 + $0x21] sm:$0xff]
      %v557 = vld [vmem:[#allocation2 + $0x31] sm:$0xff]
      %v558 = vld [vmem:[#allocation2 + $0x39] sm:$0xff]
      %v559 = vld [vmem:[#allocation2 + $0x49] sm:$0xff]
      %v560 = vld [vmem:[#allocation2 + $0x51] sm:$0xff]
      %v561 = vld [vmem:[#allocation2 + $0x61] sm:$0xff]
      %v562 = vld [vmem:[#allocation2 + $0x69] sm:$0xff]
      %v563 = vld [vmem:[#allocation2 + $0x79] sm:$0xff]
      %v564 = vld [vmem:[#allocation2 + $0x81] sm:$0xff]
      %v565 = vld [vmem:[#allocation2 + $0x91] sm:$0xff]
      %v566 = vld [vmem:[#allocation2 + $0x99] sm:$0xff]
      %v567 = vld [vmem:[#allocation2 + $0xa9] sm:$0xff]
      %v568 = vld [vmem:[#allocation2 + $0xb1] sm:$0xff]
      %v569 = vld [vmem:[#allocation2 + $0xc1] sm:$0xff]
      %v570 = vld [vmem:[#allocation2 + $0xc9] sm:$0xff]
      %v571 = vld [vmem:[#allocation2 + $0xd9] sm:$0xff]
      %v572 = vld [vmem:[#allocation2 + $0xe1] sm:$0xff]
      %v573 = vld [vmem:[#allocation2 + $0xf1] sm:$0xff]
      %v574 = vld [vmem:[#allocation2 + $0xf9] sm:$0xff]
      %v575 = vld [vmem:[#allocation2 + $0x109] sm:$0xff]
      %v576 = vld [vmem:[#allocation2 + $0x111] sm:$0xff]
      %v577 = vld [vmem:[#allocation2 + $0x121] sm:$0xff]
      %v578 = vld [vmem:[#allocation2 + $0x129] sm:$0xff]
      %v579 = vld [vmem:[#allocation2 + $0x139] sm:$0xff]
      %v580 = vld [vmem:[#allocation2 + $0x141] sm:$0xff]
      %v581 = vld [vmem:[#allocation2 + $0x151] sm:$0xff]
      %v582 = vld [vmem:[#allocation2 + $0x159] sm:$0xff]
      %v583 = vld [vmem:[#allocation2 + $0x169] sm:$0xff]
      %v584 = vld [vmem:[#allocation2 + $0x171] sm:$0xff]
      %v585 = vpack.c.bf16 %v554, %v553
      %v586 = vpack.c.bf16 %v556, %v555
      %v587 = vpack.c.bf16 %v558, %v557
      %v588 = vpack.c.bf16 %v560, %v559
      %v589 = vpack.c.bf16 %v562, %v561
      %v590 = vpack.c.bf16 %v564, %v563
      %v591 = vpack.c.bf16 %v566, %v565
      %v592 = vpack.c.bf16 %v568, %v567
      %v593 = vpack.c.bf16 %v570, %v569
      %v594 = vpack.c.bf16 %v572, %v571
      %v595 = vpack.c.bf16 %v574, %v573
      %v596 = vpack.c.bf16 %v576, %v575
      %v597 = vpack.c.bf16 %v578, %v577
      %v598 = vpack.c.bf16 %v580, %v579
      %v599 = vpack.c.bf16 %v582, %v581
      %v600 = vpack.c.bf16 %v584, %v583
      %s601 = scalar_lea.vmem %s2, 2
      %v602 = vld [vmem:[%s601] sm:$0x3]
      %v604 = vsel %vm327, %v585, 0
      %v607 = vsel %vm327, %v586, 0
      %v610 = vsel %vm327, %v587, 0
      %v613 = vsel %vm327, %v588, 0
      %v616 = vsel %vm327, %v589, 0
      %v619 = vsel %vm327, %v590, 0
      %v622 = vsel %vm327, %v591, 0
      %v625 = vsel %vm327, %v592, 0
      %v628 = vsel %vm327, %v593, 0
      %v631 = vsel %vm327, %v594, 0
      %v634 = vsel %vm327, %v595, 0
      %v637 = vsel %vm327, %v596, 0
      %v640 = vsel %vm327, %v597, 0
      %v643 = vsel %vm327, %v598, 0
      %v646 = vsel %vm327, %v599, 0
      %v649 = vsel %vm327, %v600, 0
      %vm651 = vcmask 1040384
      %vm652 = vcmask 1041408
      %v653 = vsel %vm651, 4294967295, 65535
      %v654 = vsel %vm652, %v653, 0
      %v656 = vand.u32 %v602, %v654
      %658 = vmatprep.subr.bf16.mxu0 0
      %659 = vmatpush1.bf16.msra.mxu0 0
      %660 = vmatprep.subr.bf16.mxu0 0
      %661 = vmatpush1.bf16.msra.mxu0 0
      %662 = vmatprep.subr.bf16.mxu0 0
      %663 = vmatpush1.bf16.msra.mxu0 0
      %664 = vmatprep.subr.bf16.mxu0 0
      %665 = vmatpush1.bf16.msra.mxu0 0
      %666 = vmatprep.subr.bf16.mxu0 0
      %667 = vmatpush1.bf16.msra.mxu0 0
      %668 = vmatprep.subr.bf16.mxu0 0
      %669 = vmatpush1.bf16.msra.mxu0 0
      %670 = vmatprep.subr.bf16.mxu0 0
      %671 = vmatpush1.bf16.msra.mxu0 0
      %672 = vmatprep.subr.bf16.mxu0 0
      %673 = vmatpush1.bf16.msra.mxu0 %v656
      %674 = vmatprep.subr.bf16.mxu0 0
      %675 = vmatpush2.bf16.msra.mxu0 0
      %676 = vmatprep.subr.bf16.mxu0 0
      %677 = vmatpush2.bf16.msra.mxu0 0
      %678 = vmatprep.subr.bf16.mxu0 0
      %679 = vmatpush2.bf16.msra.mxu0 0
      %680 = vmatprep.subr.bf16.mxu0 0
      %681 = vmatpush2.bf16.msra.mxu0 0
      %682 = vmatprep.subr.bf16.mxu0 0
      %683 = vmatpush2.bf16.msra.mxu0 0
      %684 = vmatprep.subr.bf16.mxu0 0
      %685 = vmatpush2.bf16.msra.mxu0 0
      %686 = vmatprep.subr.bf16.mxu0 0
      %687 = vmatpush2.bf16.msra.mxu0 0
      %688 = vmatprep.subr.bf16.mxu0 0
      %689 = vmatpush2.bf16.msra.mxu0 0
      %690 = vmatprep.mubr.bf16.mxu0 0
      %691 = vmatmul.mubr.bf16.gmra.mxu0 %v604
      %v692 = vpop.f32.mrf.mxu0
      %v693 = vadd.f32 0.0, %v692
      %v694 = vpop.f32.mrf.mxu0
      %v695 = vpop.f32.mrf.mxu0
      %v696 = vadd.f32 0.0, %v695
      %v697 = vpop.f32.mrf.mxu0
      %698 = vmatprep.mubr.bf16.mxu0 0
      %699 = vmatmul.mubr.bf16.gmra.mxu0 %v607
      %v700 = vpop.f32.mrf.mxu0
      %v701 = vadd.f32 0.0, %v700
      %v702 = vpop.f32.mrf.mxu0
      %v703 = vpop.f32.mrf.mxu0
      %v704 = vadd.f32 0.0, %v703
      %v705 = vpop.f32.mrf.mxu0
      %706 = vmatprep.mubr.bf16.mxu0 0
      %707 = vmatmul.mubr.bf16.gmra.mxu0 %v610
      %v708 = vpop.f32.mrf.mxu0
      %v709 = vadd.f32 0.0, %v708
      %v710 = vpop.f32.mrf.mxu0
      %v711 = vpop.f32.mrf.mxu0
      %v712 = vadd.f32 0.0, %v711
      %v713 = vpop.f32.mrf.mxu0
      %714 = vmatprep.mubr.bf16.mxu0 0
      %715 = vmatmul.mubr.bf16.gmra.mxu0 %v613
      %v716 = vpop.f32.mrf.mxu0
      %v717 = vadd.f32 0.0, %v716
      %v718 = vpop.f32.mrf.mxu0
      %v719 = vpop.f32.mrf.mxu0
      %v720 = vadd.f32 0.0, %v719
      %v721 = vpop.f32.mrf.mxu0
      %722 = vmatprep.mubr.bf16.mxu0 0
      %723 = vmatmul.mubr.bf16.gmra.mxu0 %v616
      %v724 = vpop.f32.mrf.mxu0
      %v725 = vadd.f32 0.0, %v724
      %v726 = vpop.f32.mrf.mxu0
      %v727 = vpop.f32.mrf.mxu0
      %v728 = vadd.f32 0.0, %v727
      %v729 = vpop.f32.mrf.mxu0
      %730 = vmatprep.mubr.bf16.mxu0 0
      %731 = vmatmul.mubr.bf16.gmra.mxu0 %v619
      %v732 = vpop.f32.mrf.mxu0
      %v733 = vadd.f32 0.0, %v732
      %v734 = vpop.f32.mrf.mxu0
      %v735 = vpop.f32.mrf.mxu0
      %v736 = vadd.f32 0.0, %v735
      %v737 = vpop.f32.mrf.mxu0
      %738 = vmatprep.mubr.bf16.mxu0 0
      %739 = vmatmul.mubr.bf16.gmra.mxu0 %v622
      %v740 = vpop.f32.mrf.mxu0
      %v741 = vadd.f32 0.0, %v740
      %v742 = vpop.f32.mrf.mxu0
      %v743 = vpop.f32.mrf.mxu0
      %v744 = vadd.f32 0.0, %v743
      %v745 = vpop.f32.mrf.mxu0
      %746 = vmatprep.mubr.bf16.mxu0 0
      %747 = vmatmul.mubr.bf16.gmra.mxu0 %v625
      %v748 = vpop.f32.mrf.mxu0
      %v749 = vadd.f32 0.0, %v748
      %v750 = vpop.f32.mrf.mxu0
      %v751 = vpop.f32.mrf.mxu0
      %v752 = vadd.f32 0.0, %v751
      %v753 = vpop.f32.mrf.mxu0
      %754 = vmatprep.mubr.bf16.mxu0 0
      %755 = vmatmul.mubr.bf16.gmra.mxu0 %v628
      %v756 = vpop.f32.mrf.mxu0
      %v757 = vadd.f32 0.0, %v756
      %v758 = vpop.f32.mrf.mxu0
      %v759 = vpop.f32.mrf.mxu0
      %v760 = vadd.f32 0.0, %v759
      %v761 = vpop.f32.mrf.mxu0
      %762 = vmatprep.mubr.bf16.mxu0 0
      %763 = vmatmul.mubr.bf16.gmra.mxu0 %v631
      %v764 = vpop.f32.mrf.mxu0
      %v765 = vadd.f32 0.0, %v764
      %v766 = vpop.f32.mrf.mxu0
      %v767 = vpop.f32.mrf.mxu0
      %v768 = vadd.f32 0.0, %v767
      %v769 = vpop.f32.mrf.mxu0
      %770 = vmatprep.mubr.bf16.mxu0 0
      %771 = vmatmul.mubr.bf16.gmra.mxu0 %v634
      %v772 = vpop.f32.mrf.mxu0
      %v773 = vadd.f32 0.0, %v772
      %v774 = vpop.f32.mrf.mxu0
      %v775 = vpop.f32.mrf.mxu0
      %v776 = vadd.f32 0.0, %v775
      %v777 = vpop.f32.mrf.mxu0
      %778 = vmatprep.mubr.bf16.mxu0 0
      %779 = vmatmul.mubr.bf16.gmra.mxu0 %v637
      %v780 = vpop.f32.mrf.mxu0
      %v781 = vadd.f32 0.0, %v780
      %v782 = vpop.f32.mrf.mxu0
      %v783 = vpop.f32.mrf.mxu0
      %v784 = vadd.f32 0.0, %v783
      %v785 = vpop.f32.mrf.mxu0
      %786 = vmatprep.mubr.bf16.mxu0 0
      %787 = vmatmul.mubr.bf16.gmra.mxu0 %v640
      %v788 = vpop.f32.mrf.mxu0
      %v789 = vadd.f32 0.0, %v788
      %v790 = vpop.f32.mrf.mxu0
      %v791 = vpop.f32.mrf.mxu0
      %v792 = vadd.f32 0.0, %v791
      %v793 = vpop.f32.mrf.mxu0
      %794 = vmatprep.mubr.bf16.mxu0 0
      %795 = vmatmul.mubr.bf16.gmra.mxu0 %v643
      %v796 = vpop.f32.mrf.mxu0
      %v797 = vadd.f32 0.0, %v796
      %v798 = vpop.f32.mrf.mxu0
      %v799 = vpop.f32.mrf.mxu0
      %v800 = vadd.f32 0.0, %v799
      %v801 = vpop.f32.mrf.mxu0
      %802 = vmatprep.mubr.bf16.mxu0 0
      %803 = vmatmul.mubr.bf16.gmra.mxu0 %v646
      %v804 = vpop.f32.mrf.mxu0
      %v805 = vadd.f32 0.0, %v804
      %v806 = vpop.f32.mrf.mxu0
      %v807 = vpop.f32.mrf.mxu0
      %v808 = vadd.f32 0.0, %v807
      %v809 = vpop.f32.mrf.mxu0
      %810 = vmatprep.mubr.bf16.mxu0 0
      %811 = vmatmul.mubr.bf16.gmra.mxu0 %v649
      %v812 = vpop.f32.mrf.mxu0
      %v813 = vadd.f32 0.0, %v812
      %v814 = vpop.f32.mrf.mxu0
      %v815 = vpop.f32.mrf.mxu0
      %v816 = vadd.f32 0.0, %v815
      %v817 = vpop.f32.mrf.mxu0
      %818 = vdwg.mxu0
      %v820 = vsel %vm327, %v536, 0
      %v823 = vsel %vm327, %v537, 0
      %v826 = vsel %vm327, %v538, 0
      %v829 = vsel %vm327, %v539, 0
      %v832 = vsel %vm327, %v540, 0
      %v835 = vsel %vm327, %v541, 0
      %v838 = vsel %vm327, %v542, 0
      %v841 = vsel %vm327, %v543, 0
      %v844 = vsel %vm327, %v544, 0
      %v847 = vsel %vm327, %v545, 0
      %v850 = vsel %vm327, %v546, 0
      %v853 = vsel %vm327, %v547, 0
      %v856 = vsel %vm327, %v548, 0
      %v859 = vsel %vm327, %v549, 0
      %v862 = vsel %vm327, %v550, 0
      %v865 = vsel %vm327, %v551, 0
      %v868 = vand.u32 %v552, %v654
      %870 = vmatprep.subr.bf16.mxu0 0
      %871 = vmatpush1.bf16.msra.mxu0 0
      %872 = vmatprep.subr.bf16.mxu0 0
      %873 = vmatpush1.bf16.msra.mxu0 0
      %874 = vmatprep.subr.bf16.mxu0 0
      %875 = vmatpush1.bf16.msra.mxu0 0
      %876 = vmatprep.subr.bf16.mxu0 0
      %877 = vmatpush1.bf16.msra.mxu0 0
      %878 = vmatprep.subr.bf16.mxu0 0
      %879 = vmatpush1.bf16.msra.mxu0 0
      %880 = vmatprep.subr.bf16.mxu0 0
      %881 = vmatpush1.bf16.msra.mxu0 0
      %882 = vmatprep.subr.bf16.mxu0 0
      %883 = vmatpush1.bf16.msra.mxu0 0
      %884 = vmatprep.subr.bf16.mxu0 0
      %885 = vmatpush1.bf16.msra.mxu0 %v868
      %886 = vmatprep.subr.bf16.mxu0 0
      %887 = vmatpush2.bf16.msra.mxu0 0
      %888 = vmatprep.subr.bf16.mxu0 0
      %889 = vmatpush2.bf16.msra.mxu0 0
      %890 = vmatprep.subr.bf16.mxu0 0
      %891 = vmatpush2.bf16.msra.mxu0 0
      %892 = vmatprep.subr.bf16.mxu0 0
      %893 = vmatpush2.bf16.msra.mxu0 0
      %894 = vmatprep.subr.bf16.mxu0 0
      %895 = vmatpush2.bf16.msra.mxu0 0
      %896 = vmatprep.subr.bf16.mxu0 0
      %897 = vmatpush2.bf16.msra.mxu0 0
      %898 = vmatprep.subr.bf16.mxu0 0
      %899 = vmatpush2.bf16.msra.mxu0 0
      %900 = vmatprep.subr.bf16.mxu0 0
      %901 = vmatpush2.bf16.msra.mxu0 0
      %902 = vmatprep.mubr.bf16.mxu0 0
      %903 = vmatmul.mubr.bf16.gmra.mxu0 %v820
      %v904 = vpop.f32.mrf.mxu0
      %v905 = vadd.f32 %v693, %v904
      %v906 = vpop.f32.mrf.mxu0
      %v907 = vpop.f32.mrf.mxu0
      %v908 = vadd.f32 %v696, %v907
      %v909 = vpop.f32.mrf.mxu0
      %910 = vmatprep.mubr.bf16.mxu0 0
      %911 = vmatmul.mubr.bf16.gmra.mxu0 %v823
      %v912 = vpop.f32.mrf.mxu0
      %v913 = vadd.f32 %v701, %v912
      %v914 = vpop.f32.mrf.mxu0
      %v915 = vpop.f32.mrf.mxu0
      %v916 = vadd.f32 %v704, %v915
      %v917 = vpop.f32.mrf.mxu0
      %918 = vmatprep.mubr.bf16.mxu0 0
      %919 = vmatmul.mubr.bf16.gmra.mxu0 %v826
      %v920 = vpop.f32.mrf.mxu0
      %v921 = vadd.f32 %v709, %v920
      %v922 = vpop.f32.mrf.mxu0
      %v923 = vpop.f32.mrf.mxu0
      %v924 = vadd.f32 %v712, %v923
      %v925 = vpop.f32.mrf.mxu0
      %926 = vmatprep.mubr.bf16.mxu0 0
      %927 = vmatmul.mubr.bf16.gmra.mxu0 %v829
      %v928 = vpop.f32.mrf.mxu0
      %v929 = vadd.f32 %v717, %v928
      %v930 = vpop.f32.mrf.mxu0
      %v931 = vpop.f32.mrf.mxu0
      %v932 = vadd.f32 %v720, %v931
      %v933 = vpop.f32.mrf.mxu0
      %934 = vmatprep.mubr.bf16.mxu0 0
      %935 = vmatmul.mubr.bf16.gmra.mxu0 %v832
      %v936 = vpop.f32.mrf.mxu0
      %v937 = vadd.f32 %v725, %v936
      %v938 = vpop.f32.mrf.mxu0
      %v939 = vpop.f32.mrf.mxu0
      %v940 = vadd.f32 %v728, %v939
      %v941 = vpop.f32.mrf.mxu0
      %942 = vmatprep.mubr.bf16.mxu0 0
      %943 = vmatmul.mubr.bf16.gmra.mxu0 %v835
      %v944 = vpop.f32.mrf.mxu0
      %v945 = vadd.f32 %v733, %v944
      %v946 = vpop.f32.mrf.mxu0
      %v947 = vpop.f32.mrf.mxu0
      %v948 = vadd.f32 %v736, %v947
      %v949 = vpop.f32.mrf.mxu0
      %950 = vmatprep.mubr.bf16.mxu0 0
      %951 = vmatmul.mubr.bf16.gmra.mxu0 %v838
      %v952 = vpop.f32.mrf.mxu0
      %v953 = vadd.f32 %v741, %v952
      %v954 = vpop.f32.mrf.mxu0
      %v955 = vpop.f32.mrf.mxu0
      %v956 = vadd.f32 %v744, %v955
      %v957 = vpop.f32.mrf.mxu0
      %958 = vmatprep.mubr.bf16.mxu0 0
      %959 = vmatmul.mubr.bf16.gmra.mxu0 %v841
      %v960 = vpop.f32.mrf.mxu0
      %v961 = vadd.f32 %v749, %v960
      %v962 = vpop.f32.mrf.mxu0
      %v963 = vpop.f32.mrf.mxu0
      %v964 = vadd.f32 %v752, %v963
      %v965 = vpop.f32.mrf.mxu0
      %966 = vmatprep.mubr.bf16.mxu0 0
      %967 = vmatmul.mubr.bf16.gmra.mxu0 %v844
      %v968 = vpop.f32.mrf.mxu0
      %v969 = vadd.f32 %v757, %v968
      %v970 = vpop.f32.mrf.mxu0
      %v971 = vpop.f32.mrf.mxu0
      %v972 = vadd.f32 %v760, %v971
      %v973 = vpop.f32.mrf.mxu0
      %974 = vmatprep.mubr.bf16.mxu0 0
      %975 = vmatmul.mubr.bf16.gmra.mxu0 %v847
      %v976 = vpop.f32.mrf.mxu0
      %v977 = vadd.f32 %v765, %v976
      %v978 = vpop.f32.mrf.mxu0
      %v979 = vpop.f32.mrf.mxu0
      %v980 = vadd.f32 %v768, %v979
      %v981 = vpop.f32.mrf.mxu0
      %982 = vmatprep.mubr.bf16.mxu0 0
      %983 = vmatmul.mubr.bf16.gmra.mxu0 %v850
      %v984 = vpop.f32.mrf.mxu0
      %v985 = vadd.f32 %v773, %v984
      %v986 = vpop.f32.mrf.mxu0
      %v987 = vpop.f32.mrf.mxu0
      %v988 = vadd.f32 %v776, %v987
      %v989 = vpop.f32.mrf.mxu0
      %990 = vmatprep.mubr.bf16.mxu0 0
      %991 = vmatmul.mubr.bf16.gmra.mxu0 %v853
      %v992 = vpop.f32.mrf.mxu0
      %v993 = vadd.f32 %v781, %v992
      %v994 = vpop.f32.mrf.mxu0
      %v995 = vpop.f32.mrf.mxu0
      %v996 = vadd.f32 %v784, %v995
      %v997 = vpop.f32.mrf.mxu0
      %998 = vmatprep.mubr.bf16.mxu0 0
      %999 = vmatmul.mubr.bf16.gmra.mxu0 %v856
      %v1000 = vpop.f32.mrf.mxu0
      %v1001 = vadd.f32 %v789, %v1000
      %v1002 = vpop.f32.mrf.mxu0
      %v1003 = vpop.f32.mrf.mxu0
      %v1004 = vadd.f32 %v792, %v1003
      %v1005 = vpop.f32.mrf.mxu0
      %1006 = vmatprep.mubr.bf16.mxu0 0
      %1007 = vmatmul.mubr.bf16.gmra.mxu0 %v859
      %v1008 = vpop.f32.mrf.mxu0
      %v1009 = vadd.f32 %v797, %v1008
      %v1010 = vpop.f32.mrf.mxu0
      %v1011 = vpop.f32.mrf.mxu0
      %v1012 = vadd.f32 %v800, %v1011
      %v1013 = vpop.f32.mrf.mxu0
      %1014 = vmatprep.mubr.bf16.mxu0 0
      %1015 = vmatmul.mubr.bf16.gmra.mxu0 %v862
      %v1016 = vpop.f32.mrf.mxu0
      %v1017 = vadd.f32 %v805, %v1016
      %v1018 = vpop.f32.mrf.mxu0
      %v1019 = vpop.f32.mrf.mxu0
      %v1020 = vadd.f32 %v808, %v1019
      %v1021 = vpop.f32.mrf.mxu0
      %1022 = vmatprep.mubr.bf16.mxu0 0
      %1023 = vmatmul.mubr.bf16.gmra.mxu0 %v865
      %v1024 = vpop.f32.mrf.mxu0
      %v1025 = vadd.f32 %v813, %v1024
      %v1026 = vpop.f32.mrf.mxu0
      %v1027 = vpop.f32.mrf.mxu0
      %v1028 = vadd.f32 %v816, %v1027
      %v1029 = vpop.f32.mrf.mxu0
      %1030 = vdwg.mxu0
      %v1031 = vld [vmem:[#allocation2 + $0x2] sm:$0xff]
      %v1032 = vld [vmem:[#allocation2 + $0xa] sm:$0xff]
      %v1033 = vld [vmem:[#allocation2 + $0x1a] sm:$0xff]
      %v1034 = vld [vmem:[#allocation2 + $0x22] sm:$0xff]
      %v1035 = vld [vmem:[#allocation2 + $0x32] sm:$0xff]
      %v1036 = vld [vmem:[#allocation2 + $0x3a] sm:$0xff]
      %v1037 = vld [vmem:[#allocation2 + $0x4a] sm:$0xff]
      %v1038 = vld [vmem:[#allocation2 + $0x52] sm:$0xff]
      %v1039 = vld [vmem:[#allocation2 + $0x62] sm:$0xff]
      %v1040 = vld [vmem:[#allocation2 + $0x6a] sm:$0xff]
      %v1041 = vld [vmem:[#allocation2 + $0x7a] sm:$0xff]
      %v1042 = vld [vmem:[#allocation2 + $0x82] sm:$0xff]
      %v1043 = vld [vmem:[#allocation2 + $0x92] sm:$0xff]
      %v1044 = vld [vmem:[#allocation2 + $0x9a] sm:$0xff]
      %v1045 = vld [vmem:[#allocation2 + $0xaa] sm:$0xff]
      %v1046 = vld [vmem:[#allocation2 + $0xb2] sm:$0xff]
      %v1047 = vld [vmem:[#allocation2 + $0xc2] sm:$0xff]
      %v1048 = vld [vmem:[#allocation2 + $0xca] sm:$0xff]
      %v1049 = vld [vmem:[#allocation2 + $0xda] sm:$0xff]
      %v1050 = vld [vmem:[#allocation2 + $0xe2] sm:$0xff]
      %v1051 = vld [vmem:[#allocation2 + $0xf2] sm:$0xff]
      %v1052 = vld [vmem:[#allocation2 + $0xfa] sm:$0xff]
      %v1053 = vld [vmem:[#allocation2 + $0x10a] sm:$0xff]
      %v1054 = vld [vmem:[#allocation2 + $0x112] sm:$0xff]
      %v1055 = vld [vmem:[#allocation2 + $0x122] sm:$0xff]
      %v1056 = vld [vmem:[#allocation2 + $0x12a] sm:$0xff]
      %v1057 = vld [vmem:[#allocation2 + $0x13a] sm:$0xff]
      %v1058 = vld [vmem:[#allocation2 + $0x142] sm:$0xff]
      %v1059 = vld [vmem:[#allocation2 + $0x152] sm:$0xff]
      %v1060 = vld [vmem:[#allocation2 + $0x15a] sm:$0xff]
      %v1061 = vld [vmem:[#allocation2 + $0x16a] sm:$0xff]
      %v1062 = vld [vmem:[#allocation2 + $0x172] sm:$0xff]
      %v1063 = vpack.c.bf16 %v1032, %v1031
      %v1064 = vpack.c.bf16 %v1034, %v1033
      %v1065 = vpack.c.bf16 %v1036, %v1035
      %v1066 = vpack.c.bf16 %v1038, %v1037
      %v1067 = vpack.c.bf16 %v1040, %v1039
      %v1068 = vpack.c.bf16 %v1042, %v1041
      %v1069 = vpack.c.bf16 %v1044, %v1043
      %v1070 = vpack.c.bf16 %v1046, %v1045
      %v1071 = vpack.c.bf16 %v1048, %v1047
      %v1072 = vpack.c.bf16 %v1050, %v1049
      %v1073 = vpack.c.bf16 %v1052, %v1051
      %v1074 = vpack.c.bf16 %v1054, %v1053
      %v1075 = vpack.c.bf16 %v1056, %v1055
      %v1076 = vpack.c.bf16 %v1058, %v1057
      %v1077 = vpack.c.bf16 %v1060, %v1059
      %v1078 = vpack.c.bf16 %v1062, %v1061
      %s1079 = scalar_lea.vmem %s2, 4
      %v1080 = vld [vmem:[%s1079] sm:$0x3]
      %v1082 = vsel %vm327, %v1063, 0
      %v1085 = vsel %vm327, %v1064, 0
      %v1088 = vsel %vm327, %v1065, 0
      %v1091 = vsel %vm327, %v1066, 0
      %v1094 = vsel %vm327, %v1067, 0
      %v1097 = vsel %vm327, %v1068, 0
      %v1100 = vsel %vm327, %v1069, 0
      %v1103 = vsel %vm327, %v1070, 0
      %v1106 = vsel %vm327, %v1071, 0
      %v1109 = vsel %vm327, %v1072, 0
      %v1112 = vsel %vm327, %v1073, 0
      %v1115 = vsel %vm327, %v1074, 0
      %v1118 = vsel %vm327, %v1075, 0
      %v1121 = vsel %vm327, %v1076, 0
      %v1124 = vsel %vm327, %v1077, 0
      %v1127 = vsel %vm327, %v1078, 0
      %v1130 = vand.u32 %v1080, %v654
      %1132 = vmatprep.subr.bf16.mxu0 0
      %1133 = vmatpush1.bf16.msra.mxu0 0
      %1134 = vmatprep.subr.bf16.mxu0 0
      %1135 = vmatpush1.bf16.msra.mxu0 0
      %1136 = vmatprep.subr.bf16.mxu0 0
      %1137 = vmatpush1.bf16.msra.mxu0 0
      %1138 = vmatprep.subr.bf16.mxu0 0
      %1139 = vmatpush1.bf16.msra.mxu0 0
      %1140 = vmatprep.subr.bf16.mxu0 0
      %1141 = vmatpush1.bf16.msra.mxu0 0
      %1142 = vmatprep.subr.bf16.mxu0 0
      %1143 = vmatpush1.bf16.msra.mxu0 0
      %1144 = vmatprep.subr.bf16.mxu0 0
      %1145 = vmatpush1.bf16.msra.mxu0 0
      %1146 = vmatprep.subr.bf16.mxu0 0
      %1147 = vmatpush1.bf16.msra.mxu0 %v1130
      %1148 = vmatprep.subr.bf16.mxu0 0
      %1149 = vmatpush2.bf16.msra.mxu0 0
      %1150 = vmatprep.subr.bf16.mxu0 0
      %1151 = vmatpush2.bf16.msra.mxu0 0
      %1152 = vmatprep.subr.bf16.mxu0 0
      %1153 = vmatpush2.bf16.msra.mxu0 0
      %1154 = vmatprep.subr.bf16.mxu0 0
      %1155 = vmatpush2.bf16.msra.mxu0 0
      %1156 = vmatprep.subr.bf16.mxu0 0
      %1157 = vmatpush2.bf16.msra.mxu0 0
      %1158 = vmatprep.subr.bf16.mxu0 0
      %1159 = vmatpush2.bf16.msra.mxu0 0
      %1160 = vmatprep.subr.bf16.mxu0 0
      %1161 = vmatpush2.bf16.msra.mxu0 0
      %1162 = vmatprep.subr.bf16.mxu0 0
      %1163 = vmatpush2.bf16.msra.mxu0 0
      %1164 = vmatprep.mubr.bf16.mxu0 0
      %1165 = vmatmul.mubr.bf16.gmra.mxu0 %v1082
      %v1166 = vpop.f32.mrf.mxu0
      %v1167 = vadd.f32 0.0, %v1166
      %v1168 = vpop.f32.mrf.mxu0
      %v1169 = vpop.f32.mrf.mxu0
      %v1170 = vadd.f32 0.0, %v1169
      %v1171 = vpop.f32.mrf.mxu0
      %1172 = vmatprep.mubr.bf16.mxu0 0
      %1173 = vmatmul.mubr.bf16.gmra.mxu0 %v1085
      %v1174 = vpop.f32.mrf.mxu0
      %v1175 = vadd.f32 0.0, %v1174
      %v1176 = vpop.f32.mrf.mxu0
      %v1177 = vpop.f32.mrf.mxu0
      %v1178 = vadd.f32 0.0, %v1177
      %v1179 = vpop.f32.mrf.mxu0
      %1180 = vmatprep.mubr.bf16.mxu0 0
      %1181 = vmatmul.mubr.bf16.gmra.mxu0 %v1088
      %v1182 = vpop.f32.mrf.mxu0
      %v1183 = vadd.f32 0.0, %v1182
      %v1184 = vpop.f32.mrf.mxu0
      %v1185 = vpop.f32.mrf.mxu0
      %v1186 = vadd.f32 0.0, %v1185
      %v1187 = vpop.f32.mrf.mxu0
      %1188 = vmatprep.mubr.bf16.mxu0 0
      %1189 = vmatmul.mubr.bf16.gmra.mxu0 %v1091
      %v1190 = vpop.f32.mrf.mxu0
      %v1191 = vadd.f32 0.0, %v1190
      %v1192 = vpop.f32.mrf.mxu0
      %v1193 = vpop.f32.mrf.mxu0
      %v1194 = vadd.f32 0.0, %v1193
      %v1195 = vpop.f32.mrf.mxu0
      %1196 = vmatprep.mubr.bf16.mxu0 0
      %1197 = vmatmul.mubr.bf16.gmra.mxu0 %v1094
      %v1198 = vpop.f32.mrf.mxu0
      %v1199 = vadd.f32 0.0, %v1198
      %v1200 = vpop.f32.mrf.mxu0
      %v1201 = vpop.f32.mrf.mxu0
      %v1202 = vadd.f32 0.0, %v1201
      %v1203 = vpop.f32.mrf.mxu0
      %1204 = vmatprep.mubr.bf16.mxu0 0
      %1205 = vmatmul.mubr.bf16.gmra.mxu0 %v1097
      %v1206 = vpop.f32.mrf.mxu0
      %v1207 = vadd.f32 0.0, %v1206
      %v1208 = vpop.f32.mrf.mxu0
      %v1209 = vpop.f32.mrf.mxu0
      %v1210 = vadd.f32 0.0, %v1209
      %v1211 = vpop.f32.mrf.mxu0
      %1212 = vmatprep.mubr.bf16.mxu0 0
      %1213 = vmatmul.mubr.bf16.gmra.mxu0 %v1100
      %v1214 = vpop.f32.mrf.mxu0
      %v1215 = vadd.f32 0.0, %v1214
      %v1216 = vpop.f32.mrf.mxu0
      %v1217 = vpop.f32.mrf.mxu0
      %v1218 = vadd.f32 0.0, %v1217
      %v1219 = vpop.f32.mrf.mxu0
      %1220 = vmatprep.mubr.bf16.mxu0 0
      %1221 = vmatmul.mubr.bf16.gmra.mxu0 %v1103
      %v1222 = vpop.f32.mrf.mxu0
      %v1223 = vadd.f32 0.0, %v1222
      %v1224 = vpop.f32.mrf.mxu0
      %v1225 = vpop.f32.mrf.mxu0
      %v1226 = vadd.f32 0.0, %v1225
      %v1227 = vpop.f32.mrf.mxu0
      %1228 = vmatprep.mubr.bf16.mxu0 0
      %1229 = vmatmul.mubr.bf16.gmra.mxu0 %v1106
      %v1230 = vpop.f32.mrf.mxu0
      %v1231 = vadd.f32 0.0, %v1230
      %v1232 = vpop.f32.mrf.mxu0
      %v1233 = vpop.f32.mrf.mxu0
      %v1234 = vadd.f32 0.0, %v1233
      %v1235 = vpop.f32.mrf.mxu0
      %1236 = vmatprep.mubr.bf16.mxu0 0
      %1237 = vmatmul.mubr.bf16.gmra.mxu0 %v1109
      %v1238 = vpop.f32.mrf.mxu0
      %v1239 = vadd.f32 0.0, %v1238
      %v1240 = vpop.f32.mrf.mxu0
      %v1241 = vpop.f32.mrf.mxu0
      %v1242 = vadd.f32 0.0, %v1241
      %v1243 = vpop.f32.mrf.mxu0
      %1244 = vmatprep.mubr.bf16.mxu0 0
      %1245 = vmatmul.mubr.bf16.gmra.mxu0 %v1112
      %v1246 = vpop.f32.mrf.mxu0
      %v1247 = vadd.f32 0.0, %v1246
      %v1248 = vpop.f32.mrf.mxu0
      %v1249 = vpop.f32.mrf.mxu0
      %v1250 = vadd.f32 0.0, %v1249
      %v1251 = vpop.f32.mrf.mxu0
      %1252 = vmatprep.mubr.bf16.mxu0 0
      %1253 = vmatmul.mubr.bf16.gmra.mxu0 %v1115
      %v1254 = vpop.f32.mrf.mxu0
      %v1255 = vadd.f32 0.0, %v1254
      %v1256 = vpop.f32.mrf.mxu0
      %v1257 = vpop.f32.mrf.mxu0
      %v1258 = vadd.f32 0.0, %v1257
      %v1259 = vpop.f32.mrf.mxu0
      %1260 = vmatprep.mubr.bf16.mxu0 0
      %1261 = vmatmul.mubr.bf16.gmra.mxu0 %v1118
      %v1262 = vpop.f32.mrf.mxu0
      %v1263 = vadd.f32 0.0, %v1262
      %v1264 = vpop.f32.mrf.mxu0
      %v1265 = vpop.f32.mrf.mxu0
      %v1266 = vadd.f32 0.0, %v1265
      %v1267 = vpop.f32.mrf.mxu0
      %1268 = vmatprep.mubr.bf16.mxu0 0
      %1269 = vmatmul.mubr.bf16.gmra.mxu0 %v1121
      %v1270 = vpop.f32.mrf.mxu0
      %v1271 = vadd.f32 0.0, %v1270
      %v1272 = vpop.f32.mrf.mxu0
      %v1273 = vpop.f32.mrf.mxu0
      %v1274 = vadd.f32 0.0, %v1273
      %v1275 = vpop.f32.mrf.mxu0
      %1276 = vmatprep.mubr.bf16.mxu0 0
      %1277 = vmatmul.mubr.bf16.gmra.mxu0 %v1124
      %v1278 = vpop.f32.mrf.mxu0
      %v1279 = vadd.f32 0.0, %v1278
      %v1280 = vpop.f32.mrf.mxu0
      %v1281 = vpop.f32.mrf.mxu0
      %v1282 = vadd.f32 0.0, %v1281
      %v1283 = vpop.f32.mrf.mxu0
      %1284 = vmatprep.mubr.bf16.mxu0 0
      %1285 = vmatmul.mubr.bf16.gmra.mxu0 %v1127
      %v1286 = vpop.f32.mrf.mxu0
      %v1287 = vadd.f32 0.0, %v1286
      %v1288 = vpop.f32.mrf.mxu0
      %v1289 = vpop.f32.mrf.mxu0
      %v1290 = vadd.f32 0.0, %v1289
      %v1291 = vpop.f32.mrf.mxu0
      %1292 = vdwg.mxu0
      %v1293 = vadd.f32 %v905, %v1167
      %v1294 = vadd.f32 %v908, %v1170
      %v1295 = vadd.f32 %v913, %v1175
      %v1296 = vadd.f32 %v916, %v1178
      %v1297 = vadd.f32 %v921, %v1183
      %v1298 = vadd.f32 %v924, %v1186
      %v1299 = vadd.f32 %v929, %v1191
      %v1300 = vadd.f32 %v932, %v1194
      %v1301 = vadd.f32 %v937, %v1199
      %v1302 = vadd.f32 %v940, %v1202
      %v1303 = vadd.f32 %v945, %v1207
      %v1304 = vadd.f32 %v948, %v1210
      %v1305 = vadd.f32 %v953, %v1215
      %v1306 = vadd.f32 %v956, %v1218
      %v1307 = vadd.f32 %v961, %v1223
      %v1308 = vadd.f32 %v964, %v1226
      %v1309 = vadd.f32 %v969, %v1231
      %v1310 = vadd.f32 %v972, %v1234
      %v1311 = vadd.f32 %v977, %v1239
      %v1312 = vadd.f32 %v980, %v1242
      %v1313 = vadd.f32 %v985, %v1247
      %v1314 = vadd.f32 %v988, %v1250
      %v1315 = vadd.f32 %v993, %v1255
      %v1316 = vadd.f32 %v996, %v1258
      %v1317 = vadd.f32 %v1001, %v1263
      %v1318 = vadd.f32 %v1004, %v1266
      %v1319 = vadd.f32 %v1009, %v1271
      %v1320 = vadd.f32 %v1012, %v1274
      %v1321 = vadd.f32 %v1017, %v1279
      %v1322 = vadd.f32 %v1020, %v1282
      %v1323 = vadd.f32 %v1025, %v1287
      %v1324 = vadd.f32 %v1028, %v1290
      %v1325 = vld [vmem:[%s471] sm:$0xff]
      %v1326 = vld [vmem:[%s471 + $0x8] sm:$0xff]
      %v1327 = vld [vmem:[%s471 + $0x18] sm:$0xff]
      %v1328 = vld [vmem:[%s471 + $0x20] sm:$0xff]
      %v1329 = vld [vmem:[%s471 + $0x30] sm:$0xff]
      %v1330 = vld [vmem:[%s471 + $0x38] sm:$0xff]
      %v1331 = vld [vmem:[%s471 + $0x48] sm:$0xff]
      %v1332 = vld [vmem:[%s471 + $0x50] sm:$0xff]
      %v1333 = vld [vmem:[%s471 + $0x60] sm:$0xff]
      %v1334 = vld [vmem:[%s471 + $0x68] sm:$0xff]
      %v1335 = vld [vmem:[%s471 + $0x78] sm:$0xff]
      %v1336 = vld [vmem:[%s471 + $0x80] sm:$0xff]
      %v1337 = vld [vmem:[%s471 + $0x90] sm:$0xff]
      %v1338 = vld [vmem:[%s471 + $0x98] sm:$0xff]
      %v1339 = vld [vmem:[%s471 + $0xa8] sm:$0xff]
      %v1340 = vld [vmem:[%s471 + $0xb0] sm:$0xff]
      %v1341 = vld [vmem:[%s471 + $0xc0] sm:$0xff]
      %v1342 = vld [vmem:[%s471 + $0xc8] sm:$0xff]
      %v1343 = vld [vmem:[%s471 + $0xd8] sm:$0xff]
      %v1344 = vld [vmem:[%s471 + $0xe0] sm:$0xff]
      %v1345 = vld [vmem:[%s471 + $0xf0] sm:$0xff]
      %v1346 = vld [vmem:[%s471 + $0xf8] sm:$0xff]
      %v1347 = vld [vmem:[%s471 + $0x108] sm:$0xff]
      %v1348 = vld [vmem:[%s471 + $0x110] sm:$0xff]
      %v1349 = vld [vmem:[%s471 + $0x120] sm:$0xff]
      %v1350 = vld [vmem:[%s471 + $0x128] sm:$0xff]
      %v1351 = vld [vmem:[%s471 + $0x138] sm:$0xff]
      %v1352 = vld [vmem:[%s471 + $0x140] sm:$0xff]
      %v1353 = vld [vmem:[%s471 + $0x150] sm:$0xff]
      %v1354 = vld [vmem:[%s471 + $0x158] sm:$0xff]
      %v1355 = vld [vmem:[%s471 + $0x168] sm:$0xff]
      %v1356 = vld [vmem:[%s471 + $0x170] sm:$0xff]
      %v1357 = vpack.c.bf16 %v1326, %v1325
      %v1358 = vpack.c.bf16 %v1328, %v1327
      %v1359 = vpack.c.bf16 %v1330, %v1329
      %v1360 = vpack.c.bf16 %v1332, %v1331
      %v1361 = vpack.c.bf16 %v1334, %v1333
      %v1362 = vpack.c.bf16 %v1336, %v1335
      %v1363 = vpack.c.bf16 %v1338, %v1337
      %v1364 = vpack.c.bf16 %v1340, %v1339
      %v1365 = vpack.c.bf16 %v1342, %v1341
      %v1366 = vpack.c.bf16 %v1344, %v1343
      %v1367 = vpack.c.bf16 %v1346, %v1345
      %v1368 = vpack.c.bf16 %v1348, %v1347
      %v1369 = vpack.c.bf16 %v1350, %v1349
      %v1370 = vpack.c.bf16 %v1352, %v1351
      %v1371 = vpack.c.bf16 %v1354, %v1353
      %v1372 = vpack.c.bf16 %v1356, %v1355
      %s1373 = scalar_lea.vmem %s2, 6
      %v1374 = vld [vmem:[%s1373] sm:$0x3]
      %v1376 = vsel %vm327, %v1357, 0
      %v1379 = vsel %vm327, %v1358, 0
      %v1382 = vsel %vm327, %v1359, 0
      %v1385 = vsel %vm327, %v1360, 0
      %v1388 = vsel %vm327, %v1361, 0
      %v1391 = vsel %vm327, %v1362, 0
      %v1394 = vsel %vm327, %v1363, 0
      %v1397 = vsel %vm327, %v1364, 0
      %v1400 = vsel %vm327, %v1365, 0
      %v1403 = vsel %vm327, %v1366, 0
      %v1406 = vsel %vm327, %v1367, 0
      %v1409 = vsel %vm327, %v1368, 0
      %v1412 = vsel %vm327, %v1369, 0
      %v1415 = vsel %vm327, %v1370, 0
      %v1418 = vsel %vm327, %v1371, 0
      %v1421 = vsel %vm327, %v1372, 0
      %v1424 = vand.u32 %v1374, %v654
      %1426 = vmatprep.subr.bf16.mxu0 0
      %1427 = vmatpush1.bf16.msra.mxu0 0
      %1428 = vmatprep.subr.bf16.mxu0 0
      %1429 = vmatpush1.bf16.msra.mxu0 0
      %1430 = vmatprep.subr.bf16.mxu0 0
      %1431 = vmatpush1.bf16.msra.mxu0 0
      %1432 = vmatprep.subr.bf16.mxu0 0
      %1433 = vmatpush1.bf16.msra.mxu0 0
      %1434 = vmatprep.subr.bf16.mxu0 0
      %1435 = vmatpush1.bf16.msra.mxu0 0
      %1436 = vmatprep.subr.bf16.mxu0 0
      %1437 = vmatpush1.bf16.msra.mxu0 0
      %1438 = vmatprep.subr.bf16.mxu0 0
      %1439 = vmatpush1.bf16.msra.mxu0 0
      %1440 = vmatprep.subr.bf16.mxu0 0
      %1441 = vmatpush1.bf16.msra.mxu0 %v1424
      %1442 = vmatprep.subr.bf16.mxu0 0
      %1443 = vmatpush2.bf16.msra.mxu0 0
      %1444 = vmatprep.subr.bf16.mxu0 0
      %1445 = vmatpush2.bf16.msra.mxu0 0
      %1446 = vmatprep.subr.bf16.mxu0 0
      %1447 = vmatpush2.bf16.msra.mxu0 0
      %1448 = vmatprep.subr.bf16.mxu0 0
      %1449 = vmatpush2.bf16.msra.mxu0 0
      %1450 = vmatprep.subr.bf16.mxu0 0
      %1451 = vmatpush2.bf16.msra.mxu0 0
      %1452 = vmatprep.subr.bf16.mxu0 0
      %1453 = vmatpush2.bf16.msra.mxu0 0
      %1454 = vmatprep.subr.bf16.mxu0 0
      %1455 = vmatpush2.bf16.msra.mxu0 0
      %1456 = vmatprep.subr.bf16.mxu0 0
      %1457 = vmatpush2.bf16.msra.mxu0 0
      %1458 = vmatprep.mubr.bf16.mxu0 0
      %1459 = vmatmul.mubr.bf16.gmra.mxu0 %v1376
      %v1460 = vpop.f32.mrf.mxu0
      %v1461 = vadd.f32 0.0, %v1460
      %v1462 = vpop.f32.mrf.mxu0
      %v1463 = vpop.f32.mrf.mxu0
      %v1464 = vadd.f32 0.0, %v1463
      %v1465 = vpop.f32.mrf.mxu0
      %1466 = vmatprep.mubr.bf16.mxu0 0
      %1467 = vmatmul.mubr.bf16.gmra.mxu0 %v1379
      %v1468 = vpop.f32.mrf.mxu0
      %v1469 = vadd.f32 0.0, %v1468
      %v1470 = vpop.f32.mrf.mxu0
      %v1471 = vpop.f32.mrf.mxu0
      %v1472 = vadd.f32 0.0, %v1471
      %v1473 = vpop.f32.mrf.mxu0
      %1474 = vmatprep.mubr.bf16.mxu0 0
      %1475 = vmatmul.mubr.bf16.gmra.mxu0 %v1382
      %v1476 = vpop.f32.mrf.mxu0
      %v1477 = vadd.f32 0.0, %v1476
      %v1478 = vpop.f32.mrf.mxu0
      %v1479 = vpop.f32.mrf.mxu0
      %v1480 = vadd.f32 0.0, %v1479
      %v1481 = vpop.f32.mrf.mxu0
      %1482 = vmatprep.mubr.bf16.mxu0 0
      %1483 = vmatmul.mubr.bf16.gmra.mxu0 %v1385
      %v1484 = vpop.f32.mrf.mxu0
      %v1485 = vadd.f32 0.0, %v1484
      %v1486 = vpop.f32.mrf.mxu0
      %v1487 = vpop.f32.mrf.mxu0
      %v1488 = vadd.f32 0.0, %v1487
      %v1489 = vpop.f32.mrf.mxu0
      %1490 = vmatprep.mubr.bf16.mxu0 0
      %1491 = vmatmul.mubr.bf16.gmra.mxu0 %v1388
      %v1492 = vpop.f32.mrf.mxu0
      %v1493 = vadd.f32 0.0, %v1492
      %v1494 = vpop.f32.mrf.mxu0
      %v1495 = vpop.f32.mrf.mxu0
      %v1496 = vadd.f32 0.0, %v1495
      %v1497 = vpop.f32.mrf.mxu0
      %1498 = vmatprep.mubr.bf16.mxu0 0
      %1499 = vmatmul.mubr.bf16.gmra.mxu0 %v1391
      %v1500 = vpop.f32.mrf.mxu0
      %v1501 = vadd.f32 0.0, %v1500
      %v1502 = vpop.f32.mrf.mxu0
      %v1503 = vpop.f32.mrf.mxu0
      %v1504 = vadd.f32 0.0, %v1503
      %v1505 = vpop.f32.mrf.mxu0
      %1506 = vmatprep.mubr.bf16.mxu0 0
      %1507 = vmatmul.mubr.bf16.gmra.mxu0 %v1394
      %v1508 = vpop.f32.mrf.mxu0
      %v1509 = vadd.f32 0.0, %v1508
      %v1510 = vpop.f32.mrf.mxu0
      %v1511 = vpop.f32.mrf.mxu0
      %v1512 = vadd.f32 0.0, %v1511
      %v1513 = vpop.f32.mrf.mxu0
      %1514 = vmatprep.mubr.bf16.mxu0 0
      %1515 = vmatmul.mubr.bf16.gmra.mxu0 %v1397
      %v1516 = vpop.f32.mrf.mxu0
      %v1517 = vadd.f32 0.0, %v1516
      %v1518 = vpop.f32.mrf.mxu0
      %v1519 = vpop.f32.mrf.mxu0
      %v1520 = vadd.f32 0.0, %v1519
      %v1521 = vpop.f32.mrf.mxu0
      %1522 = vmatprep.mubr.bf16.mxu0 0
      %1523 = vmatmul.mubr.bf16.gmra.mxu0 %v1400
      %v1524 = vpop.f32.mrf.mxu0
      %v1525 = vadd.f32 0.0, %v1524
      %v1526 = vpop.f32.mrf.mxu0
      %v1527 = vpop.f32.mrf.mxu0
      %v1528 = vadd.f32 0.0, %v1527
      %v1529 = vpop.f32.mrf.mxu0
      %1530 = vmatprep.mubr.bf16.mxu0 0
      %1531 = vmatmul.mubr.bf16.gmra.mxu0 %v1403
      %v1532 = vpop.f32.mrf.mxu0
      %v1533 = vadd.f32 0.0, %v1532
      %v1534 = vpop.f32.mrf.mxu0
      %v1535 = vpop.f32.mrf.mxu0
      %v1536 = vadd.f32 0.0, %v1535
      %v1537 = vpop.f32.mrf.mxu0
      %1538 = vmatprep.mubr.bf16.mxu0 0
      %1539 = vmatmul.mubr.bf16.gmra.mxu0 %v1406
      %v1540 = vpop.f32.mrf.mxu0
      %v1541 = vadd.f32 0.0, %v1540
      %v1542 = vpop.f32.mrf.mxu0
      %v1543 = vpop.f32.mrf.mxu0
      %v1544 = vadd.f32 0.0, %v1543
      %v1545 = vpop.f32.mrf.mxu0
      %1546 = vmatprep.mubr.bf16.mxu0 0
      %1547 = vmatmul.mubr.bf16.gmra.mxu0 %v1409
      %v1548 = vpop.f32.mrf.mxu0
      %v1549 = vadd.f32 0.0, %v1548
      %v1550 = vpop.f32.mrf.mxu0
      %v1551 = vpop.f32.mrf.mxu0
      %v1552 = vadd.f32 0.0, %v1551
      %v1553 = vpop.f32.mrf.mxu0
      %1554 = vmatprep.mubr.bf16.mxu0 0
      %1555 = vmatmul.mubr.bf16.gmra.mxu0 %v1412
      %v1556 = vpop.f32.mrf.mxu0
      %v1557 = vadd.f32 0.0, %v1556
      %v1558 = vpop.f32.mrf.mxu0
      %v1559 = vpop.f32.mrf.mxu0
      %v1560 = vadd.f32 0.0, %v1559
      %v1561 = vpop.f32.mrf.mxu0
      %1562 = vmatprep.mubr.bf16.mxu0 0
      %1563 = vmatmul.mubr.bf16.gmra.mxu0 %v1415
      %v1564 = vpop.f32.mrf.mxu0
      %v1565 = vadd.f32 0.0, %v1564
      %v1566 = vpop.f32.mrf.mxu0
      %v1567 = vpop.f32.mrf.mxu0
      %v1568 = vadd.f32 0.0, %v1567
      %v1569 = vpop.f32.mrf.mxu0
      %1570 = vmatprep.mubr.bf16.mxu0 0
      %1571 = vmatmul.mubr.bf16.gmra.mxu0 %v1418
      %v1572 = vpop.f32.mrf.mxu0
      %v1573 = vadd.f32 0.0, %v1572
      %v1574 = vpop.f32.mrf.mxu0
      %v1575 = vpop.f32.mrf.mxu0
      %v1576 = vadd.f32 0.0, %v1575
      %v1577 = vpop.f32.mrf.mxu0
      %1578 = vmatprep.mubr.bf16.mxu0 0
      %1579 = vmatmul.mubr.bf16.gmra.mxu0 %v1421
      %v1580 = vpop.f32.mrf.mxu0
      %v1581 = vadd.f32 0.0, %v1580
      %v1582 = vpop.f32.mrf.mxu0
      %v1583 = vpop.f32.mrf.mxu0
      %v1584 = vadd.f32 0.0, %v1583
      %v1585 = vpop.f32.mrf.mxu0
      %1586 = vdwg.mxu0
      %v1587 = vadd.f32 %v1293, %v1461
      %v1588 = vadd.f32 %v1294, %v1464
      %v1589 = vadd.f32 %v1295, %v1469
      %v1590 = vadd.f32 %v1296, %v1472
      %v1591 = vadd.f32 %v1297, %v1477
      %v1592 = vadd.f32 %v1298, %v1480
      %v1593 = vadd.f32 %v1299, %v1485
      %v1594 = vadd.f32 %v1300, %v1488
      %v1595 = vadd.f32 %v1301, %v1493
      %v1596 = vadd.f32 %v1302, %v1496
      %v1597 = vadd.f32 %v1303, %v1501
      %v1598 = vadd.f32 %v1304, %v1504
      %v1599 = vadd.f32 %v1305, %v1509
      %v1600 = vadd.f32 %v1306, %v1512
      %v1601 = vadd.f32 %v1307, %v1517
      %v1602 = vadd.f32 %v1308, %v1520
      %v1603 = vadd.f32 %v1309, %v1525
      %v1604 = vadd.f32 %v1310, %v1528
      %v1605 = vadd.f32 %v1311, %v1533
      %v1606 = vadd.f32 %v1312, %v1536
      %v1607 = vadd.f32 %v1313, %v1541
      %v1608 = vadd.f32 %v1314, %v1544
      %v1609 = vadd.f32 %v1315, %v1549
      %v1610 = vadd.f32 %v1316, %v1552
      %v1611 = vadd.f32 %v1317, %v1557
      %v1612 = vadd.f32 %v1318, %v1560
      %v1613 = vadd.f32 %v1319, %v1565
      %v1614 = vadd.f32 %v1320, %v1568
      %v1615 = vadd.f32 %v1321, %v1573
      %v1616 = vadd.f32 %v1322, %v1576
      %v1617 = vadd.f32 %v1323, %v1581
      %v1618 = vadd.f32 %v1324, %v1584
      %v1619 = vld [vmem:[%s471 + $0x1] sm:$0xff]
      %v1620 = vld [vmem:[%s471 + $0x9] sm:$0xff]
      %v1621 = vld [vmem:[%s471 + $0x19] sm:$0xff]
      %v1622 = vld [vmem:[%s471 + $0x21] sm:$0xff]
      %v1623 = vld [vmem:[%s471 + $0x31] sm:$0xff]
      %v1624 = vld [vmem:[%s471 + $0x39] sm:$0xff]
      %v1625 = vld [vmem:[%s471 + $0x49] sm:$0xff]
      %v1626 = vld [vmem:[%s471 + $0x51] sm:$0xff]
      %v1627 = vld [vmem:[%s471 + $0x61] sm:$0xff]
      %v1628 = vld [vmem:[%s471 + $0x69] sm:$0xff]
      %v1629 = vld [vmem:[%s471 + $0x79] sm:$0xff]
      %v1630 = vld [vmem:[%s471 + $0x81] sm:$0xff]
      %v1631 = vld [vmem:[%s471 + $0x91] sm:$0xff]
      %v1632 = vld [vmem:[%s471 + $0x99] sm:$0xff]
      %v1633 = vld [vmem:[%s471 + $0xa9] sm:$0xff]
      %v1634 = vld [vmem:[%s471 + $0xb1] sm:$0xff]
      %v1635 = vld [vmem:[%s471 + $0xc1] sm:$0xff]
      %v1636 = vld [vmem:[%s471 + $0xc9] sm:$0xff]
      %v1637 = vld [vmem:[%s471 + $0xd9] sm:$0xff]
      %v1638 = vld [vmem:[%s471 + $0xe1] sm:$0xff]
      %v1639 = vld [vmem:[%s471 + $0xf1] sm:$0xff]
      %v1640 = vld [vmem:[%s471 + $0xf9] sm:$0xff]
      %v1641 = vld [vmem:[%s471 + $0x109] sm:$0xff]
      %v1642 = vld [vmem:[%s471 + $0x111] sm:$0xff]
      %v1643 = vld [vmem:[%s471 + $0x121] sm:$0xff]
      %v1644 = vld [vmem:[%s471 + $0x129] sm:$0xff]
      %v1645 = vld [vmem:[%s471 + $0x139] sm:$0xff]
      %v1646 = vld [vmem:[%s471 + $0x141] sm:$0xff]
      %v1647 = vld [vmem:[%s471 + $0x151] sm:$0xff]
      %v1648 = vld [vmem:[%s471 + $0x159] sm:$0xff]
      %v1649 = vld [vmem:[%s471 + $0x169] sm:$0xff]
      %v1650 = vld [vmem:[%s471 + $0x171] sm:$0xff]
      %v1651 = vpack.c.bf16 %v1620, %v1619
      %v1652 = vpack.c.bf16 %v1622, %v1621
      %v1653 = vpack.c.bf16 %v1624, %v1623
      %v1654 = vpack.c.bf16 %v1626, %v1625
      %v1655 = vpack.c.bf16 %v1628, %v1627
      %v1656 = vpack.c.bf16 %v1630, %v1629
      %v1657 = vpack.c.bf16 %v1632, %v1631
      %v1658 = vpack.c.bf16 %v1634, %v1633
      %v1659 = vpack.c.bf16 %v1636, %v1635
      %v1660 = vpack.c.bf16 %v1638, %v1637
      %v1661 = vpack.c.bf16 %v1640, %v1639
      %v1662 = vpack.c.bf16 %v1642, %v1641
      %v1663 = vpack.c.bf16 %v1644, %v1643
      %v1664 = vpack.c.bf16 %v1646, %v1645
      %v1665 = vpack.c.bf16 %v1648, %v1647
      %v1666 = vpack.c.bf16 %v1650, %v1649
      %s1667 = scalar_lea.vmem %s2, 8
      %v1668 = vld [vmem:[%s1667] sm:$0x3]
      %v1670 = vsel %vm327, %v1651, 0
      %v1673 = vsel %vm327, %v1652, 0
      %v1676 = vsel %vm327, %v1653, 0
      %v1679 = vsel %vm327, %v1654, 0
      %v1682 = vsel %vm327, %v1655, 0
      %v1685 = vsel %vm327, %v1656, 0
      %v1688 = vsel %vm327, %v1657, 0
      %v1691 = vsel %vm327, %v1658, 0
      %v1694 = vsel %vm327, %v1659, 0
      %v1697 = vsel %vm327, %v1660, 0
      %v1700 = vsel %vm327, %v1661, 0
      %v1703 = vsel %vm327, %v1662, 0
      %v1706 = vsel %vm327, %v1663, 0
      %v1709 = vsel %vm327, %v1664, 0
      %v1712 = vsel %vm327, %v1665, 0
      %v1715 = vsel %vm327, %v1666, 0
      %v1718 = vand.u32 %v1668, %v654
      %1720 = vmatprep.subr.bf16.mxu0 0
      %1721 = vmatpush1.bf16.msra.mxu0 0
      %1722 = vmatprep.subr.bf16.mxu0 0
      %1723 = vmatpush1.bf16.msra.mxu0 0
      %1724 = vmatprep.subr.bf16.mxu0 0
      %1725 = vmatpush1.bf16.msra.mxu0 0
      %1726 = vmatprep.subr.bf16.mxu0 0
      %1727 = vmatpush1.bf16.msra.mxu0 0
      %1728 = vmatprep.subr.bf16.mxu0 0
      %1729 = vmatpush1.bf16.msra.mxu0 0
      %1730 = vmatprep.subr.bf16.mxu0 0
      %1731 = vmatpush1.bf16.msra.mxu0 0
      %1732 = vmatprep.subr.bf16.mxu0 0
      %1733 = vmatpush1.bf16.msra.mxu0 0
      %1734 = vmatprep.subr.bf16.mxu0 0
      %1735 = vmatpush1.bf16.msra.mxu0 %v1718
      %1736 = vmatprep.subr.bf16.mxu0 0
      %1737 = vmatpush2.bf16.msra.mxu0 0
      %1738 = vmatprep.subr.bf16.mxu0 0
      %1739 = vmatpush2.bf16.msra.mxu0 0
      %1740 = vmatprep.subr.bf16.mxu0 0
      %1741 = vmatpush2.bf16.msra.mxu0 0
      %1742 = vmatprep.subr.bf16.mxu0 0
      %1743 = vmatpush2.bf16.msra.mxu0 0
      %1744 = vmatprep.subr.bf16.mxu0 0
      %1745 = vmatpush2.bf16.msra.mxu0 0
      %1746 = vmatprep.subr.bf16.mxu0 0
      %1747 = vmatpush2.bf16.msra.mxu0 0
      %1748 = vmatprep.subr.bf16.mxu0 0
      %1749 = vmatpush2.bf16.msra.mxu0 0
      %1750 = vmatprep.subr.bf16.mxu0 0
      %1751 = vmatpush2.bf16.msra.mxu0 0
      %1752 = vmatprep.mubr.bf16.mxu0 0
      %1753 = vmatmul.mubr.bf16.gmra.mxu0 %v1670
      %v1754 = vpop.f32.mrf.mxu0
      %v1755 = vadd.f32 0.0, %v1754
      %v1756 = vpop.f32.mrf.mxu0
      %v1757 = vpop.f32.mrf.mxu0
      %v1758 = vadd.f32 0.0, %v1757
      %v1759 = vpop.f32.mrf.mxu0
      %1760 = vmatprep.mubr.bf16.mxu0 0
      %1761 = vmatmul.mubr.bf16.gmra.mxu0 %v1673
      %v1762 = vpop.f32.mrf.mxu0
      %v1763 = vadd.f32 0.0, %v1762
      %v1764 = vpop.f32.mrf.mxu0
      %v1765 = vpop.f32.mrf.mxu0
      %v1766 = vadd.f32 0.0, %v1765
      %v1767 = vpop.f32.mrf.mxu0
      %1768 = vmatprep.mubr.bf16.mxu0 0
      %1769 = vmatmul.mubr.bf16.gmra.mxu0 %v1676
      %v1770 = vpop.f32.mrf.mxu0
      %v1771 = vadd.f32 0.0, %v1770
      %v1772 = vpop.f32.mrf.mxu0
      %v1773 = vpop.f32.mrf.mxu0
      %v1774 = vadd.f32 0.0, %v1773
      %v1775 = vpop.f32.mrf.mxu0
      %1776 = vmatprep.mubr.bf16.mxu0 0
      %1777 = vmatmul.mubr.bf16.gmra.mxu0 %v1679
      %v1778 = vpop.f32.mrf.mxu0
      %v1779 = vadd.f32 0.0, %v1778
      %v1780 = vpop.f32.mrf.mxu0
      %v1781 = vpop.f32.mrf.mxu0
      %v1782 = vadd.f32 0.0, %v1781
      %v1783 = vpop.f32.mrf.mxu0
      %1784 = vmatprep.mubr.bf16.mxu0 0
      %1785 = vmatmul.mubr.bf16.gmra.mxu0 %v1682
      %v1786 = vpop.f32.mrf.mxu0
      %v1787 = vadd.f32 0.0, %v1786
      %v1788 = vpop.f32.mrf.mxu0
      %v1789 = vpop.f32.mrf.mxu0
      %v1790 = vadd.f32 0.0, %v1789
      %v1791 = vpop.f32.mrf.mxu0
      %1792 = vmatprep.mubr.bf16.mxu0 0
      %1793 = vmatmul.mubr.bf16.gmra.mxu0 %v1685
      %v1794 = vpop.f32.mrf.mxu0
      %v1795 = vadd.f32 0.0, %v1794
      %v1796 = vpop.f32.mrf.mxu0
      %v1797 = vpop.f32.mrf.mxu0
      %v1798 = vadd.f32 0.0, %v1797
      %v1799 = vpop.f32.mrf.mxu0
      %1800 = vmatprep.mubr.bf16.mxu0 0
      %1801 = vmatmul.mubr.bf16.gmra.mxu0 %v1688
      %v1802 = vpop.f32.mrf.mxu0
      %v1803 = vadd.f32 0.0, %v1802
      %v1804 = vpop.f32.mrf.mxu0
      %v1805 = vpop.f32.mrf.mxu0
      %v1806 = vadd.f32 0.0, %v1805
      %v1807 = vpop.f32.mrf.mxu0
      %1808 = vmatprep.mubr.bf16.mxu0 0
      %1809 = vmatmul.mubr.bf16.gmra.mxu0 %v1691
      %v1810 = vpop.f32.mrf.mxu0
      %v1811 = vadd.f32 0.0, %v1810
      %v1812 = vpop.f32.mrf.mxu0
      %v1813 = vpop.f32.mrf.mxu0
      %v1814 = vadd.f32 0.0, %v1813
      %v1815 = vpop.f32.mrf.mxu0
      %1816 = vmatprep.mubr.bf16.mxu0 0
      %1817 = vmatmul.mubr.bf16.gmra.mxu0 %v1694
      %v1818 = vpop.f32.mrf.mxu0
      %v1819 = vadd.f32 0.0, %v1818
      %v1820 = vpop.f32.mrf.mxu0
      %v1821 = vpop.f32.mrf.mxu0
      %v1822 = vadd.f32 0.0, %v1821
      %v1823 = vpop.f32.mrf.mxu0
      %1824 = vmatprep.mubr.bf16.mxu0 0
      %1825 = vmatmul.mubr.bf16.gmra.mxu0 %v1697
      %v1826 = vpop.f32.mrf.mxu0
      %v1827 = vadd.f32 0.0, %v1826
      %v1828 = vpop.f32.mrf.mxu0
      %v1829 = vpop.f32.mrf.mxu0
      %v1830 = vadd.f32 0.0, %v1829
      %v1831 = vpop.f32.mrf.mxu0
      %1832 = vmatprep.mubr.bf16.mxu0 0
      %1833 = vmatmul.mubr.bf16.gmra.mxu0 %v1700
      %v1834 = vpop.f32.mrf.mxu0
      %v1835 = vadd.f32 0.0, %v1834
      %v1836 = vpop.f32.mrf.mxu0
      %v1837 = vpop.f32.mrf.mxu0
      %v1838 = vadd.f32 0.0, %v1837
      %v1839 = vpop.f32.mrf.mxu0
      %1840 = vmatprep.mubr.bf16.mxu0 0
      %1841 = vmatmul.mubr.bf16.gmra.mxu0 %v1703
      %v1842 = vpop.f32.mrf.mxu0
      %v1843 = vadd.f32 0.0, %v1842
      %v1844 = vpop.f32.mrf.mxu0
      %v1845 = vpop.f32.mrf.mxu0
      %v1846 = vadd.f32 0.0, %v1845
      %v1847 = vpop.f32.mrf.mxu0
      %1848 = vmatprep.mubr.bf16.mxu0 0
      %1849 = vmatmul.mubr.bf16.gmra.mxu0 %v1706
      %v1850 = vpop.f32.mrf.mxu0
      %v1851 = vadd.f32 0.0, %v1850
      %v1852 = vpop.f32.mrf.mxu0
      %v1853 = vpop.f32.mrf.mxu0
      %v1854 = vadd.f32 0.0, %v1853
      %v1855 = vpop.f32.mrf.mxu0
      %1856 = vmatprep.mubr.bf16.mxu0 0
      %1857 = vmatmul.mubr.bf16.gmra.mxu0 %v1709
      %v1858 = vpop.f32.mrf.mxu0
      %v1859 = vadd.f32 0.0, %v1858
      %v1860 = vpop.f32.mrf.mxu0
      %v1861 = vpop.f32.mrf.mxu0
      %v1862 = vadd.f32 0.0, %v1861
      %v1863 = vpop.f32.mrf.mxu0
      %1864 = vmatprep.mubr.bf16.mxu0 0
      %1865 = vmatmul.mubr.bf16.gmra.mxu0 %v1712
      %v1866 = vpop.f32.mrf.mxu0
      %v1867 = vadd.f32 0.0, %v1866
      %v1868 = vpop.f32.mrf.mxu0
      %v1869 = vpop.f32.mrf.mxu0
      %v1870 = vadd.f32 0.0, %v1869
      %v1871 = vpop.f32.mrf.mxu0
      %1872 = vmatprep.mubr.bf16.mxu0 0
      %1873 = vmatmul.mubr.bf16.gmra.mxu0 %v1715
      %v1874 = vpop.f32.mrf.mxu0
      %v1875 = vadd.f32 0.0, %v1874
      %v1876 = vpop.f32.mrf.mxu0
      %v1877 = vpop.f32.mrf.mxu0
      %v1878 = vadd.f32 0.0, %v1877
      %v1879 = vpop.f32.mrf.mxu0
      %1880 = vdwg.mxu0
      %v1881 = vadd.f32 %v1587, %v1755
      %v1882 = vadd.f32 %v1588, %v1758
      %v1883 = vadd.f32 %v1589, %v1763
      %v1884 = vadd.f32 %v1590, %v1766
      %v1885 = vadd.f32 %v1591, %v1771
      %v1886 = vadd.f32 %v1592, %v1774
      %v1887 = vadd.f32 %v1593, %v1779
      %v1888 = vadd.f32 %v1594, %v1782
      %v1889 = vadd.f32 %v1595, %v1787
      %v1890 = vadd.f32 %v1596, %v1790
      %v1891 = vadd.f32 %v1597, %v1795
      %v1892 = vadd.f32 %v1598, %v1798
      %v1893 = vadd.f32 %v1599, %v1803
      %v1894 = vadd.f32 %v1600, %v1806
      %v1895 = vadd.f32 %v1601, %v1811
      %v1896 = vadd.f32 %v1602, %v1814
      %v1897 = vadd.f32 %v1603, %v1819
      %v1898 = vadd.f32 %v1604, %v1822
      %v1899 = vadd.f32 %v1605, %v1827
      %v1900 = vadd.f32 %v1606, %v1830
      %v1901 = vadd.f32 %v1607, %v1835
      %v1902 = vadd.f32 %v1608, %v1838
      %v1903 = vadd.f32 %v1609, %v1843
      %v1904 = vadd.f32 %v1610, %v1846
      %v1905 = vadd.f32 %v1611, %v1851
      %v1906 = vadd.f32 %v1612, %v1854
      %v1907 = vadd.f32 %v1613, %v1859
      %v1908 = vadd.f32 %v1614, %v1862
      %v1909 = vadd.f32 %v1615, %v1867
      %v1910 = vadd.f32 %v1616, %v1870
      %v1911 = vadd.f32 %v1617, %v1875
      %v1912 = vadd.f32 %v1618, %v1878
      %v1913 = vld [vmem:[%s471 + $0x2] sm:$0xff]
      %v1914 = vld [vmem:[%s471 + $0xa] sm:$0xff]
      %v1915 = vld [vmem:[%s471 + $0x1a] sm:$0xff]
      %v1916 = vld [vmem:[%s471 + $0x22] sm:$0xff]
      %v1917 = vld [vmem:[%s471 + $0x32] sm:$0xff]
      %v1918 = vld [vmem:[%s471 + $0x3a] sm:$0xff]
      %v1919 = vld [vmem:[%s471 + $0x4a] sm:$0xff]
      %v1920 = vld [vmem:[%s471 + $0x52] sm:$0xff]
      %v1921 = vld [vmem:[%s471 + $0x62] sm:$0xff]
      %v1922 = vld [vmem:[%s471 + $0x6a] sm:$0xff]
      %v1923 = vld [vmem:[%s471 + $0x7a] sm:$0xff]
      %v1924 = vld [vmem:[%s471 + $0x82] sm:$0xff]
      %v1925 = vld [vmem:[%s471 + $0x92] sm:$0xff]
      %v1926 = vld [vmem:[%s471 + $0x9a] sm:$0xff]
      %v1927 = vld [vmem:[%s471 + $0xaa] sm:$0xff]
      %v1928 = vld [vmem:[%s471 + $0xb2] sm:$0xff]
      %v1929 = vld [vmem:[%s471 + $0xc2] sm:$0xff]
      %v1930 = vld [vmem:[%s471 + $0xca] sm:$0xff]
      %v1931 = vld [vmem:[%s471 + $0xda] sm:$0xff]
      %v1932 = vld [vmem:[%s471 + $0xe2] sm:$0xff]
      %v1933 = vld [vmem:[%s471 + $0xf2] sm:$0xff]
      %v1934 = vld [vmem:[%s471 + $0xfa] sm:$0xff]
      %v1935 = vld [vmem:[%s471 + $0x10a] sm:$0xff]
      %v1936 = vld [vmem:[%s471 + $0x112] sm:$0xff]
      %v1937 = vld [vmem:[%s471 + $0x122] sm:$0xff]
      %v1938 = vld [vmem:[%s471 + $0x12a] sm:$0xff]
      %v1939 = vld [vmem:[%s471 + $0x13a] sm:$0xff]
      %v1940 = vld [vmem:[%s471 + $0x142] sm:$0xff]
      %v1941 = vld [vmem:[%s471 + $0x152] sm:$0xff]
      %v1942 = vld [vmem:[%s471 + $0x15a] sm:$0xff]
      %v1943 = vld [vmem:[%s471 + $0x16a] sm:$0xff]
      %v1944 = vld [vmem:[%s471 + $0x172] sm:$0xff]
      %v1945 = vpack.c.bf16 %v1914, %v1913
      %v1946 = vpack.c.bf16 %v1916, %v1915
      %v1947 = vpack.c.bf16 %v1918, %v1917
      %v1948 = vpack.c.bf16 %v1920, %v1919
      %v1949 = vpack.c.bf16 %v1922, %v1921
      %v1950 = vpack.c.bf16 %v1924, %v1923
      %v1951 = vpack.c.bf16 %v1926, %v1925
      %v1952 = vpack.c.bf16 %v1928, %v1927
      %v1953 = vpack.c.bf16 %v1930, %v1929
      %v1954 = vpack.c.bf16 %v1932, %v1931
      %v1955 = vpack.c.bf16 %v1934, %v1933
      %v1956 = vpack.c.bf16 %v1936, %v1935
      %v1957 = vpack.c.bf16 %v1938, %v1937
      %v1958 = vpack.c.bf16 %v1940, %v1939
      %v1959 = vpack.c.bf16 %v1942, %v1941
      %v1960 = vpack.c.bf16 %v1944, %v1943
      %s1961 = scalar_lea.vmem %s2, 10
      %v1962 = vld [vmem:[%s1961] sm:$0x3]
      %v1964 = vsel %vm327, %v1945, 0
      %v1967 = vsel %vm327, %v1946, 0
      %v1970 = vsel %vm327, %v1947, 0
      %v1973 = vsel %vm327, %v1948, 0
      %v1976 = vsel %vm327, %v1949, 0
      %v1979 = vsel %vm327, %v1950, 0
      %v1982 = vsel %vm327, %v1951, 0
      %v1985 = vsel %vm327, %v1952, 0
      %v1988 = vsel %vm327, %v1953, 0
      %v1991 = vsel %vm327, %v1954, 0
      %v1994 = vsel %vm327, %v1955, 0
      %v1997 = vsel %vm327, %v1956, 0
      %v2000 = vsel %vm327, %v1957, 0
      %v2003 = vsel %vm327, %v1958, 0
      %v2006 = vsel %vm327, %v1959, 0
      %v2009 = vsel %vm327, %v1960, 0
      %v2012 = vand.u32 %v1962, %v654
      %2014 = vmatprep.subr.bf16.mxu0 0
      %2015 = vmatpush1.bf16.msra.mxu0 0
      %2016 = vmatprep.subr.bf16.mxu0 0
      %2017 = vmatpush1.bf16.msra.mxu0 0
      %2018 = vmatprep.subr.bf16.mxu0 0
      %2019 = vmatpush1.bf16.msra.mxu0 0
      %2020 = vmatprep.subr.bf16.mxu0 0
      %2021 = vmatpush1.bf16.msra.mxu0 0
      %2022 = vmatprep.subr.bf16.mxu0 0
      %2023 = vmatpush1.bf16.msra.mxu0 0
      %2024 = vmatprep.subr.bf16.mxu0 0
      %2025 = vmatpush1.bf16.msra.mxu0 0
      %2026 = vmatprep.subr.bf16.mxu0 0
      %2027 = vmatpush1.bf16.msra.mxu0 0
      %2028 = vmatprep.subr.bf16.mxu0 0
      %2029 = vmatpush1.bf16.msra.mxu0 %v2012
      %2030 = vmatprep.subr.bf16.mxu0 0
      %2031 = vmatpush2.bf16.msra.mxu0 0
      %2032 = vmatprep.subr.bf16.mxu0 0
      %2033 = vmatpush2.bf16.msra.mxu0 0
      %2034 = vmatprep.subr.bf16.mxu0 0
      %2035 = vmatpush2.bf16.msra.mxu0 0
      %2036 = vmatprep.subr.bf16.mxu0 0
      %2037 = vmatpush2.bf16.msra.mxu0 0
      %2038 = vmatprep.subr.bf16.mxu0 0
      %2039 = vmatpush2.bf16.msra.mxu0 0
      %2040 = vmatprep.subr.bf16.mxu0 0
      %2041 = vmatpush2.bf16.msra.mxu0 0
      %2042 = vmatprep.subr.bf16.mxu0 0
      %2043 = vmatpush2.bf16.msra.mxu0 0
      %2044 = vmatprep.subr.bf16.mxu0 0
      %2045 = vmatpush2.bf16.msra.mxu0 0
      %2046 = vmatprep.mubr.bf16.mxu0 0
      %2047 = vmatmul.mubr.bf16.gmra.mxu0 %v1964
      %v2048 = vpop.f32.mrf.mxu0
      %v2049 = vadd.f32 0.0, %v2048
      %v2050 = vpop.f32.mrf.mxu0
      %v2051 = vpop.f32.mrf.mxu0
      %v2052 = vadd.f32 0.0, %v2051
      %v2053 = vpop.f32.mrf.mxu0
      %2054 = vmatprep.mubr.bf16.mxu0 0
      %2055 = vmatmul.mubr.bf16.gmra.mxu0 %v1967
      %v2056 = vpop.f32.mrf.mxu0
      %v2057 = vadd.f32 0.0, %v2056
      %v2058 = vpop.f32.mrf.mxu0
      %v2059 = vpop.f32.mrf.mxu0
      %v2060 = vadd.f32 0.0, %v2059
      %v2061 = vpop.f32.mrf.mxu0
      %2062 = vmatprep.mubr.bf16.mxu0 0
      %2063 = vmatmul.mubr.bf16.gmra.mxu0 %v1970
      %v2064 = vpop.f32.mrf.mxu0
      %v2065 = vadd.f32 0.0, %v2064
      %v2066 = vpop.f32.mrf.mxu0
      %v2067 = vpop.f32.mrf.mxu0
      %v2068 = vadd.f32 0.0, %v2067
      %v2069 = vpop.f32.mrf.mxu0
      %2070 = vmatprep.mubr.bf16.mxu0 0
      %2071 = vmatmul.mubr.bf16.gmra.mxu0 %v1973
      %v2072 = vpop.f32.mrf.mxu0
      %v2073 = vadd.f32 0.0, %v2072
      %v2074 = vpop.f32.mrf.mxu0
      %v2075 = vpop.f32.mrf.mxu0
      %v2076 = vadd.f32 0.0, %v2075
      %v2077 = vpop.f32.mrf.mxu0
      %2078 = vmatprep.mubr.bf16.mxu0 0
      %2079 = vmatmul.mubr.bf16.gmra.mxu0 %v1976
      %v2080 = vpop.f32.mrf.mxu0
      %v2081 = vadd.f32 0.0, %v2080
      %v2082 = vpop.f32.mrf.mxu0
      %v2083 = vpop.f32.mrf.mxu0
      %v2084 = vadd.f32 0.0, %v2083
      %v2085 = vpop.f32.mrf.mxu0
      %2086 = vmatprep.mubr.bf16.mxu0 0
      %2087 = vmatmul.mubr.bf16.gmra.mxu0 %v1979
      %v2088 = vpop.f32.mrf.mxu0
      %v2089 = vadd.f32 0.0, %v2088
      %v2090 = vpop.f32.mrf.mxu0
      %v2091 = vpop.f32.mrf.mxu0
      %v2092 = vadd.f32 0.0, %v2091
      %v2093 = vpop.f32.mrf.mxu0
      %2094 = vmatprep.mubr.bf16.mxu0 0
      %2095 = vmatmul.mubr.bf16.gmra.mxu0 %v1982
      %v2096 = vpop.f32.mrf.mxu0
      %v2097 = vadd.f32 0.0, %v2096
      %v2098 = vpop.f32.mrf.mxu0
      %v2099 = vpop.f32.mrf.mxu0
      %v2100 = vadd.f32 0.0, %v2099
      %v2101 = vpop.f32.mrf.mxu0
      %2102 = vmatprep.mubr.bf16.mxu0 0
      %2103 = vmatmul.mubr.bf16.gmra.mxu0 %v1985
      %v2104 = vpop.f32.mrf.mxu0
      %v2105 = vadd.f32 0.0, %v2104
      %v2106 = vpop.f32.mrf.mxu0
      %v2107 = vpop.f32.mrf.mxu0
      %v2108 = vadd.f32 0.0, %v2107
      %v2109 = vpop.f32.mrf.mxu0
      %2110 = vmatprep.mubr.bf16.mxu0 0
      %2111 = vmatmul.mubr.bf16.gmra.mxu0 %v1988
      %v2112 = vpop.f32.mrf.mxu0
      %v2113 = vadd.f32 0.0, %v2112
      %v2114 = vpop.f32.mrf.mxu0
      %v2115 = vpop.f32.mrf.mxu0
      %v2116 = vadd.f32 0.0, %v2115
      %v2117 = vpop.f32.mrf.mxu0
      %2118 = vmatprep.mubr.bf16.mxu0 0
      %2119 = vmatmul.mubr.bf16.gmra.mxu0 %v1991
      %v2120 = vpop.f32.mrf.mxu0
      %v2121 = vadd.f32 0.0, %v2120
      %v2122 = vpop.f32.mrf.mxu0
      %v2123 = vpop.f32.mrf.mxu0
      %v2124 = vadd.f32 0.0, %v2123
      %v2125 = vpop.f32.mrf.mxu0
      %2126 = vmatprep.mubr.bf16.mxu0 0
      %2127 = vmatmul.mubr.bf16.gmra.mxu0 %v1994
      %v2128 = vpop.f32.mrf.mxu0
      %v2129 = vadd.f32 0.0, %v2128
      %v2130 = vpop.f32.mrf.mxu0
      %v2131 = vpop.f32.mrf.mxu0
      %v2132 = vadd.f32 0.0, %v2131
      %v2133 = vpop.f32.mrf.mxu0
      %2134 = vmatprep.mubr.bf16.mxu0 0
      %2135 = vmatmul.mubr.bf16.gmra.mxu0 %v1997
      %v2136 = vpop.f32.mrf.mxu0
      %v2137 = vadd.f32 0.0, %v2136
      %v2138 = vpop.f32.mrf.mxu0
      %v2139 = vpop.f32.mrf.mxu0
      %v2140 = vadd.f32 0.0, %v2139
      %v2141 = vpop.f32.mrf.mxu0
      %2142 = vmatprep.mubr.bf16.mxu0 0
      %2143 = vmatmul.mubr.bf16.gmra.mxu0 %v2000
      %v2144 = vpop.f32.mrf.mxu0
      %v2145 = vadd.f32 0.0, %v2144
      %v2146 = vpop.f32.mrf.mxu0
      %v2147 = vpop.f32.mrf.mxu0
      %v2148 = vadd.f32 0.0, %v2147
      %v2149 = vpop.f32.mrf.mxu0
      %2150 = vmatprep.mubr.bf16.mxu0 0
      %2151 = vmatmul.mubr.bf16.gmra.mxu0 %v2003
      %v2152 = vpop.f32.mrf.mxu0
      %v2153 = vadd.f32 0.0, %v2152
      %v2154 = vpop.f32.mrf.mxu0
      %v2155 = vpop.f32.mrf.mxu0
      %v2156 = vadd.f32 0.0, %v2155
      %v2157 = vpop.f32.mrf.mxu0
      %2158 = vmatprep.mubr.bf16.mxu0 0
      %2159 = vmatmul.mubr.bf16.gmra.mxu0 %v2006
      %v2160 = vpop.f32.mrf.mxu0
      %v2161 = vadd.f32 0.0, %v2160
      %v2162 = vpop.f32.mrf.mxu0
      %v2163 = vpop.f32.mrf.mxu0
      %v2164 = vadd.f32 0.0, %v2163
      %v2165 = vpop.f32.mrf.mxu0
      %2166 = vmatprep.mubr.bf16.mxu0 0
      %2167 = vmatmul.mubr.bf16.gmra.mxu0 %v2009
      %v2168 = vpop.f32.mrf.mxu0
      %v2169 = vadd.f32 0.0, %v2168
      %v2170 = vpop.f32.mrf.mxu0
      %v2171 = vpop.f32.mrf.mxu0
      %v2172 = vadd.f32 0.0, %v2171
      %v2173 = vpop.f32.mrf.mxu0
      %2174 = vdwg.mxu0
      %v2175 = vadd.f32 %v1881, %v2049
      %v2176 = vadd.f32 %v1882, %v2052
      %v2177 = vadd.f32 %v1883, %v2057
      %v2178 = vadd.f32 %v1884, %v2060
      %v2179 = vadd.f32 %v1885, %v2065
      %v2180 = vadd.f32 %v1886, %v2068
      %v2181 = vadd.f32 %v1887, %v2073
      %v2182 = vadd.f32 %v1888, %v2076
      %v2183 = vadd.f32 %v1889, %v2081
      %v2184 = vadd.f32 %v1890, %v2084
      %v2185 = vadd.f32 %v1891, %v2089
      %v2186 = vadd.f32 %v1892, %v2092
      %v2187 = vadd.f32 %v1893, %v2097
      %v2188 = vadd.f32 %v1894, %v2100
      %v2189 = vadd.f32 %v1895, %v2105
      %v2190 = vadd.f32 %v1896, %v2108
      %v2191 = vadd.f32 %v1897, %v2113
      %v2192 = vadd.f32 %v1898, %v2116
      %v2193 = vadd.f32 %v1899, %v2121
      %v2194 = vadd.f32 %v1900, %v2124
      %v2195 = vadd.f32 %v1901, %v2129
      %v2196 = vadd.f32 %v1902, %v2132
      %v2197 = vadd.f32 %v1903, %v2137
      %v2198 = vadd.f32 %v1904, %v2140
      %v2199 = vadd.f32 %v1905, %v2145
      %v2200 = vadd.f32 %v1906, %v2148
      %v2201 = vadd.f32 %v1907, %v2153
      %v2202 = vadd.f32 %v1908, %v2156
      %v2203 = vadd.f32 %v1909, %v2161
      %v2204 = vadd.f32 %v1910, %v2164
      %v2205 = vadd.f32 %v1911, %v2169
      %v2206 = vadd.f32 %v1912, %v2172
      %s2207 = scalar_lea.vmem [#allocation2], 48
      %v2208 = vld [vmem:[%s2207] sm:$0xff]
      %v2209 = vld [vmem:[%s2207 + $0x8] sm:$0xff]
      %v2210 = vld [vmem:[%s2207 + $0x18] sm:$0xff]
      %v2211 = vld [vmem:[%s2207 + $0x20] sm:$0xff]
      %v2212 = vld [vmem:[%s2207 + $0x30] sm:$0xff]
      %v2213 = vld [vmem:[%s2207 + $0x38] sm:$0xff]
      %v2214 = vld [vmem:[%s2207 + $0x48] sm:$0xff]
      %v2215 = vld [vmem:[%s2207 + $0x50] sm:$0xff]
      %v2216 = vld [vmem:[%s2207 + $0x60] sm:$0xff]
      %v2217 = vld [vmem:[%s2207 + $0x68] sm:$0xff]
      %v2218 = vld [vmem:[%s2207 + $0x78] sm:$0xff]
      %v2219 = vld [vmem:[%s2207 + $0x80] sm:$0xff]
      %v2220 = vld [vmem:[%s2207 + $0x90] sm:$0xff]
      %v2221 = vld [vmem:[%s2207 + $0x98] sm:$0xff]
      %v2222 = vld [vmem:[%s2207 + $0xa8] sm:$0xff]
      %v2223 = vld [vmem:[%s2207 + $0xb0] sm:$0xff]
      %v2224 = vld [vmem:[%s2207 + $0xc0] sm:$0xff]
      %v2225 = vld [vmem:[%s2207 + $0xc8] sm:$0xff]
      %v2226 = vld [vmem:[%s2207 + $0xd8] sm:$0xff]
      %v2227 = vld [vmem:[%s2207 + $0xe0] sm:$0xff]
      %v2228 = vld [vmem:[%s2207 + $0xf0] sm:$0xff]
      %v2229 = vld [vmem:[%s2207 + $0xf8] sm:$0xff]
      %v2230 = vld [vmem:[%s2207 + $0x108] sm:$0xff]
      %v2231 = vld [vmem:[%s2207 + $0x110] sm:$0xff]
      %v2232 = vld [vmem:[%s2207 + $0x120] sm:$0xff]
      %v2233 = vld [vmem:[%s2207 + $0x128] sm:$0xff]
      %v2234 = vld [vmem:[%s2207 + $0x138] sm:$0xff]
      %v2235 = vld [vmem:[%s2207 + $0x140] sm:$0xff]
      %v2236 = vld [vmem:[%s2207 + $0x150] sm:$0xff]
      %v2237 = vld [vmem:[%s2207 + $0x158] sm:$0xff]
      %v2238 = vld [vmem:[%s2207 + $0x168] sm:$0xff]
      %v2239 = vld [vmem:[%s2207 + $0x170] sm:$0xff]
      %v2240 = vpack.c.bf16 %v2209, %v2208
      %v2241 = vpack.c.bf16 %v2211, %v2210
      %v2242 = vpack.c.bf16 %v2213, %v2212
      %v2243 = vpack.c.bf16 %v2215, %v2214
      %v2244 = vpack.c.bf16 %v2217, %v2216
      %v2245 = vpack.c.bf16 %v2219, %v2218
      %v2246 = vpack.c.bf16 %v2221, %v2220
      %v2247 = vpack.c.bf16 %v2223, %v2222
      %v2248 = vpack.c.bf16 %v2225, %v2224
      %v2249 = vpack.c.bf16 %v2227, %v2226
      %v2250 = vpack.c.bf16 %v2229, %v2228
      %v2251 = vpack.c.bf16 %v2231, %v2230
      %v2252 = vpack.c.bf16 %v2233, %v2232
      %v2253 = vpack.c.bf16 %v2235, %v2234
      %v2254 = vpack.c.bf16 %v2237, %v2236
      %v2255 = vpack.c.bf16 %v2239, %v2238
      %s2256 = scalar_lea.vmem %s2, 12
      %v2257 = vld [vmem:[%s2256] sm:$0x3]
      %v2259 = vsel %vm327, %v2240, 0
      %v2262 = vsel %vm327, %v2241, 0
      %v2265 = vsel %vm327, %v2242, 0
      %v2268 = vsel %vm327, %v2243, 0
      %v2271 = vsel %vm327, %v2244, 0
      %v2274 = vsel %vm327, %v2245, 0
      %v2277 = vsel %vm327, %v2246, 0
      %v2280 = vsel %vm327, %v2247, 0
      %v2283 = vsel %vm327, %v2248, 0
      %v2286 = vsel %vm327, %v2249, 0
      %v2289 = vsel %vm327, %v2250, 0
      %v2292 = vsel %vm327, %v2251, 0
      %v2295 = vsel %vm327, %v2252, 0
      %v2298 = vsel %vm327, %v2253, 0
      %v2301 = vsel %vm327, %v2254, 0
      %v2304 = vsel %vm327, %v2255, 0
      %v2307 = vand.u32 %v2257, %v654
      %2309 = vmatprep.subr.bf16.mxu0 0
      %2310 = vmatpush1.bf16.msra.mxu0 0
      %2311 = vmatprep.subr.bf16.mxu0 0
      %2312 = vmatpush1.bf16.msra.mxu0 0
      %2313 = vmatprep.subr.bf16.mxu0 0
      %2314 = vmatpush1.bf16.msra.mxu0 0
      %2315 = vmatprep.subr.bf16.mxu0 0
      %2316 = vmatpush1.bf16.msra.mxu0 0
      %2317 = vmatprep.subr.bf16.mxu0 0
      %2318 = vmatpush1.bf16.msra.mxu0 0
      %2319 = vmatprep.subr.bf16.mxu0 0
      %2320 = vmatpush1.bf16.msra.mxu0 0
      %2321 = vmatprep.subr.bf16.mxu0 0
      %2322 = vmatpush1.bf16.msra.mxu0 0
      %2323 = vmatprep.subr.bf16.mxu0 0
      %2324 = vmatpush1.bf16.msra.mxu0 %v2307
      %2325 = vmatprep.subr.bf16.mxu0 0
      %2326 = vmatpush2.bf16.msra.mxu0 0
      %2327 = vmatprep.subr.bf16.mxu0 0
      %2328 = vmatpush2.bf16.msra.mxu0 0
      %2329 = vmatprep.subr.bf16.mxu0 0
      %2330 = vmatpush2.bf16.msra.mxu0 0
      %2331 = vmatprep.subr.bf16.mxu0 0
      %2332 = vmatpush2.bf16.msra.mxu0 0
      %2333 = vmatprep.subr.bf16.mxu0 0
      %2334 = vmatpush2.bf16.msra.mxu0 0
      %2335 = vmatprep.subr.bf16.mxu0 0
      %2336 = vmatpush2.bf16.msra.mxu0 0
      %2337 = vmatprep.subr.bf16.mxu0 0
      %2338 = vmatpush2.bf16.msra.mxu0 0
      %2339 = vmatprep.subr.bf16.mxu0 0
      %2340 = vmatpush2.bf16.msra.mxu0 0
      %2341 = vmatprep.mubr.bf16.mxu0 0
      %2342 = vmatmul.mubr.bf16.gmra.mxu0 %v2259
      %v2343 = vpop.f32.mrf.mxu0
      %v2344 = vadd.f32 0.0, %v2343
      %v2345 = vpop.f32.mrf.mxu0
      %v2346 = vpop.f32.mrf.mxu0
      %v2347 = vadd.f32 0.0, %v2346
      %v2348 = vpop.f32.mrf.mxu0
      %2349 = vmatprep.mubr.bf16.mxu0 0
      %2350 = vmatmul.mubr.bf16.gmra.mxu0 %v2262
      %v2351 = vpop.f32.mrf.mxu0
      %v2352 = vadd.f32 0.0, %v2351
      %v2353 = vpop.f32.mrf.mxu0
      %v2354 = vpop.f32.mrf.mxu0
      %v2355 = vadd.f32 0.0, %v2354
      %v2356 = vpop.f32.mrf.mxu0
      %2357 = vmatprep.mubr.bf16.mxu0 0
      %2358 = vmatmul.mubr.bf16.gmra.mxu0 %v2265
      %v2359 = vpop.f32.mrf.mxu0
      %v2360 = vadd.f32 0.0, %v2359
      %v2361 = vpop.f32.mrf.mxu0
      %v2362 = vpop.f32.mrf.mxu0
      %v2363 = vadd.f32 0.0, %v2362
      %v2364 = vpop.f32.mrf.mxu0
      %2365 = vmatprep.mubr.bf16.mxu0 0
      %2366 = vmatmul.mubr.bf16.gmra.mxu0 %v2268
      %v2367 = vpop.f32.mrf.mxu0
      %v2368 = vadd.f32 0.0, %v2367
      %v2369 = vpop.f32.mrf.mxu0
      %v2370 = vpop.f32.mrf.mxu0
      %v2371 = vadd.f32 0.0, %v2370
      %v2372 = vpop.f32.mrf.mxu0
      %2373 = vmatprep.mubr.bf16.mxu0 0
      %2374 = vmatmul.mubr.bf16.gmra.mxu0 %v2271
      %v2375 = vpop.f32.mrf.mxu0
      %v2376 = vadd.f32 0.0, %v2375
      %v2377 = vpop.f32.mrf.mxu0
      %v2378 = vpop.f32.mrf.mxu0
      %v2379 = vadd.f32 0.0, %v2378
      %v2380 = vpop.f32.mrf.mxu0
      %2381 = vmatprep.mubr.bf16.mxu0 0
      %2382 = vmatmul.mubr.bf16.gmra.mxu0 %v2274
      %v2383 = vpop.f32.mrf.mxu0
      %v2384 = vadd.f32 0.0, %v2383
      %v2385 = vpop.f32.mrf.mxu0
      %v2386 = vpop.f32.mrf.mxu0
      %v2387 = vadd.f32 0.0, %v2386
      %v2388 = vpop.f32.mrf.mxu0
      %2389 = vmatprep.mubr.bf16.mxu0 0
      %2390 = vmatmul.mubr.bf16.gmra.mxu0 %v2277
      %v2391 = vpop.f32.mrf.mxu0
      %v2392 = vadd.f32 0.0, %v2391
      %v2393 = vpop.f32.mrf.mxu0
      %v2394 = vpop.f32.mrf.mxu0
      %v2395 = vadd.f32 0.0, %v2394
      %v2396 = vpop.f32.mrf.mxu0
      %2397 = vmatprep.mubr.bf16.mxu0 0
      %2398 = vmatmul.mubr.bf16.gmra.mxu0 %v2280
      %v2399 = vpop.f32.mrf.mxu0
      %v2400 = vadd.f32 0.0, %v2399
      %v2401 = vpop.f32.mrf.mxu0
      %v2402 = vpop.f32.mrf.mxu0
      %v2403 = vadd.f32 0.0, %v2402
      %v2404 = vpop.f32.mrf.mxu0
      %2405 = vmatprep.mubr.bf16.mxu0 0
      %2406 = vmatmul.mubr.bf16.gmra.mxu0 %v2283
      %v2407 = vpop.f32.mrf.mxu0
      %v2408 = vadd.f32 0.0, %v2407
      %v2409 = vpop.f32.mrf.mxu0
      %v2410 = vpop.f32.mrf.mxu0
      %v2411 = vadd.f32 0.0, %v2410
      %v2412 = vpop.f32.mrf.mxu0
      %2413 = vmatprep.mubr.bf16.mxu0 0
      %2414 = vmatmul.mubr.bf16.gmra.mxu0 %v2286
      %v2415 = vpop.f32.mrf.mxu0
      %v2416 = vadd.f32 0.0, %v2415
      %v2417 = vpop.f32.mrf.mxu0
      %v2418 = vpop.f32.mrf.mxu0
      %v2419 = vadd.f32 0.0, %v2418
      %v2420 = vpop.f32.mrf.mxu0
      %2421 = vmatprep.mubr.bf16.mxu0 0
      %2422 = vmatmul.mubr.bf16.gmra.mxu0 %v2289
      %v2423 = vpop.f32.mrf.mxu0
      %v2424 = vadd.f32 0.0, %v2423
      %v2425 = vpop.f32.mrf.mxu0
      %v2426 = vpop.f32.mrf.mxu0
      %v2427 = vadd.f32 0.0, %v2426
      %v2428 = vpop.f32.mrf.mxu0
      %2429 = vmatprep.mubr.bf16.mxu0 0
      %2430 = vmatmul.mubr.bf16.gmra.mxu0 %v2292
      %v2431 = vpop.f32.mrf.mxu0
      %v2432 = vadd.f32 0.0, %v2431
      %v2433 = vpop.f32.mrf.mxu0
      %v2434 = vpop.f32.mrf.mxu0
      %v2435 = vadd.f32 0.0, %v2434
      %v2436 = vpop.f32.mrf.mxu0
      %2437 = vmatprep.mubr.bf16.mxu0 0
      %2438 = vmatmul.mubr.bf16.gmra.mxu0 %v2295
      %v2439 = vpop.f32.mrf.mxu0
      %v2440 = vadd.f32 0.0, %v2439
      %v2441 = vpop.f32.mrf.mxu0
      %v2442 = vpop.f32.mrf.mxu0
      %v2443 = vadd.f32 0.0, %v2442
      %v2444 = vpop.f32.mrf.mxu0
      %2445 = vmatprep.mubr.bf16.mxu0 0
      %2446 = vmatmul.mubr.bf16.gmra.mxu0 %v2298
      %v2447 = vpop.f32.mrf.mxu0
      %v2448 = vadd.f32 0.0, %v2447
      %v2449 = vpop.f32.mrf.mxu0
      %v2450 = vpop.f32.mrf.mxu0
      %v2451 = vadd.f32 0.0, %v2450
      %v2452 = vpop.f32.mrf.mxu0
      %2453 = vmatprep.mubr.bf16.mxu0 0
      %2454 = vmatmul.mubr.bf16.gmra.mxu0 %v2301
      %v2455 = vpop.f32.mrf.mxu0
      %v2456 = vadd.f32 0.0, %v2455
      %v2457 = vpop.f32.mrf.mxu0
      %v2458 = vpop.f32.mrf.mxu0
      %v2459 = vadd.f32 0.0, %v2458
      %v2460 = vpop.f32.mrf.mxu0
      %2461 = vmatprep.mubr.bf16.mxu0 0
      %2462 = vmatmul.mubr.bf16.gmra.mxu0 %v2304
      %v2463 = vpop.f32.mrf.mxu0
      %v2464 = vadd.f32 0.0, %v2463
      %v2465 = vpop.f32.mrf.mxu0
      %v2466 = vpop.f32.mrf.mxu0
      %v2467 = vadd.f32 0.0, %v2466
      %v2468 = vpop.f32.mrf.mxu0
      %2469 = vdwg.mxu0
      %v2470 = vadd.f32 %v2175, %v2344
      %v2471 = vadd.f32 %v2176, %v2347
      %v2472 = vadd.f32 %v2177, %v2352
      %v2473 = vadd.f32 %v2178, %v2355
      %v2474 = vadd.f32 %v2179, %v2360
      %v2475 = vadd.f32 %v2180, %v2363
      %v2476 = vadd.f32 %v2181, %v2368
      %v2477 = vadd.f32 %v2182, %v2371
      %v2478 = vadd.f32 %v2183, %v2376
      %v2479 = vadd.f32 %v2184, %v2379
      %v2480 = vadd.f32 %v2185, %v2384
      %v2481 = vadd.f32 %v2186, %v2387
      %v2482 = vadd.f32 %v2187, %v2392
      %v2483 = vadd.f32 %v2188, %v2395
      %v2484 = vadd.f32 %v2189, %v2400
      %v2485 = vadd.f32 %v2190, %v2403
      %v2486 = vadd.f32 %v2191, %v2408
      %v2487 = vadd.f32 %v2192, %v2411
      %v2488 = vadd.f32 %v2193, %v2416
      %v2489 = vadd.f32 %v2194, %v2419
      %v2490 = vadd.f32 %v2195, %v2424
      %v2491 = vadd.f32 %v2196, %v2427
      %v2492 = vadd.f32 %v2197, %v2432
      %v2493 = vadd.f32 %v2198, %v2435
      %v2494 = vadd.f32 %v2199, %v2440
      %v2495 = vadd.f32 %v2200, %v2443
      %v2496 = vadd.f32 %v2201, %v2448
      %v2497 = vadd.f32 %v2202, %v2451
      %v2498 = vadd.f32 %v2203, %v2456
      %v2499 = vadd.f32 %v2204, %v2459
      %v2500 = vadd.f32 %v2205, %v2464
      %v2501 = vadd.f32 %v2206, %v2467
      %v2502 = vld [vmem:[%s2207 + $0x1] sm:$0xff]
      %v2503 = vld [vmem:[%s2207 + $0x9] sm:$0xff]
      %v2504 = vld [vmem:[%s2207 + $0x19] sm:$0xff]
      %v2505 = vld [vmem:[%s2207 + $0x21] sm:$0xff]
      %v2506 = vld [vmem:[%s2207 + $0x31] sm:$0xff]
      %v2507 = vld [vmem:[%s2207 + $0x39] sm:$0xff]
      %v2508 = vld [vmem:[%s2207 + $0x49] sm:$0xff]
      %v2509 = vld [vmem:[%s2207 + $0x51] sm:$0xff]
      %v2510 = vld [vmem:[%s2207 + $0x61] sm:$0xff]
      %v2511 = vld [vmem:[%s2207 + $0x69] sm:$0xff]
      %v2512 = vld [vmem:[%s2207 + $0x79] sm:$0xff]
      %v2513 = vld [vmem:[%s2207 + $0x81] sm:$0xff]
      %v2514 = vld [vmem:[%s2207 + $0x91] sm:$0xff]
      %v2515 = vld [vmem:[%s2207 + $0x99] sm:$0xff]
      %v2516 = vld [vmem:[%s2207 + $0xa9] sm:$0xff]
      %v2517 = vld [vmem:[%s2207 + $0xb1] sm:$0xff]
      %v2518 = vld [vmem:[%s2207 + $0xc1] sm:$0xff]
      %v2519 = vld [vmem:[%s2207 + $0xc9] sm:$0xff]
      %v2520 = vld [vmem:[%s2207 + $0xd9] sm:$0xff]
      %v2521 = vld [vmem:[%s2207 + $0xe1] sm:$0xff]
      %v2522 = vld [vmem:[%s2207 + $0xf1] sm:$0xff]
      %v2523 = vld [vmem:[%s2207 + $0xf9] sm:$0xff]
      %v2524 = vld [vmem:[%s2207 + $0x109] sm:$0xff]
      %v2525 = vld [vmem:[%s2207 + $0x111] sm:$0xff]
      %v2526 = vld [vmem:[%s2207 + $0x121] sm:$0xff]
      %v2527 = vld [vmem:[%s2207 + $0x129] sm:$0xff]
      %v2528 = vld [vmem:[%s2207 + $0x139] sm:$0xff]
      %v2529 = vld [vmem:[%s2207 + $0x141] sm:$0xff]
      %v2530 = vld [vmem:[%s2207 + $0x151] sm:$0xff]
      %v2531 = vld [vmem:[%s2207 + $0x159] sm:$0xff]
      %v2532 = vld [vmem:[%s2207 + $0x169] sm:$0xff]
      %v2533 = vld [vmem:[%s2207 + $0x171] sm:$0xff]
      %v2534 = vpack.c.bf16 %v2503, %v2502
      %v2535 = vpack.c.bf16 %v2505, %v2504
      %v2536 = vpack.c.bf16 %v2507, %v2506
      %v2537 = vpack.c.bf16 %v2509, %v2508
      %v2538 = vpack.c.bf16 %v2511, %v2510
      %v2539 = vpack.c.bf16 %v2513, %v2512
      %v2540 = vpack.c.bf16 %v2515, %v2514
      %v2541 = vpack.c.bf16 %v2517, %v2516
      %v2542 = vpack.c.bf16 %v2519, %v2518
      %v2543 = vpack.c.bf16 %v2521, %v2520
      %v2544 = vpack.c.bf16 %v2523, %v2522
      %v2545 = vpack.c.bf16 %v2525, %v2524
      %v2546 = vpack.c.bf16 %v2527, %v2526
      %v2547 = vpack.c.bf16 %v2529, %v2528
      %v2548 = vpack.c.bf16 %v2531, %v2530
      %v2549 = vpack.c.bf16 %v2533, %v2532
      %s2550 = scalar_lea.vmem %s2, 14
      %v2551 = vld [vmem:[%s2550] sm:$0x3]
      %v2553 = vsel %vm327, %v2534, 0
      %v2556 = vsel %vm327, %v2535, 0
      %v2559 = vsel %vm327, %v2536, 0
      %v2562 = vsel %vm327, %v2537, 0
      %v2565 = vsel %vm327, %v2538, 0
      %v2568 = vsel %vm327, %v2539, 0
      %v2571 = vsel %vm327, %v2540, 0
      %v2574 = vsel %vm327, %v2541, 0
      %v2577 = vsel %vm327, %v2542, 0
      %v2580 = vsel %vm327, %v2543, 0
      %v2583 = vsel %vm327, %v2544, 0
      %v2586 = vsel %vm327, %v2545, 0
      %v2589 = vsel %vm327, %v2546, 0
      %v2592 = vsel %vm327, %v2547, 0
      %v2595 = vsel %vm327, %v2548, 0
      %v2598 = vsel %vm327, %v2549, 0
      %v2601 = vand.u32 %v2551, %v654
      %2603 = vmatprep.subr.bf16.mxu0 0
      %2604 = vmatpush1.bf16.msra.mxu0 0
      %2605 = vmatprep.subr.bf16.mxu0 0
      %2606 = vmatpush1.bf16.msra.mxu0 0
      %2607 = vmatprep.subr.bf16.mxu0 0
      %2608 = vmatpush1.bf16.msra.mxu0 0
      %2609 = vmatprep.subr.bf16.mxu0 0
      %2610 = vmatpush1.bf16.msra.mxu0 0
      %2611 = vmatprep.subr.bf16.mxu0 0
      %2612 = vmatpush1.bf16.msra.mxu0 0
      %2613 = vmatprep.subr.bf16.mxu0 0
      %2614 = vmatpush1.bf16.msra.mxu0 0
      %2615 = vmatprep.subr.bf16.mxu0 0
      %2616 = vmatpush1.bf16.msra.mxu0 0
      %2617 = vmatprep.subr.bf16.mxu0 0
      %2618 = vmatpush1.bf16.msra.mxu0 %v2601
      %2619 = vmatprep.subr.bf16.mxu0 0
      %2620 = vmatpush2.bf16.msra.mxu0 0
      %2621 = vmatprep.subr.bf16.mxu0 0
      %2622 = vmatpush2.bf16.msra.mxu0 0
      %2623 = vmatprep.subr.bf16.mxu0 0
      %2624 = vmatpush2.bf16.msra.mxu0 0
      %2625 = vmatprep.subr.bf16.mxu0 0
      %2626 = vmatpush2.bf16.msra.mxu0 0
      %2627 = vmatprep.subr.bf16.mxu0 0
      %2628 = vmatpush2.bf16.msra.mxu0 0
      %2629 = vmatprep.subr.bf16.mxu0 0
      %2630 = vmatpush2.bf16.msra.mxu0 0
      %2631 = vmatprep.subr.bf16.mxu0 0
      %2632 = vmatpush2.bf16.msra.mxu0 0
      %2633 = vmatprep.subr.bf16.mxu0 0
      %2634 = vmatpush2.bf16.msra.mxu0 0
      %2635 = vmatprep.mubr.bf16.mxu0 0
      %2636 = vmatmul.mubr.bf16.gmra.mxu0 %v2553
      %v2637 = vpop.f32.mrf.mxu0
      %v2638 = vadd.f32 0.0, %v2637
      %v2639 = vpop.f32.mrf.mxu0
      %v2640 = vpop.f32.mrf.mxu0
      %v2641 = vadd.f32 0.0, %v2640
      %v2642 = vpop.f32.mrf.mxu0
      %2643 = vmatprep.mubr.bf16.mxu0 0
      %2644 = vmatmul.mubr.bf16.gmra.mxu0 %v2556
      %v2645 = vpop.f32.mrf.mxu0
      %v2646 = vadd.f32 0.0, %v2645
      %v2647 = vpop.f32.mrf.mxu0
      %v2648 = vpop.f32.mrf.mxu0
      %v2649 = vadd.f32 0.0, %v2648
      %v2650 = vpop.f32.mrf.mxu0
      %2651 = vmatprep.mubr.bf16.mxu0 0
      %2652 = vmatmul.mubr.bf16.gmra.mxu0 %v2559
      %v2653 = vpop.f32.mrf.mxu0
      %v2654 = vadd.f32 0.0, %v2653
      %v2655 = vpop.f32.mrf.mxu0
      %v2656 = vpop.f32.mrf.mxu0
      %v2657 = vadd.f32 0.0, %v2656
      %v2658 = vpop.f32.mrf.mxu0
      %2659 = vmatprep.mubr.bf16.mxu0 0
      %2660 = vmatmul.mubr.bf16.gmra.mxu0 %v2562
      %v2661 = vpop.f32.mrf.mxu0
      %v2662 = vadd.f32 0.0, %v2661
      %v2663 = vpop.f32.mrf.mxu0
      %v2664 = vpop.f32.mrf.mxu0
      %v2665 = vadd.f32 0.0, %v2664
      %v2666 = vpop.f32.mrf.mxu0
      %2667 = vmatprep.mubr.bf16.mxu0 0
      %2668 = vmatmul.mubr.bf16.gmra.mxu0 %v2565
      %v2669 = vpop.f32.mrf.mxu0
      %v2670 = vadd.f32 0.0, %v2669
      %v2671 = vpop.f32.mrf.mxu0
      %v2672 = vpop.f32.mrf.mxu0
      %v2673 = vadd.f32 0.0, %v2672
      %v2674 = vpop.f32.mrf.mxu0
      %2675 = vmatprep.mubr.bf16.mxu0 0
      %2676 = vmatmul.mubr.bf16.gmra.mxu0 %v2568
      %v2677 = vpop.f32.mrf.mxu0
      %v2678 = vadd.f32 0.0, %v2677
      %v2679 = vpop.f32.mrf.mxu0
      %v2680 = vpop.f32.mrf.mxu0
      %v2681 = vadd.f32 0.0, %v2680
      %v2682 = vpop.f32.mrf.mxu0
      %2683 = vmatprep.mubr.bf16.mxu0 0
      %2684 = vmatmul.mubr.bf16.gmra.mxu0 %v2571
      %v2685 = vpop.f32.mrf.mxu0
      %v2686 = vadd.f32 0.0, %v2685
      %v2687 = vpop.f32.mrf.mxu0
      %v2688 = vpop.f32.mrf.mxu0
      %v2689 = vadd.f32 0.0, %v2688
      %v2690 = vpop.f32.mrf.mxu0
      %2691 = vmatprep.mubr.bf16.mxu0 0
      %2692 = vmatmul.mubr.bf16.gmra.mxu0 %v2574
      %v2693 = vpop.f32.mrf.mxu0
      %v2694 = vadd.f32 0.0, %v2693
      %v2695 = vpop.f32.mrf.mxu0
      %v2696 = vpop.f32.mrf.mxu0
      %v2697 = vadd.f32 0.0, %v2696
      %v2698 = vpop.f32.mrf.mxu0
      %2699 = vmatprep.mubr.bf16.mxu0 0
      %2700 = vmatmul.mubr.bf16.gmra.mxu0 %v2577
      %v2701 = vpop.f32.mrf.mxu0
      %v2702 = vadd.f32 0.0, %v2701
      %v2703 = vpop.f32.mrf.mxu0
      %v2704 = vpop.f32.mrf.mxu0
      %v2705 = vadd.f32 0.0, %v2704
      %v2706 = vpop.f32.mrf.mxu0
      %2707 = vmatprep.mubr.bf16.mxu0 0
      %2708 = vmatmul.mubr.bf16.gmra.mxu0 %v2580
      %v2709 = vpop.f32.mrf.mxu0
      %v2710 = vadd.f32 0.0, %v2709
      %v2711 = vpop.f32.mrf.mxu0
      %v2712 = vpop.f32.mrf.mxu0
      %v2713 = vadd.f32 0.0, %v2712
      %v2714 = vpop.f32.mrf.mxu0
      %2715 = vmatprep.mubr.bf16.mxu0 0
      %2716 = vmatmul.mubr.bf16.gmra.mxu0 %v2583
      %v2717 = vpop.f32.mrf.mxu0
      %v2718 = vadd.f32 0.0, %v2717
      %v2719 = vpop.f32.mrf.mxu0
      %v2720 = vpop.f32.mrf.mxu0
      %v2721 = vadd.f32 0.0, %v2720
      %v2722 = vpop.f32.mrf.mxu0
      %2723 = vmatprep.mubr.bf16.mxu0 0
      %2724 = vmatmul.mubr.bf16.gmra.mxu0 %v2586
      %v2725 = vpop.f32.mrf.mxu0
      %v2726 = vadd.f32 0.0, %v2725
      %v2727 = vpop.f32.mrf.mxu0
      %v2728 = vpop.f32.mrf.mxu0
      %v2729 = vadd.f32 0.0, %v2728
      %v2730 = vpop.f32.mrf.mxu0
      %2731 = vmatprep.mubr.bf16.mxu0 0
      %2732 = vmatmul.mubr.bf16.gmra.mxu0 %v2589
      %v2733 = vpop.f32.mrf.mxu0
      %v2734 = vadd.f32 0.0, %v2733
      %v2735 = vpop.f32.mrf.mxu0
      %v2736 = vpop.f32.mrf.mxu0
      %v2737 = vadd.f32 0.0, %v2736
      %v2738 = vpop.f32.mrf.mxu0
      %2739 = vmatprep.mubr.bf16.mxu0 0
      %2740 = vmatmul.mubr.bf16.gmra.mxu0 %v2592
      %v2741 = vpop.f32.mrf.mxu0
      %v2742 = vadd.f32 0.0, %v2741
      %v2743 = vpop.f32.mrf.mxu0
      %v2744 = vpop.f32.mrf.mxu0
      %v2745 = vadd.f32 0.0, %v2744
      %v2746 = vpop.f32.mrf.mxu0
      %2747 = vmatprep.mubr.bf16.mxu0 0
      %2748 = vmatmul.mubr.bf16.gmra.mxu0 %v2595
      %v2749 = vpop.f32.mrf.mxu0
      %v2750 = vadd.f32 0.0, %v2749
      %v2751 = vpop.f32.mrf.mxu0
      %v2752 = vpop.f32.mrf.mxu0
      %v2753 = vadd.f32 0.0, %v2752
      %v2754 = vpop.f32.mrf.mxu0
      %2755 = vmatprep.mubr.bf16.mxu0 0
      %2756 = vmatmul.mubr.bf16.gmra.mxu0 %v2598
      %v2757 = vpop.f32.mrf.mxu0
      %v2758 = vadd.f32 0.0, %v2757
      %v2759 = vpop.f32.mrf.mxu0
      %v2760 = vpop.f32.mrf.mxu0
      %v2761 = vadd.f32 0.0, %v2760
      %v2762 = vpop.f32.mrf.mxu0
      %2763 = vdwg.mxu0
      %v2764 = vadd.f32 %v2470, %v2638
      %v2765 = vadd.f32 %v2471, %v2641
      %v2766 = vadd.f32 %v2472, %v2646
      %v2767 = vadd.f32 %v2473, %v2649
      %v2768 = vadd.f32 %v2474, %v2654
      %v2769 = vadd.f32 %v2475, %v2657
      %v2770 = vadd.f32 %v2476, %v2662
      %v2771 = vadd.f32 %v2477, %v2665
      %v2772 = vadd.f32 %v2478, %v2670
      %v2773 = vadd.f32 %v2479, %v2673
      %v2774 = vadd.f32 %v2480, %v2678
      %v2775 = vadd.f32 %v2481, %v2681
      %v2776 = vadd.f32 %v2482, %v2686
      %v2777 = vadd.f32 %v2483, %v2689
      %v2778 = vadd.f32 %v2484, %v2694
      %v2779 = vadd.f32 %v2485, %v2697
      %v2780 = vadd.f32 %v2486, %v2702
      %v2781 = vadd.f32 %v2487, %v2705
      %v2782 = vadd.f32 %v2488, %v2710
      %v2783 = vadd.f32 %v2489, %v2713
      %v2784 = vadd.f32 %v2490, %v2718
      %v2785 = vadd.f32 %v2491, %v2721
      %v2786 = vadd.f32 %v2492, %v2726
      %v2787 = vadd.f32 %v2493, %v2729
      %v2788 = vadd.f32 %v2494, %v2734
      %v2789 = vadd.f32 %v2495, %v2737
      %v2790 = vadd.f32 %v2496, %v2742
      %v2791 = vadd.f32 %v2497, %v2745
      %v2792 = vadd.f32 %v2498, %v2750
      %v2793 = vadd.f32 %v2499, %v2753
      %v2794 = vadd.f32 %v2500, %v2758
      %v2795 = vadd.f32 %v2501, %v2761
      %v2796 = vld [vmem:[%s2207 + $0x2] sm:$0xff]
      %v2797 = vld [vmem:[%s2207 + $0xa] sm:$0xff]
      %v2798 = vld [vmem:[%s2207 + $0x1a] sm:$0xff]
      %v2799 = vld [vmem:[%s2207 + $0x22] sm:$0xff]
      %v2800 = vld [vmem:[%s2207 + $0x32] sm:$0xff]
      %v2801 = vld [vmem:[%s2207 + $0x3a] sm:$0xff]
      %v2802 = vld [vmem:[%s2207 + $0x4a] sm:$0xff]
      %v2803 = vld [vmem:[%s2207 + $0x52] sm:$0xff]
      %v2804 = vld [vmem:[%s2207 + $0x62] sm:$0xff]
      %v2805 = vld [vmem:[%s2207 + $0x6a] sm:$0xff]
      %v2806 = vld [vmem:[%s2207 + $0x7a] sm:$0xff]
      %v2807 = vld [vmem:[%s2207 + $0x82] sm:$0xff]
      %v2808 = vld [vmem:[%s2207 + $0x92] sm:$0xff]
      %v2809 = vld [vmem:[%s2207 + $0x9a] sm:$0xff]
      %v2810 = vld [vmem:[%s2207 + $0xaa] sm:$0xff]
      %v2811 = vld [vmem:[%s2207 + $0xb2] sm:$0xff]
      %v2812 = vld [vmem:[%s2207 + $0xc2] sm:$0xff]
      %v2813 = vld [vmem:[%s2207 + $0xca] sm:$0xff]
      %v2814 = vld [vmem:[%s2207 + $0xda] sm:$0xff]
      %v2815 = vld [vmem:[%s2207 + $0xe2] sm:$0xff]
      %v2816 = vld [vmem:[%s2207 + $0xf2] sm:$0xff]
      %v2817 = vld [vmem:[%s2207 + $0xfa] sm:$0xff]
      %v2818 = vld [vmem:[%s2207 + $0x10a] sm:$0xff]
      %v2819 = vld [vmem:[%s2207 + $0x112] sm:$0xff]
      %v2820 = vld [vmem:[%s2207 + $0x122] sm:$0xff]
      %v2821 = vld [vmem:[%s2207 + $0x12a] sm:$0xff]
      %v2822 = vld [vmem:[%s2207 + $0x13a] sm:$0xff]
      %v2823 = vld [vmem:[%s2207 + $0x142] sm:$0xff]
      %v2824 = vld [vmem:[%s2207 + $0x152] sm:$0xff]
      %v2825 = vld [vmem:[%s2207 + $0x15a] sm:$0xff]
      %v2826 = vld [vmem:[%s2207 + $0x16a] sm:$0xff]
      %v2827 = vld [vmem:[%s2207 + $0x172] sm:$0xff]
      %v2828 = vpack.c.bf16 %v2797, %v2796
      %v2829 = vpack.c.bf16 %v2799, %v2798
      %v2830 = vpack.c.bf16 %v2801, %v2800
      %v2831 = vpack.c.bf16 %v2803, %v2802
      %v2832 = vpack.c.bf16 %v2805, %v2804
      %v2833 = vpack.c.bf16 %v2807, %v2806
      %v2834 = vpack.c.bf16 %v2809, %v2808
      %v2835 = vpack.c.bf16 %v2811, %v2810
      %v2836 = vpack.c.bf16 %v2813, %v2812
      %v2837 = vpack.c.bf16 %v2815, %v2814
      %v2838 = vpack.c.bf16 %v2817, %v2816
      %v2839 = vpack.c.bf16 %v2819, %v2818
      %v2840 = vpack.c.bf16 %v2821, %v2820
      %v2841 = vpack.c.bf16 %v2823, %v2822
      %v2842 = vpack.c.bf16 %v2825, %v2824
      %v2843 = vpack.c.bf16 %v2827, %v2826
      %s2844 = scalar_lea.vmem %s2, 16
      %v2845 = vld [vmem:[%s2844] sm:$0x3]
      %v2847 = vsel %vm327, %v2828, 0
      %v2850 = vsel %vm327, %v2829, 0
      %v2853 = vsel %vm327, %v2830, 0
      %v2856 = vsel %vm327, %v2831, 0
      %v2859 = vsel %vm327, %v2832, 0
      %v2862 = vsel %vm327, %v2833, 0
      %v2865 = vsel %vm327, %v2834, 0
      %v2868 = vsel %vm327, %v2835, 0
      %v2871 = vsel %vm327, %v2836, 0
      %v2874 = vsel %vm327, %v2837, 0
      %v2877 = vsel %vm327, %v2838, 0
      %v2880 = vsel %vm327, %v2839, 0
      %v2883 = vsel %vm327, %v2840, 0
      %v2886 = vsel %vm327, %v2841, 0
      %v2889 = vsel %vm327, %v2842, 0
      %v2892 = vsel %vm327, %v2843, 0
      %v2895 = vand.u32 %v2845, %v654
      %2897 = vmatprep.subr.bf16.mxu0 0
      %2898 = vmatpush1.bf16.msra.mxu0 0
      %2899 = vmatprep.subr.bf16.mxu0 0
      %2900 = vmatpush1.bf16.msra.mxu0 0
      %2901 = vmatprep.subr.bf16.mxu0 0
      %2902 = vmatpush1.bf16.msra.mxu0 0
      %2903 = vmatprep.subr.bf16.mxu0 0
      %2904 = vmatpush1.bf16.msra.mxu0 0
      %2905 = vmatprep.subr.bf16.mxu0 0
      %2906 = vmatpush1.bf16.msra.mxu0 0
      %2907 = vmatprep.subr.bf16.mxu0 0
      %2908 = vmatpush1.bf16.msra.mxu0 0
      %2909 = vmatprep.subr.bf16.mxu0 0
      %2910 = vmatpush1.bf16.msra.mxu0 0
      %2911 = vmatprep.subr.bf16.mxu0 0
      %2912 = vmatpush1.bf16.msra.mxu0 %v2895
      %2913 = vmatprep.subr.bf16.mxu0 0
      %2914 = vmatpush2.bf16.msra.mxu0 0
      %2915 = vmatprep.subr.bf16.mxu0 0
      %2916 = vmatpush2.bf16.msra.mxu0 0
      %2917 = vmatprep.subr.bf16.mxu0 0
      %2918 = vmatpush2.bf16.msra.mxu0 0
      %2919 = vmatprep.subr.bf16.mxu0 0
      %2920 = vmatpush2.bf16.msra.mxu0 0
      %2921 = vmatprep.subr.bf16.mxu0 0
      %2922 = vmatpush2.bf16.msra.mxu0 0
      %2923 = vmatprep.subr.bf16.mxu0 0
      %2924 = vmatpush2.bf16.msra.mxu0 0
      %2925 = vmatprep.subr.bf16.mxu0 0
      %2926 = vmatpush2.bf16.msra.mxu0 0
      %2927 = vmatprep.subr.bf16.mxu0 0
      %2928 = vmatpush2.bf16.msra.mxu0 0
      %2929 = vmatprep.mubr.bf16.mxu0 0
      %2930 = vmatmul.mubr.bf16.gmra.mxu0 %v2847
      %v2931 = vpop.f32.mrf.mxu0
      %v2932 = vadd.f32 0.0, %v2931
      %v2933 = vpop.f32.mrf.mxu0
      %v2934 = vpop.f32.mrf.mxu0
      %v2935 = vadd.f32 0.0, %v2934
      %v2936 = vpop.f32.mrf.mxu0
      %2937 = vmatprep.mubr.bf16.mxu0 0
      %2938 = vmatmul.mubr.bf16.gmra.mxu0 %v2850
      %v2939 = vpop.f32.mrf.mxu0
      %v2940 = vadd.f32 0.0, %v2939
      %v2941 = vpop.f32.mrf.mxu0
      %v2942 = vpop.f32.mrf.mxu0
      %v2943 = vadd.f32 0.0, %v2942
      %v2944 = vpop.f32.mrf.mxu0
      %2945 = vmatprep.mubr.bf16.mxu0 0
      %2946 = vmatmul.mubr.bf16.gmra.mxu0 %v2853
      %v2947 = vpop.f32.mrf.mxu0
      %v2948 = vadd.f32 0.0, %v2947
      %v2949 = vpop.f32.mrf.mxu0
      %v2950 = vpop.f32.mrf.mxu0
      %v2951 = vadd.f32 0.0, %v2950
      %v2952 = vpop.f32.mrf.mxu0
      %2953 = vmatprep.mubr.bf16.mxu0 0
      %2954 = vmatmul.mubr.bf16.gmra.mxu0 %v2856
      %v2955 = vpop.f32.mrf.mxu0
      %v2956 = vadd.f32 0.0, %v2955
      %v2957 = vpop.f32.mrf.mxu0
      %v2958 = vpop.f32.mrf.mxu0
      %v2959 = vadd.f32 0.0, %v2958
      %v2960 = vpop.f32.mrf.mxu0
      %2961 = vmatprep.mubr.bf16.mxu0 0
      %2962 = vmatmul.mubr.bf16.gmra.mxu0 %v2859
      %v2963 = vpop.f32.mrf.mxu0
      %v2964 = vadd.f32 0.0, %v2963
      %v2965 = vpop.f32.mrf.mxu0
      %v2966 = vpop.f32.mrf.mxu0
      %v2967 = vadd.f32 0.0, %v2966
      %v2968 = vpop.f32.mrf.mxu0
      %2969 = vmatprep.mubr.bf16.mxu0 0
      %2970 = vmatmul.mubr.bf16.gmra.mxu0 %v2862
      %v2971 = vpop.f32.mrf.mxu0
      %v2972 = vadd.f32 0.0, %v2971
      %v2973 = vpop.f32.mrf.mxu0
      %v2974 = vpop.f32.mrf.mxu0
      %v2975 = vadd.f32 0.0, %v2974
      %v2976 = vpop.f32.mrf.mxu0
      %2977 = vmatprep.mubr.bf16.mxu0 0
      %2978 = vmatmul.mubr.bf16.gmra.mxu0 %v2865
      %v2979 = vpop.f32.mrf.mxu0
      %v2980 = vadd.f32 0.0, %v2979
      %v2981 = vpop.f32.mrf.mxu0
      %v2982 = vpop.f32.mrf.mxu0
      %v2983 = vadd.f32 0.0, %v2982
      %v2984 = vpop.f32.mrf.mxu0
      %2985 = vmatprep.mubr.bf16.mxu0 0
      %2986 = vmatmul.mubr.bf16.gmra.mxu0 %v2868
      %v2987 = vpop.f32.mrf.mxu0
      %v2988 = vadd.f32 0.0, %v2987
      %v2989 = vpop.f32.mrf.mxu0
      %v2990 = vpop.f32.mrf.mxu0
      %v2991 = vadd.f32 0.0, %v2990
      %v2992 = vpop.f32.mrf.mxu0
      %2993 = vmatprep.mubr.bf16.mxu0 0
      %2994 = vmatmul.mubr.bf16.gmra.mxu0 %v2871
      %v2995 = vpop.f32.mrf.mxu0
      %v2996 = vadd.f32 0.0, %v2995
      %v2997 = vpop.f32.mrf.mxu0
      %v2998 = vpop.f32.mrf.mxu0
      %v2999 = vadd.f32 0.0, %v2998
      %v3000 = vpop.f32.mrf.mxu0
      %3001 = vmatprep.mubr.bf16.mxu0 0
      %3002 = vmatmul.mubr.bf16.gmra.mxu0 %v2874
      %v3003 = vpop.f32.mrf.mxu0
      %v3004 = vadd.f32 0.0, %v3003
      %v3005 = vpop.f32.mrf.mxu0
      %v3006 = vpop.f32.mrf.mxu0
      %v3007 = vadd.f32 0.0, %v3006
      %v3008 = vpop.f32.mrf.mxu0
      %3009 = vmatprep.mubr.bf16.mxu0 0
      %3010 = vmatmul.mubr.bf16.gmra.mxu0 %v2877
      %v3011 = vpop.f32.mrf.mxu0
      %v3012 = vadd.f32 0.0, %v3011
      %v3013 = vpop.f32.mrf.mxu0
      %v3014 = vpop.f32.mrf.mxu0
      %v3015 = vadd.f32 0.0, %v3014
      %v3016 = vpop.f32.mrf.mxu0
      %3017 = vmatprep.mubr.bf16.mxu0 0
      %3018 = vmatmul.mubr.bf16.gmra.mxu0 %v2880
      %v3019 = vpop.f32.mrf.mxu0
      %v3020 = vadd.f32 0.0, %v3019
      %v3021 = vpop.f32.mrf.mxu0
      %v3022 = vpop.f32.mrf.mxu0
      %v3023 = vadd.f32 0.0, %v3022
      %v3024 = vpop.f32.mrf.mxu0
      %3025 = vmatprep.mubr.bf16.mxu0 0
      %3026 = vmatmul.mubr.bf16.gmra.mxu0 %v2883
      %v3027 = vpop.f32.mrf.mxu0
      %v3028 = vadd.f32 0.0, %v3027
      %v3029 = vpop.f32.mrf.mxu0
      %v3030 = vpop.f32.mrf.mxu0
      %v3031 = vadd.f32 0.0, %v3030
      %v3032 = vpop.f32.mrf.mxu0
      %3033 = vmatprep.mubr.bf16.mxu0 0
      %3034 = vmatmul.mubr.bf16.gmra.mxu0 %v2886
      %v3035 = vpop.f32.mrf.mxu0
      %v3036 = vadd.f32 0.0, %v3035
      %v3037 = vpop.f32.mrf.mxu0
      %v3038 = vpop.f32.mrf.mxu0
      %v3039 = vadd.f32 0.0, %v3038
      %v3040 = vpop.f32.mrf.mxu0
      %3041 = vmatprep.mubr.bf16.mxu0 0
      %3042 = vmatmul.mubr.bf16.gmra.mxu0 %v2889
      %v3043 = vpop.f32.mrf.mxu0
      %v3044 = vadd.f32 0.0, %v3043
      %v3045 = vpop.f32.mrf.mxu0
      %v3046 = vpop.f32.mrf.mxu0
      %v3047 = vadd.f32 0.0, %v3046
      %v3048 = vpop.f32.mrf.mxu0
      %3049 = vmatprep.mubr.bf16.mxu0 0
      %3050 = vmatmul.mubr.bf16.gmra.mxu0 %v2892
      %v3051 = vpop.f32.mrf.mxu0
      %v3052 = vadd.f32 0.0, %v3051
      %v3053 = vpop.f32.mrf.mxu0
      %v3054 = vpop.f32.mrf.mxu0
      %v3055 = vadd.f32 0.0, %v3054
      %v3056 = vpop.f32.mrf.mxu0
      %3057 = vdwg.mxu0
      %v3058 = vadd.f32 %v2764, %v2932
      %v3059 = vadd.f32 %v2765, %v2935
      %v3060 = vadd.f32 %v2766, %v2940
      %v3061 = vadd.f32 %v2767, %v2943
      %v3062 = vadd.f32 %v2768, %v2948
      %v3063 = vadd.f32 %v2769, %v2951
      %v3064 = vadd.f32 %v2770, %v2956
      %v3065 = vadd.f32 %v2771, %v2959
      %v3066 = vadd.f32 %v2772, %v2964
      %v3067 = vadd.f32 %v2773, %v2967
      %v3068 = vadd.f32 %v2774, %v2972
      %v3069 = vadd.f32 %v2775, %v2975
      %v3070 = vadd.f32 %v2776, %v2980
      %v3071 = vadd.f32 %v2777, %v2983
      %v3072 = vadd.f32 %v2778, %v2988
      %v3073 = vadd.f32 %v2779, %v2991
      %v3074 = vadd.f32 %v2780, %v2996
      %v3075 = vadd.f32 %v2781, %v2999
      %v3076 = vadd.f32 %v2782, %v3004
      %v3077 = vadd.f32 %v2783, %v3007
      %v3078 = vadd.f32 %v2784, %v3012
      %v3079 = vadd.f32 %v2785, %v3015
      %v3080 = vadd.f32 %v2786, %v3020
      %v3081 = vadd.f32 %v2787, %v3023
      %v3082 = vadd.f32 %v2788, %v3028
      %v3083 = vadd.f32 %v2789, %v3031
      %v3084 = vadd.f32 %v2790, %v3036
      %v3085 = vadd.f32 %v2791, %v3039
      %v3086 = vadd.f32 %v2792, %v3044
      %v3087 = vadd.f32 %v2793, %v3047
      %v3088 = vadd.f32 %v2794, %v3052
      %v3089 = vadd.f32 %v2795, %v3055
      %v3090 = vld [vmem:[%s3] sm:$0x1]
      %v3092 = vlaneseq
      %v3093 = vshrl.u32 %v3092, 7
      %v3094 = vsub.s32 0, %v3093
      %v3095 = vrot.slane %v3090, %v3094
      %v3097 = vadd.f32 %v3058, %v3095
      %v3098 = vadd.f32 %v3059, %v3095
      %v3099 = vadd.f32 %v3060, %v3095
      %v3100 = vadd.f32 %v3061, %v3095
      %v3101 = vadd.f32 %v3062, %v3095
      %v3102 = vadd.f32 %v3063, %v3095
      %v3103 = vadd.f32 %v3064, %v3095
      %v3104 = vadd.f32 %v3065, %v3095
      %v3105 = vadd.f32 %v3066, %v3095
      %v3106 = vadd.f32 %v3067, %v3095
      %v3107 = vadd.f32 %v3068, %v3095
      %v3108 = vadd.f32 %v3069, %v3095
      %v3109 = vadd.f32 %v3070, %v3095
      %v3110 = vadd.f32 %v3071, %v3095
      %v3111 = vadd.f32 %v3072, %v3095
      %v3112 = vadd.f32 %v3073, %v3095
      %v3113 = vadd.f32 %v3074, %v3095
      %v3114 = vadd.f32 %v3075, %v3095
      %v3115 = vadd.f32 %v3076, %v3095
      %v3116 = vadd.f32 %v3077, %v3095
      %v3117 = vadd.f32 %v3078, %v3095
      %v3118 = vadd.f32 %v3079, %v3095
      %v3119 = vadd.f32 %v3080, %v3095
      %v3120 = vadd.f32 %v3081, %v3095
      %v3121 = vadd.f32 %v3082, %v3095
      %v3122 = vadd.f32 %v3083, %v3095
      %v3123 = vadd.f32 %v3084, %v3095
      %v3124 = vadd.f32 %v3085, %v3095
      %v3125 = vadd.f32 %v3086, %v3095
      %v3126 = vadd.f32 %v3087, %v3095
      %v3127 = vadd.f32 %v3088, %v3095
      %v3128 = vadd.f32 %v3089, %v3095
      %v3129 = vmax.f32 %v3097, 0.0
      %v3130 = vmax.f32 %v3098, 0.0
      %v3131 = vmax.f32 %v3099, 0.0
      %v3132 = vmax.f32 %v3100, 0.0
      %v3133 = vmax.f32 %v3101, 0.0
      %v3134 = vmax.f32 %v3102, 0.0
      %v3135 = vmax.f32 %v3103, 0.0
      %v3136 = vmax.f32 %v3104, 0.0
      %v3137 = vmax.f32 %v3105, 0.0
      %v3138 = vmax.f32 %v3106, 0.0
      %v3139 = vmax.f32 %v3107, 0.0
      %v3140 = vmax.f32 %v3108, 0.0
      %v3141 = vmax.f32 %v3109, 0.0
      %v3142 = vmax.f32 %v3110, 0.0
      %v3143 = vmax.f32 %v3111, 0.0
      %v3144 = vmax.f32 %v3112, 0.0
      %v3145 = vmax.f32 %v3113, 0.0
      %v3146 = vmax.f32 %v3114, 0.0
      %v3147 = vmax.f32 %v3115, 0.0
      %v3148 = vmax.f32 %v3116, 0.0
      %v3149 = vmax.f32 %v3117, 0.0
      %v3150 = vmax.f32 %v3118, 0.0
      %v3151 = vmax.f32 %v3119, 0.0
      %v3152 = vmax.f32 %v3120, 0.0
      %v3153 = vmax.f32 %v3121, 0.0
      %v3154 = vmax.f32 %v3122, 0.0
      %v3155 = vmax.f32 %v3123, 0.0
      %v3156 = vmax.f32 %v3124, 0.0
      %v3157 = vmax.f32 %v3125, 0.0
      %v3158 = vmax.f32 %v3126, 0.0
      %v3159 = vmax.f32 %v3127, 0.0
      %v3160 = vmax.f32 %v3128, 0.0
      %s3161 = scalar_lea.vmem [#allocation3], 24
      %3162 = vst.msk [vmem:[%s3161 + $0x1] sm:$0xff] %vm383, %v3129
      %3163 = vst.msk [vmem:[%s3161 + $0x9] sm:$0xff] %vm383, %v3130
      %3164 = vst.msk [vmem:[%s3161 + $0x19] sm:$0xff] %vm383, %v3131
      %3165 = vst.msk [vmem:[%s3161 + $0x21] sm:$0xff] %vm383, %v3132
      %3166 = vst.msk [vmem:[%s3161 + $0x31] sm:$0xff] %vm383, %v3133
      %3167 = vst.msk [vmem:[%s3161 + $0x39] sm:$0xff] %vm383, %v3134
      %3168 = vst.msk [vmem:[%s3161 + $0x49] sm:$0xff] %vm383, %v3135
      %3169 = vst.msk [vmem:[%s3161 + $0x51] sm:$0xff] %vm383, %v3136
      %3170 = vst.msk [vmem:[%s3161 + $0x61] sm:$0xff] %vm383, %v3137
      %3171 = vst.msk [vmem:[%s3161 + $0x69] sm:$0xff] %vm383, %v3138
      %3172 = vst.msk [vmem:[%s3161 + $0x79] sm:$0xff] %vm383, %v3139
      %3173 = vst.msk [vmem:[%s3161 + $0x81] sm:$0xff] %vm383, %v3140
      %3174 = vst.msk [vmem:[%s3161 + $0x91] sm:$0xff] %vm383, %v3141
      %3175 = vst.msk [vmem:[%s3161 + $0x99] sm:$0xff] %vm383, %v3142
      %3176 = vst.msk [vmem:[%s3161 + $0xa9] sm:$0xff] %vm383, %v3143
      %3177 = vst.msk [vmem:[%s3161 + $0xb1] sm:$0xff] %vm383, %v3144
      %3178 = vst.msk [vmem:[%s3161 + $0xc1] sm:$0xff] %vm383, %v3145
      %3179 = vst.msk [vmem:[%s3161 + $0xc9] sm:$0xff] %vm383, %v3146
      %3180 = vst.msk [vmem:[%s3161 + $0xd9] sm:$0xff] %vm383, %v3147
      %3181 = vst.msk [vmem:[%s3161 + $0xe1] sm:$0xff] %vm383, %v3148
      %3182 = vst.msk [vmem:[%s3161 + $0xf1] sm:$0xff] %vm383, %v3149
      %3183 = vst.msk [vmem:[%s3161 + $0xf9] sm:$0xff] %vm383, %v3150
      %3184 = vst.msk [vmem:[%s3161 + $0x109] sm:$0xff] %vm383, %v3151
      %3185 = vst.msk [vmem:[%s3161 + $0x111] sm:$0xff] %vm383, %v3152
      %3186 = vst.msk [vmem:[%s3161 + $0x121] sm:$0xff] %vm383, %v3153
      %3187 = vst.msk [vmem:[%s3161 + $0x129] sm:$0xff] %vm383, %v3154
      %3188 = vst.msk [vmem:[%s3161 + $0x139] sm:$0xff] %vm383, %v3155
      %3189 = vst.msk [vmem:[%s3161 + $0x141] sm:$0xff] %vm383, %v3156
      %3190 = vst.msk [vmem:[%s3161 + $0x151] sm:$0xff] %vm383, %v3157
      %3191 = vst.msk [vmem:[%s3161 + $0x159] sm:$0xff] %vm383, %v3158
      %3192 = vst.msk [vmem:[%s3161 + $0x169] sm:$0xff] %vm383, %v3159
      %3193 = vst.msk [vmem:[%s3161 + $0x171] sm:$0xff] %vm383, %v3160
      %v3194 = vld [vmem:[#allocation3] sm:$0xff]
      %v3195 = vld [vmem:[#allocation3 + $0x8] sm:$0xff]
      %v3196 = vld [vmem:[#allocation3 + $0x18] sm:$0xff]
      %v3197 = vld [vmem:[#allocation3 + $0x20] sm:$0xff]
      %v3198 = vld [vmem:[#allocation3 + $0x30] sm:$0xff]
      %v3199 = vld [vmem:[#allocation3 + $0x38] sm:$0xff]
      %v3200 = vld [vmem:[#allocation3 + $0x48] sm:$0xff]
      %v3201 = vld [vmem:[#allocation3 + $0x50] sm:$0xff]
      %v3202 = vld [vmem:[#allocation3 + $0x60] sm:$0xff]
      %v3203 = vld [vmem:[#allocation3 + $0x68] sm:$0xff]
      %v3204 = vld [vmem:[#allocation3 + $0x78] sm:$0xff]
      %v3205 = vld [vmem:[#allocation3 + $0x80] sm:$0xff]
      %v3206 = vld [vmem:[#allocation3 + $0x90] sm:$0xff]
      %v3207 = vld [vmem:[#allocation3 + $0x98] sm:$0xff]
      %v3208 = vld [vmem:[#allocation3 + $0xa8] sm:$0xff]
      %v3209 = vld [vmem:[#allocation3 + $0xb0] sm:$0xff]
      %v3210 = vld [vmem:[#allocation3 + $0xc0] sm:$0xff]
      %v3211 = vld [vmem:[#allocation3 + $0xc8] sm:$0xff]
      %v3212 = vld [vmem:[#allocation3 + $0xd8] sm:$0xff]
      %v3213 = vld [vmem:[#allocation3 + $0xe0] sm:$0xff]
      %v3214 = vld [vmem:[#allocation3 + $0xf0] sm:$0xff]
      %v3215 = vld [vmem:[#allocation3 + $0xf8] sm:$0xff]
      %v3216 = vld [vmem:[#allocation3 + $0x108] sm:$0xff]
      %v3217 = vld [vmem:[#allocation3 + $0x110] sm:$0xff]
      %v3218 = vld [vmem:[#allocation3 + $0x120] sm:$0xff]
      %v3219 = vld [vmem:[#allocation3 + $0x128] sm:$0xff]
      %v3220 = vld [vmem:[#allocation3 + $0x138] sm:$0xff]
      %v3221 = vld [vmem:[#allocation3 + $0x140] sm:$0xff]
      %v3222 = vld [vmem:[#allocation3 + $0x150] sm:$0xff]
      %v3223 = vld [vmem:[#allocation3 + $0x158] sm:$0xff]
      %v3224 = vld [vmem:[#allocation3 + $0x168] sm:$0xff]
      %v3225 = vld [vmem:[#allocation3 + $0x170] sm:$0xff]
      %v3226 = vpack.c.bf16 %v3195, %v3194
      %v3227 = vpack.c.bf16 %v3197, %v3196
      %v3228 = vpack.c.bf16 %v3199, %v3198
      %v3229 = vpack.c.bf16 %v3201, %v3200
      %v3230 = vpack.c.bf16 %v3203, %v3202
      %v3231 = vpack.c.bf16 %v3205, %v3204
      %v3232 = vpack.c.bf16 %v3207, %v3206
      %v3233 = vpack.c.bf16 %v3209, %v3208
      %v3234 = vpack.c.bf16 %v3211, %v3210
      %v3235 = vpack.c.bf16 %v3213, %v3212
      %v3236 = vpack.c.bf16 %v3215, %v3214
      %v3237 = vpack.c.bf16 %v3217, %v3216
      %v3238 = vpack.c.bf16 %v3219, %v3218
      %v3239 = vpack.c.bf16 %v3221, %v3220
      %v3240 = vpack.c.bf16 %v3223, %v3222
      %v3241 = vpack.c.bf16 %v3225, %v3224
      %v3242 = vld [vmem:[%s4] sm:$0xf]
      %v3243 = vld [vmem:[%s4 + $0x4] sm:$0xf]
      %v3244 = vld [vmem:[%s4 + $0x8] sm:$0xf]
      %v3245 = vld [vmem:[%s4 + $0xc] sm:$0xf]
      %v3246 = vld [vmem:[#allocation3 + $0x1] sm:$0xff]
      %v3247 = vld [vmem:[#allocation3 + $0x9] sm:$0xff]
      %v3248 = vld [vmem:[#allocation3 + $0x19] sm:$0xff]
      %v3249 = vld [vmem:[#allocation3 + $0x21] sm:$0xff]
      %v3250 = vld [vmem:[#allocation3 + $0x31] sm:$0xff]
      %v3251 = vld [vmem:[#allocation3 + $0x39] sm:$0xff]
      %v3252 = vld [vmem:[#allocation3 + $0x49] sm:$0xff]
      %v3253 = vld [vmem:[#allocation3 + $0x51] sm:$0xff]
      %v3254 = vld [vmem:[#allocation3 + $0x61] sm:$0xff]
      %v3255 = vld [vmem:[#allocation3 + $0x69] sm:$0xff]
      %v3256 = vld [vmem:[#allocation3 + $0x79] sm:$0xff]
      %v3257 = vld [vmem:[#allocation3 + $0x81] sm:$0xff]
      %v3258 = vld [vmem:[#allocation3 + $0x91] sm:$0xff]
      %v3259 = vld [vmem:[#allocation3 + $0x99] sm:$0xff]
      %v3260 = vld [vmem:[#allocation3 + $0xa9] sm:$0xff]
      %v3261 = vld [vmem:[#allocation3 + $0xb1] sm:$0xff]
      %v3262 = vld [vmem:[#allocation3 + $0xc1] sm:$0xff]
      %v3263 = vld [vmem:[#allocation3 + $0xc9] sm:$0xff]
      %v3264 = vld [vmem:[#allocation3 + $0xd9] sm:$0xff]
      %v3265 = vld [vmem:[#allocation3 + $0xe1] sm:$0xff]
      %v3266 = vld [vmem:[#allocation3 + $0xf1] sm:$0xff]
      %v3267 = vld [vmem:[#allocation3 + $0xf9] sm:$0xff]
      %v3268 = vld [vmem:[#allocation3 + $0x109] sm:$0xff]
      %v3269 = vld [vmem:[#allocation3 + $0x111] sm:$0xff]
      %v3270 = vld [vmem:[#allocation3 + $0x121] sm:$0xff]
      %v3271 = vld [vmem:[#allocation3 + $0x129] sm:$0xff]
      %v3272 = vld [vmem:[#allocation3 + $0x139] sm:$0xff]
      %v3273 = vld [vmem:[#allocation3 + $0x141] sm:$0xff]
      %v3274 = vld [vmem:[#allocation3 + $0x151] sm:$0xff]
      %v3275 = vld [vmem:[#allocation3 + $0x159] sm:$0xff]
      %v3276 = vld [vmem:[#allocation3 + $0x169] sm:$0xff]
      %v3277 = vld [vmem:[#allocation3 + $0x171] sm:$0xff]
      %v3278 = vpack.c.bf16 %v3247, %v3246
      %v3279 = vpack.c.bf16 %v3249, %v3248
      %v3280 = vpack.c.bf16 %v3251, %v3250
      %v3281 = vpack.c.bf16 %v3253, %v3252
      %v3282 = vpack.c.bf16 %v3255, %v3254
      %v3283 = vpack.c.bf16 %v3257, %v3256
      %v3284 = vpack.c.bf16 %v3259, %v3258
      %v3285 = vpack.c.bf16 %v3261, %v3260
      %v3286 = vpack.c.bf16 %v3263, %v3262
      %v3287 = vpack.c.bf16 %v3265, %v3264
      %v3288 = vpack.c.bf16 %v3267, %v3266
      %v3289 = vpack.c.bf16 %v3269, %v3268
      %v3290 = vpack.c.bf16 %v3271, %v3270
      %v3291 = vpack.c.bf16 %v3273, %v3272
      %v3292 = vpack.c.bf16 %v3275, %v3274
      %v3293 = vpack.c.bf16 %v3277, %v3276
      %s3294 = scalar_lea.vmem %s4, 16
      %v3295 = vld [vmem:[%s3294] sm:$0xf]
      %v3296 = vld [vmem:[%s3294 + $0x4] sm:$0xf]
      %v3297 = vld [vmem:[%s3294 + $0x8] sm:$0xf]
      %v3298 = vld [vmem:[%s3294 + $0xc] sm:$0xf]
      %v3303 = vunpack.c.l.b16 %v3295
      %v3304 = vunpack.c.l.b16 %v3296
      %v3305 = vunpack.c.l.b16 %v3297
      %v3306 = vunpack.c.l.b16 %v3298
      %v3307 = vpack.c.b16 %v3304, %v3303
      %v3308 = vpack.c.b16 %v3306, %v3305
      %v3312 = vsel %vm383, %v3278, 0
      %v3315 = vsel %vm383, %v3279, 0
      %v3318 = vsel %vm383, %v3280, 0
      %v3321 = vsel %vm383, %v3281, 0
      %v3324 = vsel %vm383, %v3282, 0
      %v3327 = vsel %vm383, %v3283, 0
      %v3330 = vsel %vm383, %v3284, 0
      %v3333 = vsel %vm383, %v3285, 0
      %v3336 = vsel %vm383, %v3286, 0
      %v3339 = vsel %vm383, %v3287, 0
      %v3342 = vsel %vm383, %v3288, 0
      %v3345 = vsel %vm383, %v3289, 0
      %v3348 = vsel %vm383, %v3290, 0
      %v3351 = vsel %vm383, %v3291, 0
      %v3354 = vsel %vm383, %v3292, 0
      %v3357 = vsel %vm383, %v3293, 0
      %3359 = vmatprep.subr.bf16.mxu0 0
      %3360 = vmatpush1.bf16.msra.mxu0 0
      %3361 = vmatprep.subr.bf16.mxu0 0
      %3362 = vmatpush1.bf16.msra.mxu0 0
      %3363 = vmatprep.subr.bf16.mxu0 0
      %3364 = vmatpush1.bf16.msra.mxu0 0
      %3365 = vmatprep.subr.bf16.mxu0 0
      %3366 = vmatpush1.bf16.msra.mxu0 0
      %3367 = vmatprep.subr.bf16.mxu0 0
      %3368 = vmatpush1.bf16.msra.mxu0 0
      %3369 = vmatprep.subr.bf16.mxu0 0
      %3370 = vmatpush1.bf16.msra.mxu0 0
      %3371 = vmatprep.subr.bf16.mxu0 0
      %3372 = vmatpush1.bf16.msra.mxu0 %v3308
      %3373 = vmatprep.subr.bf16.mxu0 0
      %3374 = vmatpush1.bf16.msra.mxu0 %v3307
      %3375 = vmatprep.subr.bf16.mxu0 0
      %3376 = vmatpush2.bf16.msra.mxu0 0
      %3377 = vmatprep.subr.bf16.mxu0 0
      %3378 = vmatpush2.bf16.msra.mxu0 0
      %3379 = vmatprep.subr.bf16.mxu0 0
      %3380 = vmatpush2.bf16.msra.mxu0 0
      %3381 = vmatprep.subr.bf16.mxu0 0
      %3382 = vmatpush2.bf16.msra.mxu0 0
      %3383 = vmatprep.subr.bf16.mxu0 0
      %3384 = vmatpush2.bf16.msra.mxu0 0
      %3385 = vmatprep.subr.bf16.mxu0 0
      %3386 = vmatpush2.bf16.msra.mxu0 0
      %3387 = vmatprep.subr.bf16.mxu0 0
      %3388 = vmatpush2.bf16.msra.mxu0 0
      %3389 = vmatprep.subr.bf16.mxu0 0
      %3390 = vmatpush2.bf16.msra.mxu0 0
      %3391 = vmatprep.mubr.bf16.mxu0 0
      %3392 = vmatmul.mubr.bf16.gmra.mxu0 %v3312
      %v3393 = vpop.f32.mrf.mxu0
      %v3394 = vadd.f32 0.0, %v3393
      %v3395 = vpop.f32.mrf.mxu0
      %v3396 = vpop.f32.mrf.mxu0
      %v3397 = vadd.f32 0.0, %v3396
      %v3398 = vpop.f32.mrf.mxu0
      %3399 = vmatprep.mubr.bf16.mxu0 0
      %3400 = vmatmul.mubr.bf16.gmra.mxu0 %v3315
      %v3401 = vpop.f32.mrf.mxu0
      %v3402 = vadd.f32 0.0, %v3401
      %v3403 = vpop.f32.mrf.mxu0
      %v3404 = vpop.f32.mrf.mxu0
      %v3405 = vadd.f32 0.0, %v3404
      %v3406 = vpop.f32.mrf.mxu0
      %3407 = vmatprep.mubr.bf16.mxu0 0
      %3408 = vmatmul.mubr.bf16.gmra.mxu0 %v3318
      %v3409 = vpop.f32.mrf.mxu0
      %v3410 = vadd.f32 0.0, %v3409
      %v3411 = vpop.f32.mrf.mxu0
      %v3412 = vpop.f32.mrf.mxu0
      %v3413 = vadd.f32 0.0, %v3412
      %v3414 = vpop.f32.mrf.mxu0
      %3415 = vmatprep.mubr.bf16.mxu0 0
      %3416 = vmatmul.mubr.bf16.gmra.mxu0 %v3321
      %v3417 = vpop.f32.mrf.mxu0
      %v3418 = vadd.f32 0.0, %v3417
      %v3419 = vpop.f32.mrf.mxu0
      %v3420 = vpop.f32.mrf.mxu0
      %v3421 = vadd.f32 0.0, %v3420
      %v3422 = vpop.f32.mrf.mxu0
      %3423 = vmatprep.mubr.bf16.mxu0 0
      %3424 = vmatmul.mubr.bf16.gmra.mxu0 %v3324
      %v3425 = vpop.f32.mrf.mxu0
      %v3426 = vadd.f32 0.0, %v3425
      %v3427 = vpop.f32.mrf.mxu0
      %v3428 = vpop.f32.mrf.mxu0
      %v3429 = vadd.f32 0.0, %v3428
      %v3430 = vpop.f32.mrf.mxu0
      %3431 = vmatprep.mubr.bf16.mxu0 0
      %3432 = vmatmul.mubr.bf16.gmra.mxu0 %v3327
      %v3433 = vpop.f32.mrf.mxu0
      %v3434 = vadd.f32 0.0, %v3433
      %v3435 = vpop.f32.mrf.mxu0
      %v3436 = vpop.f32.mrf.mxu0
      %v3437 = vadd.f32 0.0, %v3436
      %v3438 = vpop.f32.mrf.mxu0
      %3439 = vmatprep.mubr.bf16.mxu0 0
      %3440 = vmatmul.mubr.bf16.gmra.mxu0 %v3330
      %v3441 = vpop.f32.mrf.mxu0
      %v3442 = vadd.f32 0.0, %v3441
      %v3443 = vpop.f32.mrf.mxu0
      %v3444 = vpop.f32.mrf.mxu0
      %v3445 = vadd.f32 0.0, %v3444
      %v3446 = vpop.f32.mrf.mxu0
      %3447 = vmatprep.mubr.bf16.mxu0 0
      %3448 = vmatmul.mubr.bf16.gmra.mxu0 %v3333
      %v3449 = vpop.f32.mrf.mxu0
      %v3450 = vadd.f32 0.0, %v3449
      %v3451 = vpop.f32.mrf.mxu0
      %v3452 = vpop.f32.mrf.mxu0
      %v3453 = vadd.f32 0.0, %v3452
      %v3454 = vpop.f32.mrf.mxu0
      %3455 = vmatprep.mubr.bf16.mxu0 0
      %3456 = vmatmul.mubr.bf16.gmra.mxu0 %v3336
      %v3457 = vpop.f32.mrf.mxu0
      %v3458 = vadd.f32 0.0, %v3457
      %v3459 = vpop.f32.mrf.mxu0
      %v3460 = vpop.f32.mrf.mxu0
      %v3461 = vadd.f32 0.0, %v3460
      %v3462 = vpop.f32.mrf.mxu0
      %3463 = vmatprep.mubr.bf16.mxu0 0
      %3464 = vmatmul.mubr.bf16.gmra.mxu0 %v3339
      %v3465 = vpop.f32.mrf.mxu0
      %v3466 = vadd.f32 0.0, %v3465
      %v3467 = vpop.f32.mrf.mxu0
      %v3468 = vpop.f32.mrf.mxu0
      %v3469 = vadd.f32 0.0, %v3468
      %v3470 = vpop.f32.mrf.mxu0
      %3471 = vmatprep.mubr.bf16.mxu0 0
      %3472 = vmatmul.mubr.bf16.gmra.mxu0 %v3342
      %v3473 = vpop.f32.mrf.mxu0
      %v3474 = vadd.f32 0.0, %v3473
      %v3475 = vpop.f32.mrf.mxu0
      %v3476 = vpop.f32.mrf.mxu0
      %v3477 = vadd.f32 0.0, %v3476
      %v3478 = vpop.f32.mrf.mxu0
      %3479 = vmatprep.mubr.bf16.mxu0 0
      %3480 = vmatmul.mubr.bf16.gmra.mxu0 %v3345
      %v3481 = vpop.f32.mrf.mxu0
      %v3482 = vadd.f32 0.0, %v3481
      %v3483 = vpop.f32.mrf.mxu0
      %v3484 = vpop.f32.mrf.mxu0
      %v3485 = vadd.f32 0.0, %v3484
      %v3486 = vpop.f32.mrf.mxu0
      %3487 = vmatprep.mubr.bf16.mxu0 0
      %3488 = vmatmul.mubr.bf16.gmra.mxu0 %v3348
      %v3489 = vpop.f32.mrf.mxu0
      %v3490 = vadd.f32 0.0, %v3489
      %v3491 = vpop.f32.mrf.mxu0
      %v3492 = vpop.f32.mrf.mxu0
      %v3493 = vadd.f32 0.0, %v3492
      %v3494 = vpop.f32.mrf.mxu0
      %3495 = vmatprep.mubr.bf16.mxu0 0
      %3496 = vmatmul.mubr.bf16.gmra.mxu0 %v3351
      %v3497 = vpop.f32.mrf.mxu0
      %v3498 = vadd.f32 0.0, %v3497
      %v3499 = vpop.f32.mrf.mxu0
      %v3500 = vpop.f32.mrf.mxu0
      %v3501 = vadd.f32 0.0, %v3500
      %v3502 = vpop.f32.mrf.mxu0
      %3503 = vmatprep.mubr.bf16.mxu0 0
      %3504 = vmatmul.mubr.bf16.gmra.mxu0 %v3354
      %v3505 = vpop.f32.mrf.mxu0
      %v3506 = vadd.f32 0.0, %v3505
      %v3507 = vpop.f32.mrf.mxu0
      %v3508 = vpop.f32.mrf.mxu0
      %v3509 = vadd.f32 0.0, %v3508
      %v3510 = vpop.f32.mrf.mxu0
      %3511 = vmatprep.mubr.bf16.mxu0 0
      %3512 = vmatmul.mubr.bf16.gmra.mxu0 %v3357
      %v3513 = vpop.f32.mrf.mxu0
      %v3514 = vadd.f32 0.0, %v3513
      %v3515 = vpop.f32.mrf.mxu0
      %v3516 = vpop.f32.mrf.mxu0
      %v3517 = vadd.f32 0.0, %v3516
      %v3518 = vpop.f32.mrf.mxu0
      %3519 = vdwg.mxu0
      %v3524 = vunpack.c.l.b16 %v3242
      %v3525 = vunpack.c.l.b16 %v3243
      %v3526 = vunpack.c.l.b16 %v3244
      %v3527 = vunpack.c.l.b16 %v3245
      %v3528 = vpack.c.b16 %v3525, %v3524
      %v3529 = vpack.c.b16 %v3527, %v3526
      %v3533 = vsel %vm383, %v3226, 0
      %v3536 = vsel %vm383, %v3227, 0
      %v3539 = vsel %vm383, %v3228, 0
      %v3542 = vsel %vm383, %v3229, 0
      %v3545 = vsel %vm383, %v3230, 0
      %v3548 = vsel %vm383, %v3231, 0
      %v3551 = vsel %vm383, %v3232, 0
      %v3554 = vsel %vm383, %v3233, 0
      %v3557 = vsel %vm383, %v3234, 0
      %v3560 = vsel %vm383, %v3235, 0
      %v3563 = vsel %vm383, %v3236, 0
      %v3566 = vsel %vm383, %v3237, 0
      %v3569 = vsel %vm383, %v3238, 0
      %v3572 = vsel %vm383, %v3239, 0
      %v3575 = vsel %vm383, %v3240, 0
      %v3578 = vsel %vm383, %v3241, 0
      %3580 = vmatprep.subr.bf16.mxu0 0
      %3581 = vmatpush1.bf16.msra.mxu0 0
      %3582 = vmatprep.subr.bf16.mxu0 0
      %3583 = vmatpush1.bf16.msra.mxu0 0
      %3584 = vmatprep.subr.bf16.mxu0 0
      %3585 = vmatpush1.bf16.msra.mxu0 0
      %3586 = vmatprep.subr.bf16.mxu0 0
      %3587 = vmatpush1.bf16.msra.mxu0 0
      %3588 = vmatprep.subr.bf16.mxu0 0
      %3589 = vmatpush1.bf16.msra.mxu0 0
      %3590 = vmatprep.subr.bf16.mxu0 0
      %3591 = vmatpush1.bf16.msra.mxu0 0
      %3592 = vmatprep.subr.bf16.mxu0 0
      %3593 = vmatpush1.bf16.msra.mxu0 %v3529
      %3594 = vmatprep.subr.bf16.mxu0 0
      %3595 = vmatpush1.bf16.msra.mxu0 %v3528
      %3596 = vmatprep.subr.bf16.mxu0 0
      %3597 = vmatpush2.bf16.msra.mxu0 0
      %3598 = vmatprep.subr.bf16.mxu0 0
      %3599 = vmatpush2.bf16.msra.mxu0 0
      %3600 = vmatprep.subr.bf16.mxu0 0
      %3601 = vmatpush2.bf16.msra.mxu0 0
      %3602 = vmatprep.subr.bf16.mxu0 0
      %3603 = vmatpush2.bf16.msra.mxu0 0
      %3604 = vmatprep.subr.bf16.mxu0 0
      %3605 = vmatpush2.bf16.msra.mxu0 0
      %3606 = vmatprep.subr.bf16.mxu0 0
      %3607 = vmatpush2.bf16.msra.mxu0 0
      %3608 = vmatprep.subr.bf16.mxu0 0
      %3609 = vmatpush2.bf16.msra.mxu0 0
      %3610 = vmatprep.subr.bf16.mxu0 0
      %3611 = vmatpush2.bf16.msra.mxu0 0
      %3612 = vmatprep.mubr.bf16.mxu0 0
      %3613 = vmatmul.mubr.bf16.gmra.mxu0 %v3533
      %v3614 = vpop.f32.mrf.mxu0
      %v3615 = vadd.f32 %v3394, %v3614
      %v3616 = vpop.f32.mrf.mxu0
      %v3617 = vpop.f32.mrf.mxu0
      %v3618 = vadd.f32 %v3397, %v3617
      %v3619 = vpop.f32.mrf.mxu0
      %3620 = vmatprep.mubr.bf16.mxu0 0
      %3621 = vmatmul.mubr.bf16.gmra.mxu0 %v3536
      %v3622 = vpop.f32.mrf.mxu0
      %v3623 = vadd.f32 %v3402, %v3622
      %v3624 = vpop.f32.mrf.mxu0
      %v3625 = vpop.f32.mrf.mxu0
      %v3626 = vadd.f32 %v3405, %v3625
      %v3627 = vpop.f32.mrf.mxu0
      %3628 = vmatprep.mubr.bf16.mxu0 0
      %3629 = vmatmul.mubr.bf16.gmra.mxu0 %v3539
      %v3630 = vpop.f32.mrf.mxu0
      %v3631 = vadd.f32 %v3410, %v3630
      %v3632 = vpop.f32.mrf.mxu0
      %v3633 = vpop.f32.mrf.mxu0
      %v3634 = vadd.f32 %v3413, %v3633
      %v3635 = vpop.f32.mrf.mxu0
      %3636 = vmatprep.mubr.bf16.mxu0 0
      %3637 = vmatmul.mubr.bf16.gmra.mxu0 %v3542
      %v3638 = vpop.f32.mrf.mxu0
      %v3639 = vadd.f32 %v3418, %v3638
      %v3640 = vpop.f32.mrf.mxu0
      %v3641 = vpop.f32.mrf.mxu0
      %v3642 = vadd.f32 %v3421, %v3641
      %v3643 = vpop.f32.mrf.mxu0
      %3644 = vmatprep.mubr.bf16.mxu0 0
      %3645 = vmatmul.mubr.bf16.gmra.mxu0 %v3545
      %v3646 = vpop.f32.mrf.mxu0
      %v3647 = vadd.f32 %v3426, %v3646
      %v3648 = vpop.f32.mrf.mxu0
      %v3649 = vpop.f32.mrf.mxu0
      %v3650 = vadd.f32 %v3429, %v3649
      %v3651 = vpop.f32.mrf.mxu0
      %3652 = vmatprep.mubr.bf16.mxu0 0
      %3653 = vmatmul.mubr.bf16.gmra.mxu0 %v3548
      %v3654 = vpop.f32.mrf.mxu0
      %v3655 = vadd.f32 %v3434, %v3654
      %v3656 = vpop.f32.mrf.mxu0
      %v3657 = vpop.f32.mrf.mxu0
      %v3658 = vadd.f32 %v3437, %v3657
      %v3659 = vpop.f32.mrf.mxu0
      %3660 = vmatprep.mubr.bf16.mxu0 0
      %3661 = vmatmul.mubr.bf16.gmra.mxu0 %v3551
      %v3662 = vpop.f32.mrf.mxu0
      %v3663 = vadd.f32 %v3442, %v3662
      %v3664 = vpop.f32.mrf.mxu0
      %v3665 = vpop.f32.mrf.mxu0
      %v3666 = vadd.f32 %v3445, %v3665
      %v3667 = vpop.f32.mrf.mxu0
      %3668 = vmatprep.mubr.bf16.mxu0 0
      %3669 = vmatmul.mubr.bf16.gmra.mxu0 %v3554
      %v3670 = vpop.f32.mrf.mxu0
      %v3671 = vadd.f32 %v3450, %v3670
      %v3672 = vpop.f32.mrf.mxu0
      %v3673 = vpop.f32.mrf.mxu0
      %v3674 = vadd.f32 %v3453, %v3673
      %v3675 = vpop.f32.mrf.mxu0
      %3676 = vmatprep.mubr.bf16.mxu0 0
      %3677 = vmatmul.mubr.bf16.gmra.mxu0 %v3557
      %v3678 = vpop.f32.mrf.mxu0
      %v3679 = vadd.f32 %v3458, %v3678
      %v3680 = vpop.f32.mrf.mxu0
      %v3681 = vpop.f32.mrf.mxu0
      %v3682 = vadd.f32 %v3461, %v3681
      %v3683 = vpop.f32.mrf.mxu0
      %3684 = vmatprep.mubr.bf16.mxu0 0
      %3685 = vmatmul.mubr.bf16.gmra.mxu0 %v3560
      %v3686 = vpop.f32.mrf.mxu0
      %v3687 = vadd.f32 %v3466, %v3686
      %v3688 = vpop.f32.mrf.mxu0
      %v3689 = vpop.f32.mrf.mxu0
      %v3690 = vadd.f32 %v3469, %v3689
      %v3691 = vpop.f32.mrf.mxu0
      %3692 = vmatprep.mubr.bf16.mxu0 0
      %3693 = vmatmul.mubr.bf16.gmra.mxu0 %v3563
      %v3694 = vpop.f32.mrf.mxu0
      %v3695 = vadd.f32 %v3474, %v3694
      %v3696 = vpop.f32.mrf.mxu0
      %v3697 = vpop.f32.mrf.mxu0
      %v3698 = vadd.f32 %v3477, %v3697
      %v3699 = vpop.f32.mrf.mxu0
      %3700 = vmatprep.mubr.bf16.mxu0 0
      %3701 = vmatmul.mubr.bf16.gmra.mxu0 %v3566
      %v3702 = vpop.f32.mrf.mxu0
      %v3703 = vadd.f32 %v3482, %v3702
      %v3704 = vpop.f32.mrf.mxu0
      %v3705 = vpop.f32.mrf.mxu0
      %v3706 = vadd.f32 %v3485, %v3705
      %v3707 = vpop.f32.mrf.mxu0
      %3708 = vmatprep.mubr.bf16.mxu0 0
      %3709 = vmatmul.mubr.bf16.gmra.mxu0 %v3569
      %v3710 = vpop.f32.mrf.mxu0
      %v3711 = vadd.f32 %v3490, %v3710
      %v3712 = vpop.f32.mrf.mxu0
      %v3713 = vpop.f32.mrf.mxu0
      %v3714 = vadd.f32 %v3493, %v3713
      %v3715 = vpop.f32.mrf.mxu0
      %3716 = vmatprep.mubr.bf16.mxu0 0
      %3717 = vmatmul.mubr.bf16.gmra.mxu0 %v3572
      %v3718 = vpop.f32.mrf.mxu0
      %v3719 = vadd.f32 %v3498, %v3718
      %v3720 = vpop.f32.mrf.mxu0
      %v3721 = vpop.f32.mrf.mxu0
      %v3722 = vadd.f32 %v3501, %v3721
      %v3723 = vpop.f32.mrf.mxu0
      %3724 = vmatprep.mubr.bf16.mxu0 0
      %3725 = vmatmul.mubr.bf16.gmra.mxu0 %v3575
      %v3726 = vpop.f32.mrf.mxu0
      %v3727 = vadd.f32 %v3506, %v3726
      %v3728 = vpop.f32.mrf.mxu0
      %v3729 = vpop.f32.mrf.mxu0
      %v3730 = vadd.f32 %v3509, %v3729
      %v3731 = vpop.f32.mrf.mxu0
      %3732 = vmatprep.mubr.bf16.mxu0 0
      %3733 = vmatmul.mubr.bf16.gmra.mxu0 %v3578
      %v3734 = vpop.f32.mrf.mxu0
      %v3735 = vadd.f32 %v3514, %v3734
      %v3736 = vpop.f32.mrf.mxu0
      %v3737 = vpop.f32.mrf.mxu0
      %v3738 = vadd.f32 %v3517, %v3737
      %v3739 = vpop.f32.mrf.mxu0
      %3740 = vdwg.mxu0
      %v3741 = vld [vmem:[#allocation3 + $0x2] sm:$0xff]
      %v3742 = vld [vmem:[#allocation3 + $0xa] sm:$0xff]
      %v3743 = vld [vmem:[#allocation3 + $0x1a] sm:$0xff]
      %v3744 = vld [vmem:[#allocation3 + $0x22] sm:$0xff]
      %v3745 = vld [vmem:[#allocation3 + $0x32] sm:$0xff]
      %v3746 = vld [vmem:[#allocation3 + $0x3a] sm:$0xff]
      %v3747 = vld [vmem:[#allocation3 + $0x4a] sm:$0xff]
      %v3748 = vld [vmem:[#allocation3 + $0x52] sm:$0xff]
      %v3749 = vld [vmem:[#allocation3 + $0x62] sm:$0xff]
      %v3750 = vld [vmem:[#allocation3 + $0x6a] sm:$0xff]
      %v3751 = vld [vmem:[#allocation3 + $0x7a] sm:$0xff]
      %v3752 = vld [vmem:[#allocation3 + $0x82] sm:$0xff]
      %v3753 = vld [vmem:[#allocation3 + $0x92] sm:$0xff]
      %v3754 = vld [vmem:[#allocation3 + $0x9a] sm:$0xff]
      %v3755 = vld [vmem:[#allocation3 + $0xaa] sm:$0xff]
      %v3756 = vld [vmem:[#allocation3 + $0xb2] sm:$0xff]
      %v3757 = vld [vmem:[#allocation3 + $0xc2] sm:$0xff]
      %v3758 = vld [vmem:[#allocation3 + $0xca] sm:$0xff]
      %v3759 = vld [vmem:[#allocation3 + $0xda] sm:$0xff]
      %v3760 = vld [vmem:[#allocation3 + $0xe2] sm:$0xff]
      %v3761 = vld [vmem:[#allocation3 + $0xf2] sm:$0xff]
      %v3762 = vld [vmem:[#allocation3 + $0xfa] sm:$0xff]
      %v3763 = vld [vmem:[#allocation3 + $0x10a] sm:$0xff]
      %v3764 = vld [vmem:[#allocation3 + $0x112] sm:$0xff]
      %v3765 = vld [vmem:[#allocation3 + $0x122] sm:$0xff]
      %v3766 = vld [vmem:[#allocation3 + $0x12a] sm:$0xff]
      %v3767 = vld [vmem:[#allocation3 + $0x13a] sm:$0xff]
      %v3768 = vld [vmem:[#allocation3 + $0x142] sm:$0xff]
      %v3769 = vld [vmem:[#allocation3 + $0x152] sm:$0xff]
      %v3770 = vld [vmem:[#allocation3 + $0x15a] sm:$0xff]
      %v3771 = vld [vmem:[#allocation3 + $0x16a] sm:$0xff]
      %v3772 = vld [vmem:[#allocation3 + $0x172] sm:$0xff]
      %v3773 = vpack.c.bf16 %v3742, %v3741
      %v3774 = vpack.c.bf16 %v3744, %v3743
      %v3775 = vpack.c.bf16 %v3746, %v3745
      %v3776 = vpack.c.bf16 %v3748, %v3747
      %v3777 = vpack.c.bf16 %v3750, %v3749
      %v3778 = vpack.c.bf16 %v3752, %v3751
      %v3779 = vpack.c.bf16 %v3754, %v3753
      %v3780 = vpack.c.bf16 %v3756, %v3755
      %v3781 = vpack.c.bf16 %v3758, %v3757
      %v3782 = vpack.c.bf16 %v3760, %v3759
      %v3783 = vpack.c.bf16 %v3762, %v3761
      %v3784 = vpack.c.bf16 %v3764, %v3763
      %v3785 = vpack.c.bf16 %v3766, %v3765
      %v3786 = vpack.c.bf16 %v3768, %v3767
      %v3787 = vpack.c.bf16 %v3770, %v3769
      %v3788 = vpack.c.bf16 %v3772, %v3771
      %s3789 = scalar_lea.vmem %s4, 32
      %v3790 = vld [vmem:[%s3789] sm:$0xf]
      %v3791 = vld [vmem:[%s3789 + $0x4] sm:$0xf]
      %v3792 = vld [vmem:[%s3789 + $0x8] sm:$0xf]
      %v3793 = vld [vmem:[%s3789 + $0xc] sm:$0xf]
      %v3798 = vunpack.c.l.b16 %v3790
      %v3799 = vunpack.c.l.b16 %v3791
      %v3800 = vunpack.c.l.b16 %v3792
      %v3801 = vunpack.c.l.b16 %v3793
      %v3802 = vpack.c.b16 %v3799, %v3798
      %v3803 = vpack.c.b16 %v3801, %v3800
      %v3807 = vsel %vm383, %v3773, 0
      %v3810 = vsel %vm383, %v3774, 0
      %v3813 = vsel %vm383, %v3775, 0
      %v3816 = vsel %vm383, %v3776, 0
      %v3819 = vsel %vm383, %v3777, 0
      %v3822 = vsel %vm383, %v3778, 0
      %v3825 = vsel %vm383, %v3779, 0
      %v3828 = vsel %vm383, %v3780, 0
      %v3831 = vsel %vm383, %v3781, 0
      %v3834 = vsel %vm383, %v3782, 0
      %v3837 = vsel %vm383, %v3783, 0
      %v3840 = vsel %vm383, %v3784, 0
      %v3843 = vsel %vm383, %v3785, 0
      %v3846 = vsel %vm383, %v3786, 0
      %v3849 = vsel %vm383, %v3787, 0
      %v3852 = vsel %vm383, %v3788, 0
      %3854 = vmatprep.subr.bf16.mxu0 0
      %3855 = vmatpush1.bf16.msra.mxu0 0
      %3856 = vmatprep.subr.bf16.mxu0 0
      %3857 = vmatpush1.bf16.msra.mxu0 0
      %3858 = vmatprep.subr.bf16.mxu0 0
      %3859 = vmatpush1.bf16.msra.mxu0 0
      %3860 = vmatprep.subr.bf16.mxu0 0
      %3861 = vmatpush1.bf16.msra.mxu0 0
      %3862 = vmatprep.subr.bf16.mxu0 0
      %3863 = vmatpush1.bf16.msra.mxu0 0
      %3864 = vmatprep.subr.bf16.mxu0 0
      %3865 = vmatpush1.bf16.msra.mxu0 0
      %3866 = vmatprep.subr.bf16.mxu0 0
      %3867 = vmatpush1.bf16.msra.mxu0 %v3803
      %3868 = vmatprep.subr.bf16.mxu0 0
      %3869 = vmatpush1.bf16.msra.mxu0 %v3802
      %3870 = vmatprep.subr.bf16.mxu0 0
      %3871 = vmatpush2.bf16.msra.mxu0 0
      %3872 = vmatprep.subr.bf16.mxu0 0
      %3873 = vmatpush2.bf16.msra.mxu0 0
      %3874 = vmatprep.subr.bf16.mxu0 0
      %3875 = vmatpush2.bf16.msra.mxu0 0
      %3876 = vmatprep.subr.bf16.mxu0 0
      %3877 = vmatpush2.bf16.msra.mxu0 0
      %3878 = vmatprep.subr.bf16.mxu0 0
      %3879 = vmatpush2.bf16.msra.mxu0 0
      %3880 = vmatprep.subr.bf16.mxu0 0
      %3881 = vmatpush2.bf16.msra.mxu0 0
      %3882 = vmatprep.subr.bf16.mxu0 0
      %3883 = vmatpush2.bf16.msra.mxu0 0
      %3884 = vmatprep.subr.bf16.mxu0 0
      %3885 = vmatpush2.bf16.msra.mxu0 0
      %3886 = vmatprep.mubr.bf16.mxu0 0
      %3887 = vmatmul.mubr.bf16.gmra.mxu0 %v3807
      %v3888 = vpop.f32.mrf.mxu0
      %v3889 = vadd.f32 0.0, %v3888
      %v3890 = vpop.f32.mrf.mxu0
      %v3891 = vpop.f32.mrf.mxu0
      %v3892 = vadd.f32 0.0, %v3891
      %v3893 = vpop.f32.mrf.mxu0
      %3894 = vmatprep.mubr.bf16.mxu0 0
      %3895 = vmatmul.mubr.bf16.gmra.mxu0 %v3810
      %v3896 = vpop.f32.mrf.mxu0
      %v3897 = vadd.f32 0.0, %v3896
      %v3898 = vpop.f32.mrf.mxu0
      %v3899 = vpop.f32.mrf.mxu0
      %v3900 = vadd.f32 0.0, %v3899
      %v3901 = vpop.f32.mrf.mxu0
      %3902 = vmatprep.mubr.bf16.mxu0 0
      %3903 = vmatmul.mubr.bf16.gmra.mxu0 %v3813
      %v3904 = vpop.f32.mrf.mxu0
      %v3905 = vadd.f32 0.0, %v3904
      %v3906 = vpop.f32.mrf.mxu0
      %v3907 = vpop.f32.mrf.mxu0
      %v3908 = vadd.f32 0.0, %v3907
      %v3909 = vpop.f32.mrf.mxu0
      %3910 = vmatprep.mubr.bf16.mxu0 0
      %3911 = vmatmul.mubr.bf16.gmra.mxu0 %v3816
      %v3912 = vpop.f32.mrf.mxu0
      %v3913 = vadd.f32 0.0, %v3912
      %v3914 = vpop.f32.mrf.mxu0
      %v3915 = vpop.f32.mrf.mxu0
      %v3916 = vadd.f32 0.0, %v3915
      %v3917 = vpop.f32.mrf.mxu0
      %3918 = vmatprep.mubr.bf16.mxu0 0
      %3919 = vmatmul.mubr.bf16.gmra.mxu0 %v3819
      %v3920 = vpop.f32.mrf.mxu0
      %v3921 = vadd.f32 0.0, %v3920
      %v3922 = vpop.f32.mrf.mxu0
      %v3923 = vpop.f32.mrf.mxu0
      %v3924 = vadd.f32 0.0, %v3923
      %v3925 = vpop.f32.mrf.mxu0
      %3926 = vmatprep.mubr.bf16.mxu0 0
      %3927 = vmatmul.mubr.bf16.gmra.mxu0 %v3822
      %v3928 = vpop.f32.mrf.mxu0
      %v3929 = vadd.f32 0.0, %v3928
      %v3930 = vpop.f32.mrf.mxu0
      %v3931 = vpop.f32.mrf.mxu0
      %v3932 = vadd.f32 0.0, %v3931
      %v3933 = vpop.f32.mrf.mxu0
      %3934 = vmatprep.mubr.bf16.mxu0 0
      %3935 = vmatmul.mubr.bf16.gmra.mxu0 %v3825
      %v3936 = vpop.f32.mrf.mxu0
      %v3937 = vadd.f32 0.0, %v3936
      %v3938 = vpop.f32.mrf.mxu0
      %v3939 = vpop.f32.mrf.mxu0
      %v3940 = vadd.f32 0.0, %v3939
      %v3941 = vpop.f32.mrf.mxu0
      %3942 = vmatprep.mubr.bf16.mxu0 0
      %3943 = vmatmul.mubr.bf16.gmra.mxu0 %v3828
      %v3944 = vpop.f32.mrf.mxu0
      %v3945 = vadd.f32 0.0, %v3944
      %v3946 = vpop.f32.mrf.mxu0
      %v3947 = vpop.f32.mrf.mxu0
      %v3948 = vadd.f32 0.0, %v3947
      %v3949 = vpop.f32.mrf.mxu0
      %3950 = vmatprep.mubr.bf16.mxu0 0
      %3951 = vmatmul.mubr.bf16.gmra.mxu0 %v3831
      %v3952 = vpop.f32.mrf.mxu0
      %v3953 = vadd.f32 0.0, %v3952
      %v3954 = vpop.f32.mrf.mxu0
      %v3955 = vpop.f32.mrf.mxu0
      %v3956 = vadd.f32 0.0, %v3955
      %v3957 = vpop.f32.mrf.mxu0
      %3958 = vmatprep.mubr.bf16.mxu0 0
      %3959 = vmatmul.mubr.bf16.gmra.mxu0 %v3834
      %v3960 = vpop.f32.mrf.mxu0
      %v3961 = vadd.f32 0.0, %v3960
      %v3962 = vpop.f32.mrf.mxu0
      %v3963 = vpop.f32.mrf.mxu0
      %v3964 = vadd.f32 0.0, %v3963
      %v3965 = vpop.f32.mrf.mxu0
      %3966 = vmatprep.mubr.bf16.mxu0 0
      %3967 = vmatmul.mubr.bf16.gmra.mxu0 %v3837
      %v3968 = vpop.f32.mrf.mxu0
      %v3969 = vadd.f32 0.0, %v3968
      %v3970 = vpop.f32.mrf.mxu0
      %v3971 = vpop.f32.mrf.mxu0
      %v3972 = vadd.f32 0.0, %v3971
      %v3973 = vpop.f32.mrf.mxu0
      %3974 = vmatprep.mubr.bf16.mxu0 0
      %3975 = vmatmul.mubr.bf16.gmra.mxu0 %v3840
      %v3976 = vpop.f32.mrf.mxu0
      %v3977 = vadd.f32 0.0, %v3976
      %v3978 = vpop.f32.mrf.mxu0
      %v3979 = vpop.f32.mrf.mxu0
      %v3980 = vadd.f32 0.0, %v3979
      %v3981 = vpop.f32.mrf.mxu0
      %3982 = vmatprep.mubr.bf16.mxu0 0
      %3983 = vmatmul.mubr.bf16.gmra.mxu0 %v3843
      %v3984 = vpop.f32.mrf.mxu0
      %v3985 = vadd.f32 0.0, %v3984
      %v3986 = vpop.f32.mrf.mxu0
      %v3987 = vpop.f32.mrf.mxu0
      %v3988 = vadd.f32 0.0, %v3987
      %v3989 = vpop.f32.mrf.mxu0
      %3990 = vmatprep.mubr.bf16.mxu0 0
      %3991 = vmatmul.mubr.bf16.gmra.mxu0 %v3846
      %v3992 = vpop.f32.mrf.mxu0
      %v3993 = vadd.f32 0.0, %v3992
      %v3994 = vpop.f32.mrf.mxu0
      %v3995 = vpop.f32.mrf.mxu0
      %v3996 = vadd.f32 0.0, %v3995
      %v3997 = vpop.f32.mrf.mxu0
      %3998 = vmatprep.mubr.bf16.mxu0 0
      %3999 = vmatmul.mubr.bf16.gmra.mxu0 %v3849
      %v4000 = vpop.f32.mrf.mxu0
      %v4001 = vadd.f32 0.0, %v4000
      %v4002 = vpop.f32.mrf.mxu0
      %v4003 = vpop.f32.mrf.mxu0
      %v4004 = vadd.f32 0.0, %v4003
      %v4005 = vpop.f32.mrf.mxu0
      %4006 = vmatprep.mubr.bf16.mxu0 0
      %4007 = vmatmul.mubr.bf16.gmra.mxu0 %v3852
      %v4008 = vpop.f32.mrf.mxu0
      %v4009 = vadd.f32 0.0, %v4008
      %v4010 = vpop.f32.mrf.mxu0
      %v4011 = vpop.f32.mrf.mxu0
      %v4012 = vadd.f32 0.0, %v4011
      %v4013 = vpop.f32.mrf.mxu0
      %4014 = vdwg.mxu0
      %v4015 = vadd.f32 %v3615, %v3889
      %v4016 = vadd.f32 %v3618, %v3892
      %v4017 = vadd.f32 %v3623, %v3897
      %v4018 = vadd.f32 %v3626, %v3900
      %v4019 = vadd.f32 %v3631, %v3905
      %v4020 = vadd.f32 %v3634, %v3908
      %v4021 = vadd.f32 %v3639, %v3913
      %v4022 = vadd.f32 %v3642, %v3916
      %v4023 = vadd.f32 %v3647, %v3921
      %v4024 = vadd.f32 %v3650, %v3924
      %v4025 = vadd.f32 %v3655, %v3929
      %v4026 = vadd.f32 %v3658, %v3932
      %v4027 = vadd.f32 %v3663, %v3937
      %v4028 = vadd.f32 %v3666, %v3940
      %v4029 = vadd.f32 %v3671, %v3945
      %v4030 = vadd.f32 %v3674, %v3948
      %v4031 = vadd.f32 %v3679, %v3953
      %v4032 = vadd.f32 %v3682, %v3956
      %v4033 = vadd.f32 %v3687, %v3961
      %v4034 = vadd.f32 %v3690, %v3964
      %v4035 = vadd.f32 %v3695, %v3969
      %v4036 = vadd.f32 %v3698, %v3972
      %v4037 = vadd.f32 %v3703, %v3977
      %v4038 = vadd.f32 %v3706, %v3980
      %v4039 = vadd.f32 %v3711, %v3985
      %v4040 = vadd.f32 %v3714, %v3988
      %v4041 = vadd.f32 %v3719, %v3993
      %v4042 = vadd.f32 %v3722, %v3996
      %v4043 = vadd.f32 %v3727, %v4001
      %v4044 = vadd.f32 %v3730, %v4004
      %v4045 = vadd.f32 %v3735, %v4009
      %v4046 = vadd.f32 %v3738, %v4012
      %v4047 = vld [vmem:[%s3161] sm:$0xff]
      %v4048 = vld [vmem:[%s3161 + $0x8] sm:$0xff]
      %v4049 = vld [vmem:[%s3161 + $0x18] sm:$0xff]
      %v4050 = vld [vmem:[%s3161 + $0x20] sm:$0xff]
      %v4051 = vld [vmem:[%s3161 + $0x30] sm:$0xff]
      %v4052 = vld [vmem:[%s3161 + $0x38] sm:$0xff]
      %v4053 = vld [vmem:[%s3161 + $0x48] sm:$0xff]
      %v4054 = vld [vmem:[%s3161 + $0x50] sm:$0xff]
      %v4055 = vld [vmem:[%s3161 + $0x60] sm:$0xff]
      %v4056 = vld [vmem:[%s3161 + $0x68] sm:$0xff]
      %v4057 = vld [vmem:[%s3161 + $0x78] sm:$0xff]
      %v4058 = vld [vmem:[%s3161 + $0x80] sm:$0xff]
      %v4059 = vld [vmem:[%s3161 + $0x90] sm:$0xff]
      %v4060 = vld [vmem:[%s3161 + $0x98] sm:$0xff]
      %v4061 = vld [vmem:[%s3161 + $0xa8] sm:$0xff]
      %v4062 = vld [vmem:[%s3161 + $0xb0] sm:$0xff]
      %v4063 = vld [vmem:[%s3161 + $0xc0] sm:$0xff]
      %v4064 = vld [vmem:[%s3161 + $0xc8] sm:$0xff]
      %v4065 = vld [vmem:[%s3161 + $0xd8] sm:$0xff]
      %v4066 = vld [vmem:[%s3161 + $0xe0] sm:$0xff]
      %v4067 = vld [vmem:[%s3161 + $0xf0] sm:$0xff]
      %v4068 = vld [vmem:[%s3161 + $0xf8] sm:$0xff]
      %v4069 = vld [vmem:[%s3161 + $0x108] sm:$0xff]
      %v4070 = vld [vmem:[%s3161 + $0x110] sm:$0xff]
      %v4071 = vld [vmem:[%s3161 + $0x120] sm:$0xff]
      %v4072 = vld [vmem:[%s3161 + $0x128] sm:$0xff]
      %v4073 = vld [vmem:[%s3161 + $0x138] sm:$0xff]
      %v4074 = vld [vmem:[%s3161 + $0x140] sm:$0xff]
      %v4075 = vld [vmem:[%s3161 + $0x150] sm:$0xff]
      %v4076 = vld [vmem:[%s3161 + $0x158] sm:$0xff]
      %v4077 = vld [vmem:[%s3161 + $0x168] sm:$0xff]
      %v4078 = vld [vmem:[%s3161 + $0x170] sm:$0xff]
      %v4079 = vpack.c.bf16 %v4048, %v4047
      %v4080 = vpack.c.bf16 %v4050, %v4049
      %v4081 = vpack.c.bf16 %v4052, %v4051
      %v4082 = vpack.c.bf16 %v4054, %v4053
      %v4083 = vpack.c.bf16 %v4056, %v4055
      %v4084 = vpack.c.bf16 %v4058, %v4057
      %v4085 = vpack.c.bf16 %v4060, %v4059
      %v4086 = vpack.c.bf16 %v4062, %v4061
      %v4087 = vpack.c.bf16 %v4064, %v4063
      %v4088 = vpack.c.bf16 %v4066, %v4065
      %v4089 = vpack.c.bf16 %v4068, %v4067
      %v4090 = vpack.c.bf16 %v4070, %v4069
      %v4091 = vpack.c.bf16 %v4072, %v4071
      %v4092 = vpack.c.bf16 %v4074, %v4073
      %v4093 = vpack.c.bf16 %v4076, %v4075
      %v4094 = vpack.c.bf16 %v4078, %v4077
      %s4095 = scalar_lea.vmem %s4, 48
      %v4096 = vld [vmem:[%s4095] sm:$0xf]
      %v4097 = vld [vmem:[%s4095 + $0x4] sm:$0xf]
      %v4098 = vld [vmem:[%s4095 + $0x8] sm:$0xf]
      %v4099 = vld [vmem:[%s4095 + $0xc] sm:$0xf]
      %v4104 = vunpack.c.l.b16 %v4096
      %v4105 = vunpack.c.l.b16 %v4097
      %v4106 = vunpack.c.l.b16 %v4098
      %v4107 = vunpack.c.l.b16 %v4099
      %v4108 = vpack.c.b16 %v4105, %v4104
      %v4109 = vpack.c.b16 %v4107, %v4106
      %v4113 = vsel %vm383, %v4079, 0
      %v4116 = vsel %vm383, %v4080, 0
      %v4119 = vsel %vm383, %v4081, 0
      %v4122 = vsel %vm383, %v4082, 0
      %v4125 = vsel %vm383, %v4083, 0
      %v4128 = vsel %vm383, %v4084, 0
      %v4131 = vsel %vm383, %v4085, 0
      %v4134 = vsel %vm383, %v4086, 0
      %v4137 = vsel %vm383, %v4087, 0
      %v4140 = vsel %vm383, %v4088, 0
      %v4143 = vsel %vm383, %v4089, 0
      %v4146 = vsel %vm383, %v4090, 0
      %v4149 = vsel %vm383, %v4091, 0
      %v4152 = vsel %vm383, %v4092, 0
      %v4155 = vsel %vm383, %v4093, 0
      %v4158 = vsel %vm383, %v4094, 0
      %4160 = vmatprep.subr.bf16.mxu0 0
      %4161 = vmatpush1.bf16.msra.mxu0 0
      %4162 = vmatprep.subr.bf16.mxu0 0
      %4163 = vmatpush1.bf16.msra.mxu0 0
      %4164 = vmatprep.subr.bf16.mxu0 0
      %4165 = vmatpush1.bf16.msra.mxu0 0
      %4166 = vmatprep.subr.bf16.mxu0 0
      %4167 = vmatpush1.bf16.msra.mxu0 0
      %4168 = vmatprep.subr.bf16.mxu0 0
      %4169 = vmatpush1.bf16.msra.mxu0 0
      %4170 = vmatprep.subr.bf16.mxu0 0
      %4171 = vmatpush1.bf16.msra.mxu0 0
      %4172 = vmatprep.subr.bf16.mxu0 0
      %4173 = vmatpush1.bf16.msra.mxu0 %v4109
      %4174 = vmatprep.subr.bf16.mxu0 0
      %4175 = vmatpush1.bf16.msra.mxu0 %v4108
      %4176 = vmatprep.subr.bf16.mxu0 0
      %4177 = vmatpush2.bf16.msra.mxu0 0
      %4178 = vmatprep.subr.bf16.mxu0 0
      %4179 = vmatpush2.bf16.msra.mxu0 0
      %4180 = vmatprep.subr.bf16.mxu0 0
      %4181 = vmatpush2.bf16.msra.mxu0 0
      %4182 = vmatprep.subr.bf16.mxu0 0
      %4183 = vmatpush2.bf16.msra.mxu0 0
      %4184 = vmatprep.subr.bf16.mxu0 0
      %4185 = vmatpush2.bf16.msra.mxu0 0
      %4186 = vmatprep.subr.bf16.mxu0 0
      %4187 = vmatpush2.bf16.msra.mxu0 0
      %4188 = vmatprep.subr.bf16.mxu0 0
      %4189 = vmatpush2.bf16.msra.mxu0 0
      %4190 = vmatprep.subr.bf16.mxu0 0
      %4191 = vmatpush2.bf16.msra.mxu0 0
      %4192 = vmatprep.mubr.bf16.mxu0 0
      %4193 = vmatmul.mubr.bf16.gmra.mxu0 %v4113
      %v4194 = vpop.f32.mrf.mxu0
      %v4195 = vadd.f32 0.0, %v4194
      %v4196 = vpop.f32.mrf.mxu0
      %v4197 = vpop.f32.mrf.mxu0
      %v4198 = vadd.f32 0.0, %v4197
      %v4199 = vpop.f32.mrf.mxu0
      %4200 = vmatprep.mubr.bf16.mxu0 0
      %4201 = vmatmul.mubr.bf16.gmra.mxu0 %v4116
      %v4202 = vpop.f32.mrf.mxu0
      %v4203 = vadd.f32 0.0, %v4202
      %v4204 = vpop.f32.mrf.mxu0
      %v4205 = vpop.f32.mrf.mxu0
      %v4206 = vadd.f32 0.0, %v4205
      %v4207 = vpop.f32.mrf.mxu0
      %4208 = vmatprep.mubr.bf16.mxu0 0
      %4209 = vmatmul.mubr.bf16.gmra.mxu0 %v4119
      %v4210 = vpop.f32.mrf.mxu0
      %v4211 = vadd.f32 0.0, %v4210
      %v4212 = vpop.f32.mrf.mxu0
      %v4213 = vpop.f32.mrf.mxu0
      %v4214 = vadd.f32 0.0, %v4213
      %v4215 = vpop.f32.mrf.mxu0
      %4216 = vmatprep.mubr.bf16.mxu0 0
      %4217 = vmatmul.mubr.bf16.gmra.mxu0 %v4122
      %v4218 = vpop.f32.mrf.mxu0
      %v4219 = vadd.f32 0.0, %v4218
      %v4220 = vpop.f32.mrf.mxu0
      %v4221 = vpop.f32.mrf.mxu0
      %v4222 = vadd.f32 0.0, %v4221
      %v4223 = vpop.f32.mrf.mxu0
      %4224 = vmatprep.mubr.bf16.mxu0 0
      %4225 = vmatmul.mubr.bf16.gmra.mxu0 %v4125
      %v4226 = vpop.f32.mrf.mxu0
      %v4227 = vadd.f32 0.0, %v4226
      %v4228 = vpop.f32.mrf.mxu0
      %v4229 = vpop.f32.mrf.mxu0
      %v4230 = vadd.f32 0.0, %v4229
      %v4231 = vpop.f32.mrf.mxu0
      %4232 = vmatprep.mubr.bf16.mxu0 0
      %4233 = vmatmul.mubr.bf16.gmra.mxu0 %v4128
      %v4234 = vpop.f32.mrf.mxu0
      %v4235 = vadd.f32 0.0, %v4234
      %v4236 = vpop.f32.mrf.mxu0
      %v4237 = vpop.f32.mrf.mxu0
      %v4238 = vadd.f32 0.0, %v4237
      %v4239 = vpop.f32.mrf.mxu0
      %4240 = vmatprep.mubr.bf16.mxu0 0
      %4241 = vmatmul.mubr.bf16.gmra.mxu0 %v4131
      %v4242 = vpop.f32.mrf.mxu0
      %v4243 = vadd.f32 0.0, %v4242
      %v4244 = vpop.f32.mrf.mxu0
      %v4245 = vpop.f32.mrf.mxu0
      %v4246 = vadd.f32 0.0, %v4245
      %v4247 = vpop.f32.mrf.mxu0
      %4248 = vmatprep.mubr.bf16.mxu0 0
      %4249 = vmatmul.mubr.bf16.gmra.mxu0 %v4134
      %v4250 = vpop.f32.mrf.mxu0
      %v4251 = vadd.f32 0.0, %v4250
      %v4252 = vpop.f32.mrf.mxu0
      %v4253 = vpop.f32.mrf.mxu0
      %v4254 = vadd.f32 0.0, %v4253
      %v4255 = vpop.f32.mrf.mxu0
      %4256 = vmatprep.mubr.bf16.mxu0 0
      %4257 = vmatmul.mubr.bf16.gmra.mxu0 %v4137
      %v4258 = vpop.f32.mrf.mxu0
      %v4259 = vadd.f32 0.0, %v4258
      %v4260 = vpop.f32.mrf.mxu0
      %v4261 = vpop.f32.mrf.mxu0
      %v4262 = vadd.f32 0.0, %v4261
      %v4263 = vpop.f32.mrf.mxu0
      %4264 = vmatprep.mubr.bf16.mxu0 0
      %4265 = vmatmul.mubr.bf16.gmra.mxu0 %v4140
      %v4266 = vpop.f32.mrf.mxu0
      %v4267 = vadd.f32 0.0, %v4266
      %v4268 = vpop.f32.mrf.mxu0
      %v4269 = vpop.f32.mrf.mxu0
      %v4270 = vadd.f32 0.0, %v4269
      %v4271 = vpop.f32.mrf.mxu0
      %4272 = vmatprep.mubr.bf16.mxu0 0
      %4273 = vmatmul.mubr.bf16.gmra.mxu0 %v4143
      %v4274 = vpop.f32.mrf.mxu0
      %v4275 = vadd.f32 0.0, %v4274
      %v4276 = vpop.f32.mrf.mxu0
      %v4277 = vpop.f32.mrf.mxu0
      %v4278 = vadd.f32 0.0, %v4277
      %v4279 = vpop.f32.mrf.mxu0
      %4280 = vmatprep.mubr.bf16.mxu0 0
      %4281 = vmatmul.mubr.bf16.gmra.mxu0 %v4146
      %v4282 = vpop.f32.mrf.mxu0
      %v4283 = vadd.f32 0.0, %v4282
      %v4284 = vpop.f32.mrf.mxu0
      %v4285 = vpop.f32.mrf.mxu0
      %v4286 = vadd.f32 0.0, %v4285
      %v4287 = vpop.f32.mrf.mxu0
      %4288 = vmatprep.mubr.bf16.mxu0 0
      %4289 = vmatmul.mubr.bf16.gmra.mxu0 %v4149
      %v4290 = vpop.f32.mrf.mxu0
      %v4291 = vadd.f32 0.0, %v4290
      %v4292 = vpop.f32.mrf.mxu0
      %v4293 = vpop.f32.mrf.mxu0
      %v4294 = vadd.f32 0.0, %v4293
      %v4295 = vpop.f32.mrf.mxu0
      %4296 = vmatprep.mubr.bf16.mxu0 0
      %4297 = vmatmul.mubr.bf16.gmra.mxu0 %v4152
      %v4298 = vpop.f32.mrf.mxu0
      %v4299 = vadd.f32 0.0, %v4298
      %v4300 = vpop.f32.mrf.mxu0
      %v4301 = vpop.f32.mrf.mxu0
      %v4302 = vadd.f32 0.0, %v4301
      %v4303 = vpop.f32.mrf.mxu0
      %4304 = vmatprep.mubr.bf16.mxu0 0
      %4305 = vmatmul.mubr.bf16.gmra.mxu0 %v4155
      %v4306 = vpop.f32.mrf.mxu0
      %v4307 = vadd.f32 0.0, %v4306
      %v4308 = vpop.f32.mrf.mxu0
      %v4309 = vpop.f32.mrf.mxu0
      %v4310 = vadd.f32 0.0, %v4309
      %v4311 = vpop.f32.mrf.mxu0
      %4312 = vmatprep.mubr.bf16.mxu0 0
      %4313 = vmatmul.mubr.bf16.gmra.mxu0 %v4158
      %v4314 = vpop.f32.mrf.mxu0
      %v4315 = vadd.f32 0.0, %v4314
      %v4316 = vpop.f32.mrf.mxu0
      %v4317 = vpop.f32.mrf.mxu0
      %v4318 = vadd.f32 0.0, %v4317
      %v4319 = vpop.f32.mrf.mxu0
      %4320 = vdwg.mxu0
      %v4321 = vadd.f32 %v4015, %v4195
      %v4322 = vadd.f32 %v4016, %v4198
      %v4323 = vadd.f32 %v4017, %v4203
      %v4324 = vadd.f32 %v4018, %v4206
      %v4325 = vadd.f32 %v4019, %v4211
      %v4326 = vadd.f32 %v4020, %v4214
      %v4327 = vadd.f32 %v4021, %v4219
      %v4328 = vadd.f32 %v4022, %v4222
      %v4329 = vadd.f32 %v4023, %v4227
      %v4330 = vadd.f32 %v4024, %v4230
      %v4331 = vadd.f32 %v4025, %v4235
      %v4332 = vadd.f32 %v4026, %v4238
      %v4333 = vadd.f32 %v4027, %v4243
      %v4334 = vadd.f32 %v4028, %v4246
      %v4335 = vadd.f32 %v4029, %v4251
      %v4336 = vadd.f32 %v4030, %v4254
      %v4337 = vadd.f32 %v4031, %v4259
      %v4338 = vadd.f32 %v4032, %v4262
      %v4339 = vadd.f32 %v4033, %v4267
      %v4340 = vadd.f32 %v4034, %v4270
      %v4341 = vadd.f32 %v4035, %v4275
      %v4342 = vadd.f32 %v4036, %v4278
      %v4343 = vadd.f32 %v4037, %v4283
      %v4344 = vadd.f32 %v4038, %v4286
      %v4345 = vadd.f32 %v4039, %v4291
      %v4346 = vadd.f32 %v4040, %v4294
      %v4347 = vadd.f32 %v4041, %v4299
      %v4348 = vadd.f32 %v4042, %v4302
      %v4349 = vadd.f32 %v4043, %v4307
      %v4350 = vadd.f32 %v4044, %v4310
      %v4351 = vadd.f32 %v4045, %v4315
      %v4352 = vadd.f32 %v4046, %v4318
      %v4353 = vld [vmem:[%s3161 + $0x1] sm:$0xff]
      %v4354 = vld [vmem:[%s3161 + $0x9] sm:$0xff]
      %v4355 = vld [vmem:[%s3161 + $0x19] sm:$0xff]
      %v4356 = vld [vmem:[%s3161 + $0x21] sm:$0xff]
      %v4357 = vld [vmem:[%s3161 + $0x31] sm:$0xff]
      %v4358 = vld [vmem:[%s3161 + $0x39] sm:$0xff]
      %v4359 = vld [vmem:[%s3161 + $0x49] sm:$0xff]
      %v4360 = vld [vmem:[%s3161 + $0x51] sm:$0xff]
      %v4361 = vld [vmem:[%s3161 + $0x61] sm:$0xff]
      %v4362 = vld [vmem:[%s3161 + $0x69] sm:$0xff]
      %v4363 = vld [vmem:[%s3161 + $0x79] sm:$0xff]
      %v4364 = vld [vmem:[%s3161 + $0x81] sm:$0xff]
      %v4365 = vld [vmem:[%s3161 + $0x91] sm:$0xff]
      %v4366 = vld [vmem:[%s3161 + $0x99] sm:$0xff]
      %v4367 = vld [vmem:[%s3161 + $0xa9] sm:$0xff]
      %v4368 = vld [vmem:[%s3161 + $0xb1] sm:$0xff]
      %v4369 = vld [vmem:[%s3161 + $0xc1] sm:$0xff]
      %v4370 = vld [vmem:[%s3161 + $0xc9] sm:$0xff]
      %v4371 = vld [vmem:[%s3161 + $0xd9] sm:$0xff]
      %v4372 = vld [vmem:[%s3161 + $0xe1] sm:$0xff]
      %v4373 = vld [vmem:[%s3161 + $0xf1] sm:$0xff]
      %v4374 = vld [vmem:[%s3161 + $0xf9] sm:$0xff]
      %v4375 = vld [vmem:[%s3161 + $0x109] sm:$0xff]
      %v4376 = vld [vmem:[%s3161 + $0x111] sm:$0xff]
      %v4377 = vld [vmem:[%s3161 + $0x121] sm:$0xff]
      %v4378 = vld [vmem:[%s3161 + $0x129] sm:$0xff]
      %v4379 = vld [vmem:[%s3161 + $0x139] sm:$0xff]
      %v4380 = vld [vmem:[%s3161 + $0x141] sm:$0xff]
      %v4381 = vld [vmem:[%s3161 + $0x151] sm:$0xff]
      %v4382 = vld [vmem:[%s3161 + $0x159] sm:$0xff]
      %v4383 = vld [vmem:[%s3161 + $0x169] sm:$0xff]
      %v4384 = vld [vmem:[%s3161 + $0x171] sm:$0xff]
      %v4385 = vpack.c.bf16 %v4354, %v4353
      %v4386 = vpack.c.bf16 %v4356, %v4355
      %v4387 = vpack.c.bf16 %v4358, %v4357
      %v4388 = vpack.c.bf16 %v4360, %v4359
      %v4389 = vpack.c.bf16 %v4362, %v4361
      %v4390 = vpack.c.bf16 %v4364, %v4363
      %v4391 = vpack.c.bf16 %v4366, %v4365
      %v4392 = vpack.c.bf16 %v4368, %v4367
      %v4393 = vpack.c.bf16 %v4370, %v4369
      %v4394 = vpack.c.bf16 %v4372, %v4371
      %v4395 = vpack.c.bf16 %v4374, %v4373
      %v4396 = vpack.c.bf16 %v4376, %v4375
      %v4397 = vpack.c.bf16 %v4378, %v4377
      %v4398 = vpack.c.bf16 %v4380, %v4379
      %v4399 = vpack.c.bf16 %v4382, %v4381
      %v4400 = vpack.c.bf16 %v4384, %v4383
      %s4401 = scalar_lea.vmem %s4, 64
      %v4402 = vld [vmem:[%s4401] sm:$0xf]
      %v4403 = vld [vmem:[%s4401 + $0x4] sm:$0xf]
      %v4404 = vld [vmem:[%s4401 + $0x8] sm:$0xf]
      %v4405 = vld [vmem:[%s4401 + $0xc] sm:$0xf]
      %v4410 = vunpack.c.l.b16 %v4402
      %v4411 = vunpack.c.l.b16 %v4403
      %v4412 = vunpack.c.l.b16 %v4404
      %v4413 = vunpack.c.l.b16 %v4405
      %v4414 = vpack.c.b16 %v4411, %v4410
      %v4415 = vpack.c.b16 %v4413, %v4412
      %v4419 = vsel %vm383, %v4385, 0
      %v4422 = vsel %vm383, %v4386, 0
      %v4425 = vsel %vm383, %v4387, 0
      %v4428 = vsel %vm383, %v4388, 0
      %v4431 = vsel %vm383, %v4389, 0
      %v4434 = vsel %vm383, %v4390, 0
      %v4437 = vsel %vm383, %v4391, 0
      %v4440 = vsel %vm383, %v4392, 0
      %v4443 = vsel %vm383, %v4393, 0
      %v4446 = vsel %vm383, %v4394, 0
      %v4449 = vsel %vm383, %v4395, 0
      %v4452 = vsel %vm383, %v4396, 0
      %v4455 = vsel %vm383, %v4397, 0
      %v4458 = vsel %vm383, %v4398, 0
      %v4461 = vsel %vm383, %v4399, 0
      %v4464 = vsel %vm383, %v4400, 0
      %4466 = vmatprep.subr.bf16.mxu0 0
      %4467 = vmatpush1.bf16.msra.mxu0 0
      %4468 = vmatprep.subr.bf16.mxu0 0
      %4469 = vmatpush1.bf16.msra.mxu0 0
      %4470 = vmatprep.subr.bf16.mxu0 0
      %4471 = vmatpush1.bf16.msra.mxu0 0
      %4472 = vmatprep.subr.bf16.mxu0 0
      %4473 = vmatpush1.bf16.msra.mxu0 0
      %4474 = vmatprep.subr.bf16.mxu0 0
      %4475 = vmatpush1.bf16.msra.mxu0 0
      %4476 = vmatprep.subr.bf16.mxu0 0
      %4477 = vmatpush1.bf16.msra.mxu0 0
      %4478 = vmatprep.subr.bf16.mxu0 0
      %4479 = vmatpush1.bf16.msra.mxu0 %v4415
      %4480 = vmatprep.subr.bf16.mxu0 0
      %4481 = vmatpush1.bf16.msra.mxu0 %v4414
      %4482 = vmatprep.subr.bf16.mxu0 0
      %4483 = vmatpush2.bf16.msra.mxu0 0
      %4484 = vmatprep.subr.bf16.mxu0 0
      %4485 = vmatpush2.bf16.msra.mxu0 0
      %4486 = vmatprep.subr.bf16.mxu0 0
      %4487 = vmatpush2.bf16.msra.mxu0 0
      %4488 = vmatprep.subr.bf16.mxu0 0
      %4489 = vmatpush2.bf16.msra.mxu0 0
      %4490 = vmatprep.subr.bf16.mxu0 0
      %4491 = vmatpush2.bf16.msra.mxu0 0
      %4492 = vmatprep.subr.bf16.mxu0 0
      %4493 = vmatpush2.bf16.msra.mxu0 0
      %4494 = vmatprep.subr.bf16.mxu0 0
      %4495 = vmatpush2.bf16.msra.mxu0 0
      %4496 = vmatprep.subr.bf16.mxu0 0
      %4497 = vmatpush2.bf16.msra.mxu0 0
      %4498 = vmatprep.mubr.bf16.mxu0 0
      %4499 = vmatmul.mubr.bf16.gmra.mxu0 %v4419
      %v4500 = vpop.f32.mrf.mxu0
      %v4501 = vadd.f32 0.0, %v4500
      %v4502 = vpop.f32.mrf.mxu0
      %v4503 = vpop.f32.mrf.mxu0
      %v4504 = vadd.f32 0.0, %v4503
      %v4505 = vpop.f32.mrf.mxu0
      %4506 = vmatprep.mubr.bf16.mxu0 0
      %4507 = vmatmul.mubr.bf16.gmra.mxu0 %v4422
      %v4508 = vpop.f32.mrf.mxu0
      %v4509 = vadd.f32 0.0, %v4508
      %v4510 = vpop.f32.mrf.mxu0
      %v4511 = vpop.f32.mrf.mxu0
      %v4512 = vadd.f32 0.0, %v4511
      %v4513 = vpop.f32.mrf.mxu0
      %4514 = vmatprep.mubr.bf16.mxu0 0
      %4515 = vmatmul.mubr.bf16.gmra.mxu0 %v4425
      %v4516 = vpop.f32.mrf.mxu0
      %v4517 = vadd.f32 0.0, %v4516
      %v4518 = vpop.f32.mrf.mxu0
      %v4519 = vpop.f32.mrf.mxu0
      %v4520 = vadd.f32 0.0, %v4519
      %v4521 = vpop.f32.mrf.mxu0
      %4522 = vmatprep.mubr.bf16.mxu0 0
      %4523 = vmatmul.mubr.bf16.gmra.mxu0 %v4428
      %v4524 = vpop.f32.mrf.mxu0
      %v4525 = vadd.f32 0.0, %v4524
      %v4526 = vpop.f32.mrf.mxu0
      %v4527 = vpop.f32.mrf.mxu0
      %v4528 = vadd.f32 0.0, %v4527
      %v4529 = vpop.f32.mrf.mxu0
      %4530 = vmatprep.mubr.bf16.mxu0 0
      %4531 = vmatmul.mubr.bf16.gmra.mxu0 %v4431
      %v4532 = vpop.f32.mrf.mxu0
      %v4533 = vadd.f32 0.0, %v4532
      %v4534 = vpop.f32.mrf.mxu0
      %v4535 = vpop.f32.mrf.mxu0
      %v4536 = vadd.f32 0.0, %v4535
      %v4537 = vpop.f32.mrf.mxu0
      %4538 = vmatprep.mubr.bf16.mxu0 0
      %4539 = vmatmul.mubr.bf16.gmra.mxu0 %v4434
      %v4540 = vpop.f32.mrf.mxu0
      %v4541 = vadd.f32 0.0, %v4540
      %v4542 = vpop.f32.mrf.mxu0
      %v4543 = vpop.f32.mrf.mxu0
      %v4544 = vadd.f32 0.0, %v4543
      %v4545 = vpop.f32.mrf.mxu0
      %4546 = vmatprep.mubr.bf16.mxu0 0
      %4547 = vmatmul.mubr.bf16.gmra.mxu0 %v4437
      %v4548 = vpop.f32.mrf.mxu0
      %v4549 = vadd.f32 0.0, %v4548
      %v4550 = vpop.f32.mrf.mxu0
      %v4551 = vpop.f32.mrf.mxu0
      %v4552 = vadd.f32 0.0, %v4551
      %v4553 = vpop.f32.mrf.mxu0
      %4554 = vmatprep.mubr.bf16.mxu0 0
      %4555 = vmatmul.mubr.bf16.gmra.mxu0 %v4440
      %v4556 = vpop.f32.mrf.mxu0
      %v4557 = vadd.f32 0.0, %v4556
      %v4558 = vpop.f32.mrf.mxu0
      %v4559 = vpop.f32.mrf.mxu0
      %v4560 = vadd.f32 0.0, %v4559
      %v4561 = vpop.f32.mrf.mxu0
      %4562 = vmatprep.mubr.bf16.mxu0 0
      %4563 = vmatmul.mubr.bf16.gmra.mxu0 %v4443
      %v4564 = vpop.f32.mrf.mxu0
      %v4565 = vadd.f32 0.0, %v4564
      %v4566 = vpop.f32.mrf.mxu0
      %v4567 = vpop.f32.mrf.mxu0
      %v4568 = vadd.f32 0.0, %v4567
      %v4569 = vpop.f32.mrf.mxu0
      %4570 = vmatprep.mubr.bf16.mxu0 0
      %4571 = vmatmul.mubr.bf16.gmra.mxu0 %v4446
      %v4572 = vpop.f32.mrf.mxu0
      %v4573 = vadd.f32 0.0, %v4572
      %v4574 = vpop.f32.mrf.mxu0
      %v4575 = vpop.f32.mrf.mxu0
      %v4576 = vadd.f32 0.0, %v4575
      %v4577 = vpop.f32.mrf.mxu0
      %4578 = vmatprep.mubr.bf16.mxu0 0
      %4579 = vmatmul.mubr.bf16.gmra.mxu0 %v4449
      %v4580 = vpop.f32.mrf.mxu0
      %v4581 = vadd.f32 0.0, %v4580
      %v4582 = vpop.f32.mrf.mxu0
      %v4583 = vpop.f32.mrf.mxu0
      %v4584 = vadd.f32 0.0, %v4583
      %v4585 = vpop.f32.mrf.mxu0
      %4586 = vmatprep.mubr.bf16.mxu0 0
      %4587 = vmatmul.mubr.bf16.gmra.mxu0 %v4452
      %v4588 = vpop.f32.mrf.mxu0
      %v4589 = vadd.f32 0.0, %v4588
      %v4590 = vpop.f32.mrf.mxu0
      %v4591 = vpop.f32.mrf.mxu0
      %v4592 = vadd.f32 0.0, %v4591
      %v4593 = vpop.f32.mrf.mxu0
      %4594 = vmatprep.mubr.bf16.mxu0 0
      %4595 = vmatmul.mubr.bf16.gmra.mxu0 %v4455
      %v4596 = vpop.f32.mrf.mxu0
      %v4597 = vadd.f32 0.0, %v4596
      %v4598 = vpop.f32.mrf.mxu0
      %v4599 = vpop.f32.mrf.mxu0
      %v4600 = vadd.f32 0.0, %v4599
      %v4601 = vpop.f32.mrf.mxu0
      %4602 = vmatprep.mubr.bf16.mxu0 0
      %4603 = vmatmul.mubr.bf16.gmra.mxu0 %v4458
      %v4604 = vpop.f32.mrf.mxu0
      %v4605 = vadd.f32 0.0, %v4604
      %v4606 = vpop.f32.mrf.mxu0
      %v4607 = vpop.f32.mrf.mxu0
      %v4608 = vadd.f32 0.0, %v4607
      %v4609 = vpop.f32.mrf.mxu0
      %4610 = vmatprep.mubr.bf16.mxu0 0
      %4611 = vmatmul.mubr.bf16.gmra.mxu0 %v4461
      %v4612 = vpop.f32.mrf.mxu0
      %v4613 = vadd.f32 0.0, %v4612
      %v4614 = vpop.f32.mrf.mxu0
      %v4615 = vpop.f32.mrf.mxu0
      %v4616 = vadd.f32 0.0, %v4615
      %v4617 = vpop.f32.mrf.mxu0
      %4618 = vmatprep.mubr.bf16.mxu0 0
      %4619 = vmatmul.mubr.bf16.gmra.mxu0 %v4464
      %v4620 = vpop.f32.mrf.mxu0
      %v4621 = vadd.f32 0.0, %v4620
      %v4622 = vpop.f32.mrf.mxu0
      %v4623 = vpop.f32.mrf.mxu0
      %v4624 = vadd.f32 0.0, %v4623
      %v4625 = vpop.f32.mrf.mxu0
      %4626 = vdwg.mxu0
      %v4627 = vadd.f32 %v4321, %v4501
      %v4628 = vadd.f32 %v4322, %v4504
      %v4629 = vadd.f32 %v4323, %v4509
      %v4630 = vadd.f32 %v4324, %v4512
      %v4631 = vadd.f32 %v4325, %v4517
      %v4632 = vadd.f32 %v4326, %v4520
      %v4633 = vadd.f32 %v4327, %v4525
      %v4634 = vadd.f32 %v4328, %v4528
      %v4635 = vadd.f32 %v4329, %v4533
      %v4636 = vadd.f32 %v4330, %v4536
      %v4637 = vadd.f32 %v4331, %v4541
      %v4638 = vadd.f32 %v4332, %v4544
      %v4639 = vadd.f32 %v4333, %v4549
      %v4640 = vadd.f32 %v4334, %v4552
      %v4641 = vadd.f32 %v4335, %v4557
      %v4642 = vadd.f32 %v4336, %v4560
      %v4643 = vadd.f32 %v4337, %v4565
      %v4644 = vadd.f32 %v4338, %v4568
      %v4645 = vadd.f32 %v4339, %v4573
      %v4646 = vadd.f32 %v4340, %v4576
      %v4647 = vadd.f32 %v4341, %v4581
      %v4648 = vadd.f32 %v4342, %v4584
      %v4649 = vadd.f32 %v4343, %v4589
      %v4650 = vadd.f32 %v4344, %v4592
      %v4651 = vadd.f32 %v4345, %v4597
      %v4652 = vadd.f32 %v4346, %v4600
      %v4653 = vadd.f32 %v4347, %v4605
      %v4654 = vadd.f32 %v4348, %v4608
      %v4655 = vadd.f32 %v4349, %v4613
      %v4656 = vadd.f32 %v4350, %v4616
      %v4657 = vadd.f32 %v4351, %v4621
      %v4658 = vadd.f32 %v4352, %v4624
      %v4659 = vld [vmem:[%s3161 + $0x2] sm:$0xff]
      %v4660 = vld [vmem:[%s3161 + $0xa] sm:$0xff]
      %v4661 = vld [vmem:[%s3161 + $0x1a] sm:$0xff]
      %v4662 = vld [vmem:[%s3161 + $0x22] sm:$0xff]
      %v4663 = vld [vmem:[%s3161 + $0x32] sm:$0xff]
      %v4664 = vld [vmem:[%s3161 + $0x3a] sm:$0xff]
      %v4665 = vld [vmem:[%s3161 + $0x4a] sm:$0xff]
      %v4666 = vld [vmem:[%s3161 + $0x52] sm:$0xff]
      %v4667 = vld [vmem:[%s3161 + $0x62] sm:$0xff]
      %v4668 = vld [vmem:[%s3161 + $0x6a] sm:$0xff]
      %v4669 = vld [vmem:[%s3161 + $0x7a] sm:$0xff]
      %v4670 = vld [vmem:[%s3161 + $0x82] sm:$0xff]
      %v4671 = vld [vmem:[%s3161 + $0x92] sm:$0xff]
      %v4672 = vld [vmem:[%s3161 + $0x9a] sm:$0xff]
      %v4673 = vld [vmem:[%s3161 + $0xaa] sm:$0xff]
      %v4674 = vld [vmem:[%s3161 + $0xb2] sm:$0xff]
      %v4675 = vld [vmem:[%s3161 + $0xc2] sm:$0xff]
      %v4676 = vld [vmem:[%s3161 + $0xca] sm:$0xff]
      %v4677 = vld [vmem:[%s3161 + $0xda] sm:$0xff]
      %v4678 = vld [vmem:[%s3161 + $0xe2] sm:$0xff]
      %v4679 = vld [vmem:[%s3161 + $0xf2] sm:$0xff]
      %v4680 = vld [vmem:[%s3161 + $0xfa] sm:$0xff]
      %v4681 = vld [vmem:[%s3161 + $0x10a] sm:$0xff]
      %v4682 = vld [vmem:[%s3161 + $0x112] sm:$0xff]
      %v4683 = vld [vmem:[%s3161 + $0x122] sm:$0xff]
      %v4684 = vld [vmem:[%s3161 + $0x12a] sm:$0xff]
      %v4685 = vld [vmem:[%s3161 + $0x13a] sm:$0xff]
      %v4686 = vld [vmem:[%s3161 + $0x142] sm:$0xff]
      %v4687 = vld [vmem:[%s3161 + $0x152] sm:$0xff]
      %v4688 = vld [vmem:[%s3161 + $0x15a] sm:$0xff]
      %v4689 = vld [vmem:[%s3161 + $0x16a] sm:$0xff]
      %v4690 = vld [vmem:[%s3161 + $0x172] sm:$0xff]
      %v4691 = vpack.c.bf16 %v4660, %v4659
      %v4692 = vpack.c.bf16 %v4662, %v4661
      %v4693 = vpack.c.bf16 %v4664, %v4663
      %v4694 = vpack.c.bf16 %v4666, %v4665
      %v4695 = vpack.c.bf16 %v4668, %v4667
      %v4696 = vpack.c.bf16 %v4670, %v4669
      %v4697 = vpack.c.bf16 %v4672, %v4671
      %v4698 = vpack.c.bf16 %v4674, %v4673
      %v4699 = vpack.c.bf16 %v4676, %v4675
      %v4700 = vpack.c.bf16 %v4678, %v4677
      %v4701 = vpack.c.bf16 %v4680, %v4679
      %v4702 = vpack.c.bf16 %v4682, %v4681
      %v4703 = vpack.c.bf16 %v4684, %v4683
      %v4704 = vpack.c.bf16 %v4686, %v4685
      %v4705 = vpack.c.bf16 %v4688, %v4687
      %v4706 = vpack.c.bf16 %v4690, %v4689
      %s4707 = scalar_lea.vmem %s4, 80
      %v4708 = vld [vmem:[%s4707] sm:$0xf]
      %v4709 = vld [vmem:[%s4707 + $0x4] sm:$0xf]
      %v4710 = vld [vmem:[%s4707 + $0x8] sm:$0xf]
      %v4711 = vld [vmem:[%s4707 + $0xc] sm:$0xf]
      %v4716 = vunpack.c.l.b16 %v4708
      %v4717 = vunpack.c.l.b16 %v4709
      %v4718 = vunpack.c.l.b16 %v4710
      %v4719 = vunpack.c.l.b16 %v4711
      %v4720 = vpack.c.b16 %v4717, %v4716
      %v4721 = vpack.c.b16 %v4719, %v4718
      %v4725 = vsel %vm383, %v4691, 0
      %v4728 = vsel %vm383, %v4692, 0
      %v4731 = vsel %vm383, %v4693, 0
      %v4734 = vsel %vm383, %v4694, 0
      %v4737 = vsel %vm383, %v4695, 0
      %v4740 = vsel %vm383, %v4696, 0
      %v4743 = vsel %vm383, %v4697, 0
      %v4746 = vsel %vm383, %v4698, 0
      %v4749 = vsel %vm383, %v4699, 0
      %v4752 = vsel %vm383, %v4700, 0
      %v4755 = vsel %vm383, %v4701, 0
      %v4758 = vsel %vm383, %v4702, 0
      %v4761 = vsel %vm383, %v4703, 0
      %v4764 = vsel %vm383, %v4704, 0
      %v4767 = vsel %vm383, %v4705, 0
      %v4770 = vsel %vm383, %v4706, 0
      %4772 = vmatprep.subr.bf16.mxu0 0
      %4773 = vmatpush1.bf16.msra.mxu0 0
      %4774 = vmatprep.subr.bf16.mxu0 0
      %4775 = vmatpush1.bf16.msra.mxu0 0
      %4776 = vmatprep.subr.bf16.mxu0 0
      %4777 = vmatpush1.bf16.msra.mxu0 0
      %4778 = vmatprep.subr.bf16.mxu0 0
      %4779 = vmatpush1.bf16.msra.mxu0 0
      %4780 = vmatprep.subr.bf16.mxu0 0
      %4781 = vmatpush1.bf16.msra.mxu0 0
      %4782 = vmatprep.subr.bf16.mxu0 0
      %4783 = vmatpush1.bf16.msra.mxu0 0
      %4784 = vmatprep.subr.bf16.mxu0 0
      %4785 = vmatpush1.bf16.msra.mxu0 %v4721
      %4786 = vmatprep.subr.bf16.mxu0 0
      %4787 = vmatpush1.bf16.msra.mxu0 %v4720
      %4788 = vmatprep.subr.bf16.mxu0 0
      %4789 = vmatpush2.bf16.msra.mxu0 0
      %4790 = vmatprep.subr.bf16.mxu0 0
      %4791 = vmatpush2.bf16.msra.mxu0 0
      %4792 = vmatprep.subr.bf16.mxu0 0
      %4793 = vmatpush2.bf16.msra.mxu0 0
      %4794 = vmatprep.subr.bf16.mxu0 0
      %4795 = vmatpush2.bf16.msra.mxu0 0
      %4796 = vmatprep.subr.bf16.mxu0 0
      %4797 = vmatpush2.bf16.msra.mxu0 0
      %4798 = vmatprep.subr.bf16.mxu0 0
      %4799 = vmatpush2.bf16.msra.mxu0 0
      %4800 = vmatprep.subr.bf16.mxu0 0
      %4801 = vmatpush2.bf16.msra.mxu0 0
      %4802 = vmatprep.subr.bf16.mxu0 0
      %4803 = vmatpush2.bf16.msra.mxu0 0
      %4804 = vmatprep.mubr.bf16.mxu0 0
      %4805 = vmatmul.mubr.bf16.gmra.mxu0 %v4725
      %v4806 = vpop.f32.mrf.mxu0
      %v4807 = vadd.f32 0.0, %v4806
      %v4808 = vpop.f32.mrf.mxu0
      %v4809 = vpop.f32.mrf.mxu0
      %v4810 = vadd.f32 0.0, %v4809
      %v4811 = vpop.f32.mrf.mxu0
      %4812 = vmatprep.mubr.bf16.mxu0 0
      %4813 = vmatmul.mubr.bf16.gmra.mxu0 %v4728
      %v4814 = vpop.f32.mrf.mxu0
      %v4815 = vadd.f32 0.0, %v4814
      %v4816 = vpop.f32.mrf.mxu0
      %v4817 = vpop.f32.mrf.mxu0
      %v4818 = vadd.f32 0.0, %v4817
      %v4819 = vpop.f32.mrf.mxu0
      %4820 = vmatprep.mubr.bf16.mxu0 0
      %4821 = vmatmul.mubr.bf16.gmra.mxu0 %v4731
      %v4822 = vpop.f32.mrf.mxu0
      %v4823 = vadd.f32 0.0, %v4822
      %v4824 = vpop.f32.mrf.mxu0
      %v4825 = vpop.f32.mrf.mxu0
      %v4826 = vadd.f32 0.0, %v4825
      %v4827 = vpop.f32.mrf.mxu0
      %4828 = vmatprep.mubr.bf16.mxu0 0
      %4829 = vmatmul.mubr.bf16.gmra.mxu0 %v4734
      %v4830 = vpop.f32.mrf.mxu0
      %v4831 = vadd.f32 0.0, %v4830
      %v4832 = vpop.f32.mrf.mxu0
      %v4833 = vpop.f32.mrf.mxu0
      %v4834 = vadd.f32 0.0, %v4833
      %v4835 = vpop.f32.mrf.mxu0
      %4836 = vmatprep.mubr.bf16.mxu0 0
      %4837 = vmatmul.mubr.bf16.gmra.mxu0 %v4737
      %v4838 = vpop.f32.mrf.mxu0
      %v4839 = vadd.f32 0.0, %v4838
      %v4840 = vpop.f32.mrf.mxu0
      %v4841 = vpop.f32.mrf.mxu0
      %v4842 = vadd.f32 0.0, %v4841
      %v4843 = vpop.f32.mrf.mxu0
      %4844 = vmatprep.mubr.bf16.mxu0 0
      %4845 = vmatmul.mubr.bf16.gmra.mxu0 %v4740
      %v4846 = vpop.f32.mrf.mxu0
      %v4847 = vadd.f32 0.0, %v4846
      %v4848 = vpop.f32.mrf.mxu0
      %v4849 = vpop.f32.mrf.mxu0
      %v4850 = vadd.f32 0.0, %v4849
      %v4851 = vpop.f32.mrf.mxu0
      %4852 = vmatprep.mubr.bf16.mxu0 0
      %4853 = vmatmul.mubr.bf16.gmra.mxu0 %v4743
      %v4854 = vpop.f32.mrf.mxu0
      %v4855 = vadd.f32 0.0, %v4854
      %v4856 = vpop.f32.mrf.mxu0
      %v4857 = vpop.f32.mrf.mxu0
      %v4858 = vadd.f32 0.0, %v4857
      %v4859 = vpop.f32.mrf.mxu0
      %4860 = vmatprep.mubr.bf16.mxu0 0
      %4861 = vmatmul.mubr.bf16.gmra.mxu0 %v4746
      %v4862 = vpop.f32.mrf.mxu0
      %v4863 = vadd.f32 0.0, %v4862
      %v4864 = vpop.f32.mrf.mxu0
      %v4865 = vpop.f32.mrf.mxu0
      %v4866 = vadd.f32 0.0, %v4865
      %v4867 = vpop.f32.mrf.mxu0
      %4868 = vmatprep.mubr.bf16.mxu0 0
      %4869 = vmatmul.mubr.bf16.gmra.mxu0 %v4749
      %v4870 = vpop.f32.mrf.mxu0
      %v4871 = vadd.f32 0.0, %v4870
      %v4872 = vpop.f32.mrf.mxu0
      %v4873 = vpop.f32.mrf.mxu0
      %v4874 = vadd.f32 0.0, %v4873
      %v4875 = vpop.f32.mrf.mxu0
      %4876 = vmatprep.mubr.bf16.mxu0 0
      %4877 = vmatmul.mubr.bf16.gmra.mxu0 %v4752
      %v4878 = vpop.f32.mrf.mxu0
      %v4879 = vadd.f32 0.0, %v4878
      %v4880 = vpop.f32.mrf.mxu0
      %v4881 = vpop.f32.mrf.mxu0
      %v4882 = vadd.f32 0.0, %v4881
      %v4883 = vpop.f32.mrf.mxu0
      %4884 = vmatprep.mubr.bf16.mxu0 0
      %4885 = vmatmul.mubr.bf16.gmra.mxu0 %v4755
      %v4886 = vpop.f32.mrf.mxu0
      %v4887 = vadd.f32 0.0, %v4886
      %v4888 = vpop.f32.mrf.mxu0
      %v4889 = vpop.f32.mrf.mxu0
      %v4890 = vadd.f32 0.0, %v4889
      %v4891 = vpop.f32.mrf.mxu0
      %4892 = vmatprep.mubr.bf16.mxu0 0
      %4893 = vmatmul.mubr.bf16.gmra.mxu0 %v4758
      %v4894 = vpop.f32.mrf.mxu0
      %v4895 = vadd.f32 0.0, %v4894
      %v4896 = vpop.f32.mrf.mxu0
      %v4897 = vpop.f32.mrf.mxu0
      %v4898 = vadd.f32 0.0, %v4897
      %v4899 = vpop.f32.mrf.mxu0
      %4900 = vmatprep.mubr.bf16.mxu0 0
      %4901 = vmatmul.mubr.bf16.gmra.mxu0 %v4761
      %v4902 = vpop.f32.mrf.mxu0
      %v4903 = vadd.f32 0.0, %v4902
      %v4904 = vpop.f32.mrf.mxu0
      %v4905 = vpop.f32.mrf.mxu0
      %v4906 = vadd.f32 0.0, %v4905
      %v4907 = vpop.f32.mrf.mxu0
      %4908 = vmatprep.mubr.bf16.mxu0 0
      %4909 = vmatmul.mubr.bf16.gmra.mxu0 %v4764
      %v4910 = vpop.f32.mrf.mxu0
      %v4911 = vadd.f32 0.0, %v4910
      %v4912 = vpop.f32.mrf.mxu0
      %v4913 = vpop.f32.mrf.mxu0
      %v4914 = vadd.f32 0.0, %v4913
      %v4915 = vpop.f32.mrf.mxu0
      %4916 = vmatprep.mubr.bf16.mxu0 0
      %4917 = vmatmul.mubr.bf16.gmra.mxu0 %v4767
      %v4918 = vpop.f32.mrf.mxu0
      %v4919 = vadd.f32 0.0, %v4918
      %v4920 = vpop.f32.mrf.mxu0
      %v4921 = vpop.f32.mrf.mxu0
      %v4922 = vadd.f32 0.0, %v4921
      %v4923 = vpop.f32.mrf.mxu0
      %4924 = vmatprep.mubr.bf16.mxu0 0
      %4925 = vmatmul.mubr.bf16.gmra.mxu0 %v4770
      %v4926 = vpop.f32.mrf.mxu0
      %v4927 = vadd.f32 0.0, %v4926
      %v4928 = vpop.f32.mrf.mxu0
      %v4929 = vpop.f32.mrf.mxu0
      %v4930 = vadd.f32 0.0, %v4929
      %v4931 = vpop.f32.mrf.mxu0
      %4932 = vdwg.mxu0
      %v4933 = vadd.f32 %v4627, %v4807
      %v4934 = vadd.f32 %v4628, %v4810
      %v4935 = vadd.f32 %v4629, %v4815
      %v4936 = vadd.f32 %v4630, %v4818
      %v4937 = vadd.f32 %v4631, %v4823
      %v4938 = vadd.f32 %v4632, %v4826
      %v4939 = vadd.f32 %v4633, %v4831
      %v4940 = vadd.f32 %v4634, %v4834
      %v4941 = vadd.f32 %v4635, %v4839
      %v4942 = vadd.f32 %v4636, %v4842
      %v4943 = vadd.f32 %v4637, %v4847
      %v4944 = vadd.f32 %v4638, %v4850
      %v4945 = vadd.f32 %v4639, %v4855
      %v4946 = vadd.f32 %v4640, %v4858
      %v4947 = vadd.f32 %v4641, %v4863
      %v4948 = vadd.f32 %v4642, %v4866
      %v4949 = vadd.f32 %v4643, %v4871
      %v4950 = vadd.f32 %v4644, %v4874
      %v4951 = vadd.f32 %v4645, %v4879
      %v4952 = vadd.f32 %v4646, %v4882
      %v4953 = vadd.f32 %v4647, %v4887
      %v4954 = vadd.f32 %v4648, %v4890
      %v4955 = vadd.f32 %v4649, %v4895
      %v4956 = vadd.f32 %v4650, %v4898
      %v4957 = vadd.f32 %v4651, %v4903
      %v4958 = vadd.f32 %v4652, %v4906
      %v4959 = vadd.f32 %v4653, %v4911
      %v4960 = vadd.f32 %v4654, %v4914
      %v4961 = vadd.f32 %v4655, %v4919
      %v4962 = vadd.f32 %v4656, %v4922
      %v4963 = vadd.f32 %v4657, %v4927
      %v4964 = vadd.f32 %v4658, %v4930
      %s4965 = scalar_lea.vmem [#allocation3], 48
      %v4966 = vld [vmem:[%s4965] sm:$0xff]
      %v4967 = vld [vmem:[%s4965 + $0x8] sm:$0xff]
      %v4968 = vld [vmem:[%s4965 + $0x18] sm:$0xff]
      %v4969 = vld [vmem:[%s4965 + $0x20] sm:$0xff]
      %v4970 = vld [vmem:[%s4965 + $0x30] sm:$0xff]
      %v4971 = vld [vmem:[%s4965 + $0x38] sm:$0xff]
      %v4972 = vld [vmem:[%s4965 + $0x48] sm:$0xff]
      %v4973 = vld [vmem:[%s4965 + $0x50] sm:$0xff]
      %v4974 = vld [vmem:[%s4965 + $0x60] sm:$0xff]
      %v4975 = vld [vmem:[%s4965 + $0x68] sm:$0xff]
      %v4976 = vld [vmem:[%s4965 + $0x78] sm:$0xff]
      %v4977 = vld [vmem:[%s4965 + $0x80] sm:$0xff]
      %v4978 = vld [vmem:[%s4965 + $0x90] sm:$0xff]
      %v4979 = vld [vmem:[%s4965 + $0x98] sm:$0xff]
      %v4980 = vld [vmem:[%s4965 + $0xa8] sm:$0xff]
      %v4981 = vld [vmem:[%s4965 + $0xb0] sm:$0xff]
      %v4982 = vld [vmem:[%s4965 + $0xc0] sm:$0xff]
      %v4983 = vld [vmem:[%s4965 + $0xc8] sm:$0xff]
      %v4984 = vld [vmem:[%s4965 + $0xd8] sm:$0xff]
      %v4985 = vld [vmem:[%s4965 + $0xe0] sm:$0xff]
      %v4986 = vld [vmem:[%s4965 + $0xf0] sm:$0xff]
      %v4987 = vld [vmem:[%s4965 + $0xf8] sm:$0xff]
      %v4988 = vld [vmem:[%s4965 + $0x108] sm:$0xff]
      %v4989 = vld [vmem:[%s4965 + $0x110] sm:$0xff]
      %v4990 = vld [vmem:[%s4965 + $0x120] sm:$0xff]
      %v4991 = vld [vmem:[%s4965 + $0x128] sm:$0xff]
      %v4992 = vld [vmem:[%s4965 + $0x138] sm:$0xff]
      %v4993 = vld [vmem:[%s4965 + $0x140] sm:$0xff]
      %v4994 = vld [vmem:[%s4965 + $0x150] sm:$0xff]
      %v4995 = vld [vmem:[%s4965 + $0x158] sm:$0xff]
      %v4996 = vld [vmem:[%s4965 + $0x168] sm:$0xff]
      %v4997 = vld [vmem:[%s4965 + $0x170] sm:$0xff]
      %v4998 = vpack.c.bf16 %v4967, %v4966
      %v4999 = vpack.c.bf16 %v4969, %v4968
      %v5000 = vpack.c.bf16 %v4971, %v4970
      %v5001 = vpack.c.bf16 %v4973, %v4972
      %v5002 = vpack.c.bf16 %v4975, %v4974
      %v5003 = vpack.c.bf16 %v4977, %v4976
      %v5004 = vpack.c.bf16 %v4979, %v4978
      %v5005 = vpack.c.bf16 %v4981, %v4980
      %v5006 = vpack.c.bf16 %v4983, %v4982
      %v5007 = vpack.c.bf16 %v4985, %v4984
      %v5008 = vpack.c.bf16 %v4987, %v4986
      %v5009 = vpack.c.bf16 %v4989, %v4988
      %v5010 = vpack.c.bf16 %v4991, %v4990
      %v5011 = vpack.c.bf16 %v4993, %v4992
      %v5012 = vpack.c.bf16 %v4995, %v4994
      %v5013 = vpack.c.bf16 %v4997, %v4996
      %s5014 = scalar_lea.vmem %s4, 96
      %v5015 = vld [vmem:[%s5014] sm:$0xf]
      %v5016 = vld [vmem:[%s5014 + $0x4] sm:$0xf]
      %v5017 = vld [vmem:[%s5014 + $0x8] sm:$0xf]
      %v5018 = vld [vmem:[%s5014 + $0xc] sm:$0xf]
      %v5023 = vunpack.c.l.b16 %v5015
      %v5024 = vunpack.c.l.b16 %v5016
      %v5025 = vunpack.c.l.b16 %v5017
      %v5026 = vunpack.c.l.b16 %v5018
      %v5027 = vpack.c.b16 %v5024, %v5023
      %v5028 = vpack.c.b16 %v5026, %v5025
      %v5032 = vsel %vm383, %v4998, 0
      %v5035 = vsel %vm383, %v4999, 0
      %v5038 = vsel %vm383, %v5000, 0
      %v5041 = vsel %vm383, %v5001, 0
      %v5044 = vsel %vm383, %v5002, 0
      %v5047 = vsel %vm383, %v5003, 0
      %v5050 = vsel %vm383, %v5004, 0
      %v5053 = vsel %vm383, %v5005, 0
      %v5056 = vsel %vm383, %v5006, 0
      %v5059 = vsel %vm383, %v5007, 0
      %v5062 = vsel %vm383, %v5008, 0
      %v5065 = vsel %vm383, %v5009, 0
      %v5068 = vsel %vm383, %v5010, 0
      %v5071 = vsel %vm383, %v5011, 0
      %v5074 = vsel %vm383, %v5012, 0
      %v5077 = vsel %vm383, %v5013, 0
      %5079 = vmatprep.subr.bf16.mxu0 0
      %5080 = vmatpush1.bf16.msra.mxu0 0
      %5081 = vmatprep.subr.bf16.mxu0 0
      %5082 = vmatpush1.bf16.msra.mxu0 0
      %5083 = vmatprep.subr.bf16.mxu0 0
      %5084 = vmatpush1.bf16.msra.mxu0 0
      %5085 = vmatprep.subr.bf16.mxu0 0
      %5086 = vmatpush1.bf16.msra.mxu0 0
      %5087 = vmatprep.subr.bf16.mxu0 0
      %5088 = vmatpush1.bf16.msra.mxu0 0
      %5089 = vmatprep.subr.bf16.mxu0 0
      %5090 = vmatpush1.bf16.msra.mxu0 0
      %5091 = vmatprep.subr.bf16.mxu0 0
      %5092 = vmatpush1.bf16.msra.mxu0 %v5028
      %5093 = vmatprep.subr.bf16.mxu0 0
      %5094 = vmatpush1.bf16.msra.mxu0 %v5027
      %5095 = vmatprep.subr.bf16.mxu0 0
      %5096 = vmatpush2.bf16.msra.mxu0 0
      %5097 = vmatprep.subr.bf16.mxu0 0
      %5098 = vmatpush2.bf16.msra.mxu0 0
      %5099 = vmatprep.subr.bf16.mxu0 0
      %5100 = vmatpush2.bf16.msra.mxu0 0
      %5101 = vmatprep.subr.bf16.mxu0 0
      %5102 = vmatpush2.bf16.msra.mxu0 0
      %5103 = vmatprep.subr.bf16.mxu0 0
      %5104 = vmatpush2.bf16.msra.mxu0 0
      %5105 = vmatprep.subr.bf16.mxu0 0
      %5106 = vmatpush2.bf16.msra.mxu0 0
      %5107 = vmatprep.subr.bf16.mxu0 0
      %5108 = vmatpush2.bf16.msra.mxu0 0
      %5109 = vmatprep.subr.bf16.mxu0 0
      %5110 = vmatpush2.bf16.msra.mxu0 0
      %5111 = vmatprep.mubr.bf16.mxu0 0
      %5112 = vmatmul.mubr.bf16.gmra.mxu0 %v5032
      %v5113 = vpop.f32.mrf.mxu0
      %v5114 = vadd.f32 0.0, %v5113
      %v5115 = vpop.f32.mrf.mxu0
      %v5116 = vpop.f32.mrf.mxu0
      %v5117 = vadd.f32 0.0, %v5116
      %v5118 = vpop.f32.mrf.mxu0
      %5119 = vmatprep.mubr.bf16.mxu0 0
      %5120 = vmatmul.mubr.bf16.gmra.mxu0 %v5035
      %v5121 = vpop.f32.mrf.mxu0
      %v5122 = vadd.f32 0.0, %v5121
      %v5123 = vpop.f32.mrf.mxu0
      %v5124 = vpop.f32.mrf.mxu0
      %v5125 = vadd.f32 0.0, %v5124
      %v5126 = vpop.f32.mrf.mxu0
      %5127 = vmatprep.mubr.bf16.mxu0 0
      %5128 = vmatmul.mubr.bf16.gmra.mxu0 %v5038
      %v5129 = vpop.f32.mrf.mxu0
      %v5130 = vadd.f32 0.0, %v5129
      %v5131 = vpop.f32.mrf.mxu0
      %v5132 = vpop.f32.mrf.mxu0
      %v5133 = vadd.f32 0.0, %v5132
      %v5134 = vpop.f32.mrf.mxu0
      %5135 = vmatprep.mubr.bf16.mxu0 0
      %5136 = vmatmul.mubr.bf16.gmra.mxu0 %v5041
      %v5137 = vpop.f32.mrf.mxu0
      %v5138 = vadd.f32 0.0, %v5137
      %v5139 = vpop.f32.mrf.mxu0
      %v5140 = vpop.f32.mrf.mxu0
      %v5141 = vadd.f32 0.0, %v5140
      %v5142 = vpop.f32.mrf.mxu0
      %5143 = vmatprep.mubr.bf16.mxu0 0
      %5144 = vmatmul.mubr.bf16.gmra.mxu0 %v5044
      %v5145 = vpop.f32.mrf.mxu0
      %v5146 = vadd.f32 0.0, %v5145
      %v5147 = vpop.f32.mrf.mxu0
      %v5148 = vpop.f32.mrf.mxu0
      %v5149 = vadd.f32 0.0, %v5148
      %v5150 = vpop.f32.mrf.mxu0
      %5151 = vmatprep.mubr.bf16.mxu0 0
      %5152 = vmatmul.mubr.bf16.gmra.mxu0 %v5047
      %v5153 = vpop.f32.mrf.mxu0
      %v5154 = vadd.f32 0.0, %v5153
      %v5155 = vpop.f32.mrf.mxu0
      %v5156 = vpop.f32.mrf.mxu0
      %v5157 = vadd.f32 0.0, %v5156
      %v5158 = vpop.f32.mrf.mxu0
      %5159 = vmatprep.mubr.bf16.mxu0 0
      %5160 = vmatmul.mubr.bf16.gmra.mxu0 %v5050
      %v5161 = vpop.f32.mrf.mxu0
      %v5162 = vadd.f32 0.0, %v5161
      %v5163 = vpop.f32.mrf.mxu0
      %v5164 = vpop.f32.mrf.mxu0
      %v5165 = vadd.f32 0.0, %v5164
      %v5166 = vpop.f32.mrf.mxu0
      %5167 = vmatprep.mubr.bf16.mxu0 0
      %5168 = vmatmul.mubr.bf16.gmra.mxu0 %v5053
      %v5169 = vpop.f32.mrf.mxu0
      %v5170 = vadd.f32 0.0, %v5169
      %v5171 = vpop.f32.mrf.mxu0
      %v5172 = vpop.f32.mrf.mxu0
      %v5173 = vadd.f32 0.0, %v5172
      %v5174 = vpop.f32.mrf.mxu0
      %5175 = vmatprep.mubr.bf16.mxu0 0
      %5176 = vmatmul.mubr.bf16.gmra.mxu0 %v5056
      %v5177 = vpop.f32.mrf.mxu0
      %v5178 = vadd.f32 0.0, %v5177
      %v5179 = vpop.f32.mrf.mxu0
      %v5180 = vpop.f32.mrf.mxu0
      %v5181 = vadd.f32 0.0, %v5180
      %v5182 = vpop.f32.mrf.mxu0
      %5183 = vmatprep.mubr.bf16.mxu0 0
      %5184 = vmatmul.mubr.bf16.gmra.mxu0 %v5059
      %v5185 = vpop.f32.mrf.mxu0
      %v5186 = vadd.f32 0.0, %v5185
      %v5187 = vpop.f32.mrf.mxu0
      %v5188 = vpop.f32.mrf.mxu0
      %v5189 = vadd.f32 0.0, %v5188
      %v5190 = vpop.f32.mrf.mxu0
      %5191 = vmatprep.mubr.bf16.mxu0 0
      %5192 = vmatmul.mubr.bf16.gmra.mxu0 %v5062
      %v5193 = vpop.f32.mrf.mxu0
      %v5194 = vadd.f32 0.0, %v5193
      %v5195 = vpop.f32.mrf.mxu0
      %v5196 = vpop.f32.mrf.mxu0
      %v5197 = vadd.f32 0.0, %v5196
      %v5198 = vpop.f32.mrf.mxu0
      %5199 = vmatprep.mubr.bf16.mxu0 0
      %5200 = vmatmul.mubr.bf16.gmra.mxu0 %v5065
      %v5201 = vpop.f32.mrf.mxu0
      %v5202 = vadd.f32 0.0, %v5201
      %v5203 = vpop.f32.mrf.mxu0
      %v5204 = vpop.f32.mrf.mxu0
      %v5205 = vadd.f32 0.0, %v5204
      %v5206 = vpop.f32.mrf.mxu0
      %5207 = vmatprep.mubr.bf16.mxu0 0
      %5208 = vmatmul.mubr.bf16.gmra.mxu0 %v5068
      %v5209 = vpop.f32.mrf.mxu0
      %v5210 = vadd.f32 0.0, %v5209
      %v5211 = vpop.f32.mrf.mxu0
      %v5212 = vpop.f32.mrf.mxu0
      %v5213 = vadd.f32 0.0, %v5212
      %v5214 = vpop.f32.mrf.mxu0
      %5215 = vmatprep.mubr.bf16.mxu0 0
      %5216 = vmatmul.mubr.bf16.gmra.mxu0 %v5071
      %v5217 = vpop.f32.mrf.mxu0
      %v5218 = vadd.f32 0.0, %v5217
      %v5219 = vpop.f32.mrf.mxu0
      %v5220 = vpop.f32.mrf.mxu0
      %v5221 = vadd.f32 0.0, %v5220
      %v5222 = vpop.f32.mrf.mxu0
      %5223 = vmatprep.mubr.bf16.mxu0 0
      %5224 = vmatmul.mubr.bf16.gmra.mxu0 %v5074
      %v5225 = vpop.f32.mrf.mxu0
      %v5226 = vadd.f32 0.0, %v5225
      %v5227 = vpop.f32.mrf.mxu0
      %v5228 = vpop.f32.mrf.mxu0
      %v5229 = vadd.f32 0.0, %v5228
      %v5230 = vpop.f32.mrf.mxu0
      %5231 = vmatprep.mubr.bf16.mxu0 0
      %5232 = vmatmul.mubr.bf16.gmra.mxu0 %v5077
      %v5233 = vpop.f32.mrf.mxu0
      %v5234 = vadd.f32 0.0, %v5233
      %v5235 = vpop.f32.mrf.mxu0
      %v5236 = vpop.f32.mrf.mxu0
      %v5237 = vadd.f32 0.0, %v5236
      %v5238 = vpop.f32.mrf.mxu0
      %5239 = vdwg.mxu0
      %v5240 = vadd.f32 %v4933, %v5114
      %v5241 = vadd.f32 %v4934, %v5117
      %v5242 = vadd.f32 %v4935, %v5122
      %v5243 = vadd.f32 %v4936, %v5125
      %v5244 = vadd.f32 %v4937, %v5130
      %v5245 = vadd.f32 %v4938, %v5133
      %v5246 = vadd.f32 %v4939, %v5138
      %v5247 = vadd.f32 %v4940, %v5141
      %v5248 = vadd.f32 %v4941, %v5146
      %v5249 = vadd.f32 %v4942, %v5149
      %v5250 = vadd.f32 %v4943, %v5154
      %v5251 = vadd.f32 %v4944, %v5157
      %v5252 = vadd.f32 %v4945, %v5162
      %v5253 = vadd.f32 %v4946, %v5165
      %v5254 = vadd.f32 %v4947, %v5170
      %v5255 = vadd.f32 %v4948, %v5173
      %v5256 = vadd.f32 %v4949, %v5178
      %v5257 = vadd.f32 %v4950, %v5181
      %v5258 = vadd.f32 %v4951, %v5186
      %v5259 = vadd.f32 %v4952, %v5189
      %v5260 = vadd.f32 %v4953, %v5194
      %v5261 = vadd.f32 %v4954, %v5197
      %v5262 = vadd.f32 %v4955, %v5202
      %v5263 = vadd.f32 %v4956, %v5205
      %v5264 = vadd.f32 %v4957, %v5210
      %v5265 = vadd.f32 %v4958, %v5213
      %v5266 = vadd.f32 %v4959, %v5218
      %v5267 = vadd.f32 %v4960, %v5221
      %v5268 = vadd.f32 %v4961, %v5226
      %v5269 = vadd.f32 %v4962, %v5229
      %v5270 = vadd.f32 %v4963, %v5234
      %v5271 = vadd.f32 %v4964, %v5237
      %v5272 = vld [vmem:[%s4965 + $0x1] sm:$0xff]
      %v5273 = vld [vmem:[%s4965 + $0x9] sm:$0xff]
      %v5274 = vld [vmem:[%s4965 + $0x19] sm:$0xff]
      %v5275 = vld [vmem:[%s4965 + $0x21] sm:$0xff]
      %v5276 = vld [vmem:[%s4965 + $0x31] sm:$0xff]
      %v5277 = vld [vmem:[%s4965 + $0x39] sm:$0xff]
      %v5278 = vld [vmem:[%s4965 + $0x49] sm:$0xff]
      %v5279 = vld [vmem:[%s4965 + $0x51] sm:$0xff]
      %v5280 = vld [vmem:[%s4965 + $0x61] sm:$0xff]
      %v5281 = vld [vmem:[%s4965 + $0x69] sm:$0xff]
      %v5282 = vld [vmem:[%s4965 + $0x79] sm:$0xff]
      %v5283 = vld [vmem:[%s4965 + $0x81] sm:$0xff]
      %v5284 = vld [vmem:[%s4965 + $0x91] sm:$0xff]
      %v5285 = vld [vmem:[%s4965 + $0x99] sm:$0xff]
      %v5286 = vld [vmem:[%s4965 + $0xa9] sm:$0xff]
      %v5287 = vld [vmem:[%s4965 + $0xb1] sm:$0xff]
      %v5288 = vld [vmem:[%s4965 + $0xc1] sm:$0xff]
      %v5289 = vld [vmem:[%s4965 + $0xc9] sm:$0xff]
      %v5290 = vld [vmem:[%s4965 + $0xd9] sm:$0xff]
      %v5291 = vld [vmem:[%s4965 + $0xe1] sm:$0xff]
      %v5292 = vld [vmem:[%s4965 + $0xf1] sm:$0xff]
      %v5293 = vld [vmem:[%s4965 + $0xf9] sm:$0xff]
      %v5294 = vld [vmem:[%s4965 + $0x109] sm:$0xff]
      %v5295 = vld [vmem:[%s4965 + $0x111] sm:$0xff]
      %v5296 = vld [vmem:[%s4965 + $0x121] sm:$0xff]
      %v5297 = vld [vmem:[%s4965 + $0x129] sm:$0xff]
      %v5298 = vld [vmem:[%s4965 + $0x139] sm:$0xff]
      %v5299 = vld [vmem:[%s4965 + $0x141] sm:$0xff]
      %v5300 = vld [vmem:[%s4965 + $0x151] sm:$0xff]
      %v5301 = vld [vmem:[%s4965 + $0x159] sm:$0xff]
      %v5302 = vld [vmem:[%s4965 + $0x169] sm:$0xff]
      %v5303 = vld [vmem:[%s4965 + $0x171] sm:$0xff]
      %v5304 = vpack.c.bf16 %v5273, %v5272
      %v5305 = vpack.c.bf16 %v5275, %v5274
      %v5306 = vpack.c.bf16 %v5277, %v5276
      %v5307 = vpack.c.bf16 %v5279, %v5278
      %v5308 = vpack.c.bf16 %v5281, %v5280
      %v5309 = vpack.c.bf16 %v5283, %v5282
      %v5310 = vpack.c.bf16 %v5285, %v5284
      %v5311 = vpack.c.bf16 %v5287, %v5286
      %v5312 = vpack.c.bf16 %v5289, %v5288
      %v5313 = vpack.c.bf16 %v5291, %v5290
      %v5314 = vpack.c.bf16 %v5293, %v5292
      %v5315 = vpack.c.bf16 %v5295, %v5294
      %v5316 = vpack.c.bf16 %v5297, %v5296
      %v5317 = vpack.c.bf16 %v5299, %v5298
      %v5318 = vpack.c.bf16 %v5301, %v5300
      %v5319 = vpack.c.bf16 %v5303, %v5302
      %s5320 = scalar_lea.vmem %s4, 112
      %v5321 = vld [vmem:[%s5320] sm:$0xf]
      %v5322 = vld [vmem:[%s5320 + $0x4] sm:$0xf]
      %v5323 = vld [vmem:[%s5320 + $0x8] sm:$0xf]
      %v5324 = vld [vmem:[%s5320 + $0xc] sm:$0xf]
      %v5329 = vunpack.c.l.b16 %v5321
      %v5330 = vunpack.c.l.b16 %v5322
      %v5331 = vunpack.c.l.b16 %v5323
      %v5332 = vunpack.c.l.b16 %v5324
      %v5333 = vpack.c.b16 %v5330, %v5329
      %v5334 = vpack.c.b16 %v5332, %v5331
      %v5338 = vsel %vm383, %v5304, 0
      %v5341 = vsel %vm383, %v5305, 0
      %v5344 = vsel %vm383, %v5306, 0
      %v5347 = vsel %vm383, %v5307, 0
      %v5350 = vsel %vm383, %v5308, 0
      %v5353 = vsel %vm383, %v5309, 0
      %v5356 = vsel %vm383, %v5310, 0
      %v5359 = vsel %vm383, %v5311, 0
      %v5362 = vsel %vm383, %v5312, 0
      %v5365 = vsel %vm383, %v5313, 0
      %v5368 = vsel %vm383, %v5314, 0
      %v5371 = vsel %vm383, %v5315, 0
      %v5374 = vsel %vm383, %v5316, 0
      %v5377 = vsel %vm383, %v5317, 0
      %v5380 = vsel %vm383, %v5318, 0
      %v5383 = vsel %vm383, %v5319, 0
      %5385 = vmatprep.subr.bf16.mxu0 0
      %5386 = vmatpush1.bf16.msra.mxu0 0
      %5387 = vmatprep.subr.bf16.mxu0 0
      %5388 = vmatpush1.bf16.msra.mxu0 0
      %5389 = vmatprep.subr.bf16.mxu0 0
      %5390 = vmatpush1.bf16.msra.mxu0 0
      %5391 = vmatprep.subr.bf16.mxu0 0
      %5392 = vmatpush1.bf16.msra.mxu0 0
      %5393 = vmatprep.subr.bf16.mxu0 0
      %5394 = vmatpush1.bf16.msra.mxu0 0
      %5395 = vmatprep.subr.bf16.mxu0 0
      %5396 = vmatpush1.bf16.msra.mxu0 0
      %5397 = vmatprep.subr.bf16.mxu0 0
      %5398 = vmatpush1.bf16.msra.mxu0 %v5334
      %5399 = vmatprep.subr.bf16.mxu0 0
      %5400 = vmatpush1.bf16.msra.mxu0 %v5333
      %5401 = vmatprep.subr.bf16.mxu0 0
      %5402 = vmatpush2.bf16.msra.mxu0 0
      %5403 = vmatprep.subr.bf16.mxu0 0
      %5404 = vmatpush2.bf16.msra.mxu0 0
      %5405 = vmatprep.subr.bf16.mxu0 0
      %5406 = vmatpush2.bf16.msra.mxu0 0
      %5407 = vmatprep.subr.bf16.mxu0 0
      %5408 = vmatpush2.bf16.msra.mxu0 0
      %5409 = vmatprep.subr.bf16.mxu0 0
      %5410 = vmatpush2.bf16.msra.mxu0 0
      %5411 = vmatprep.subr.bf16.mxu0 0
      %5412 = vmatpush2.bf16.msra.mxu0 0
      %5413 = vmatprep.subr.bf16.mxu0 0
      %5414 = vmatpush2.bf16.msra.mxu0 0
      %5415 = vmatprep.subr.bf16.mxu0 0
      %5416 = vmatpush2.bf16.msra.mxu0 0
      %5417 = vmatprep.mubr.bf16.mxu0 0
      %5418 = vmatmul.mubr.bf16.gmra.mxu0 %v5338
      %v5419 = vpop.f32.mrf.mxu0
      %v5420 = vadd.f32 0.0, %v5419
      %v5421 = vpop.f32.mrf.mxu0
      %v5422 = vpop.f32.mrf.mxu0
      %v5423 = vadd.f32 0.0, %v5422
      %v5424 = vpop.f32.mrf.mxu0
      %5425 = vmatprep.mubr.bf16.mxu0 0
      %5426 = vmatmul.mubr.bf16.gmra.mxu0 %v5341
      %v5427 = vpop.f32.mrf.mxu0
      %v5428 = vadd.f32 0.0, %v5427
      %v5429 = vpop.f32.mrf.mxu0
      %v5430 = vpop.f32.mrf.mxu0
      %v5431 = vadd.f32 0.0, %v5430
      %v5432 = vpop.f32.mrf.mxu0
      %5433 = vmatprep.mubr.bf16.mxu0 0
      %5434 = vmatmul.mubr.bf16.gmra.mxu0 %v5344
      %v5435 = vpop.f32.mrf.mxu0
      %v5436 = vadd.f32 0.0, %v5435
      %v5437 = vpop.f32.mrf.mxu0
      %v5438 = vpop.f32.mrf.mxu0
      %v5439 = vadd.f32 0.0, %v5438
      %v5440 = vpop.f32.mrf.mxu0
      %5441 = vmatprep.mubr.bf16.mxu0 0
      %5442 = vmatmul.mubr.bf16.gmra.mxu0 %v5347
      %v5443 = vpop.f32.mrf.mxu0
      %v5444 = vadd.f32 0.0, %v5443
      %v5445 = vpop.f32.mrf.mxu0
      %v5446 = vpop.f32.mrf.mxu0
      %v5447 = vadd.f32 0.0, %v5446
      %v5448 = vpop.f32.mrf.mxu0
      %5449 = vmatprep.mubr.bf16.mxu0 0
      %5450 = vmatmul.mubr.bf16.gmra.mxu0 %v5350
      %v5451 = vpop.f32.mrf.mxu0
      %v5452 = vadd.f32 0.0, %v5451
      %v5453 = vpop.f32.mrf.mxu0
      %v5454 = vpop.f32.mrf.mxu0
      %v5455 = vadd.f32 0.0, %v5454
      %v5456 = vpop.f32.mrf.mxu0
      %5457 = vmatprep.mubr.bf16.mxu0 0
      %5458 = vmatmul.mubr.bf16.gmra.mxu0 %v5353
      %v5459 = vpop.f32.mrf.mxu0
      %v5460 = vadd.f32 0.0, %v5459
      %v5461 = vpop.f32.mrf.mxu0
      %v5462 = vpop.f32.mrf.mxu0
      %v5463 = vadd.f32 0.0, %v5462
      %v5464 = vpop.f32.mrf.mxu0
      %5465 = vmatprep.mubr.bf16.mxu0 0
      %5466 = vmatmul.mubr.bf16.gmra.mxu0 %v5356
      %v5467 = vpop.f32.mrf.mxu0
      %v5468 = vadd.f32 0.0, %v5467
      %v5469 = vpop.f32.mrf.mxu0
      %v5470 = vpop.f32.mrf.mxu0
      %v5471 = vadd.f32 0.0, %v5470
      %v5472 = vpop.f32.mrf.mxu0
      %5473 = vmatprep.mubr.bf16.mxu0 0
      %5474 = vmatmul.mubr.bf16.gmra.mxu0 %v5359
      %v5475 = vpop.f32.mrf.mxu0
      %v5476 = vadd.f32 0.0, %v5475
      %v5477 = vpop.f32.mrf.mxu0
      %v5478 = vpop.f32.mrf.mxu0
      %v5479 = vadd.f32 0.0, %v5478
      %v5480 = vpop.f32.mrf.mxu0
      %5481 = vmatprep.mubr.bf16.mxu0 0
      %5482 = vmatmul.mubr.bf16.gmra.mxu0 %v5362
      %v5483 = vpop.f32.mrf.mxu0
      %v5484 = vadd.f32 0.0, %v5483
      %v5485 = vpop.f32.mrf.mxu0
      %v5486 = vpop.f32.mrf.mxu0
      %v5487 = vadd.f32 0.0, %v5486
      %v5488 = vpop.f32.mrf.mxu0
      %5489 = vmatprep.mubr.bf16.mxu0 0
      %5490 = vmatmul.mubr.bf16.gmra.mxu0 %v5365
      %v5491 = vpop.f32.mrf.mxu0
      %v5492 = vadd.f32 0.0, %v5491
      %v5493 = vpop.f32.mrf.mxu0
      %v5494 = vpop.f32.mrf.mxu0
      %v5495 = vadd.f32 0.0, %v5494
      %v5496 = vpop.f32.mrf.mxu0
      %5497 = vmatprep.mubr.bf16.mxu0 0
      %5498 = vmatmul.mubr.bf16.gmra.mxu0 %v5368
      %v5499 = vpop.f32.mrf.mxu0
      %v5500 = vadd.f32 0.0, %v5499
      %v5501 = vpop.f32.mrf.mxu0
      %v5502 = vpop.f32.mrf.mxu0
      %v5503 = vadd.f32 0.0, %v5502
      %v5504 = vpop.f32.mrf.mxu0
      %5505 = vmatprep.mubr.bf16.mxu0 0
      %5506 = vmatmul.mubr.bf16.gmra.mxu0 %v5371
      %v5507 = vpop.f32.mrf.mxu0
      %v5508 = vadd.f32 0.0, %v5507
      %v5509 = vpop.f32.mrf.mxu0
      %v5510 = vpop.f32.mrf.mxu0
      %v5511 = vadd.f32 0.0, %v5510
      %v5512 = vpop.f32.mrf.mxu0
      %5513 = vmatprep.mubr.bf16.mxu0 0
      %5514 = vmatmul.mubr.bf16.gmra.mxu0 %v5374
      %v5515 = vpop.f32.mrf.mxu0
      %v5516 = vadd.f32 0.0, %v5515
      %v5517 = vpop.f32.mrf.mxu0
      %v5518 = vpop.f32.mrf.mxu0
      %v5519 = vadd.f32 0.0, %v5518
      %v5520 = vpop.f32.mrf.mxu0
      %5521 = vmatprep.mubr.bf16.mxu0 0
      %5522 = vmatmul.mubr.bf16.gmra.mxu0 %v5377
      %v5523 = vpop.f32.mrf.mxu0
      %v5524 = vadd.f32 0.0, %v5523
      %v5525 = vpop.f32.mrf.mxu0
      %v5526 = vpop.f32.mrf.mxu0
      %v5527 = vadd.f32 0.0, %v5526
      %v5528 = vpop.f32.mrf.mxu0
      %5529 = vmatprep.mubr.bf16.mxu0 0
      %5530 = vmatmul.mubr.bf16.gmra.mxu0 %v5380
      %v5531 = vpop.f32.mrf.mxu0
      %v5532 = vadd.f32 0.0, %v5531
      %v5533 = vpop.f32.mrf.mxu0
      %v5534 = vpop.f32.mrf.mxu0
      %v5535 = vadd.f32 0.0, %v5534
      %v5536 = vpop.f32.mrf.mxu0
      %5537 = vmatprep.mubr.bf16.mxu0 0
      %5538 = vmatmul.mubr.bf16.gmra.mxu0 %v5383
      %v5539 = vpop.f32.mrf.mxu0
      %v5540 = vadd.f32 0.0, %v5539
      %v5541 = vpop.f32.mrf.mxu0
      %v5542 = vpop.f32.mrf.mxu0
      %v5543 = vadd.f32 0.0, %v5542
      %v5544 = vpop.f32.mrf.mxu0
      %5545 = vdwg.mxu0
      %v5546 = vadd.f32 %v5240, %v5420
      %v5547 = vadd.f32 %v5241, %v5423
      %v5548 = vadd.f32 %v5242, %v5428
      %v5549 = vadd.f32 %v5243, %v5431
      %v5550 = vadd.f32 %v5244, %v5436
      %v5551 = vadd.f32 %v5245, %v5439
      %v5552 = vadd.f32 %v5246, %v5444
      %v5553 = vadd.f32 %v5247, %v5447
      %v5554 = vadd.f32 %v5248, %v5452
      %v5555 = vadd.f32 %v5249, %v5455
      %v5556 = vadd.f32 %v5250, %v5460
      %v5557 = vadd.f32 %v5251, %v5463
      %v5558 = vadd.f32 %v5252, %v5468
      %v5559 = vadd.f32 %v5253, %v5471
      %v5560 = vadd.f32 %v5254, %v5476
      %v5561 = vadd.f32 %v5255, %v5479
      %v5562 = vadd.f32 %v5256, %v5484
      %v5563 = vadd.f32 %v5257, %v5487
      %v5564 = vadd.f32 %v5258, %v5492
      %v5565 = vadd.f32 %v5259, %v5495
      %v5566 = vadd.f32 %v5260, %v5500
      %v5567 = vadd.f32 %v5261, %v5503
      %v5568 = vadd.f32 %v5262, %v5508
      %v5569 = vadd.f32 %v5263, %v5511
      %v5570 = vadd.f32 %v5264, %v5516
      %v5571 = vadd.f32 %v5265, %v5519
      %v5572 = vadd.f32 %v5266, %v5524
      %v5573 = vadd.f32 %v5267, %v5527
      %v5574 = vadd.f32 %v5268, %v5532
      %v5575 = vadd.f32 %v5269, %v5535
      %v5576 = vadd.f32 %v5270, %v5540
      %v5577 = vadd.f32 %v5271, %v5543
      %v5578 = vld [vmem:[%s4965 + $0x2] sm:$0xff]
      %v5579 = vld [vmem:[%s4965 + $0xa] sm:$0xff]
      %v5580 = vld [vmem:[%s4965 + $0x1a] sm:$0xff]
      %v5581 = vld [vmem:[%s4965 + $0x22] sm:$0xff]
      %v5582 = vld [vmem:[%s4965 + $0x32] sm:$0xff]
      %v5583 = vld [vmem:[%s4965 + $0x3a] sm:$0xff]
      %v5584 = vld [vmem:[%s4965 + $0x4a] sm:$0xff]
      %v5585 = vld [vmem:[%s4965 + $0x52] sm:$0xff]
      %v5586 = vld [vmem:[%s4965 + $0x62] sm:$0xff]
      %v5587 = vld [vmem:[%s4965 + $0x6a] sm:$0xff]
      %v5588 = vld [vmem:[%s4965 + $0x7a] sm:$0xff]
      %v5589 = vld [vmem:[%s4965 + $0x82] sm:$0xff]
      %v5590 = vld [vmem:[%s4965 + $0x92] sm:$0xff]
      %v5591 = vld [vmem:[%s4965 + $0x9a] sm:$0xff]
      %v5592 = vld [vmem:[%s4965 + $0xaa] sm:$0xff]
      %v5593 = vld [vmem:[%s4965 + $0xb2] sm:$0xff]
      %v5594 = vld [vmem:[%s4965 + $0xc2] sm:$0xff]
      %v5595 = vld [vmem:[%s4965 + $0xca] sm:$0xff]
      %v5596 = vld [vmem:[%s4965 + $0xda] sm:$0xff]
      %v5597 = vld [vmem:[%s4965 + $0xe2] sm:$0xff]
      %v5598 = vld [vmem:[%s4965 + $0xf2] sm:$0xff]
      %v5599 = vld [vmem:[%s4965 + $0xfa] sm:$0xff]
      %v5600 = vld [vmem:[%s4965 + $0x10a] sm:$0xff]
      %v5601 = vld [vmem:[%s4965 + $0x112] sm:$0xff]
      %v5602 = vld [vmem:[%s4965 + $0x122] sm:$0xff]
      %v5603 = vld [vmem:[%s4965 + $0x12a] sm:$0xff]
      %v5604 = vld [vmem:[%s4965 + $0x13a] sm:$0xff]
      %v5605 = vld [vmem:[%s4965 + $0x142] sm:$0xff]
      %v5606 = vld [vmem:[%s4965 + $0x152] sm:$0xff]
      %v5607 = vld [vmem:[%s4965 + $0x15a] sm:$0xff]
      %v5608 = vld [vmem:[%s4965 + $0x16a] sm:$0xff]
      %v5609 = vld [vmem:[%s4965 + $0x172] sm:$0xff]
      %v5610 = vpack.c.bf16 %v5579, %v5578
      %v5611 = vpack.c.bf16 %v5581, %v5580
      %v5612 = vpack.c.bf16 %v5583, %v5582
      %v5613 = vpack.c.bf16 %v5585, %v5584
      %v5614 = vpack.c.bf16 %v5587, %v5586
      %v5615 = vpack.c.bf16 %v5589, %v5588
      %v5616 = vpack.c.bf16 %v5591, %v5590
      %v5617 = vpack.c.bf16 %v5593, %v5592
      %v5618 = vpack.c.bf16 %v5595, %v5594
      %v5619 = vpack.c.bf16 %v5597, %v5596
      %v5620 = vpack.c.bf16 %v5599, %v5598
      %v5621 = vpack.c.bf16 %v5601, %v5600
      %v5622 = vpack.c.bf16 %v5603, %v5602
      %v5623 = vpack.c.bf16 %v5605, %v5604
      %v5624 = vpack.c.bf16 %v5607, %v5606
      %v5625 = vpack.c.bf16 %v5609, %v5608
      %s5626 = scalar_lea.vmem %s4, 128
      %v5627 = vld [vmem:[%s5626] sm:$0xf]
      %v5628 = vld [vmem:[%s5626 + $0x4] sm:$0xf]
      %v5629 = vld [vmem:[%s5626 + $0x8] sm:$0xf]
      %v5630 = vld [vmem:[%s5626 + $0xc] sm:$0xf]
      %v5635 = vunpack.c.l.b16 %v5627
      %v5636 = vunpack.c.l.b16 %v5628
      %v5637 = vunpack.c.l.b16 %v5629
      %v5638 = vunpack.c.l.b16 %v5630
      %v5639 = vpack.c.b16 %v5636, %v5635
      %v5640 = vpack.c.b16 %v5638, %v5637
      %v5644 = vsel %vm383, %v5610, 0
      %v5647 = vsel %vm383, %v5611, 0
      %v5650 = vsel %vm383, %v5612, 0
      %v5653 = vsel %vm383, %v5613, 0
      %v5656 = vsel %vm383, %v5614, 0
      %v5659 = vsel %vm383, %v5615, 0
      %v5662 = vsel %vm383, %v5616, 0
      %v5665 = vsel %vm383, %v5617, 0
      %v5668 = vsel %vm383, %v5618, 0
      %v5671 = vsel %vm383, %v5619, 0
      %v5674 = vsel %vm383, %v5620, 0
      %v5677 = vsel %vm383, %v5621, 0
      %v5680 = vsel %vm383, %v5622, 0
      %v5683 = vsel %vm383, %v5623, 0
      %v5686 = vsel %vm383, %v5624, 0
      %v5689 = vsel %vm383, %v5625, 0
      %5691 = vmatprep.subr.bf16.mxu0 0
      %5692 = vmatpush1.bf16.msra.mxu0 0
      %5693 = vmatprep.subr.bf16.mxu0 0
      %5694 = vmatpush1.bf16.msra.mxu0 0
      %5695 = vmatprep.subr.bf16.mxu0 0
      %5696 = vmatpush1.bf16.msra.mxu0 0
      %5697 = vmatprep.subr.bf16.mxu0 0
      %5698 = vmatpush1.bf16.msra.mxu0 0
      %5699 = vmatprep.subr.bf16.mxu0 0
      %5700 = vmatpush1.bf16.msra.mxu0 0
      %5701 = vmatprep.subr.bf16.mxu0 0
      %5702 = vmatpush1.bf16.msra.mxu0 0
      %5703 = vmatprep.subr.bf16.mxu0 0
      %5704 = vmatpush1.bf16.msra.mxu0 %v5640
      %5705 = vmatprep.subr.bf16.mxu0 0
      %5706 = vmatpush1.bf16.msra.mxu0 %v5639
      %5707 = vmatprep.subr.bf16.mxu0 0
      %5708 = vmatpush2.bf16.msra.mxu0 0
      %5709 = vmatprep.subr.bf16.mxu0 0
      %5710 = vmatpush2.bf16.msra.mxu0 0
      %5711 = vmatprep.subr.bf16.mxu0 0
      %5712 = vmatpush2.bf16.msra.mxu0 0
      %5713 = vmatprep.subr.bf16.mxu0 0
      %5714 = vmatpush2.bf16.msra.mxu0 0
      %5715 = vmatprep.subr.bf16.mxu0 0
      %5716 = vmatpush2.bf16.msra.mxu0 0
      %5717 = vmatprep.subr.bf16.mxu0 0
      %5718 = vmatpush2.bf16.msra.mxu0 0
      %5719 = vmatprep.subr.bf16.mxu0 0
      %5720 = vmatpush2.bf16.msra.mxu0 0
      %5721 = vmatprep.subr.bf16.mxu0 0
      %5722 = vmatpush2.bf16.msra.mxu0 0
      %5723 = vmatprep.mubr.bf16.mxu0 0
      %5724 = vmatmul.mubr.bf16.gmra.mxu0 %v5644
      %v5725 = vpop.f32.mrf.mxu0
      %v5726 = vadd.f32 0.0, %v5725
      %v5727 = vpop.f32.mrf.mxu0
      %v5728 = vpop.f32.mrf.mxu0
      %v5729 = vadd.f32 0.0, %v5728
      %v5730 = vpop.f32.mrf.mxu0
      %5731 = vmatprep.mubr.bf16.mxu0 0
      %5732 = vmatmul.mubr.bf16.gmra.mxu0 %v5647
      %v5733 = vpop.f32.mrf.mxu0
      %v5734 = vadd.f32 0.0, %v5733
      %v5735 = vpop.f32.mrf.mxu0
      %v5736 = vpop.f32.mrf.mxu0
      %v5737 = vadd.f32 0.0, %v5736
      %v5738 = vpop.f32.mrf.mxu0
      %5739 = vmatprep.mubr.bf16.mxu0 0
      %5740 = vmatmul.mubr.bf16.gmra.mxu0 %v5650
      %v5741 = vpop.f32.mrf.mxu0
      %v5742 = vadd.f32 0.0, %v5741
      %v5743 = vpop.f32.mrf.mxu0
      %v5744 = vpop.f32.mrf.mxu0
      %v5745 = vadd.f32 0.0, %v5744
      %v5746 = vpop.f32.mrf.mxu0
      %5747 = vmatprep.mubr.bf16.mxu0 0
      %5748 = vmatmul.mubr.bf16.gmra.mxu0 %v5653
      %v5749 = vpop.f32.mrf.mxu0
      %v5750 = vadd.f32 0.0, %v5749
      %v5751 = vpop.f32.mrf.mxu0
      %v5752 = vpop.f32.mrf.mxu0
      %v5753 = vadd.f32 0.0, %v5752
      %v5754 = vpop.f32.mrf.mxu0
      %5755 = vmatprep.mubr.bf16.mxu0 0
      %5756 = vmatmul.mubr.bf16.gmra.mxu0 %v5656
      %v5757 = vpop.f32.mrf.mxu0
      %v5758 = vadd.f32 0.0, %v5757
      %v5759 = vpop.f32.mrf.mxu0
      %v5760 = vpop.f32.mrf.mxu0
      %v5761 = vadd.f32 0.0, %v5760
      %v5762 = vpop.f32.mrf.mxu0
      %5763 = vmatprep.mubr.bf16.mxu0 0
      %5764 = vmatmul.mubr.bf16.gmra.mxu0 %v5659
      %v5765 = vpop.f32.mrf.mxu0
      %v5766 = vadd.f32 0.0, %v5765
      %v5767 = vpop.f32.mrf.mxu0
      %v5768 = vpop.f32.mrf.mxu0
      %v5769 = vadd.f32 0.0, %v5768
      %v5770 = vpop.f32.mrf.mxu0
      %5771 = vmatprep.mubr.bf16.mxu0 0
      %5772 = vmatmul.mubr.bf16.gmra.mxu0 %v5662
      %v5773 = vpop.f32.mrf.mxu0
      %v5774 = vadd.f32 0.0, %v5773
      %v5775 = vpop.f32.mrf.mxu0
      %v5776 = vpop.f32.mrf.mxu0
      %v5777 = vadd.f32 0.0, %v5776
      %v5778 = vpop.f32.mrf.mxu0
      %5779 = vmatprep.mubr.bf16.mxu0 0
      %5780 = vmatmul.mubr.bf16.gmra.mxu0 %v5665
      %v5781 = vpop.f32.mrf.mxu0
      %v5782 = vadd.f32 0.0, %v5781
      %v5783 = vpop.f32.mrf.mxu0
      %v5784 = vpop.f32.mrf.mxu0
      %v5785 = vadd.f32 0.0, %v5784
      %v5786 = vpop.f32.mrf.mxu0
      %5787 = vmatprep.mubr.bf16.mxu0 0
      %5788 = vmatmul.mubr.bf16.gmra.mxu0 %v5668
      %v5789 = vpop.f32.mrf.mxu0
      %v5790 = vadd.f32 0.0, %v5789
      %v5791 = vpop.f32.mrf.mxu0
      %v5792 = vpop.f32.mrf.mxu0
      %v5793 = vadd.f32 0.0, %v5792
      %v5794 = vpop.f32.mrf.mxu0
      %5795 = vmatprep.mubr.bf16.mxu0 0
      %5796 = vmatmul.mubr.bf16.gmra.mxu0 %v5671
      %v5797 = vpop.f32.mrf.mxu0
      %v5798 = vadd.f32 0.0, %v5797
      %v5799 = vpop.f32.mrf.mxu0
      %v5800 = vpop.f32.mrf.mxu0
      %v5801 = vadd.f32 0.0, %v5800
      %v5802 = vpop.f32.mrf.mxu0
      %5803 = vmatprep.mubr.bf16.mxu0 0
      %5804 = vmatmul.mubr.bf16.gmra.mxu0 %v5674
      %v5805 = vpop.f32.mrf.mxu0
      %v5806 = vadd.f32 0.0, %v5805
      %v5807 = vpop.f32.mrf.mxu0
      %v5808 = vpop.f32.mrf.mxu0
      %v5809 = vadd.f32 0.0, %v5808
      %v5810 = vpop.f32.mrf.mxu0
      %5811 = vmatprep.mubr.bf16.mxu0 0
      %5812 = vmatmul.mubr.bf16.gmra.mxu0 %v5677
      %v5813 = vpop.f32.mrf.mxu0
      %v5814 = vadd.f32 0.0, %v5813
      %v5815 = vpop.f32.mrf.mxu0
      %v5816 = vpop.f32.mrf.mxu0
      %v5817 = vadd.f32 0.0, %v5816
      %v5818 = vpop.f32.mrf.mxu0
      %5819 = vmatprep.mubr.bf16.mxu0 0
      %5820 = vmatmul.mubr.bf16.gmra.mxu0 %v5680
      %v5821 = vpop.f32.mrf.mxu0
      %v5822 = vadd.f32 0.0, %v5821
      %v5823 = vpop.f32.mrf.mxu0
      %v5824 = vpop.f32.mrf.mxu0
      %v5825 = vadd.f32 0.0, %v5824
      %v5826 = vpop.f32.mrf.mxu0
      %5827 = vmatprep.mubr.bf16.mxu0 0
      %5828 = vmatmul.mubr.bf16.gmra.mxu0 %v5683
      %v5829 = vpop.f32.mrf.mxu0
      %v5830 = vadd.f32 0.0, %v5829
      %v5831 = vpop.f32.mrf.mxu0
      %v5832 = vpop.f32.mrf.mxu0
      %v5833 = vadd.f32 0.0, %v5832
      %v5834 = vpop.f32.mrf.mxu0
      %5835 = vmatprep.mubr.bf16.mxu0 0
      %5836 = vmatmul.mubr.bf16.gmra.mxu0 %v5686
      %v5837 = vpop.f32.mrf.mxu0
      %v5838 = vadd.f32 0.0, %v5837
      %v5839 = vpop.f32.mrf.mxu0
      %v5840 = vpop.f32.mrf.mxu0
      %v5841 = vadd.f32 0.0, %v5840
      %v5842 = vpop.f32.mrf.mxu0
      %5843 = vmatprep.mubr.bf16.mxu0 0
      %5844 = vmatmul.mubr.bf16.gmra.mxu0 %v5689
      %v5845 = vpop.f32.mrf.mxu0
      %v5846 = vadd.f32 0.0, %v5845
      %v5847 = vpop.f32.mrf.mxu0
      %v5848 = vpop.f32.mrf.mxu0
      %v5849 = vadd.f32 0.0, %v5848
      %v5850 = vpop.f32.mrf.mxu0
      %5851 = vdwg.mxu0
      %v5852 = vadd.f32 %v5546, %v5726
      %v5853 = vadd.f32 %v5547, %v5729
      %v5854 = vadd.f32 %v5548, %v5734
      %v5855 = vadd.f32 %v5549, %v5737
      %v5856 = vadd.f32 %v5550, %v5742
      %v5857 = vadd.f32 %v5551, %v5745
      %v5858 = vadd.f32 %v5552, %v5750
      %v5859 = vadd.f32 %v5553, %v5753
      %v5860 = vadd.f32 %v5554, %v5758
      %v5861 = vadd.f32 %v5555, %v5761
      %v5862 = vadd.f32 %v5556, %v5766
      %v5863 = vadd.f32 %v5557, %v5769
      %v5864 = vadd.f32 %v5558, %v5774
      %v5865 = vadd.f32 %v5559, %v5777
      %v5866 = vadd.f32 %v5560, %v5782
      %v5867 = vadd.f32 %v5561, %v5785
      %v5868 = vadd.f32 %v5562, %v5790
      %v5869 = vadd.f32 %v5563, %v5793
      %v5870 = vadd.f32 %v5564, %v5798
      %v5871 = vadd.f32 %v5565, %v5801
      %v5872 = vadd.f32 %v5566, %v5806
      %v5873 = vadd.f32 %v5567, %v5809
      %v5874 = vadd.f32 %v5568, %v5814
      %v5875 = vadd.f32 %v5569, %v5817
      %v5876 = vadd.f32 %v5570, %v5822
      %v5877 = vadd.f32 %v5571, %v5825
      %v5878 = vadd.f32 %v5572, %v5830
      %v5879 = vadd.f32 %v5573, %v5833
      %v5880 = vadd.f32 %v5574, %v5838
      %v5881 = vadd.f32 %v5575, %v5841
      %v5882 = vadd.f32 %v5576, %v5846
      %v5883 = vadd.f32 %v5577, %v5849
      %v5884 = vld [vmem:[%s5] sm:$0x1]
      %v5886 = vlaneseq
      %v5887 = vshrl.u32 %v5886, 7
      %v5888 = vsub.s32 0, %v5887
      %v5889 = vrot.slane %v5884, %v5888
      %v5891 = vadd.f32 %v5852, %v5889
      %v5892 = vadd.f32 %v5853, %v5889
      %v5893 = vadd.f32 %v5854, %v5889
      %v5894 = vadd.f32 %v5855, %v5889
      %v5895 = vadd.f32 %v5856, %v5889
      %v5896 = vadd.f32 %v5857, %v5889
      %v5897 = vadd.f32 %v5858, %v5889
      %v5898 = vadd.f32 %v5859, %v5889
      %v5899 = vadd.f32 %v5860, %v5889
      %v5900 = vadd.f32 %v5861, %v5889
      %v5901 = vadd.f32 %v5862, %v5889
      %v5902 = vadd.f32 %v5863, %v5889
      %v5903 = vadd.f32 %v5864, %v5889
      %v5904 = vadd.f32 %v5865, %v5889
      %v5905 = vadd.f32 %v5866, %v5889
      %v5906 = vadd.f32 %v5867, %v5889
      %v5907 = vadd.f32 %v5868, %v5889
      %v5908 = vadd.f32 %v5869, %v5889
      %v5909 = vadd.f32 %v5870, %v5889
      %v5910 = vadd.f32 %v5871, %v5889
      %v5911 = vadd.f32 %v5872, %v5889
      %v5912 = vadd.f32 %v5873, %v5889
      %v5913 = vadd.f32 %v5874, %v5889
      %v5914 = vadd.f32 %v5875, %v5889
      %v5915 = vadd.f32 %v5876, %v5889
      %v5916 = vadd.f32 %v5877, %v5889
      %v5917 = vadd.f32 %v5878, %v5889
      %v5918 = vadd.f32 %v5879, %v5889
      %v5919 = vadd.f32 %v5880, %v5889
      %v5920 = vadd.f32 %v5881, %v5889
      %v5921 = vadd.f32 %v5882, %v5889
      %v5922 = vadd.f32 %v5883, %v5889
      %v5923 = vmax.f32 %v5891, 0.0
      %v5924 = vmax.f32 %v5892, 0.0
      %v5925 = vmax.f32 %v5893, 0.0
      %v5926 = vmax.f32 %v5894, 0.0
      %v5927 = vmax.f32 %v5895, 0.0
      %v5928 = vmax.f32 %v5896, 0.0
      %v5929 = vmax.f32 %v5897, 0.0
      %v5930 = vmax.f32 %v5898, 0.0
      %v5931 = vmax.f32 %v5899, 0.0
      %v5932 = vmax.f32 %v5900, 0.0
      %v5933 = vmax.f32 %v5901, 0.0
      %v5934 = vmax.f32 %v5902, 0.0
      %v5935 = vmax.f32 %v5903, 0.0
      %v5936 = vmax.f32 %v5904, 0.0
      %v5937 = vmax.f32 %v5905, 0.0
      %v5938 = vmax.f32 %v5906, 0.0
      %v5939 = vmax.f32 %v5907, 0.0
      %v5940 = vmax.f32 %v5908, 0.0
      %v5941 = vmax.f32 %v5909, 0.0
      %v5942 = vmax.f32 %v5910, 0.0
      %v5943 = vmax.f32 %v5911, 0.0
      %v5944 = vmax.f32 %v5912, 0.0
      %v5945 = vmax.f32 %v5913, 0.0
      %v5946 = vmax.f32 %v5914, 0.0
      %v5947 = vmax.f32 %v5915, 0.0
      %v5948 = vmax.f32 %v5916, 0.0
      %v5949 = vmax.f32 %v5917, 0.0
      %v5950 = vmax.f32 %v5918, 0.0
      %v5951 = vmax.f32 %v5919, 0.0
      %v5952 = vmax.f32 %v5920, 0.0
      %v5953 = vmax.f32 %v5921, 0.0
      %v5954 = vmax.f32 %v5922, 0.0
      %5955 = vst.msk [vmem:[%s3161 + $0x1] sm:$0xff] %vm383, %v5923
      %5956 = vst.msk [vmem:[%s3161 + $0x9] sm:$0xff] %vm383, %v5924
      %5957 = vst.msk [vmem:[%s3161 + $0x19] sm:$0xff] %vm383, %v5925
      %5958 = vst.msk [vmem:[%s3161 + $0x21] sm:$0xff] %vm383, %v5926
      %5959 = vst.msk [vmem:[%s3161 + $0x31] sm:$0xff] %vm383, %v5927
      %5960 = vst.msk [vmem:[%s3161 + $0x39] sm:$0xff] %vm383, %v5928
      %5961 = vst.msk [vmem:[%s3161 + $0x49] sm:$0xff] %vm383, %v5929
      %5962 = vst.msk [vmem:[%s3161 + $0x51] sm:$0xff] %vm383, %v5930
      %5963 = vst.msk [vmem:[%s3161 + $0x61] sm:$0xff] %vm383, %v5931
      %5964 = vst.msk [vmem:[%s3161 + $0x69] sm:$0xff] %vm383, %v5932
      %5965 = vst.msk [vmem:[%s3161 + $0x79] sm:$0xff] %vm383, %v5933
      %5966 = vst.msk [vmem:[%s3161 + $0x81] sm:$0xff] %vm383, %v5934
      %5967 = vst.msk [vmem:[%s3161 + $0x91] sm:$0xff] %vm383, %v5935
      %5968 = vst.msk [vmem:[%s3161 + $0x99] sm:$0xff] %vm383, %v5936
      %5969 = vst.msk [vmem:[%s3161 + $0xa9] sm:$0xff] %vm383, %v5937
      %5970 = vst.msk [vmem:[%s3161 + $0xb1] sm:$0xff] %vm383, %v5938
      %5971 = vst.msk [vmem:[%s3161 + $0xc1] sm:$0xff] %vm383, %v5939
      %5972 = vst.msk [vmem:[%s3161 + $0xc9] sm:$0xff] %vm383, %v5940
      %5973 = vst.msk [vmem:[%s3161 + $0xd9] sm:$0xff] %vm383, %v5941
      %5974 = vst.msk [vmem:[%s3161 + $0xe1] sm:$0xff] %vm383, %v5942
      %5975 = vst.msk [vmem:[%s3161 + $0xf1] sm:$0xff] %vm383, %v5943
      %5976 = vst.msk [vmem:[%s3161 + $0xf9] sm:$0xff] %vm383, %v5944
      %5977 = vst.msk [vmem:[%s3161 + $0x109] sm:$0xff] %vm383, %v5945
      %5978 = vst.msk [vmem:[%s3161 + $0x111] sm:$0xff] %vm383, %v5946
      %5979 = vst.msk [vmem:[%s3161 + $0x121] sm:$0xff] %vm383, %v5947
      %5980 = vst.msk [vmem:[%s3161 + $0x129] sm:$0xff] %vm383, %v5948
      %5981 = vst.msk [vmem:[%s3161 + $0x139] sm:$0xff] %vm383, %v5949
      %5982 = vst.msk [vmem:[%s3161 + $0x141] sm:$0xff] %vm383, %v5950
      %5983 = vst.msk [vmem:[%s3161 + $0x151] sm:$0xff] %vm383, %v5951
      %5984 = vst.msk [vmem:[%s3161 + $0x159] sm:$0xff] %vm383, %v5952
      %5985 = vst.msk [vmem:[%s3161 + $0x169] sm:$0xff] %vm383, %v5953
      %5986 = vst.msk [vmem:[%s3161 + $0x171] sm:$0xff] %vm383, %v5954
      %v5987 = vld [vmem:[#allocation3] sm:$0xff]
      %v5988 = vld [vmem:[#allocation3 + $0x8] sm:$0xff]
      %v5989 = vld [vmem:[#allocation3 + $0x18] sm:$0xff]
      %v5990 = vld [vmem:[#allocation3 + $0x20] sm:$0xff]
      %v5991 = vld [vmem:[#allocation3 + $0x30] sm:$0xff]
      %v5992 = vld [vmem:[#allocation3 + $0x38] sm:$0xff]
      %v5993 = vld [vmem:[#allocation3 + $0x48] sm:$0xff]
      %v5994 = vld [vmem:[#allocation3 + $0x50] sm:$0xff]
      %v5995 = vld [vmem:[#allocation3 + $0x60] sm:$0xff]
      %v5996 = vld [vmem:[#allocation3 + $0x68] sm:$0xff]
      %v5997 = vld [vmem:[#allocation3 + $0x78] sm:$0xff]
      %v5998 = vld [vmem:[#allocation3 + $0x80] sm:$0xff]
      %v5999 = vld [vmem:[#allocation3 + $0x90] sm:$0xff]
      %v6000 = vld [vmem:[#allocation3 + $0x98] sm:$0xff]
      %v6001 = vld [vmem:[#allocation3 + $0xa8] sm:$0xff]
      %v6002 = vld [vmem:[#allocation3 + $0xb0] sm:$0xff]
      %v6003 = vld [vmem:[#allocation3 + $0xc0] sm:$0xff]
      %v6004 = vld [vmem:[#allocation3 + $0xc8] sm:$0xff]
      %v6005 = vld [vmem:[#allocation3 + $0xd8] sm:$0xff]
      %v6006 = vld [vmem:[#allocation3 + $0xe0] sm:$0xff]
      %v6007 = vld [vmem:[#allocation3 + $0xf0] sm:$0xff]
      %v6008 = vld [vmem:[#allocation3 + $0xf8] sm:$0xff]
      %v6009 = vld [vmem:[#allocation3 + $0x108] sm:$0xff]
      %v6010 = vld [vmem:[#allocation3 + $0x110] sm:$0xff]
      %v6011 = vld [vmem:[#allocation3 + $0x120] sm:$0xff]
      %v6012 = vld [vmem:[#allocation3 + $0x128] sm:$0xff]
      %v6013 = vld [vmem:[#allocation3 + $0x138] sm:$0xff]
      %v6014 = vld [vmem:[#allocation3 + $0x140] sm:$0xff]
      %v6015 = vld [vmem:[#allocation3 + $0x150] sm:$0xff]
      %v6016 = vld [vmem:[#allocation3 + $0x158] sm:$0xff]
      %v6017 = vld [vmem:[#allocation3 + $0x168] sm:$0xff]
      %v6018 = vld [vmem:[#allocation3 + $0x170] sm:$0xff]
      %v6019 = vpack.c.bf16 %v5988, %v5987
      %v6020 = vpack.c.bf16 %v5990, %v5989
      %v6021 = vpack.c.bf16 %v5992, %v5991
      %v6022 = vpack.c.bf16 %v5994, %v5993
      %v6023 = vpack.c.bf16 %v5996, %v5995
      %v6024 = vpack.c.bf16 %v5998, %v5997
      %v6025 = vpack.c.bf16 %v6000, %v5999
      %v6026 = vpack.c.bf16 %v6002, %v6001
      %v6027 = vpack.c.bf16 %v6004, %v6003
      %v6028 = vpack.c.bf16 %v6006, %v6005
      %v6029 = vpack.c.bf16 %v6008, %v6007
      %v6030 = vpack.c.bf16 %v6010, %v6009
      %v6031 = vpack.c.bf16 %v6012, %v6011
      %v6032 = vpack.c.bf16 %v6014, %v6013
      %v6033 = vpack.c.bf16 %v6016, %v6015
      %v6034 = vpack.c.bf16 %v6018, %v6017
      %v6035 = vld [vmem:[%s6] sm:$0xf]
      %v6036 = vld [vmem:[%s6 + $0x4] sm:$0xf]
      %v6037 = vld [vmem:[%s6 + $0x8] sm:$0xf]
      %v6038 = vld [vmem:[%s6 + $0xc] sm:$0xf]
      %v6039 = vld [vmem:[#allocation3 + $0x1] sm:$0xff]
      %v6040 = vld [vmem:[#allocation3 + $0x9] sm:$0xff]
      %v6041 = vld [vmem:[#allocation3 + $0x19] sm:$0xff]
      %v6042 = vld [vmem:[#allocation3 + $0x21] sm:$0xff]
      %v6043 = vld [vmem:[#allocation3 + $0x31] sm:$0xff]
      %v6044 = vld [vmem:[#allocation3 + $0x39] sm:$0xff]
      %v6045 = vld [vmem:[#allocation3 + $0x49] sm:$0xff]
      %v6046 = vld [vmem:[#allocation3 + $0x51] sm:$0xff]
      %v6047 = vld [vmem:[#allocation3 + $0x61] sm:$0xff]
      %v6048 = vld [vmem:[#allocation3 + $0x69] sm:$0xff]
      %v6049 = vld [vmem:[#allocation3 + $0x79] sm:$0xff]
      %v6050 = vld [vmem:[#allocation3 + $0x81] sm:$0xff]
      %v6051 = vld [vmem:[#allocation3 + $0x91] sm:$0xff]
      %v6052 = vld [vmem:[#allocation3 + $0x99] sm:$0xff]
      %v6053 = vld [vmem:[#allocation3 + $0xa9] sm:$0xff]
      %v6054 = vld [vmem:[#allocation3 + $0xb1] sm:$0xff]
      %v6055 = vld [vmem:[#allocation3 + $0xc1] sm:$0xff]
      %v6056 = vld [vmem:[#allocation3 + $0xc9] sm:$0xff]
      %v6057 = vld [vmem:[#allocation3 + $0xd9] sm:$0xff]
      %v6058 = vld [vmem:[#allocation3 + $0xe1] sm:$0xff]
      %v6059 = vld [vmem:[#allocation3 + $0xf1] sm:$0xff]
      %v6060 = vld [vmem:[#allocation3 + $0xf9] sm:$0xff]
      %v6061 = vld [vmem:[#allocation3 + $0x109] sm:$0xff]
      %v6062 = vld [vmem:[#allocation3 + $0x111] sm:$0xff]
      %v6063 = vld [vmem:[#allocation3 + $0x121] sm:$0xff]
      %v6064 = vld [vmem:[#allocation3 + $0x129] sm:$0xff]
      %v6065 = vld [vmem:[#allocation3 + $0x139] sm:$0xff]
      %v6066 = vld [vmem:[#allocation3 + $0x141] sm:$0xff]
      %v6067 = vld [vmem:[#allocation3 + $0x151] sm:$0xff]
      %v6068 = vld [vmem:[#allocation3 + $0x159] sm:$0xff]
      %v6069 = vld [vmem:[#allocation3 + $0x169] sm:$0xff]
      %v6070 = vld [vmem:[#allocation3 + $0x171] sm:$0xff]
      %v6071 = vpack.c.bf16 %v6040, %v6039
      %v6072 = vpack.c.bf16 %v6042, %v6041
      %v6073 = vpack.c.bf16 %v6044, %v6043
      %v6074 = vpack.c.bf16 %v6046, %v6045
      %v6075 = vpack.c.bf16 %v6048, %v6047
      %v6076 = vpack.c.bf16 %v6050, %v6049
      %v6077 = vpack.c.bf16 %v6052, %v6051
      %v6078 = vpack.c.bf16 %v6054, %v6053
      %v6079 = vpack.c.bf16 %v6056, %v6055
      %v6080 = vpack.c.bf16 %v6058, %v6057
      %v6081 = vpack.c.bf16 %v6060, %v6059
      %v6082 = vpack.c.bf16 %v6062, %v6061
      %v6083 = vpack.c.bf16 %v6064, %v6063
      %v6084 = vpack.c.bf16 %v6066, %v6065
      %v6085 = vpack.c.bf16 %v6068, %v6067
      %v6086 = vpack.c.bf16 %v6070, %v6069
      %s6087 = scalar_lea.vmem %s6, 16
      %v6088 = vld [vmem:[%s6087] sm:$0xf]
      %v6089 = vld [vmem:[%s6087 + $0x4] sm:$0xf]
      %v6090 = vld [vmem:[%s6087 + $0x8] sm:$0xf]
      %v6091 = vld [vmem:[%s6087 + $0xc] sm:$0xf]
      %v6096 = vunpack.c.l.b16 %v6088
      %v6097 = vunpack.c.l.b16 %v6089
      %v6098 = vunpack.c.l.b16 %v6090
      %v6099 = vunpack.c.l.b16 %v6091
      %v6100 = vpack.c.b16 %v6097, %v6096
      %v6101 = vpack.c.b16 %v6099, %v6098
      %v6105 = vsel %vm383, %v6071, 0
      %v6108 = vsel %vm383, %v6072, 0
      %v6111 = vsel %vm383, %v6073, 0
      %v6114 = vsel %vm383, %v6074, 0
      %v6117 = vsel %vm383, %v6075, 0
      %v6120 = vsel %vm383, %v6076, 0
      %v6123 = vsel %vm383, %v6077, 0
      %v6126 = vsel %vm383, %v6078, 0
      %v6129 = vsel %vm383, %v6079, 0
      %v6132 = vsel %vm383, %v6080, 0
      %v6135 = vsel %vm383, %v6081, 0
      %v6138 = vsel %vm383, %v6082, 0
      %v6141 = vsel %vm383, %v6083, 0
      %v6144 = vsel %vm383, %v6084, 0
      %v6147 = vsel %vm383, %v6085, 0
      %v6150 = vsel %vm383, %v6086, 0
      %6152 = vmatprep.subr.bf16.mxu0 0
      %6153 = vmatpush1.bf16.msra.mxu0 0
      %6154 = vmatprep.subr.bf16.mxu0 0
      %6155 = vmatpush1.bf16.msra.mxu0 0
      %6156 = vmatprep.subr.bf16.mxu0 0
      %6157 = vmatpush1.bf16.msra.mxu0 0
      %6158 = vmatprep.subr.bf16.mxu0 0
      %6159 = vmatpush1.bf16.msra.mxu0 0
      %6160 = vmatprep.subr.bf16.mxu0 0
      %6161 = vmatpush1.bf16.msra.mxu0 0
      %6162 = vmatprep.subr.bf16.mxu0 0
      %6163 = vmatpush1.bf16.msra.mxu0 0
      %6164 = vmatprep.subr.bf16.mxu0 0
      %6165 = vmatpush1.bf16.msra.mxu0 %v6101
      %6166 = vmatprep.subr.bf16.mxu0 0
      %6167 = vmatpush1.bf16.msra.mxu0 %v6100
      %6168 = vmatprep.subr.bf16.mxu0 0
      %6169 = vmatpush2.bf16.msra.mxu0 0
      %6170 = vmatprep.subr.bf16.mxu0 0
      %6171 = vmatpush2.bf16.msra.mxu0 0
      %6172 = vmatprep.subr.bf16.mxu0 0
      %6173 = vmatpush2.bf16.msra.mxu0 0
      %6174 = vmatprep.subr.bf16.mxu0 0
      %6175 = vmatpush2.bf16.msra.mxu0 0
      %6176 = vmatprep.subr.bf16.mxu0 0
      %6177 = vmatpush2.bf16.msra.mxu0 0
      %6178 = vmatprep.subr.bf16.mxu0 0
      %6179 = vmatpush2.bf16.msra.mxu0 0
      %6180 = vmatprep.subr.bf16.mxu0 0
      %6181 = vmatpush2.bf16.msra.mxu0 0
      %6182 = vmatprep.subr.bf16.mxu0 0
      %6183 = vmatpush2.bf16.msra.mxu0 0
      %6184 = vmatprep.mubr.bf16.mxu0 0
      %6185 = vmatmul.mubr.bf16.gmra.mxu0 %v6105
      %v6186 = vpop.f32.mrf.mxu0
      %v6187 = vadd.f32 0.0, %v6186
      %v6188 = vpop.f32.mrf.mxu0
      %v6189 = vpop.f32.mrf.mxu0
      %v6190 = vadd.f32 0.0, %v6189
      %v6191 = vpop.f32.mrf.mxu0
      %6192 = vmatprep.mubr.bf16.mxu0 0
      %6193 = vmatmul.mubr.bf16.gmra.mxu0 %v6108
      %v6194 = vpop.f32.mrf.mxu0
      %v6195 = vadd.f32 0.0, %v6194
      %v6196 = vpop.f32.mrf.mxu0
      %v6197 = vpop.f32.mrf.mxu0
      %v6198 = vadd.f32 0.0, %v6197
      %v6199 = vpop.f32.mrf.mxu0
      %6200 = vmatprep.mubr.bf16.mxu0 0
      %6201 = vmatmul.mubr.bf16.gmra.mxu0 %v6111
      %v6202 = vpop.f32.mrf.mxu0
      %v6203 = vadd.f32 0.0, %v6202
      %v6204 = vpop.f32.mrf.mxu0
      %v6205 = vpop.f32.mrf.mxu0
      %v6206 = vadd.f32 0.0, %v6205
      %v6207 = vpop.f32.mrf.mxu0
      %6208 = vmatprep.mubr.bf16.mxu0 0
      %6209 = vmatmul.mubr.bf16.gmra.mxu0 %v6114
      %v6210 = vpop.f32.mrf.mxu0
      %v6211 = vadd.f32 0.0, %v6210
      %v6212 = vpop.f32.mrf.mxu0
      %v6213 = vpop.f32.mrf.mxu0
      %v6214 = vadd.f32 0.0, %v6213
      %v6215 = vpop.f32.mrf.mxu0
      %6216 = vmatprep.mubr.bf16.mxu0 0
      %6217 = vmatmul.mubr.bf16.gmra.mxu0 %v6117
      %v6218 = vpop.f32.mrf.mxu0
      %v6219 = vadd.f32 0.0, %v6218
      %v6220 = vpop.f32.mrf.mxu0
      %v6221 = vpop.f32.mrf.mxu0
      %v6222 = vadd.f32 0.0, %v6221
      %v6223 = vpop.f32.mrf.mxu0
      %6224 = vmatprep.mubr.bf16.mxu0 0
      %6225 = vmatmul.mubr.bf16.gmra.mxu0 %v6120
      %v6226 = vpop.f32.mrf.mxu0
      %v6227 = vadd.f32 0.0, %v6226
      %v6228 = vpop.f32.mrf.mxu0
      %v6229 = vpop.f32.mrf.mxu0
      %v6230 = vadd.f32 0.0, %v6229
      %v6231 = vpop.f32.mrf.mxu0
      %6232 = vmatprep.mubr.bf16.mxu0 0
      %6233 = vmatmul.mubr.bf16.gmra.mxu0 %v6123
      %v6234 = vpop.f32.mrf.mxu0
      %v6235 = vadd.f32 0.0, %v6234
      %v6236 = vpop.f32.mrf.mxu0
      %v6237 = vpop.f32.mrf.mxu0
      %v6238 = vadd.f32 0.0, %v6237
      %v6239 = vpop.f32.mrf.mxu0
      %6240 = vmatprep.mubr.bf16.mxu0 0
      %6241 = vmatmul.mubr.bf16.gmra.mxu0 %v6126
      %v6242 = vpop.f32.mrf.mxu0
      %v6243 = vadd.f32 0.0, %v6242
      %v6244 = vpop.f32.mrf.mxu0
      %v6245 = vpop.f32.mrf.mxu0
      %v6246 = vadd.f32 0.0, %v6245
      %v6247 = vpop.f32.mrf.mxu0
      %6248 = vmatprep.mubr.bf16.mxu0 0
      %6249 = vmatmul.mubr.bf16.gmra.mxu0 %v6129
      %v6250 = vpop.f32.mrf.mxu0
      %v6251 = vadd.f32 0.0, %v6250
      %v6252 = vpop.f32.mrf.mxu0
      %v6253 = vpop.f32.mrf.mxu0
      %v6254 = vadd.f32 0.0, %v6253
      %v6255 = vpop.f32.mrf.mxu0
      %6256 = vmatprep.mubr.bf16.mxu0 0
      %6257 = vmatmul.mubr.bf16.gmra.mxu0 %v6132
      %v6258 = vpop.f32.mrf.mxu0
      %v6259 = vadd.f32 0.0, %v6258
      %v6260 = vpop.f32.mrf.mxu0
      %v6261 = vpop.f32.mrf.mxu0
      %v6262 = vadd.f32 0.0, %v6261
      %v6263 = vpop.f32.mrf.mxu0
      %6264 = vmatprep.mubr.bf16.mxu0 0
      %6265 = vmatmul.mubr.bf16.gmra.mxu0 %v6135
      %v6266 = vpop.f32.mrf.mxu0
      %v6267 = vadd.f32 0.0, %v6266
      %v6268 = vpop.f32.mrf.mxu0
      %v6269 = vpop.f32.mrf.mxu0
      %v6270 = vadd.f32 0.0, %v6269
      %v6271 = vpop.f32.mrf.mxu0
      %6272 = vmatprep.mubr.bf16.mxu0 0
      %6273 = vmatmul.mubr.bf16.gmra.mxu0 %v6138
      %v6274 = vpop.f32.mrf.mxu0
      %v6275 = vadd.f32 0.0, %v6274
      %v6276 = vpop.f32.mrf.mxu0
      %v6277 = vpop.f32.mrf.mxu0
      %v6278 = vadd.f32 0.0, %v6277
      %v6279 = vpop.f32.mrf.mxu0
      %6280 = vmatprep.mubr.bf16.mxu0 0
      %6281 = vmatmul.mubr.bf16.gmra.mxu0 %v6141
      %v6282 = vpop.f32.mrf.mxu0
      %v6283 = vadd.f32 0.0, %v6282
      %v6284 = vpop.f32.mrf.mxu0
      %v6285 = vpop.f32.mrf.mxu0
      %v6286 = vadd.f32 0.0, %v6285
      %v6287 = vpop.f32.mrf.mxu0
      %6288 = vmatprep.mubr.bf16.mxu0 0
      %6289 = vmatmul.mubr.bf16.gmra.mxu0 %v6144
      %v6290 = vpop.f32.mrf.mxu0
      %v6291 = vadd.f32 0.0, %v6290
      %v6292 = vpop.f32.mrf.mxu0
      %v6293 = vpop.f32.mrf.mxu0
      %v6294 = vadd.f32 0.0, %v6293
      %v6295 = vpop.f32.mrf.mxu0
      %6296 = vmatprep.mubr.bf16.mxu0 0
      %6297 = vmatmul.mubr.bf16.gmra.mxu0 %v6147
      %v6298 = vpop.f32.mrf.mxu0
      %v6299 = vadd.f32 0.0, %v6298
      %v6300 = vpop.f32.mrf.mxu0
      %v6301 = vpop.f32.mrf.mxu0
      %v6302 = vadd.f32 0.0, %v6301
      %v6303 = vpop.f32.mrf.mxu0
      %6304 = vmatprep.mubr.bf16.mxu0 0
      %6305 = vmatmul.mubr.bf16.gmra.mxu0 %v6150
      %v6306 = vpop.f32.mrf.mxu0
      %v6307 = vadd.f32 0.0, %v6306
      %v6308 = vpop.f32.mrf.mxu0
      %v6309 = vpop.f32.mrf.mxu0
      %v6310 = vadd.f32 0.0, %v6309
      %v6311 = vpop.f32.mrf.mxu0
      %6312 = vdwg.mxu0
      %v6317 = vunpack.c.l.b16 %v6035
      %v6318 = vunpack.c.l.b16 %v6036
      %v6319 = vunpack.c.l.b16 %v6037
      %v6320 = vunpack.c.l.b16 %v6038
      %v6321 = vpack.c.b16 %v6318, %v6317
      %v6322 = vpack.c.b16 %v6320, %v6319
      %v6326 = vsel %vm383, %v6019, 0
      %v6329 = vsel %vm383, %v6020, 0
      %v6332 = vsel %vm383, %v6021, 0
      %v6335 = vsel %vm383, %v6022, 0
      %v6338 = vsel %vm383, %v6023, 0
      %v6341 = vsel %vm383, %v6024, 0
      %v6344 = vsel %vm383, %v6025, 0
      %v6347 = vsel %vm383, %v6026, 0
      %v6350 = vsel %vm383, %v6027, 0
      %v6353 = vsel %vm383, %v6028, 0
      %v6356 = vsel %vm383, %v6029, 0
      %v6359 = vsel %vm383, %v6030, 0
      %v6362 = vsel %vm383, %v6031, 0
      %v6365 = vsel %vm383, %v6032, 0
      %v6368 = vsel %vm383, %v6033, 0
      %v6371 = vsel %vm383, %v6034, 0
      %6373 = vmatprep.subr.bf16.mxu0 0
      %6374 = vmatpush1.bf16.msra.mxu0 0
      %6375 = vmatprep.subr.bf16.mxu0 0
      %6376 = vmatpush1.bf16.msra.mxu0 0
      %6377 = vmatprep.subr.bf16.mxu0 0
      %6378 = vmatpush1.bf16.msra.mxu0 0
      %6379 = vmatprep.subr.bf16.mxu0 0
      %6380 = vmatpush1.bf16.msra.mxu0 0
      %6381 = vmatprep.subr.bf16.mxu0 0
      %6382 = vmatpush1.bf16.msra.mxu0 0
      %6383 = vmatprep.subr.bf16.mxu0 0
      %6384 = vmatpush1.bf16.msra.mxu0 0
      %6385 = vmatprep.subr.bf16.mxu0 0
      %6386 = vmatpush1.bf16.msra.mxu0 %v6322
      %6387 = vmatprep.subr.bf16.mxu0 0
      %6388 = vmatpush1.bf16.msra.mxu0 %v6321
      %6389 = vmatprep.subr.bf16.mxu0 0
      %6390 = vmatpush2.bf16.msra.mxu0 0
      %6391 = vmatprep.subr.bf16.mxu0 0
      %6392 = vmatpush2.bf16.msra.mxu0 0
      %6393 = vmatprep.subr.bf16.mxu0 0
      %6394 = vmatpush2.bf16.msra.mxu0 0
      %6395 = vmatprep.subr.bf16.mxu0 0
      %6396 = vmatpush2.bf16.msra.mxu0 0
      %6397 = vmatprep.subr.bf16.mxu0 0
      %6398 = vmatpush2.bf16.msra.mxu0 0
      %6399 = vmatprep.subr.bf16.mxu0 0
      %6400 = vmatpush2.bf16.msra.mxu0 0
      %6401 = vmatprep.subr.bf16.mxu0 0
      %6402 = vmatpush2.bf16.msra.mxu0 0
      %6403 = vmatprep.subr.bf16.mxu0 0
      %6404 = vmatpush2.bf16.msra.mxu0 0
      %6405 = vmatprep.mubr.bf16.mxu0 0
      %6406 = vmatmul.mubr.bf16.gmra.mxu0 %v6326
      %v6407 = vpop.f32.mrf.mxu0
      %v6408 = vadd.f32 %v6187, %v6407
      %v6409 = vpop.f32.mrf.mxu0
      %v6410 = vpop.f32.mrf.mxu0
      %v6411 = vadd.f32 %v6190, %v6410
      %v6412 = vpop.f32.mrf.mxu0
      %6413 = vmatprep.mubr.bf16.mxu0 0
      %6414 = vmatmul.mubr.bf16.gmra.mxu0 %v6329
      %v6415 = vpop.f32.mrf.mxu0
      %v6416 = vadd.f32 %v6195, %v6415
      %v6417 = vpop.f32.mrf.mxu0
      %v6418 = vpop.f32.mrf.mxu0
      %v6419 = vadd.f32 %v6198, %v6418
      %v6420 = vpop.f32.mrf.mxu0
      %6421 = vmatprep.mubr.bf16.mxu0 0
      %6422 = vmatmul.mubr.bf16.gmra.mxu0 %v6332
      %v6423 = vpop.f32.mrf.mxu0
      %v6424 = vadd.f32 %v6203, %v6423
      %v6425 = vpop.f32.mrf.mxu0
      %v6426 = vpop.f32.mrf.mxu0
      %v6427 = vadd.f32 %v6206, %v6426
      %v6428 = vpop.f32.mrf.mxu0
      %6429 = vmatprep.mubr.bf16.mxu0 0
      %6430 = vmatmul.mubr.bf16.gmra.mxu0 %v6335
      %v6431 = vpop.f32.mrf.mxu0
      %v6432 = vadd.f32 %v6211, %v6431
      %v6433 = vpop.f32.mrf.mxu0
      %v6434 = vpop.f32.mrf.mxu0
      %v6435 = vadd.f32 %v6214, %v6434
      %v6436 = vpop.f32.mrf.mxu0
      %6437 = vmatprep.mubr.bf16.mxu0 0
      %6438 = vmatmul.mubr.bf16.gmra.mxu0 %v6338
      %v6439 = vpop.f32.mrf.mxu0
      %v6440 = vadd.f32 %v6219, %v6439
      %v6441 = vpop.f32.mrf.mxu0
      %v6442 = vpop.f32.mrf.mxu0
      %v6443 = vadd.f32 %v6222, %v6442
      %v6444 = vpop.f32.mrf.mxu0
      %6445 = vmatprep.mubr.bf16.mxu0 0
      %6446 = vmatmul.mubr.bf16.gmra.mxu0 %v6341
      %v6447 = vpop.f32.mrf.mxu0
      %v6448 = vadd.f32 %v6227, %v6447
      %v6449 = vpop.f32.mrf.mxu0
      %v6450 = vpop.f32.mrf.mxu0
      %v6451 = vadd.f32 %v6230, %v6450
      %v6452 = vpop.f32.mrf.mxu0
      %6453 = vmatprep.mubr.bf16.mxu0 0
      %6454 = vmatmul.mubr.bf16.gmra.mxu0 %v6344
      %v6455 = vpop.f32.mrf.mxu0
      %v6456 = vadd.f32 %v6235, %v6455
      %v6457 = vpop.f32.mrf.mxu0
      %v6458 = vpop.f32.mrf.mxu0
      %v6459 = vadd.f32 %v6238, %v6458
      %v6460 = vpop.f32.mrf.mxu0
      %6461 = vmatprep.mubr.bf16.mxu0 0
      %6462 = vmatmul.mubr.bf16.gmra.mxu0 %v6347
      %v6463 = vpop.f32.mrf.mxu0
      %v6464 = vadd.f32 %v6243, %v6463
      %v6465 = vpop.f32.mrf.mxu0
      %v6466 = vpop.f32.mrf.mxu0
      %v6467 = vadd.f32 %v6246, %v6466
      %v6468 = vpop.f32.mrf.mxu0
      %6469 = vmatprep.mubr.bf16.mxu0 0
      %6470 = vmatmul.mubr.bf16.gmra.mxu0 %v6350
      %v6471 = vpop.f32.mrf.mxu0
      %v6472 = vadd.f32 %v6251, %v6471
      %v6473 = vpop.f32.mrf.mxu0
      %v6474 = vpop.f32.mrf.mxu0
      %v6475 = vadd.f32 %v6254, %v6474
      %v6476 = vpop.f32.mrf.mxu0
      %6477 = vmatprep.mubr.bf16.mxu0 0
      %6478 = vmatmul.mubr.bf16.gmra.mxu0 %v6353
      %v6479 = vpop.f32.mrf.mxu0
      %v6480 = vadd.f32 %v6259, %v6479
      %v6481 = vpop.f32.mrf.mxu0
      %v6482 = vpop.f32.mrf.mxu0
      %v6483 = vadd.f32 %v6262, %v6482
      %v6484 = vpop.f32.mrf.mxu0
      %6485 = vmatprep.mubr.bf16.mxu0 0
      %6486 = vmatmul.mubr.bf16.gmra.mxu0 %v6356
      %v6487 = vpop.f32.mrf.mxu0
      %v6488 = vadd.f32 %v6267, %v6487
      %v6489 = vpop.f32.mrf.mxu0
      %v6490 = vpop.f32.mrf.mxu0
      %v6491 = vadd.f32 %v6270, %v6490
      %v6492 = vpop.f32.mrf.mxu0
      %6493 = vmatprep.mubr.bf16.mxu0 0
      %6494 = vmatmul.mubr.bf16.gmra.mxu0 %v6359
      %v6495 = vpop.f32.mrf.mxu0
      %v6496 = vadd.f32 %v6275, %v6495
      %v6497 = vpop.f32.mrf.mxu0
      %v6498 = vpop.f32.mrf.mxu0
      %v6499 = vadd.f32 %v6278, %v6498
      %v6500 = vpop.f32.mrf.mxu0
      %6501 = vmatprep.mubr.bf16.mxu0 0
      %6502 = vmatmul.mubr.bf16.gmra.mxu0 %v6362
      %v6503 = vpop.f32.mrf.mxu0
      %v6504 = vadd.f32 %v6283, %v6503
      %v6505 = vpop.f32.mrf.mxu0
      %v6506 = vpop.f32.mrf.mxu0
      %v6507 = vadd.f32 %v6286, %v6506
      %v6508 = vpop.f32.mrf.mxu0
      %6509 = vmatprep.mubr.bf16.mxu0 0
      %6510 = vmatmul.mubr.bf16.gmra.mxu0 %v6365
      %v6511 = vpop.f32.mrf.mxu0
      %v6512 = vadd.f32 %v6291, %v6511
      %v6513 = vpop.f32.mrf.mxu0
      %v6514 = vpop.f32.mrf.mxu0
      %v6515 = vadd.f32 %v6294, %v6514
      %v6516 = vpop.f32.mrf.mxu0
      %6517 = vmatprep.mubr.bf16.mxu0 0
      %6518 = vmatmul.mubr.bf16.gmra.mxu0 %v6368
      %v6519 = vpop.f32.mrf.mxu0
      %v6520 = vadd.f32 %v6299, %v6519
      %v6521 = vpop.f32.mrf.mxu0
      %v6522 = vpop.f32.mrf.mxu0
      %v6523 = vadd.f32 %v6302, %v6522
      %v6524 = vpop.f32.mrf.mxu0
      %6525 = vmatprep.mubr.bf16.mxu0 0
      %6526 = vmatmul.mubr.bf16.gmra.mxu0 %v6371
      %v6527 = vpop.f32.mrf.mxu0
      %v6528 = vadd.f32 %v6307, %v6527
      %v6529 = vpop.f32.mrf.mxu0
      %v6530 = vpop.f32.mrf.mxu0
      %v6531 = vadd.f32 %v6310, %v6530
      %v6532 = vpop.f32.mrf.mxu0
      %6533 = vdwg.mxu0
      %v6534 = vld [vmem:[#allocation3 + $0x2] sm:$0xff]
      %v6535 = vld [vmem:[#allocation3 + $0xa] sm:$0xff]
      %v6536 = vld [vmem:[#allocation3 + $0x1a] sm:$0xff]
      %v6537 = vld [vmem:[#allocation3 + $0x22] sm:$0xff]
      %v6538 = vld [vmem:[#allocation3 + $0x32] sm:$0xff]
      %v6539 = vld [vmem:[#allocation3 + $0x3a] sm:$0xff]
      %v6540 = vld [vmem:[#allocation3 + $0x4a] sm:$0xff]
      %v6541 = vld [vmem:[#allocation3 + $0x52] sm:$0xff]
      %v6542 = vld [vmem:[#allocation3 + $0x62] sm:$0xff]
      %v6543 = vld [vmem:[#allocation3 + $0x6a] sm:$0xff]
      %v6544 = vld [vmem:[#allocation3 + $0x7a] sm:$0xff]
      %v6545 = vld [vmem:[#allocation3 + $0x82] sm:$0xff]
      %v6546 = vld [vmem:[#allocation3 + $0x92] sm:$0xff]
      %v6547 = vld [vmem:[#allocation3 + $0x9a] sm:$0xff]
      %v6548 = vld [vmem:[#allocation3 + $0xaa] sm:$0xff]
      %v6549 = vld [vmem:[#allocation3 + $0xb2] sm:$0xff]
      %v6550 = vld [vmem:[#allocation3 + $0xc2] sm:$0xff]
      %v6551 = vld [vmem:[#allocation3 + $0xca] sm:$0xff]
      %v6552 = vld [vmem:[#allocation3 + $0xda] sm:$0xff]
      %v6553 = vld [vmem:[#allocation3 + $0xe2] sm:$0xff]
      %v6554 = vld [vmem:[#allocation3 + $0xf2] sm:$0xff]
      %v6555 = vld [vmem:[#allocation3 + $0xfa] sm:$0xff]
      %v6556 = vld [vmem:[#allocation3 + $0x10a] sm:$0xff]
      %v6557 = vld [vmem:[#allocation3 + $0x112] sm:$0xff]
      %v6558 = vld [vmem:[#allocation3 + $0x122] sm:$0xff]
      %v6559 = vld [vmem:[#allocation3 + $0x12a] sm:$0xff]
      %v6560 = vld [vmem:[#allocation3 + $0x13a] sm:$0xff]
      %v6561 = vld [vmem:[#allocation3 + $0x142] sm:$0xff]
      %v6562 = vld [vmem:[#allocation3 + $0x152] sm:$0xff]
      %v6563 = vld [vmem:[#allocation3 + $0x15a] sm:$0xff]
      %v6564 = vld [vmem:[#allocation3 + $0x16a] sm:$0xff]
      %v6565 = vld [vmem:[#allocation3 + $0x172] sm:$0xff]
      %v6566 = vpack.c.bf16 %v6535, %v6534
      %v6567 = vpack.c.bf16 %v6537, %v6536
      %v6568 = vpack.c.bf16 %v6539, %v6538
      %v6569 = vpack.c.bf16 %v6541, %v6540
      %v6570 = vpack.c.bf16 %v6543, %v6542
      %v6571 = vpack.c.bf16 %v6545, %v6544
      %v6572 = vpack.c.bf16 %v6547, %v6546
      %v6573 = vpack.c.bf16 %v6549, %v6548
      %v6574 = vpack.c.bf16 %v6551, %v6550
      %v6575 = vpack.c.bf16 %v6553, %v6552
      %v6576 = vpack.c.bf16 %v6555, %v6554
      %v6577 = vpack.c.bf16 %v6557, %v6556
      %v6578 = vpack.c.bf16 %v6559, %v6558
      %v6579 = vpack.c.bf16 %v6561, %v6560
      %v6580 = vpack.c.bf16 %v6563, %v6562
      %v6581 = vpack.c.bf16 %v6565, %v6564
      %s6582 = scalar_lea.vmem %s6, 32
      %v6583 = vld [vmem:[%s6582] sm:$0xf]
      %v6584 = vld [vmem:[%s6582 + $0x4] sm:$0xf]
      %v6585 = vld [vmem:[%s6582 + $0x8] sm:$0xf]
      %v6586 = vld [vmem:[%s6582 + $0xc] sm:$0xf]
      %v6591 = vunpack.c.l.b16 %v6583
      %v6592 = vunpack.c.l.b16 %v6584
      %v6593 = vunpack.c.l.b16 %v6585
      %v6594 = vunpack.c.l.b16 %v6586
      %v6595 = vpack.c.b16 %v6592, %v6591
      %v6596 = vpack.c.b16 %v6594, %v6593
      %v6600 = vsel %vm383, %v6566, 0
      %v6603 = vsel %vm383, %v6567, 0
      %v6606 = vsel %vm383, %v6568, 0
      %v6609 = vsel %vm383, %v6569, 0
      %v6612 = vsel %vm383, %v6570, 0
      %v6615 = vsel %vm383, %v6571, 0
      %v6618 = vsel %vm383, %v6572, 0
      %v6621 = vsel %vm383, %v6573, 0
      %v6624 = vsel %vm383, %v6574, 0
      %v6627 = vsel %vm383, %v6575, 0
      %v6630 = vsel %vm383, %v6576, 0
      %v6633 = vsel %vm383, %v6577, 0
      %v6636 = vsel %vm383, %v6578, 0
      %v6639 = vsel %vm383, %v6579, 0
      %v6642 = vsel %vm383, %v6580, 0
      %v6645 = vsel %vm383, %v6581, 0
      %6647 = vmatprep.subr.bf16.mxu0 0
      %6648 = vmatpush1.bf16.msra.mxu0 0
      %6649 = vmatprep.subr.bf16.mxu0 0
      %6650 = vmatpush1.bf16.msra.mxu0 0
      %6651 = vmatprep.subr.bf16.mxu0 0
      %6652 = vmatpush1.bf16.msra.mxu0 0
      %6653 = vmatprep.subr.bf16.mxu0 0
      %6654 = vmatpush1.bf16.msra.mxu0 0
      %6655 = vmatprep.subr.bf16.mxu0 0
      %6656 = vmatpush1.bf16.msra.mxu0 0
      %6657 = vmatprep.subr.bf16.mxu0 0
      %6658 = vmatpush1.bf16.msra.mxu0 0
      %6659 = vmatprep.subr.bf16.mxu0 0
      %6660 = vmatpush1.bf16.msra.mxu0 %v6596
      %6661 = vmatprep.subr.bf16.mxu0 0
      %6662 = vmatpush1.bf16.msra.mxu0 %v6595
      %6663 = vmatprep.subr.bf16.mxu0 0
      %6664 = vmatpush2.bf16.msra.mxu0 0
      %6665 = vmatprep.subr.bf16.mxu0 0
      %6666 = vmatpush2.bf16.msra.mxu0 0
      %6667 = vmatprep.subr.bf16.mxu0 0
      %6668 = vmatpush2.bf16.msra.mxu0 0
      %6669 = vmatprep.subr.bf16.mxu0 0
      %6670 = vmatpush2.bf16.msra.mxu0 0
      %6671 = vmatprep.subr.bf16.mxu0 0
      %6672 = vmatpush2.bf16.msra.mxu0 0
      %6673 = vmatprep.subr.bf16.mxu0 0
      %6674 = vmatpush2.bf16.msra.mxu0 0
      %6675 = vmatprep.subr.bf16.mxu0 0
      %6676 = vmatpush2.bf16.msra.mxu0 0
      %6677 = vmatprep.subr.bf16.mxu0 0
      %6678 = vmatpush2.bf16.msra.mxu0 0
      %6679 = vmatprep.mubr.bf16.mxu0 0
      %6680 = vmatmul.mubr.bf16.gmra.mxu0 %v6600
      %v6681 = vpop.f32.mrf.mxu0
      %v6682 = vadd.f32 0.0, %v6681
      %v6683 = vpop.f32.mrf.mxu0
      %v6684 = vpop.f32.mrf.mxu0
      %v6685 = vadd.f32 0.0, %v6684
      %v6686 = vpop.f32.mrf.mxu0
      %6687 = vmatprep.mubr.bf16.mxu0 0
      %6688 = vmatmul.mubr.bf16.gmra.mxu0 %v6603
      %v6689 = vpop.f32.mrf.mxu0
      %v6690 = vadd.f32 0.0, %v6689
      %v6691 = vpop.f32.mrf.mxu0
      %v6692 = vpop.f32.mrf.mxu0
      %v6693 = vadd.f32 0.0, %v6692
      %v6694 = vpop.f32.mrf.mxu0
      %6695 = vmatprep.mubr.bf16.mxu0 0
      %6696 = vmatmul.mubr.bf16.gmra.mxu0 %v6606
      %v6697 = vpop.f32.mrf.mxu0
      %v6698 = vadd.f32 0.0, %v6697
      %v6699 = vpop.f32.mrf.mxu0
      %v6700 = vpop.f32.mrf.mxu0
      %v6701 = vadd.f32 0.0, %v6700
      %v6702 = vpop.f32.mrf.mxu0
      %6703 = vmatprep.mubr.bf16.mxu0 0
      %6704 = vmatmul.mubr.bf16.gmra.mxu0 %v6609
      %v6705 = vpop.f32.mrf.mxu0
      %v6706 = vadd.f32 0.0, %v6705
      %v6707 = vpop.f32.mrf.mxu0
      %v6708 = vpop.f32.mrf.mxu0
      %v6709 = vadd.f32 0.0, %v6708
      %v6710 = vpop.f32.mrf.mxu0
      %6711 = vmatprep.mubr.bf16.mxu0 0
      %6712 = vmatmul.mubr.bf16.gmra.mxu0 %v6612
      %v6713 = vpop.f32.mrf.mxu0
      %v6714 = vadd.f32 0.0, %v6713
      %v6715 = vpop.f32.mrf.mxu0
      %v6716 = vpop.f32.mrf.mxu0
      %v6717 = vadd.f32 0.0, %v6716
      %v6718 = vpop.f32.mrf.mxu0
      %6719 = vmatprep.mubr.bf16.mxu0 0
      %6720 = vmatmul.mubr.bf16.gmra.mxu0 %v6615
      %v6721 = vpop.f32.mrf.mxu0
      %v6722 = vadd.f32 0.0, %v6721
      %v6723 = vpop.f32.mrf.mxu0
      %v6724 = vpop.f32.mrf.mxu0
      %v6725 = vadd.f32 0.0, %v6724
      %v6726 = vpop.f32.mrf.mxu0
      %6727 = vmatprep.mubr.bf16.mxu0 0
      %6728 = vmatmul.mubr.bf16.gmra.mxu0 %v6618
      %v6729 = vpop.f32.mrf.mxu0
      %v6730 = vadd.f32 0.0, %v6729
      %v6731 = vpop.f32.mrf.mxu0
      %v6732 = vpop.f32.mrf.mxu0
      %v6733 = vadd.f32 0.0, %v6732
      %v6734 = vpop.f32.mrf.mxu0
      %6735 = vmatprep.mubr.bf16.mxu0 0
      %6736 = vmatmul.mubr.bf16.gmra.mxu0 %v6621
      %v6737 = vpop.f32.mrf.mxu0
      %v6738 = vadd.f32 0.0, %v6737
      %v6739 = vpop.f32.mrf.mxu0
      %v6740 = vpop.f32.mrf.mxu0
      %v6741 = vadd.f32 0.0, %v6740
      %v6742 = vpop.f32.mrf.mxu0
      %6743 = vmatprep.mubr.bf16.mxu0 0
      %6744 = vmatmul.mubr.bf16.gmra.mxu0 %v6624
      %v6745 = vpop.f32.mrf.mxu0
      %v6746 = vadd.f32 0.0, %v6745
      %v6747 = vpop.f32.mrf.mxu0
      %v6748 = vpop.f32.mrf.mxu0
      %v6749 = vadd.f32 0.0, %v6748
      %v6750 = vpop.f32.mrf.mxu0
      %6751 = vmatprep.mubr.bf16.mxu0 0
      %6752 = vmatmul.mubr.bf16.gmra.mxu0 %v6627
      %v6753 = vpop.f32.mrf.mxu0
      %v6754 = vadd.f32 0.0, %v6753
      %v6755 = vpop.f32.mrf.mxu0
      %v6756 = vpop.f32.mrf.mxu0
      %v6757 = vadd.f32 0.0, %v6756
      %v6758 = vpop.f32.mrf.mxu0
      %6759 = vmatprep.mubr.bf16.mxu0 0
      %6760 = vmatmul.mubr.bf16.gmra.mxu0 %v6630
      %v6761 = vpop.f32.mrf.mxu0
      %v6762 = vadd.f32 0.0, %v6761
      %v6763 = vpop.f32.mrf.mxu0
      %v6764 = vpop.f32.mrf.mxu0
      %v6765 = vadd.f32 0.0, %v6764
      %v6766 = vpop.f32.mrf.mxu0
      %6767 = vmatprep.mubr.bf16.mxu0 0
      %6768 = vmatmul.mubr.bf16.gmra.mxu0 %v6633
      %v6769 = vpop.f32.mrf.mxu0
      %v6770 = vadd.f32 0.0, %v6769
      %v6771 = vpop.f32.mrf.mxu0
      %v6772 = vpop.f32.mrf.mxu0
      %v6773 = vadd.f32 0.0, %v6772
      %v6774 = vpop.f32.mrf.mxu0
      %6775 = vmatprep.mubr.bf16.mxu0 0
      %6776 = vmatmul.mubr.bf16.gmra.mxu0 %v6636
      %v6777 = vpop.f32.mrf.mxu0
      %v6778 = vadd.f32 0.0, %v6777
      %v6779 = vpop.f32.mrf.mxu0
      %v6780 = vpop.f32.mrf.mxu0
      %v6781 = vadd.f32 0.0, %v6780
      %v6782 = vpop.f32.mrf.mxu0
      %6783 = vmatprep.mubr.bf16.mxu0 0
      %6784 = vmatmul.mubr.bf16.gmra.mxu0 %v6639
      %v6785 = vpop.f32.mrf.mxu0
      %v6786 = vadd.f32 0.0, %v6785
      %v6787 = vpop.f32.mrf.mxu0
      %v6788 = vpop.f32.mrf.mxu0
      %v6789 = vadd.f32 0.0, %v6788
      %v6790 = vpop.f32.mrf.mxu0
      %6791 = vmatprep.mubr.bf16.mxu0 0
      %6792 = vmatmul.mubr.bf16.gmra.mxu0 %v6642
      %v6793 = vpop.f32.mrf.mxu0
      %v6794 = vadd.f32 0.0, %v6793
      %v6795 = vpop.f32.mrf.mxu0
      %v6796 = vpop.f32.mrf.mxu0
      %v6797 = vadd.f32 0.0, %v6796
      %v6798 = vpop.f32.mrf.mxu0
      %6799 = vmatprep.mubr.bf16.mxu0 0
      %6800 = vmatmul.mubr.bf16.gmra.mxu0 %v6645
      %v6801 = vpop.f32.mrf.mxu0
      %v6802 = vadd.f32 0.0, %v6801
      %v6803 = vpop.f32.mrf.mxu0
      %v6804 = vpop.f32.mrf.mxu0
      %v6805 = vadd.f32 0.0, %v6804
      %v6806 = vpop.f32.mrf.mxu0
      %6807 = vdwg.mxu0
      %v6808 = vadd.f32 %v6408, %v6682
      %v6809 = vadd.f32 %v6411, %v6685
      %v6810 = vadd.f32 %v6416, %v6690
      %v6811 = vadd.f32 %v6419, %v6693
      %v6812 = vadd.f32 %v6424, %v6698
      %v6813 = vadd.f32 %v6427, %v6701
      %v6814 = vadd.f32 %v6432, %v6706
      %v6815 = vadd.f32 %v6435, %v6709
      %v6816 = vadd.f32 %v6440, %v6714
      %v6817 = vadd.f32 %v6443, %v6717
      %v6818 = vadd.f32 %v6448, %v6722
      %v6819 = vadd.f32 %v6451, %v6725
      %v6820 = vadd.f32 %v6456, %v6730
      %v6821 = vadd.f32 %v6459, %v6733
      %v6822 = vadd.f32 %v6464, %v6738
      %v6823 = vadd.f32 %v6467, %v6741
      %v6824 = vadd.f32 %v6472, %v6746
      %v6825 = vadd.f32 %v6475, %v6749
      %v6826 = vadd.f32 %v6480, %v6754
      %v6827 = vadd.f32 %v6483, %v6757
      %v6828 = vadd.f32 %v6488, %v6762
      %v6829 = vadd.f32 %v6491, %v6765
      %v6830 = vadd.f32 %v6496, %v6770
      %v6831 = vadd.f32 %v6499, %v6773
      %v6832 = vadd.f32 %v6504, %v6778
      %v6833 = vadd.f32 %v6507, %v6781
      %v6834 = vadd.f32 %v6512, %v6786
      %v6835 = vadd.f32 %v6515, %v6789
      %v6836 = vadd.f32 %v6520, %v6794
      %v6837 = vadd.f32 %v6523, %v6797
      %v6838 = vadd.f32 %v6528, %v6802
      %v6839 = vadd.f32 %v6531, %v6805
      %v6840 = vld [vmem:[%s3161] sm:$0xff]
      %v6841 = vld [vmem:[%s3161 + $0x8] sm:$0xff]
      %v6842 = vld [vmem:[%s3161 + $0x18] sm:$0xff]
      %v6843 = vld [vmem:[%s3161 + $0x20] sm:$0xff]
      %v6844 = vld [vmem:[%s3161 + $0x30] sm:$0xff]
      %v6845 = vld [vmem:[%s3161 + $0x38] sm:$0xff]
      %v6846 = vld [vmem:[%s3161 + $0x48] sm:$0xff]
      %v6847 = vld [vmem:[%s3161 + $0x50] sm:$0xff]
      %v6848 = vld [vmem:[%s3161 + $0x60] sm:$0xff]
      %v6849 = vld [vmem:[%s3161 + $0x68] sm:$0xff]
      %v6850 = vld [vmem:[%s3161 + $0x78] sm:$0xff]
      %v6851 = vld [vmem:[%s3161 + $0x80] sm:$0xff]
      %v6852 = vld [vmem:[%s3161 + $0x90] sm:$0xff]
      %v6853 = vld [vmem:[%s3161 + $0x98] sm:$0xff]
      %v6854 = vld [vmem:[%s3161 + $0xa8] sm:$0xff]
      %v6855 = vld [vmem:[%s3161 + $0xb0] sm:$0xff]
      %v6856 = vld [vmem:[%s3161 + $0xc0] sm:$0xff]
      %v6857 = vld [vmem:[%s3161 + $0xc8] sm:$0xff]
      %v6858 = vld [vmem:[%s3161 + $0xd8] sm:$0xff]
      %v6859 = vld [vmem:[%s3161 + $0xe0] sm:$0xff]
      %v6860 = vld [vmem:[%s3161 + $0xf0] sm:$0xff]
      %v6861 = vld [vmem:[%s3161 + $0xf8] sm:$0xff]
      %v6862 = vld [vmem:[%s3161 + $0x108] sm:$0xff]
      %v6863 = vld [vmem:[%s3161 + $0x110] sm:$0xff]
      %v6864 = vld [vmem:[%s3161 + $0x120] sm:$0xff]
      %v6865 = vld [vmem:[%s3161 + $0x128] sm:$0xff]
      %v6866 = vld [vmem:[%s3161 + $0x138] sm:$0xff]
      %v6867 = vld [vmem:[%s3161 + $0x140] sm:$0xff]
      %v6868 = vld [vmem:[%s3161 + $0x150] sm:$0xff]
      %v6869 = vld [vmem:[%s3161 + $0x158] sm:$0xff]
      %v6870 = vld [vmem:[%s3161 + $0x168] sm:$0xff]
      %v6871 = vld [vmem:[%s3161 + $0x170] sm:$0xff]
      %v6872 = vpack.c.bf16 %v6841, %v6840
      %v6873 = vpack.c.bf16 %v6843, %v6842
      %v6874 = vpack.c.bf16 %v6845, %v6844
      %v6875 = vpack.c.bf16 %v6847, %v6846
      %v6876 = vpack.c.bf16 %v6849, %v6848
      %v6877 = vpack.c.bf16 %v6851, %v6850
      %v6878 = vpack.c.bf16 %v6853, %v6852
      %v6879 = vpack.c.bf16 %v6855, %v6854
      %v6880 = vpack.c.bf16 %v6857, %v6856
      %v6881 = vpack.c.bf16 %v6859, %v6858
      %v6882 = vpack.c.bf16 %v6861, %v6860
      %v6883 = vpack.c.bf16 %v6863, %v6862
      %v6884 = vpack.c.bf16 %v6865, %v6864
      %v6885 = vpack.c.bf16 %v6867, %v6866
      %v6886 = vpack.c.bf16 %v6869, %v6868
      %v6887 = vpack.c.bf16 %v6871, %v6870
      %s6888 = scalar_lea.vmem %s6, 48
      %v6889 = vld [vmem:[%s6888] sm:$0xf]
      %v6890 = vld [vmem:[%s6888 + $0x4] sm:$0xf]
      %v6891 = vld [vmem:[%s6888 + $0x8] sm:$0xf]
      %v6892 = vld [vmem:[%s6888 + $0xc] sm:$0xf]
      %v6897 = vunpack.c.l.b16 %v6889
      %v6898 = vunpack.c.l.b16 %v6890
      %v6899 = vunpack.c.l.b16 %v6891
      %v6900 = vunpack.c.l.b16 %v6892
      %v6901 = vpack.c.b16 %v6898, %v6897
      %v6902 = vpack.c.b16 %v6900, %v6899
      %v6906 = vsel %vm383, %v6872, 0
      %v6909 = vsel %vm383, %v6873, 0
      %v6912 = vsel %vm383, %v6874, 0
      %v6915 = vsel %vm383, %v6875, 0
      %v6918 = vsel %vm383, %v6876, 0
      %v6921 = vsel %vm383, %v6877, 0
      %v6924 = vsel %vm383, %v6878, 0
      %v6927 = vsel %vm383, %v6879, 0
      %v6930 = vsel %vm383, %v6880, 0
      %v6933 = vsel %vm383, %v6881, 0
      %v6936 = vsel %vm383, %v6882, 0
      %v6939 = vsel %vm383, %v6883, 0
      %v6942 = vsel %vm383, %v6884, 0
      %v6945 = vsel %vm383, %v6885, 0
      %v6948 = vsel %vm383, %v6886, 0
      %v6951 = vsel %vm383, %v6887, 0
      %6953 = vmatprep.subr.bf16.mxu0 0
      %6954 = vmatpush1.bf16.msra.mxu0 0
      %6955 = vmatprep.subr.bf16.mxu0 0
      %6956 = vmatpush1.bf16.msra.mxu0 0
      %6957 = vmatprep.subr.bf16.mxu0 0
      %6958 = vmatpush1.bf16.msra.mxu0 0
      %6959 = vmatprep.subr.bf16.mxu0 0
      %6960 = vmatpush1.bf16.msra.mxu0 0
      %6961 = vmatprep.subr.bf16.mxu0 0
      %6962 = vmatpush1.bf16.msra.mxu0 0
      %6963 = vmatprep.subr.bf16.mxu0 0
      %6964 = vmatpush1.bf16.msra.mxu0 0
      %6965 = vmatprep.subr.bf16.mxu0 0
      %6966 = vmatpush1.bf16.msra.mxu0 %v6902
      %6967 = vmatprep.subr.bf16.mxu0 0
      %6968 = vmatpush1.bf16.msra.mxu0 %v6901
      %6969 = vmatprep.subr.bf16.mxu0 0
      %6970 = vmatpush2.bf16.msra.mxu0 0
      %6971 = vmatprep.subr.bf16.mxu0 0
      %6972 = vmatpush2.bf16.msra.mxu0 0
      %6973 = vmatprep.subr.bf16.mxu0 0
      %6974 = vmatpush2.bf16.msra.mxu0 0
      %6975 = vmatprep.subr.bf16.mxu0 0
      %6976 = vmatpush2.bf16.msra.mxu0 0
      %6977 = vmatprep.subr.bf16.mxu0 0
      %6978 = vmatpush2.bf16.msra.mxu0 0
      %6979 = vmatprep.subr.bf16.mxu0 0
      %6980 = vmatpush2.bf16.msra.mxu0 0
      %6981 = vmatprep.subr.bf16.mxu0 0
      %6982 = vmatpush2.bf16.msra.mxu0 0
      %6983 = vmatprep.subr.bf16.mxu0 0
      %6984 = vmatpush2.bf16.msra.mxu0 0
      %6985 = vmatprep.mubr.bf16.mxu0 0
      %6986 = vmatmul.mubr.bf16.gmra.mxu0 %v6906
      %v6987 = vpop.f32.mrf.mxu0
      %v6988 = vadd.f32 0.0, %v6987
      %v6989 = vpop.f32.mrf.mxu0
      %v6990 = vpop.f32.mrf.mxu0
      %v6991 = vadd.f32 0.0, %v6990
      %v6992 = vpop.f32.mrf.mxu0
      %6993 = vmatprep.mubr.bf16.mxu0 0
      %6994 = vmatmul.mubr.bf16.gmra.mxu0 %v6909
      %v6995 = vpop.f32.mrf.mxu0
      %v6996 = vadd.f32 0.0, %v6995
      %v6997 = vpop.f32.mrf.mxu0
      %v6998 = vpop.f32.mrf.mxu0
      %v6999 = vadd.f32 0.0, %v6998
      %v7000 = vpop.f32.mrf.mxu0
      %7001 = vmatprep.mubr.bf16.mxu0 0
      %7002 = vmatmul.mubr.bf16.gmra.mxu0 %v6912
      %v7003 = vpop.f32.mrf.mxu0
      %v7004 = vadd.f32 0.0, %v7003
      %v7005 = vpop.f32.mrf.mxu0
      %v7006 = vpop.f32.mrf.mxu0
      %v7007 = vadd.f32 0.0, %v7006
      %v7008 = vpop.f32.mrf.mxu0
      %7009 = vmatprep.mubr.bf16.mxu0 0
      %7010 = vmatmul.mubr.bf16.gmra.mxu0 %v6915
      %v7011 = vpop.f32.mrf.mxu0
      %v7012 = vadd.f32 0.0, %v7011
      %v7013 = vpop.f32.mrf.mxu0
      %v7014 = vpop.f32.mrf.mxu0
      %v7015 = vadd.f32 0.0, %v7014
      %v7016 = vpop.f32.mrf.mxu0
      %7017 = vmatprep.mubr.bf16.mxu0 0
      %7018 = vmatmul.mubr.bf16.gmra.mxu0 %v6918
      %v7019 = vpop.f32.mrf.mxu0
      %v7020 = vadd.f32 0.0, %v7019
      %v7021 = vpop.f32.mrf.mxu0
      %v7022 = vpop.f32.mrf.mxu0
      %v7023 = vadd.f32 0.0, %v7022
      %v7024 = vpop.f32.mrf.mxu0
      %7025 = vmatprep.mubr.bf16.mxu0 0
      %7026 = vmatmul.mubr.bf16.gmra.mxu0 %v6921
      %v7027 = vpop.f32.mrf.mxu0
      %v7028 = vadd.f32 0.0, %v7027
      %v7029 = vpop.f32.mrf.mxu0
      %v7030 = vpop.f32.mrf.mxu0
      %v7031 = vadd.f32 0.0, %v7030
      %v7032 = vpop.f32.mrf.mxu0
      %7033 = vmatprep.mubr.bf16.mxu0 0
      %7034 = vmatmul.mubr.bf16.gmra.mxu0 %v6924
      %v7035 = vpop.f32.mrf.mxu0
      %v7036 = vadd.f32 0.0, %v7035
      %v7037 = vpop.f32.mrf.mxu0
      %v7038 = vpop.f32.mrf.mxu0
      %v7039 = vadd.f32 0.0, %v7038
      %v7040 = vpop.f32.mrf.mxu0
      %7041 = vmatprep.mubr.bf16.mxu0 0
      %7042 = vmatmul.mubr.bf16.gmra.mxu0 %v6927
      %v7043 = vpop.f32.mrf.mxu0
      %v7044 = vadd.f32 0.0, %v7043
      %v7045 = vpop.f32.mrf.mxu0
      %v7046 = vpop.f32.mrf.mxu0
      %v7047 = vadd.f32 0.0, %v7046
      %v7048 = vpop.f32.mrf.mxu0
      %7049 = vmatprep.mubr.bf16.mxu0 0
      %7050 = vmatmul.mubr.bf16.gmra.mxu0 %v6930
      %v7051 = vpop.f32.mrf.mxu0
      %v7052 = vadd.f32 0.0, %v7051
      %v7053 = vpop.f32.mrf.mxu0
      %v7054 = vpop.f32.mrf.mxu0
      %v7055 = vadd.f32 0.0, %v7054
      %v7056 = vpop.f32.mrf.mxu0
      %7057 = vmatprep.mubr.bf16.mxu0 0
      %7058 = vmatmul.mubr.bf16.gmra.mxu0 %v6933
      %v7059 = vpop.f32.mrf.mxu0
      %v7060 = vadd.f32 0.0, %v7059
      %v7061 = vpop.f32.mrf.mxu0
      %v7062 = vpop.f32.mrf.mxu0
      %v7063 = vadd.f32 0.0, %v7062
      %v7064 = vpop.f32.mrf.mxu0
      %7065 = vmatprep.mubr.bf16.mxu0 0
      %7066 = vmatmul.mubr.bf16.gmra.mxu0 %v6936
      %v7067 = vpop.f32.mrf.mxu0
      %v7068 = vadd.f32 0.0, %v7067
      %v7069 = vpop.f32.mrf.mxu0
      %v7070 = vpop.f32.mrf.mxu0
      %v7071 = vadd.f32 0.0, %v7070
      %v7072 = vpop.f32.mrf.mxu0
      %7073 = vmatprep.mubr.bf16.mxu0 0
      %7074 = vmatmul.mubr.bf16.gmra.mxu0 %v6939
      %v7075 = vpop.f32.mrf.mxu0
      %v7076 = vadd.f32 0.0, %v7075
      %v7077 = vpop.f32.mrf.mxu0
      %v7078 = vpop.f32.mrf.mxu0
      %v7079 = vadd.f32 0.0, %v7078
      %v7080 = vpop.f32.mrf.mxu0
      %7081 = vmatprep.mubr.bf16.mxu0 0
      %7082 = vmatmul.mubr.bf16.gmra.mxu0 %v6942
      %v7083 = vpop.f32.mrf.mxu0
      %v7084 = vadd.f32 0.0, %v7083
      %v7085 = vpop.f32.mrf.mxu0
      %v7086 = vpop.f32.mrf.mxu0
      %v7087 = vadd.f32 0.0, %v7086
      %v7088 = vpop.f32.mrf.mxu0
      %7089 = vmatprep.mubr.bf16.mxu0 0
      %7090 = vmatmul.mubr.bf16.gmra.mxu0 %v6945
      %v7091 = vpop.f32.mrf.mxu0
      %v7092 = vadd.f32 0.0, %v7091
      %v7093 = vpop.f32.mrf.mxu0
      %v7094 = vpop.f32.mrf.mxu0
      %v7095 = vadd.f32 0.0, %v7094
      %v7096 = vpop.f32.mrf.mxu0
      %7097 = vmatprep.mubr.bf16.mxu0 0
      %7098 = vmatmul.mubr.bf16.gmra.mxu0 %v6948
      %v7099 = vpop.f32.mrf.mxu0
      %v7100 = vadd.f32 0.0, %v7099
      %v7101 = vpop.f32.mrf.mxu0
      %v7102 = vpop.f32.mrf.mxu0
      %v7103 = vadd.f32 0.0, %v7102
      %v7104 = vpop.f32.mrf.mxu0
      %7105 = vmatprep.mubr.bf16.mxu0 0
      %7106 = vmatmul.mubr.bf16.gmra.mxu0 %v6951
      %v7107 = vpop.f32.mrf.mxu0
      %v7108 = vadd.f32 0.0, %v7107
      %v7109 = vpop.f32.mrf.mxu0
      %v7110 = vpop.f32.mrf.mxu0
      %v7111 = vadd.f32 0.0, %v7110
      %v7112 = vpop.f32.mrf.mxu0
      %7113 = vdwg.mxu0
      %v7114 = vadd.f32 %v6808, %v6988
      %v7115 = vadd.f32 %v6809, %v6991
      %v7116 = vadd.f32 %v6810, %v6996
      %v7117 = vadd.f32 %v6811, %v6999
      %v7118 = vadd.f32 %v6812, %v7004
      %v7119 = vadd.f32 %v6813, %v7007
      %v7120 = vadd.f32 %v6814, %v7012
      %v7121 = vadd.f32 %v6815, %v7015
      %v7122 = vadd.f32 %v6816, %v7020
      %v7123 = vadd.f32 %v6817, %v7023
      %v7124 = vadd.f32 %v6818, %v7028
      %v7125 = vadd.f32 %v6819, %v7031
      %v7126 = vadd.f32 %v6820, %v7036
      %v7127 = vadd.f32 %v6821, %v7039
      %v7128 = vadd.f32 %v6822, %v7044
      %v7129 = vadd.f32 %v6823, %v7047
      %v7130 = vadd.f32 %v6824, %v7052
      %v7131 = vadd.f32 %v6825, %v7055
      %v7132 = vadd.f32 %v6826, %v7060
      %v7133 = vadd.f32 %v6827, %v7063
      %v7134 = vadd.f32 %v6828, %v7068
      %v7135 = vadd.f32 %v6829, %v7071
      %v7136 = vadd.f32 %v6830, %v7076
      %v7137 = vadd.f32 %v6831, %v7079
      %v7138 = vadd.f32 %v6832, %v7084
      %v7139 = vadd.f32 %v6833, %v7087
      %v7140 = vadd.f32 %v6834, %v7092
      %v7141 = vadd.f32 %v6835, %v7095
      %v7142 = vadd.f32 %v6836, %v7100
      %v7143 = vadd.f32 %v6837, %v7103
      %v7144 = vadd.f32 %v6838, %v7108
      %v7145 = vadd.f32 %v6839, %v7111
      %v7146 = vld [vmem:[%s3161 + $0x1] sm:$0xff]
      %v7147 = vld [vmem:[%s3161 + $0x9] sm:$0xff]
      %v7148 = vld [vmem:[%s3161 + $0x19] sm:$0xff]
      %v7149 = vld [vmem:[%s3161 + $0x21] sm:$0xff]
      %v7150 = vld [vmem:[%s3161 + $0x31] sm:$0xff]
      %v7151 = vld [vmem:[%s3161 + $0x39] sm:$0xff]
      %v7152 = vld [vmem:[%s3161 + $0x49] sm:$0xff]
      %v7153 = vld [vmem:[%s3161 + $0x51] sm:$0xff]
      %v7154 = vld [vmem:[%s3161 + $0x61] sm:$0xff]
      %v7155 = vld [vmem:[%s3161 + $0x69] sm:$0xff]
      %v7156 = vld [vmem:[%s3161 + $0x79] sm:$0xff]
      %v7157 = vld [vmem:[%s3161 + $0x81] sm:$0xff]
      %v7158 = vld [vmem:[%s3161 + $0x91] sm:$0xff]
      %v7159 = vld [vmem:[%s3161 + $0x99] sm:$0xff]
      %v7160 = vld [vmem:[%s3161 + $0xa9] sm:$0xff]
      %v7161 = vld [vmem:[%s3161 + $0xb1] sm:$0xff]
      %v7162 = vld [vmem:[%s3161 + $0xc1] sm:$0xff]
      %v7163 = vld [vmem:[%s3161 + $0xc9] sm:$0xff]
      %v7164 = vld [vmem:[%s3161 + $0xd9] sm:$0xff]
      %v7165 = vld [vmem:[%s3161 + $0xe1] sm:$0xff]
      %v7166 = vld [vmem:[%s3161 + $0xf1] sm:$0xff]
      %v7167 = vld [vmem:[%s3161 + $0xf9] sm:$0xff]
      %v7168 = vld [vmem:[%s3161 + $0x109] sm:$0xff]
      %v7169 = vld [vmem:[%s3161 + $0x111] sm:$0xff]
      %v7170 = vld [vmem:[%s3161 + $0x121] sm:$0xff]
      %v7171 = vld [vmem:[%s3161 + $0x129] sm:$0xff]
      %v7172 = vld [vmem:[%s3161 + $0x139] sm:$0xff]
      %v7173 = vld [vmem:[%s3161 + $0x141] sm:$0xff]
      %v7174 = vld [vmem:[%s3161 + $0x151] sm:$0xff]
      %v7175 = vld [vmem:[%s3161 + $0x159] sm:$0xff]
      %v7176 = vld [vmem:[%s3161 + $0x169] sm:$0xff]
      %v7177 = vld [vmem:[%s3161 + $0x171] sm:$0xff]
      %v7178 = vpack.c.bf16 %v7147, %v7146
      %v7179 = vpack.c.bf16 %v7149, %v7148
      %v7180 = vpack.c.bf16 %v7151, %v7150
      %v7181 = vpack.c.bf16 %v7153, %v7152
      %v7182 = vpack.c.bf16 %v7155, %v7154
      %v7183 = vpack.c.bf16 %v7157, %v7156
      %v7184 = vpack.c.bf16 %v7159, %v7158
      %v7185 = vpack.c.bf16 %v7161, %v7160
      %v7186 = vpack.c.bf16 %v7163, %v7162
      %v7187 = vpack.c.bf16 %v7165, %v7164
      %v7188 = vpack.c.bf16 %v7167, %v7166
      %v7189 = vpack.c.bf16 %v7169, %v7168
      %v7190 = vpack.c.bf16 %v7171, %v7170
      %v7191 = vpack.c.bf16 %v7173, %v7172
      %v7192 = vpack.c.bf16 %v7175, %v7174
      %v7193 = vpack.c.bf16 %v7177, %v7176
      %s7194 = scalar_lea.vmem %s6, 64
      %v7195 = vld [vmem:[%s7194] sm:$0xf]
      %v7196 = vld [vmem:[%s7194 + $0x4] sm:$0xf]
      %v7197 = vld [vmem:[%s7194 + $0x8] sm:$0xf]
      %v7198 = vld [vmem:[%s7194 + $0xc] sm:$0xf]
      %v7203 = vunpack.c.l.b16 %v7195
      %v7204 = vunpack.c.l.b16 %v7196
      %v7205 = vunpack.c.l.b16 %v7197
      %v7206 = vunpack.c.l.b16 %v7198
      %v7207 = vpack.c.b16 %v7204, %v7203
      %v7208 = vpack.c.b16 %v7206, %v7205
      %v7212 = vsel %vm383, %v7178, 0
      %v7215 = vsel %vm383, %v7179, 0
      %v7218 = vsel %vm383, %v7180, 0
      %v7221 = vsel %vm383, %v7181, 0
      %v7224 = vsel %vm383, %v7182, 0
      %v7227 = vsel %vm383, %v7183, 0
      %v7230 = vsel %vm383, %v7184, 0
      %v7233 = vsel %vm383, %v7185, 0
      %v7236 = vsel %vm383, %v7186, 0
      %v7239 = vsel %vm383, %v7187, 0
      %v7242 = vsel %vm383, %v7188, 0
      %v7245 = vsel %vm383, %v7189, 0
      %v7248 = vsel %vm383, %v7190, 0
      %v7251 = vsel %vm383, %v7191, 0
      %v7254 = vsel %vm383, %v7192, 0
      %v7257 = vsel %vm383, %v7193, 0
      %7259 = vmatprep.subr.bf16.mxu0 0
      %7260 = vmatpush1.bf16.msra.mxu0 0
      %7261 = vmatprep.subr.bf16.mxu0 0
      %7262 = vmatpush1.bf16.msra.mxu0 0
      %7263 = vmatprep.subr.bf16.mxu0 0
      %7264 = vmatpush1.bf16.msra.mxu0 0
      %7265 = vmatprep.subr.bf16.mxu0 0
      %7266 = vmatpush1.bf16.msra.mxu0 0
      %7267 = vmatprep.subr.bf16.mxu0 0
      %7268 = vmatpush1.bf16.msra.mxu0 0
      %7269 = vmatprep.subr.bf16.mxu0 0
      %7270 = vmatpush1.bf16.msra.mxu0 0
      %7271 = vmatprep.subr.bf16.mxu0 0
      %7272 = vmatpush1.bf16.msra.mxu0 %v7208
      %7273 = vmatprep.subr.bf16.mxu0 0
      %7274 = vmatpush1.bf16.msra.mxu0 %v7207
      %7275 = vmatprep.subr.bf16.mxu0 0
      %7276 = vmatpush2.bf16.msra.mxu0 0
      %7277 = vmatprep.subr.bf16.mxu0 0
      %7278 = vmatpush2.bf16.msra.mxu0 0
      %7279 = vmatprep.subr.bf16.mxu0 0
      %7280 = vmatpush2.bf16.msra.mxu0 0
      %7281 = vmatprep.subr.bf16.mxu0 0
      %7282 = vmatpush2.bf16.msra.mxu0 0
      %7283 = vmatprep.subr.bf16.mxu0 0
      %7284 = vmatpush2.bf16.msra.mxu0 0
      %7285 = vmatprep.subr.bf16.mxu0 0
      %7286 = vmatpush2.bf16.msra.mxu0 0
      %7287 = vmatprep.subr.bf16.mxu0 0
      %7288 = vmatpush2.bf16.msra.mxu0 0
      %7289 = vmatprep.subr.bf16.mxu0 0
      %7290 = vmatpush2.bf16.msra.mxu0 0
      %7291 = vmatprep.mubr.bf16.mxu0 0
      %7292 = vmatmul.mubr.bf16.gmra.mxu0 %v7212
      %v7293 = vpop.f32.mrf.mxu0
      %v7294 = vadd.f32 0.0, %v7293
      %v7295 = vpop.f32.mrf.mxu0
      %v7296 = vpop.f32.mrf.mxu0
      %v7297 = vadd.f32 0.0, %v7296
      %v7298 = vpop.f32.mrf.mxu0
      %7299 = vmatprep.mubr.bf16.mxu0 0
      %7300 = vmatmul.mubr.bf16.gmra.mxu0 %v7215
      %v7301 = vpop.f32.mrf.mxu0
      %v7302 = vadd.f32 0.0, %v7301
      %v7303 = vpop.f32.mrf.mxu0
      %v7304 = vpop.f32.mrf.mxu0
      %v7305 = vadd.f32 0.0, %v7304
      %v7306 = vpop.f32.mrf.mxu0
      %7307 = vmatprep.mubr.bf16.mxu0 0
      %7308 = vmatmul.mubr.bf16.gmra.mxu0 %v7218
      %v7309 = vpop.f32.mrf.mxu0
      %v7310 = vadd.f32 0.0, %v7309
      %v7311 = vpop.f32.mrf.mxu0
      %v7312 = vpop.f32.mrf.mxu0
      %v7313 = vadd.f32 0.0, %v7312
      %v7314 = vpop.f32.mrf.mxu0
      %7315 = vmatprep.mubr.bf16.mxu0 0
      %7316 = vmatmul.mubr.bf16.gmra.mxu0 %v7221
      %v7317 = vpop.f32.mrf.mxu0
      %v7318 = vadd.f32 0.0, %v7317
      %v7319 = vpop.f32.mrf.mxu0
      %v7320 = vpop.f32.mrf.mxu0
      %v7321 = vadd.f32 0.0, %v7320
      %v7322 = vpop.f32.mrf.mxu0
      %7323 = vmatprep.mubr.bf16.mxu0 0
      %7324 = vmatmul.mubr.bf16.gmra.mxu0 %v7224
      %v7325 = vpop.f32.mrf.mxu0
      %v7326 = vadd.f32 0.0, %v7325
      %v7327 = vpop.f32.mrf.mxu0
      %v7328 = vpop.f32.mrf.mxu0
      %v7329 = vadd.f32 0.0, %v7328
      %v7330 = vpop.f32.mrf.mxu0
      %7331 = vmatprep.mubr.bf16.mxu0 0
      %7332 = vmatmul.mubr.bf16.gmra.mxu0 %v7227
      %v7333 = vpop.f32.mrf.mxu0
      %v7334 = vadd.f32 0.0, %v7333
      %v7335 = vpop.f32.mrf.mxu0
      %v7336 = vpop.f32.mrf.mxu0
      %v7337 = vadd.f32 0.0, %v7336
      %v7338 = vpop.f32.mrf.mxu0
      %7339 = vmatprep.mubr.bf16.mxu0 0
      %7340 = vmatmul.mubr.bf16.gmra.mxu0 %v7230
      %v7341 = vpop.f32.mrf.mxu0
      %v7342 = vadd.f32 0.0, %v7341
      %v7343 = vpop.f32.mrf.mxu0
      %v7344 = vpop.f32.mrf.mxu0
      %v7345 = vadd.f32 0.0, %v7344
      %v7346 = vpop.f32.mrf.mxu0
      %7347 = vmatprep.mubr.bf16.mxu0 0
      %7348 = vmatmul.mubr.bf16.gmra.mxu0 %v7233
      %v7349 = vpop.f32.mrf.mxu0
      %v7350 = vadd.f32 0.0, %v7349
      %v7351 = vpop.f32.mrf.mxu0
      %v7352 = vpop.f32.mrf.mxu0
      %v7353 = vadd.f32 0.0, %v7352
      %v7354 = vpop.f32.mrf.mxu0
      %7355 = vmatprep.mubr.bf16.mxu0 0
      %7356 = vmatmul.mubr.bf16.gmra.mxu0 %v7236
      %v7357 = vpop.f32.mrf.mxu0
      %v7358 = vadd.f32 0.0, %v7357
      %v7359 = vpop.f32.mrf.mxu0
      %v7360 = vpop.f32.mrf.mxu0
      %v7361 = vadd.f32 0.0, %v7360
      %v7362 = vpop.f32.mrf.mxu0
      %7363 = vmatprep.mubr.bf16.mxu0 0
      %7364 = vmatmul.mubr.bf16.gmra.mxu0 %v7239
      %v7365 = vpop.f32.mrf.mxu0
      %v7366 = vadd.f32 0.0, %v7365
      %v7367 = vpop.f32.mrf.mxu0
      %v7368 = vpop.f32.mrf.mxu0
      %v7369 = vadd.f32 0.0, %v7368
      %v7370 = vpop.f32.mrf.mxu0
      %7371 = vmatprep.mubr.bf16.mxu0 0
      %7372 = vmatmul.mubr.bf16.gmra.mxu0 %v7242
      %v7373 = vpop.f32.mrf.mxu0
      %v7374 = vadd.f32 0.0, %v7373
      %v7375 = vpop.f32.mrf.mxu0
      %v7376 = vpop.f32.mrf.mxu0
      %v7377 = vadd.f32 0.0, %v7376
      %v7378 = vpop.f32.mrf.mxu0
      %7379 = vmatprep.mubr.bf16.mxu0 0
      %7380 = vmatmul.mubr.bf16.gmra.mxu0 %v7245
      %v7381 = vpop.f32.mrf.mxu0
      %v7382 = vadd.f32 0.0, %v7381
      %v7383 = vpop.f32.mrf.mxu0
      %v7384 = vpop.f32.mrf.mxu0
      %v7385 = vadd.f32 0.0, %v7384
      %v7386 = vpop.f32.mrf.mxu0
      %7387 = vmatprep.mubr.bf16.mxu0 0
      %7388 = vmatmul.mubr.bf16.gmra.mxu0 %v7248
      %v7389 = vpop.f32.mrf.mxu0
      %v7390 = vadd.f32 0.0, %v7389
      %v7391 = vpop.f32.mrf.mxu0
      %v7392 = vpop.f32.mrf.mxu0
      %v7393 = vadd.f32 0.0, %v7392
      %v7394 = vpop.f32.mrf.mxu0
      %7395 = vmatprep.mubr.bf16.mxu0 0
      %7396 = vmatmul.mubr.bf16.gmra.mxu0 %v7251
      %v7397 = vpop.f32.mrf.mxu0
      %v7398 = vadd.f32 0.0, %v7397
      %v7399 = vpop.f32.mrf.mxu0
      %v7400 = vpop.f32.mrf.mxu0
      %v7401 = vadd.f32 0.0, %v7400
      %v7402 = vpop.f32.mrf.mxu0
      %7403 = vmatprep.mubr.bf16.mxu0 0
      %7404 = vmatmul.mubr.bf16.gmra.mxu0 %v7254
      %v7405 = vpop.f32.mrf.mxu0
      %v7406 = vadd.f32 0.0, %v7405
      %v7407 = vpop.f32.mrf.mxu0
      %v7408 = vpop.f32.mrf.mxu0
      %v7409 = vadd.f32 0.0, %v7408
      %v7410 = vpop.f32.mrf.mxu0
      %7411 = vmatprep.mubr.bf16.mxu0 0
      %7412 = vmatmul.mubr.bf16.gmra.mxu0 %v7257
      %v7413 = vpop.f32.mrf.mxu0
      %v7414 = vadd.f32 0.0, %v7413
      %v7415 = vpop.f32.mrf.mxu0
      %v7416 = vpop.f32.mrf.mxu0
      %v7417 = vadd.f32 0.0, %v7416
      %v7418 = vpop.f32.mrf.mxu0
      %7419 = vdwg.mxu0
      %v7420 = vadd.f32 %v7114, %v7294
      %v7421 = vadd.f32 %v7115, %v7297
      %v7422 = vadd.f32 %v7116, %v7302
      %v7423 = vadd.f32 %v7117, %v7305
      %v7424 = vadd.f32 %v7118, %v7310
      %v7425 = vadd.f32 %v7119, %v7313
      %v7426 = vadd.f32 %v7120, %v7318
      %v7427 = vadd.f32 %v7121, %v7321
      %v7428 = vadd.f32 %v7122, %v7326
      %v7429 = vadd.f32 %v7123, %v7329
      %v7430 = vadd.f32 %v7124, %v7334
      %v7431 = vadd.f32 %v7125, %v7337
      %v7432 = vadd.f32 %v7126, %v7342
      %v7433 = vadd.f32 %v7127, %v7345
      %v7434 = vadd.f32 %v7128, %v7350
      %v7435 = vadd.f32 %v7129, %v7353
      %v7436 = vadd.f32 %v7130, %v7358
      %v7437 = vadd.f32 %v7131, %v7361
      %v7438 = vadd.f32 %v7132, %v7366
      %v7439 = vadd.f32 %v7133, %v7369
      %v7440 = vadd.f32 %v7134, %v7374
      %v7441 = vadd.f32 %v7135, %v7377
      %v7442 = vadd.f32 %v7136, %v7382
      %v7443 = vadd.f32 %v7137, %v7385
      %v7444 = vadd.f32 %v7138, %v7390
      %v7445 = vadd.f32 %v7139, %v7393
      %v7446 = vadd.f32 %v7140, %v7398
      %v7447 = vadd.f32 %v7141, %v7401
      %v7448 = vadd.f32 %v7142, %v7406
      %v7449 = vadd.f32 %v7143, %v7409
      %v7450 = vadd.f32 %v7144, %v7414
      %v7451 = vadd.f32 %v7145, %v7417
      %v7452 = vld [vmem:[%s3161 + $0x2] sm:$0xff]
      %v7453 = vld [vmem:[%s3161 + $0xa] sm:$0xff]
      %v7454 = vld [vmem:[%s3161 + $0x1a] sm:$0xff]
      %v7455 = vld [vmem:[%s3161 + $0x22] sm:$0xff]
      %v7456 = vld [vmem:[%s3161 + $0x32] sm:$0xff]
      %v7457 = vld [vmem:[%s3161 + $0x3a] sm:$0xff]
      %v7458 = vld [vmem:[%s3161 + $0x4a] sm:$0xff]
      %v7459 = vld [vmem:[%s3161 + $0x52] sm:$0xff]
      %v7460 = vld [vmem:[%s3161 + $0x62] sm:$0xff]
      %v7461 = vld [vmem:[%s3161 + $0x6a] sm:$0xff]
      %v7462 = vld [vmem:[%s3161 + $0x7a] sm:$0xff]
      %v7463 = vld [vmem:[%s3161 + $0x82] sm:$0xff]
      %v7464 = vld [vmem:[%s3161 + $0x92] sm:$0xff]
      %v7465 = vld [vmem:[%s3161 + $0x9a] sm:$0xff]
      %v7466 = vld [vmem:[%s3161 + $0xaa] sm:$0xff]
      %v7467 = vld [vmem:[%s3161 + $0xb2] sm:$0xff]
      %v7468 = vld [vmem:[%s3161 + $0xc2] sm:$0xff]
      %v7469 = vld [vmem:[%s3161 + $0xca] sm:$0xff]
      %v7470 = vld [vmem:[%s3161 + $0xda] sm:$0xff]
      %v7471 = vld [vmem:[%s3161 + $0xe2] sm:$0xff]
      %v7472 = vld [vmem:[%s3161 + $0xf2] sm:$0xff]
      %v7473 = vld [vmem:[%s3161 + $0xfa] sm:$0xff]
      %v7474 = vld [vmem:[%s3161 + $0x10a] sm:$0xff]
      %v7475 = vld [vmem:[%s3161 + $0x112] sm:$0xff]
      %v7476 = vld [vmem:[%s3161 + $0x122] sm:$0xff]
      %v7477 = vld [vmem:[%s3161 + $0x12a] sm:$0xff]
      %v7478 = vld [vmem:[%s3161 + $0x13a] sm:$0xff]
      %v7479 = vld [vmem:[%s3161 + $0x142] sm:$0xff]
      %v7480 = vld [vmem:[%s3161 + $0x152] sm:$0xff]
      %v7481 = vld [vmem:[%s3161 + $0x15a] sm:$0xff]
      %v7482 = vld [vmem:[%s3161 + $0x16a] sm:$0xff]
      %v7483 = vld [vmem:[%s3161 + $0x172] sm:$0xff]
      %v7484 = vpack.c.bf16 %v7453, %v7452
      %v7485 = vpack.c.bf16 %v7455, %v7454
      %v7486 = vpack.c.bf16 %v7457, %v7456
      %v7487 = vpack.c.bf16 %v7459, %v7458
      %v7488 = vpack.c.bf16 %v7461, %v7460
      %v7489 = vpack.c.bf16 %v7463, %v7462
      %v7490 = vpack.c.bf16 %v7465, %v7464
      %v7491 = vpack.c.bf16 %v7467, %v7466
      %v7492 = vpack.c.bf16 %v7469, %v7468
      %v7493 = vpack.c.bf16 %v7471, %v7470
      %v7494 = vpack.c.bf16 %v7473, %v7472
      %v7495 = vpack.c.bf16 %v7475, %v7474
      %v7496 = vpack.c.bf16 %v7477, %v7476
      %v7497 = vpack.c.bf16 %v7479, %v7478
      %v7498 = vpack.c.bf16 %v7481, %v7480
      %v7499 = vpack.c.bf16 %v7483, %v7482
      %s7500 = scalar_lea.vmem %s6, 80
      %v7501 = vld [vmem:[%s7500] sm:$0xf]
      %v7502 = vld [vmem:[%s7500 + $0x4] sm:$0xf]
      %v7503 = vld [vmem:[%s7500 + $0x8] sm:$0xf]
      %v7504 = vld [vmem:[%s7500 + $0xc] sm:$0xf]
      %v7509 = vunpack.c.l.b16 %v7501
      %v7510 = vunpack.c.l.b16 %v7502
      %v7511 = vunpack.c.l.b16 %v7503
      %v7512 = vunpack.c.l.b16 %v7504
      %v7513 = vpack.c.b16 %v7510, %v7509
      %v7514 = vpack.c.b16 %v7512, %v7511
      %v7518 = vsel %vm383, %v7484, 0
      %v7521 = vsel %vm383, %v7485, 0
      %v7524 = vsel %vm383, %v7486, 0
      %v7527 = vsel %vm383, %v7487, 0
      %v7530 = vsel %vm383, %v7488, 0
      %v7533 = vsel %vm383, %v7489, 0
      %v7536 = vsel %vm383, %v7490, 0
      %v7539 = vsel %vm383, %v7491, 0
      %v7542 = vsel %vm383, %v7492, 0
      %v7545 = vsel %vm383, %v7493, 0
      %v7548 = vsel %vm383, %v7494, 0
      %v7551 = vsel %vm383, %v7495, 0
      %v7554 = vsel %vm383, %v7496, 0
      %v7557 = vsel %vm383, %v7497, 0
      %v7560 = vsel %vm383, %v7498, 0
      %v7563 = vsel %vm383, %v7499, 0
      %7565 = vmatprep.subr.bf16.mxu0 0
      %7566 = vmatpush1.bf16.msra.mxu0 0
      %7567 = vmatprep.subr.bf16.mxu0 0
      %7568 = vmatpush1.bf16.msra.mxu0 0
      %7569 = vmatprep.subr.bf16.mxu0 0
      %7570 = vmatpush1.bf16.msra.mxu0 0
      %7571 = vmatprep.subr.bf16.mxu0 0
      %7572 = vmatpush1.bf16.msra.mxu0 0
      %7573 = vmatprep.subr.bf16.mxu0 0
      %7574 = vmatpush1.bf16.msra.mxu0 0
      %7575 = vmatprep.subr.bf16.mxu0 0
      %7576 = vmatpush1.bf16.msra.mxu0 0
      %7577 = vmatprep.subr.bf16.mxu0 0
      %7578 = vmatpush1.bf16.msra.mxu0 %v7514
      %7579 = vmatprep.subr.bf16.mxu0 0
      %7580 = vmatpush1.bf16.msra.mxu0 %v7513
      %7581 = vmatprep.subr.bf16.mxu0 0
      %7582 = vmatpush2.bf16.msra.mxu0 0
      %7583 = vmatprep.subr.bf16.mxu0 0
      %7584 = vmatpush2.bf16.msra.mxu0 0
      %7585 = vmatprep.subr.bf16.mxu0 0
      %7586 = vmatpush2.bf16.msra.mxu0 0
      %7587 = vmatprep.subr.bf16.mxu0 0
      %7588 = vmatpush2.bf16.msra.mxu0 0
      %7589 = vmatprep.subr.bf16.mxu0 0
      %7590 = vmatpush2.bf16.msra.mxu0 0
      %7591 = vmatprep.subr.bf16.mxu0 0
      %7592 = vmatpush2.bf16.msra.mxu0 0
      %7593 = vmatprep.subr.bf16.mxu0 0
      %7594 = vmatpush2.bf16.msra.mxu0 0
      %7595 = vmatprep.subr.bf16.mxu0 0
      %7596 = vmatpush2.bf16.msra.mxu0 0
      %7597 = vmatprep.mubr.bf16.mxu0 0
      %7598 = vmatmul.mubr.bf16.gmra.mxu0 %v7518
      %v7599 = vpop.f32.mrf.mxu0
      %v7600 = vadd.f32 0.0, %v7599
      %v7601 = vpop.f32.mrf.mxu0
      %v7602 = vpop.f32.mrf.mxu0
      %v7603 = vadd.f32 0.0, %v7602
      %v7604 = vpop.f32.mrf.mxu0
      %7605 = vmatprep.mubr.bf16.mxu0 0
      %7606 = vmatmul.mubr.bf16.gmra.mxu0 %v7521
      %v7607 = vpop.f32.mrf.mxu0
      %v7608 = vadd.f32 0.0, %v7607
      %v7609 = vpop.f32.mrf.mxu0
      %v7610 = vpop.f32.mrf.mxu0
      %v7611 = vadd.f32 0.0, %v7610
      %v7612 = vpop.f32.mrf.mxu0
      %7613 = vmatprep.mubr.bf16.mxu0 0
      %7614 = vmatmul.mubr.bf16.gmra.mxu0 %v7524
      %v7615 = vpop.f32.mrf.mxu0
      %v7616 = vadd.f32 0.0, %v7615
      %v7617 = vpop.f32.mrf.mxu0
      %v7618 = vpop.f32.mrf.mxu0
      %v7619 = vadd.f32 0.0, %v7618
      %v7620 = vpop.f32.mrf.mxu0
      %7621 = vmatprep.mubr.bf16.mxu0 0
      %7622 = vmatmul.mubr.bf16.gmra.mxu0 %v7527
      %v7623 = vpop.f32.mrf.mxu0
      %v7624 = vadd.f32 0.0, %v7623
      %v7625 = vpop.f32.mrf.mxu0
      %v7626 = vpop.f32.mrf.mxu0
      %v7627 = vadd.f32 0.0, %v7626
      %v7628 = vpop.f32.mrf.mxu0
      %7629 = vmatprep.mubr.bf16.mxu0 0
      %7630 = vmatmul.mubr.bf16.gmra.mxu0 %v7530
      %v7631 = vpop.f32.mrf.mxu0
      %v7632 = vadd.f32 0.0, %v7631
      %v7633 = vpop.f32.mrf.mxu0
      %v7634 = vpop.f32.mrf.mxu0
      %v7635 = vadd.f32 0.0, %v7634
      %v7636 = vpop.f32.mrf.mxu0
      %7637 = vmatprep.mubr.bf16.mxu0 0
      %7638 = vmatmul.mubr.bf16.gmra.mxu0 %v7533
      %v7639 = vpop.f32.mrf.mxu0
      %v7640 = vadd.f32 0.0, %v7639
      %v7641 = vpop.f32.mrf.mxu0
      %v7642 = vpop.f32.mrf.mxu0
      %v7643 = vadd.f32 0.0, %v7642
      %v7644 = vpop.f32.mrf.mxu0
      %7645 = vmatprep.mubr.bf16.mxu0 0
      %7646 = vmatmul.mubr.bf16.gmra.mxu0 %v7536
      %v7647 = vpop.f32.mrf.mxu0
      %v7648 = vadd.f32 0.0, %v7647
      %v7649 = vpop.f32.mrf.mxu0
      %v7650 = vpop.f32.mrf.mxu0
      %v7651 = vadd.f32 0.0, %v7650
      %v7652 = vpop.f32.mrf.mxu0
      %7653 = vmatprep.mubr.bf16.mxu0 0
      %7654 = vmatmul.mubr.bf16.gmra.mxu0 %v7539
      %v7655 = vpop.f32.mrf.mxu0
      %v7656 = vadd.f32 0.0, %v7655
      %v7657 = vpop.f32.mrf.mxu0
      %v7658 = vpop.f32.mrf.mxu0
      %v7659 = vadd.f32 0.0, %v7658
      %v7660 = vpop.f32.mrf.mxu0
      %7661 = vmatprep.mubr.bf16.mxu0 0
      %7662 = vmatmul.mubr.bf16.gmra.mxu0 %v7542
      %v7663 = vpop.f32.mrf.mxu0
      %v7664 = vadd.f32 0.0, %v7663
      %v7665 = vpop.f32.mrf.mxu0
      %v7666 = vpop.f32.mrf.mxu0
      %v7667 = vadd.f32 0.0, %v7666
      %v7668 = vpop.f32.mrf.mxu0
      %7669 = vmatprep.mubr.bf16.mxu0 0
      %7670 = vmatmul.mubr.bf16.gmra.mxu0 %v7545
      %v7671 = vpop.f32.mrf.mxu0
      %v7672 = vadd.f32 0.0, %v7671
      %v7673 = vpop.f32.mrf.mxu0
      %v7674 = vpop.f32.mrf.mxu0
      %v7675 = vadd.f32 0.0, %v7674
      %v7676 = vpop.f32.mrf.mxu0
      %7677 = vmatprep.mubr.bf16.mxu0 0
      %7678 = vmatmul.mubr.bf16.gmra.mxu0 %v7548
      %v7679 = vpop.f32.mrf.mxu0
      %v7680 = vadd.f32 0.0, %v7679
      %v7681 = vpop.f32.mrf.mxu0
      %v7682 = vpop.f32.mrf.mxu0
      %v7683 = vadd.f32 0.0, %v7682
      %v7684 = vpop.f32.mrf.mxu0
      %7685 = vmatprep.mubr.bf16.mxu0 0
      %7686 = vmatmul.mubr.bf16.gmra.mxu0 %v7551
      %v7687 = vpop.f32.mrf.mxu0
      %v7688 = vadd.f32 0.0, %v7687
      %v7689 = vpop.f32.mrf.mxu0
      %v7690 = vpop.f32.mrf.mxu0
      %v7691 = vadd.f32 0.0, %v7690
      %v7692 = vpop.f32.mrf.mxu0
      %7693 = vmatprep.mubr.bf16.mxu0 0
      %7694 = vmatmul.mubr.bf16.gmra.mxu0 %v7554
      %v7695 = vpop.f32.mrf.mxu0
      %v7696 = vadd.f32 0.0, %v7695
      %v7697 = vpop.f32.mrf.mxu0
      %v7698 = vpop.f32.mrf.mxu0
      %v7699 = vadd.f32 0.0, %v7698
      %v7700 = vpop.f32.mrf.mxu0
      %7701 = vmatprep.mubr.bf16.mxu0 0
      %7702 = vmatmul.mubr.bf16.gmra.mxu0 %v7557
      %v7703 = vpop.f32.mrf.mxu0
      %v7704 = vadd.f32 0.0, %v7703
      %v7705 = vpop.f32.mrf.mxu0
      %v7706 = vpop.f32.mrf.mxu0
      %v7707 = vadd.f32 0.0, %v7706
      %v7708 = vpop.f32.mrf.mxu0
      %7709 = vmatprep.mubr.bf16.mxu0 0
      %7710 = vmatmul.mubr.bf16.gmra.mxu0 %v7560
      %v7711 = vpop.f32.mrf.mxu0
      %v7712 = vadd.f32 0.0, %v7711
      %v7713 = vpop.f32.mrf.mxu0
      %v7714 = vpop.f32.mrf.mxu0
      %v7715 = vadd.f32 0.0, %v7714
      %v7716 = vpop.f32.mrf.mxu0
      %7717 = vmatprep.mubr.bf16.mxu0 0
      %7718 = vmatmul.mubr.bf16.gmra.mxu0 %v7563
      %v7719 = vpop.f32.mrf.mxu0
      %v7720 = vadd.f32 0.0, %v7719
      %v7721 = vpop.f32.mrf.mxu0
      %v7722 = vpop.f32.mrf.mxu0
      %v7723 = vadd.f32 0.0, %v7722
      %v7724 = vpop.f32.mrf.mxu0
      %7725 = vdwg.mxu0
      %v7726 = vadd.f32 %v7420, %v7600
      %v7727 = vadd.f32 %v7421, %v7603
      %v7728 = vadd.f32 %v7422, %v7608
      %v7729 = vadd.f32 %v7423, %v7611
      %v7730 = vadd.f32 %v7424, %v7616
      %v7731 = vadd.f32 %v7425, %v7619
      %v7732 = vadd.f32 %v7426, %v7624
      %v7733 = vadd.f32 %v7427, %v7627
      %v7734 = vadd.f32 %v7428, %v7632
      %v7735 = vadd.f32 %v7429, %v7635
      %v7736 = vadd.f32 %v7430, %v7640
      %v7737 = vadd.f32 %v7431, %v7643
      %v7738 = vadd.f32 %v7432, %v7648
      %v7739 = vadd.f32 %v7433, %v7651
      %v7740 = vadd.f32 %v7434, %v7656
      %v7741 = vadd.f32 %v7435, %v7659
      %v7742 = vadd.f32 %v7436, %v7664
      %v7743 = vadd.f32 %v7437, %v7667
      %v7744 = vadd.f32 %v7438, %v7672
      %v7745 = vadd.f32 %v7439, %v7675
      %v7746 = vadd.f32 %v7440, %v7680
      %v7747 = vadd.f32 %v7441, %v7683
      %v7748 = vadd.f32 %v7442, %v7688
      %v7749 = vadd.f32 %v7443, %v7691
      %v7750 = vadd.f32 %v7444, %v7696
      %v7751 = vadd.f32 %v7445, %v7699
      %v7752 = vadd.f32 %v7446, %v7704
      %v7753 = vadd.f32 %v7447, %v7707
      %v7754 = vadd.f32 %v7448, %v7712
      %v7755 = vadd.f32 %v7449, %v7715
      %v7756 = vadd.f32 %v7450, %v7720
      %v7757 = vadd.f32 %v7451, %v7723
      %v7758 = vld [vmem:[%s4965] sm:$0xff]
      %v7759 = vld [vmem:[%s4965 + $0x8] sm:$0xff]
      %v7760 = vld [vmem:[%s4965 + $0x18] sm:$0xff]
      %v7761 = vld [vmem:[%s4965 + $0x20] sm:$0xff]
      %v7762 = vld [vmem:[%s4965 + $0x30] sm:$0xff]
      %v7763 = vld [vmem:[%s4965 + $0x38] sm:$0xff]
      %v7764 = vld [vmem:[%s4965 + $0x48] sm:$0xff]
      %v7765 = vld [vmem:[%s4965 + $0x50] sm:$0xff]
      %v7766 = vld [vmem:[%s4965 + $0x60] sm:$0xff]
      %v7767 = vld [vmem:[%s4965 + $0x68] sm:$0xff]
      %v7768 = vld [vmem:[%s4965 + $0x78] sm:$0xff]
      %v7769 = vld [vmem:[%s4965 + $0x80] sm:$0xff]
      %v7770 = vld [vmem:[%s4965 + $0x90] sm:$0xff]
      %v7771 = vld [vmem:[%s4965 + $0x98] sm:$0xff]
      %v7772 = vld [vmem:[%s4965 + $0xa8] sm:$0xff]
      %v7773 = vld [vmem:[%s4965 + $0xb0] sm:$0xff]
      %v7774 = vld [vmem:[%s4965 + $0xc0] sm:$0xff]
      %v7775 = vld [vmem:[%s4965 + $0xc8] sm:$0xff]
      %v7776 = vld [vmem:[%s4965 + $0xd8] sm:$0xff]
      %v7777 = vld [vmem:[%s4965 + $0xe0] sm:$0xff]
      %v7778 = vld [vmem:[%s4965 + $0xf0] sm:$0xff]
      %v7779 = vld [vmem:[%s4965 + $0xf8] sm:$0xff]
      %v7780 = vld [vmem:[%s4965 + $0x108] sm:$0xff]
      %v7781 = vld [vmem:[%s4965 + $0x110] sm:$0xff]
      %v7782 = vld [vmem:[%s4965 + $0x120] sm:$0xff]
      %v7783 = vld [vmem:[%s4965 + $0x128] sm:$0xff]
      %v7784 = vld [vmem:[%s4965 + $0x138] sm:$0xff]
      %v7785 = vld [vmem:[%s4965 + $0x140] sm:$0xff]
      %v7786 = vld [vmem:[%s4965 + $0x150] sm:$0xff]
      %v7787 = vld [vmem:[%s4965 + $0x158] sm:$0xff]
      %v7788 = vld [vmem:[%s4965 + $0x168] sm:$0xff]
      %v7789 = vld [vmem:[%s4965 + $0x170] sm:$0xff]
      %v7790 = vpack.c.bf16 %v7759, %v7758
      %v7791 = vpack.c.bf16 %v7761, %v7760
      %v7792 = vpack.c.bf16 %v7763, %v7762
      %v7793 = vpack.c.bf16 %v7765, %v7764
      %v7794 = vpack.c.bf16 %v7767, %v7766
      %v7795 = vpack.c.bf16 %v7769, %v7768
      %v7796 = vpack.c.bf16 %v7771, %v7770
      %v7797 = vpack.c.bf16 %v7773, %v7772
      %v7798 = vpack.c.bf16 %v7775, %v7774
      %v7799 = vpack.c.bf16 %v7777, %v7776
      %v7800 = vpack.c.bf16 %v7779, %v7778
      %v7801 = vpack.c.bf16 %v7781, %v7780
      %v7802 = vpack.c.bf16 %v7783, %v7782
      %v7803 = vpack.c.bf16 %v7785, %v7784
      %v7804 = vpack.c.bf16 %v7787, %v7786
      %v7805 = vpack.c.bf16 %v7789, %v7788
      %s7806 = scalar_lea.vmem %s6, 96
      %v7807 = vld [vmem:[%s7806] sm:$0xf]
      %v7808 = vld [vmem:[%s7806 + $0x4] sm:$0xf]
      %v7809 = vld [vmem:[%s7806 + $0x8] sm:$0xf]
      %v7810 = vld [vmem:[%s7806 + $0xc] sm:$0xf]
      %v7815 = vunpack.c.l.b16 %v7807
      %v7816 = vunpack.c.l.b16 %v7808
      %v7817 = vunpack.c.l.b16 %v7809
      %v7818 = vunpack.c.l.b16 %v7810
      %v7819 = vpack.c.b16 %v7816, %v7815
      %v7820 = vpack.c.b16 %v7818, %v7817
      %v7824 = vsel %vm383, %v7790, 0
      %v7827 = vsel %vm383, %v7791, 0
      %v7830 = vsel %vm383, %v7792, 0
      %v7833 = vsel %vm383, %v7793, 0
      %v7836 = vsel %vm383, %v7794, 0
      %v7839 = vsel %vm383, %v7795, 0
      %v7842 = vsel %vm383, %v7796, 0
      %v7845 = vsel %vm383, %v7797, 0
      %v7848 = vsel %vm383, %v7798, 0
      %v7851 = vsel %vm383, %v7799, 0
      %v7854 = vsel %vm383, %v7800, 0
      %v7857 = vsel %vm383, %v7801, 0
      %v7860 = vsel %vm383, %v7802, 0
      %v7863 = vsel %vm383, %v7803, 0
      %v7866 = vsel %vm383, %v7804, 0
      %v7869 = vsel %vm383, %v7805, 0
      %7871 = vmatprep.subr.bf16.mxu0 0
      %7872 = vmatpush1.bf16.msra.mxu0 0
      %7873 = vmatprep.subr.bf16.mxu0 0
      %7874 = vmatpush1.bf16.msra.mxu0 0
      %7875 = vmatprep.subr.bf16.mxu0 0
      %7876 = vmatpush1.bf16.msra.mxu0 0
      %7877 = vmatprep.subr.bf16.mxu0 0
      %7878 = vmatpush1.bf16.msra.mxu0 0
      %7879 = vmatprep.subr.bf16.mxu0 0
      %7880 = vmatpush1.bf16.msra.mxu0 0
      %7881 = vmatprep.subr.bf16.mxu0 0
      %7882 = vmatpush1.bf16.msra.mxu0 0
      %7883 = vmatprep.subr.bf16.mxu0 0
      %7884 = vmatpush1.bf16.msra.mxu0 %v7820
      %7885 = vmatprep.subr.bf16.mxu0 0
      %7886 = vmatpush1.bf16.msra.mxu0 %v7819
      %7887 = vmatprep.subr.bf16.mxu0 0
      %7888 = vmatpush2.bf16.msra.mxu0 0
      %7889 = vmatprep.subr.bf16.mxu0 0
      %7890 = vmatpush2.bf16.msra.mxu0 0
      %7891 = vmatprep.subr.bf16.mxu0 0
      %7892 = vmatpush2.bf16.msra.mxu0 0
      %7893 = vmatprep.subr.bf16.mxu0 0
      %7894 = vmatpush2.bf16.msra.mxu0 0
      %7895 = vmatprep.subr.bf16.mxu0 0
      %7896 = vmatpush2.bf16.msra.mxu0 0
      %7897 = vmatprep.subr.bf16.mxu0 0
      %7898 = vmatpush2.bf16.msra.mxu0 0
      %7899 = vmatprep.subr.bf16.mxu0 0
      %7900 = vmatpush2.bf16.msra.mxu0 0
      %7901 = vmatprep.subr.bf16.mxu0 0
      %7902 = vmatpush2.bf16.msra.mxu0 0
      %7903 = vmatprep.mubr.bf16.mxu0 0
      %7904 = vmatmul.mubr.bf16.gmra.mxu0 %v7824
      %v7905 = vpop.f32.mrf.mxu0
      %v7906 = vadd.f32 0.0, %v7905
      %v7907 = vpop.f32.mrf.mxu0
      %v7908 = vpop.f32.mrf.mxu0
      %v7909 = vadd.f32 0.0, %v7908
      %v7910 = vpop.f32.mrf.mxu0
      %7911 = vmatprep.mubr.bf16.mxu0 0
      %7912 = vmatmul.mubr.bf16.gmra.mxu0 %v7827
      %v7913 = vpop.f32.mrf.mxu0
      %v7914 = vadd.f32 0.0, %v7913
      %v7915 = vpop.f32.mrf.mxu0
      %v7916 = vpop.f32.mrf.mxu0
      %v7917 = vadd.f32 0.0, %v7916
      %v7918 = vpop.f32.mrf.mxu0
      %7919 = vmatprep.mubr.bf16.mxu0 0
      %7920 = vmatmul.mubr.bf16.gmra.mxu0 %v7830
      %v7921 = vpop.f32.mrf.mxu0
      %v7922 = vadd.f32 0.0, %v7921
      %v7923 = vpop.f32.mrf.mxu0
      %v7924 = vpop.f32.mrf.mxu0
      %v7925 = vadd.f32 0.0, %v7924
      %v7926 = vpop.f32.mrf.mxu0
      %7927 = vmatprep.mubr.bf16.mxu0 0
      %7928 = vmatmul.mubr.bf16.gmra.mxu0 %v7833
      %v7929 = vpop.f32.mrf.mxu0
      %v7930 = vadd.f32 0.0, %v7929
      %v7931 = vpop.f32.mrf.mxu0
      %v7932 = vpop.f32.mrf.mxu0
      %v7933 = vadd.f32 0.0, %v7932
      %v7934 = vpop.f32.mrf.mxu0
      %7935 = vmatprep.mubr.bf16.mxu0 0
      %7936 = vmatmul.mubr.bf16.gmra.mxu0 %v7836
      %v7937 = vpop.f32.mrf.mxu0
      %v7938 = vadd.f32 0.0, %v7937
      %v7939 = vpop.f32.mrf.mxu0
      %v7940 = vpop.f32.mrf.mxu0
      %v7941 = vadd.f32 0.0, %v7940
      %v7942 = vpop.f32.mrf.mxu0
      %7943 = vmatprep.mubr.bf16.mxu0 0
      %7944 = vmatmul.mubr.bf16.gmra.mxu0 %v7839
      %v7945 = vpop.f32.mrf.mxu0
      %v7946 = vadd.f32 0.0, %v7945
      %v7947 = vpop.f32.mrf.mxu0
      %v7948 = vpop.f32.mrf.mxu0
      %v7949 = vadd.f32 0.0, %v7948
      %v7950 = vpop.f32.mrf.mxu0
      %7951 = vmatprep.mubr.bf16.mxu0 0
      %7952 = vmatmul.mubr.bf16.gmra.mxu0 %v7842
      %v7953 = vpop.f32.mrf.mxu0
      %v7954 = vadd.f32 0.0, %v7953
      %v7955 = vpop.f32.mrf.mxu0
      %v7956 = vpop.f32.mrf.mxu0
      %v7957 = vadd.f32 0.0, %v7956
      %v7958 = vpop.f32.mrf.mxu0
      %7959 = vmatprep.mubr.bf16.mxu0 0
      %7960 = vmatmul.mubr.bf16.gmra.mxu0 %v7845
      %v7961 = vpop.f32.mrf.mxu0
      %v7962 = vadd.f32 0.0, %v7961
      %v7963 = vpop.f32.mrf.mxu0
      %v7964 = vpop.f32.mrf.mxu0
      %v7965 = vadd.f32 0.0, %v7964
      %v7966 = vpop.f32.mrf.mxu0
      %7967 = vmatprep.mubr.bf16.mxu0 0
      %7968 = vmatmul.mubr.bf16.gmra.mxu0 %v7848
      %v7969 = vpop.f32.mrf.mxu0
      %v7970 = vadd.f32 0.0, %v7969
      %v7971 = vpop.f32.mrf.mxu0
      %v7972 = vpop.f32.mrf.mxu0
      %v7973 = vadd.f32 0.0, %v7972
      %v7974 = vpop.f32.mrf.mxu0
      %7975 = vmatprep.mubr.bf16.mxu0 0
      %7976 = vmatmul.mubr.bf16.gmra.mxu0 %v7851
      %v7977 = vpop.f32.mrf.mxu0
      %v7978 = vadd.f32 0.0, %v7977
      %v7979 = vpop.f32.mrf.mxu0
      %v7980 = vpop.f32.mrf.mxu0
      %v7981 = vadd.f32 0.0, %v7980
      %v7982 = vpop.f32.mrf.mxu0
      %7983 = vmatprep.mubr.bf16.mxu0 0
      %7984 = vmatmul.mubr.bf16.gmra.mxu0 %v7854
      %v7985 = vpop.f32.mrf.mxu0
      %v7986 = vadd.f32 0.0, %v7985
      %v7987 = vpop.f32.mrf.mxu0
      %v7988 = vpop.f32.mrf.mxu0
      %v7989 = vadd.f32 0.0, %v7988
      %v7990 = vpop.f32.mrf.mxu0
      %7991 = vmatprep.mubr.bf16.mxu0 0
      %7992 = vmatmul.mubr.bf16.gmra.mxu0 %v7857
      %v7993 = vpop.f32.mrf.mxu0
      %v7994 = vadd.f32 0.0, %v7993
      %v7995 = vpop.f32.mrf.mxu0
      %v7996 = vpop.f32.mrf.mxu0
      %v7997 = vadd.f32 0.0, %v7996
      %v7998 = vpop.f32.mrf.mxu0
      %7999 = vmatprep.mubr.bf16.mxu0 0
      %8000 = vmatmul.mubr.bf16.gmra.mxu0 %v7860
      %v8001 = vpop.f32.mrf.mxu0
      %v8002 = vadd.f32 0.0, %v8001
      %v8003 = vpop.f32.mrf.mxu0
      %v8004 = vpop.f32.mrf.mxu0
      %v8005 = vadd.f32 0.0, %v8004
      %v8006 = vpop.f32.mrf.mxu0
      %8007 = vmatprep.mubr.bf16.mxu0 0
      %8008 = vmatmul.mubr.bf16.gmra.mxu0 %v7863
      %v8009 = vpop.f32.mrf.mxu0
      %v8010 = vadd.f32 0.0, %v8009
      %v8011 = vpop.f32.mrf.mxu0
      %v8012 = vpop.f32.mrf.mxu0
      %v8013 = vadd.f32 0.0, %v8012
      %v8014 = vpop.f32.mrf.mxu0
      %8015 = vmatprep.mubr.bf16.mxu0 0
      %8016 = vmatmul.mubr.bf16.gmra.mxu0 %v7866
      %v8017 = vpop.f32.mrf.mxu0
      %v8018 = vadd.f32 0.0, %v8017
      %v8019 = vpop.f32.mrf.mxu0
      %v8020 = vpop.f32.mrf.mxu0
      %v8021 = vadd.f32 0.0, %v8020
      %v8022 = vpop.f32.mrf.mxu0
      %8023 = vmatprep.mubr.bf16.mxu0 0
      %8024 = vmatmul.mubr.bf16.gmra.mxu0 %v7869
      %v8025 = vpop.f32.mrf.mxu0
      %v8026 = vadd.f32 0.0, %v8025
      %v8027 = vpop.f32.mrf.mxu0
      %v8028 = vpop.f32.mrf.mxu0
      %v8029 = vadd.f32 0.0, %v8028
      %v8030 = vpop.f32.mrf.mxu0
      %8031 = vdwg.mxu0
      %v8032 = vadd.f32 %v7726, %v7906
      %v8033 = vadd.f32 %v7727, %v7909
      %v8034 = vadd.f32 %v7728, %v7914
      %v8035 = vadd.f32 %v7729, %v7917
      %v8036 = vadd.f32 %v7730, %v7922
      %v8037 = vadd.f32 %v7731, %v7925
      %v8038 = vadd.f32 %v7732, %v7930
      %v8039 = vadd.f32 %v7733, %v7933
      %v8040 = vadd.f32 %v7734, %v7938
      %v8041 = vadd.f32 %v7735, %v7941
      %v8042 = vadd.f32 %v7736, %v7946
      %v8043 = vadd.f32 %v7737, %v7949
      %v8044 = vadd.f32 %v7738, %v7954
      %v8045 = vadd.f32 %v7739, %v7957
      %v8046 = vadd.f32 %v7740, %v7962
      %v8047 = vadd.f32 %v7741, %v7965
      %v8048 = vadd.f32 %v7742, %v7970
      %v8049 = vadd.f32 %v7743, %v7973
      %v8050 = vadd.f32 %v7744, %v7978
      %v8051 = vadd.f32 %v7745, %v7981
      %v8052 = vadd.f32 %v7746, %v7986
      %v8053 = vadd.f32 %v7747, %v7989
      %v8054 = vadd.f32 %v7748, %v7994
      %v8055 = vadd.f32 %v7749, %v7997
      %v8056 = vadd.f32 %v7750, %v8002
      %v8057 = vadd.f32 %v7751, %v8005
      %v8058 = vadd.f32 %v7752, %v8010
      %v8059 = vadd.f32 %v7753, %v8013
      %v8060 = vadd.f32 %v7754, %v8018
      %v8061 = vadd.f32 %v7755, %v8021
      %v8062 = vadd.f32 %v7756, %v8026
      %v8063 = vadd.f32 %v7757, %v8029
      %v8064 = vld [vmem:[%s4965 + $0x1] sm:$0xff]
      %v8065 = vld [vmem:[%s4965 + $0x9] sm:$0xff]
      %v8066 = vld [vmem:[%s4965 + $0x19] sm:$0xff]
      %v8067 = vld [vmem:[%s4965 + $0x21] sm:$0xff]
      %v8068 = vld [vmem:[%s4965 + $0x31] sm:$0xff]
      %v8069 = vld [vmem:[%s4965 + $0x39] sm:$0xff]
      %v8070 = vld [vmem:[%s4965 + $0x49] sm:$0xff]
      %v8071 = vld [vmem:[%s4965 + $0x51] sm:$0xff]
      %v8072 = vld [vmem:[%s4965 + $0x61] sm:$0xff]
      %v8073 = vld [vmem:[%s4965 + $0x69] sm:$0xff]
      %v8074 = vld [vmem:[%s4965 + $0x79] sm:$0xff]
      %v8075 = vld [vmem:[%s4965 + $0x81] sm:$0xff]
      %v8076 = vld [vmem:[%s4965 + $0x91] sm:$0xff]
      %v8077 = vld [vmem:[%s4965 + $0x99] sm:$0xff]
      %v8078 = vld [vmem:[%s4965 + $0xa9] sm:$0xff]
      %v8079 = vld [vmem:[%s4965 + $0xb1] sm:$0xff]
      %v8080 = vld [vmem:[%s4965 + $0xc1] sm:$0xff]
      %v8081 = vld [vmem:[%s4965 + $0xc9] sm:$0xff]
      %v8082 = vld [vmem:[%s4965 + $0xd9] sm:$0xff]
      %v8083 = vld [vmem:[%s4965 + $0xe1] sm:$0xff]
      %v8084 = vld [vmem:[%s4965 + $0xf1] sm:$0xff]
      %v8085 = vld [vmem:[%s4965 + $0xf9] sm:$0xff]
      %v8086 = vld [vmem:[%s4965 + $0x109] sm:$0xff]
      %v8087 = vld [vmem:[%s4965 + $0x111] sm:$0xff]
      %v8088 = vld [vmem:[%s4965 + $0x121] sm:$0xff]
      %v8089 = vld [vmem:[%s4965 + $0x129] sm:$0xff]
      %v8090 = vld [vmem:[%s4965 + $0x139] sm:$0xff]
      %v8091 = vld [vmem:[%s4965 + $0x141] sm:$0xff]
      %v8092 = vld [vmem:[%s4965 + $0x151] sm:$0xff]
      %v8093 = vld [vmem:[%s4965 + $0x159] sm:$0xff]
      %v8094 = vld [vmem:[%s4965 + $0x169] sm:$0xff]
      %v8095 = vld [vmem:[%s4965 + $0x171] sm:$0xff]
      %v8096 = vpack.c.bf16 %v8065, %v8064
      %v8097 = vpack.c.bf16 %v8067, %v8066
      %v8098 = vpack.c.bf16 %v8069, %v8068
      %v8099 = vpack.c.bf16 %v8071, %v8070
      %v8100 = vpack.c.bf16 %v8073, %v8072
      %v8101 = vpack.c.bf16 %v8075, %v8074
      %v8102 = vpack.c.bf16 %v8077, %v8076
      %v8103 = vpack.c.bf16 %v8079, %v8078
      %v8104 = vpack.c.bf16 %v8081, %v8080
      %v8105 = vpack.c.bf16 %v8083, %v8082
      %v8106 = vpack.c.bf16 %v8085, %v8084
      %v8107 = vpack.c.bf16 %v8087, %v8086
      %v8108 = vpack.c.bf16 %v8089, %v8088
      %v8109 = vpack.c.bf16 %v8091, %v8090
      %v8110 = vpack.c.bf16 %v8093, %v8092
      %v8111 = vpack.c.bf16 %v8095, %v8094
      %s8112 = scalar_lea.vmem %s6, 112
      %v8113 = vld [vmem:[%s8112] sm:$0xf]
      %v8114 = vld [vmem:[%s8112 + $0x4] sm:$0xf]
      %v8115 = vld [vmem:[%s8112 + $0x8] sm:$0xf]
      %v8116 = vld [vmem:[%s8112 + $0xc] sm:$0xf]
      %v8121 = vunpack.c.l.b16 %v8113
      %v8122 = vunpack.c.l.b16 %v8114
      %v8123 = vunpack.c.l.b16 %v8115
      %v8124 = vunpack.c.l.b16 %v8116
      %v8125 = vpack.c.b16 %v8122, %v8121
      %v8126 = vpack.c.b16 %v8124, %v8123
      %v8130 = vsel %vm383, %v8096, 0
      %v8133 = vsel %vm383, %v8097, 0
      %v8136 = vsel %vm383, %v8098, 0
      %v8139 = vsel %vm383, %v8099, 0
      %v8142 = vsel %vm383, %v8100, 0
      %v8145 = vsel %vm383, %v8101, 0
      %v8148 = vsel %vm383, %v8102, 0
      %v8151 = vsel %vm383, %v8103, 0
      %v8154 = vsel %vm383, %v8104, 0
      %v8157 = vsel %vm383, %v8105, 0
      %v8160 = vsel %vm383, %v8106, 0
      %v8163 = vsel %vm383, %v8107, 0
      %v8166 = vsel %vm383, %v8108, 0
      %v8169 = vsel %vm383, %v8109, 0
      %v8172 = vsel %vm383, %v8110, 0
      %v8175 = vsel %vm383, %v8111, 0
      %8177 = vmatprep.subr.bf16.mxu0 0
      %8178 = vmatpush1.bf16.msra.mxu0 0
      %8179 = vmatprep.subr.bf16.mxu0 0
      %8180 = vmatpush1.bf16.msra.mxu0 0
      %8181 = vmatprep.subr.bf16.mxu0 0
      %8182 = vmatpush1.bf16.msra.mxu0 0
      %8183 = vmatprep.subr.bf16.mxu0 0
      %8184 = vmatpush1.bf16.msra.mxu0 0
      %8185 = vmatprep.subr.bf16.mxu0 0
      %8186 = vmatpush1.bf16.msra.mxu0 0
      %8187 = vmatprep.subr.bf16.mxu0 0
      %8188 = vmatpush1.bf16.msra.mxu0 0
      %8189 = vmatprep.subr.bf16.mxu0 0
      %8190 = vmatpush1.bf16.msra.mxu0 %v8126
      %8191 = vmatprep.subr.bf16.mxu0 0
      %8192 = vmatpush1.bf16.msra.mxu0 %v8125
      %8193 = vmatprep.subr.bf16.mxu0 0
      %8194 = vmatpush2.bf16.msra.mxu0 0
      %8195 = vmatprep.subr.bf16.mxu0 0
      %8196 = vmatpush2.bf16.msra.mxu0 0
      %8197 = vmatprep.subr.bf16.mxu0 0
      %8198 = vmatpush2.bf16.msra.mxu0 0
      %8199 = vmatprep.subr.bf16.mxu0 0
      %8200 = vmatpush2.bf16.msra.mxu0 0
      %8201 = vmatprep.subr.bf16.mxu0 0
      %8202 = vmatpush2.bf16.msra.mxu0 0
      %8203 = vmatprep.subr.bf16.mxu0 0
      %8204 = vmatpush2.bf16.msra.mxu0 0
      %8205 = vmatprep.subr.bf16.mxu0 0
      %8206 = vmatpush2.bf16.msra.mxu0 0
      %8207 = vmatprep.subr.bf16.mxu0 0
      %8208 = vmatpush2.bf16.msra.mxu0 0
      %8209 = vmatprep.mubr.bf16.mxu0 0
      %8210 = vmatmul.mubr.bf16.gmra.mxu0 %v8130
      %v8211 = vpop.f32.mrf.mxu0
      %v8212 = vadd.f32 0.0, %v8211
      %v8213 = vpop.f32.mrf.mxu0
      %v8214 = vpop.f32.mrf.mxu0
      %v8215 = vadd.f32 0.0, %v8214
      %v8216 = vpop.f32.mrf.mxu0
      %8217 = vmatprep.mubr.bf16.mxu0 0
      %8218 = vmatmul.mubr.bf16.gmra.mxu0 %v8133
      %v8219 = vpop.f32.mrf.mxu0
      %v8220 = vadd.f32 0.0, %v8219
      %v8221 = vpop.f32.mrf.mxu0
      %v8222 = vpop.f32.mrf.mxu0
      %v8223 = vadd.f32 0.0, %v8222
      %v8224 = vpop.f32.mrf.mxu0
      %8225 = vmatprep.mubr.bf16.mxu0 0
      %8226 = vmatmul.mubr.bf16.gmra.mxu0 %v8136
      %v8227 = vpop.f32.mrf.mxu0
      %v8228 = vadd.f32 0.0, %v8227
      %v8229 = vpop.f32.mrf.mxu0
      %v8230 = vpop.f32.mrf.mxu0
      %v8231 = vadd.f32 0.0, %v8230
      %v8232 = vpop.f32.mrf.mxu0
      %8233 = vmatprep.mubr.bf16.mxu0 0
      %8234 = vmatmul.mubr.bf16.gmra.mxu0 %v8139
      %v8235 = vpop.f32.mrf.mxu0
      %v8236 = vadd.f32 0.0, %v8235
      %v8237 = vpop.f32.mrf.mxu0
      %v8238 = vpop.f32.mrf.mxu0
      %v8239 = vadd.f32 0.0, %v8238
      %v8240 = vpop.f32.mrf.mxu0
      %8241 = vmatprep.mubr.bf16.mxu0 0
      %8242 = vmatmul.mubr.bf16.gmra.mxu0 %v8142
      %v8243 = vpop.f32.mrf.mxu0
      %v8244 = vadd.f32 0.0, %v8243
      %v8245 = vpop.f32.mrf.mxu0
      %v8246 = vpop.f32.mrf.mxu0
      %v8247 = vadd.f32 0.0, %v8246
      %v8248 = vpop.f32.mrf.mxu0
      %8249 = vmatprep.mubr.bf16.mxu0 0
      %8250 = vmatmul.mubr.bf16.gmra.mxu0 %v8145
      %v8251 = vpop.f32.mrf.mxu0
      %v8252 = vadd.f32 0.0, %v8251
      %v8253 = vpop.f32.mrf.mxu0
      %v8254 = vpop.f32.mrf.mxu0
      %v8255 = vadd.f32 0.0, %v8254
      %v8256 = vpop.f32.mrf.mxu0
      %8257 = vmatprep.mubr.bf16.mxu0 0
      %8258 = vmatmul.mubr.bf16.gmra.mxu0 %v8148
      %v8259 = vpop.f32.mrf.mxu0
      %v8260 = vadd.f32 0.0, %v8259
      %v8261 = vpop.f32.mrf.mxu0
      %v8262 = vpop.f32.mrf.mxu0
      %v8263 = vadd.f32 0.0, %v8262
      %v8264 = vpop.f32.mrf.mxu0
      %8265 = vmatprep.mubr.bf16.mxu0 0
      %8266 = vmatmul.mubr.bf16.gmra.mxu0 %v8151
      %v8267 = vpop.f32.mrf.mxu0
      %v8268 = vadd.f32 0.0, %v8267
      %v8269 = vpop.f32.mrf.mxu0
      %v8270 = vpop.f32.mrf.mxu0
      %v8271 = vadd.f32 0.0, %v8270
      %v8272 = vpop.f32.mrf.mxu0
      %8273 = vmatprep.mubr.bf16.mxu0 0
      %8274 = vmatmul.mubr.bf16.gmra.mxu0 %v8154
      %v8275 = vpop.f32.mrf.mxu0
      %v8276 = vadd.f32 0.0, %v8275
      %v8277 = vpop.f32.mrf.mxu0
      %v8278 = vpop.f32.mrf.mxu0
      %v8279 = vadd.f32 0.0, %v8278
      %v8280 = vpop.f32.mrf.mxu0
      %8281 = vmatprep.mubr.bf16.mxu0 0
      %8282 = vmatmul.mubr.bf16.gmra.mxu0 %v8157
      %v8283 = vpop.f32.mrf.mxu0
      %v8284 = vadd.f32 0.0, %v8283
      %v8285 = vpop.f32.mrf.mxu0
      %v8286 = vpop.f32.mrf.mxu0
      %v8287 = vadd.f32 0.0, %v8286
      %v8288 = vpop.f32.mrf.mxu0
      %8289 = vmatprep.mubr.bf16.mxu0 0
      %8290 = vmatmul.mubr.bf16.gmra.mxu0 %v8160
      %v8291 = vpop.f32.mrf.mxu0
      %v8292 = vadd.f32 0.0, %v8291
      %v8293 = vpop.f32.mrf.mxu0
      %v8294 = vpop.f32.mrf.mxu0
      %v8295 = vadd.f32 0.0, %v8294
      %v8296 = vpop.f32.mrf.mxu0
      %8297 = vmatprep.mubr.bf16.mxu0 0
      %8298 = vmatmul.mubr.bf16.gmra.mxu0 %v8163
      %v8299 = vpop.f32.mrf.mxu0
      %v8300 = vadd.f32 0.0, %v8299
      %v8301 = vpop.f32.mrf.mxu0
      %v8302 = vpop.f32.mrf.mxu0
      %v8303 = vadd.f32 0.0, %v8302
      %v8304 = vpop.f32.mrf.mxu0
      %8305 = vmatprep.mubr.bf16.mxu0 0
      %8306 = vmatmul.mubr.bf16.gmra.mxu0 %v8166
      %v8307 = vpop.f32.mrf.mxu0
      %v8308 = vadd.f32 0.0, %v8307
      %v8309 = vpop.f32.mrf.mxu0
      %v8310 = vpop.f32.mrf.mxu0
      %v8311 = vadd.f32 0.0, %v8310
      %v8312 = vpop.f32.mrf.mxu0
      %8313 = vmatprep.mubr.bf16.mxu0 0
      %8314 = vmatmul.mubr.bf16.gmra.mxu0 %v8169
      %v8315 = vpop.f32.mrf.mxu0
      %v8316 = vadd.f32 0.0, %v8315
      %v8317 = vpop.f32.mrf.mxu0
      %v8318 = vpop.f32.mrf.mxu0
      %v8319 = vadd.f32 0.0, %v8318
      %v8320 = vpop.f32.mrf.mxu0
      %8321 = vmatprep.mubr.bf16.mxu0 0
      %8322 = vmatmul.mubr.bf16.gmra.mxu0 %v8172
      %v8323 = vpop.f32.mrf.mxu0
      %v8324 = vadd.f32 0.0, %v8323
      %v8325 = vpop.f32.mrf.mxu0
      %v8326 = vpop.f32.mrf.mxu0
      %v8327 = vadd.f32 0.0, %v8326
      %v8328 = vpop.f32.mrf.mxu0
      %8329 = vmatprep.mubr.bf16.mxu0 0
      %8330 = vmatmul.mubr.bf16.gmra.mxu0 %v8175
      %v8331 = vpop.f32.mrf.mxu0
      %v8332 = vadd.f32 0.0, %v8331
      %v8333 = vpop.f32.mrf.mxu0
      %v8334 = vpop.f32.mrf.mxu0
      %v8335 = vadd.f32 0.0, %v8334
      %v8336 = vpop.f32.mrf.mxu0
      %8337 = vdwg.mxu0
      %v8338 = vadd.f32 %v8032, %v8212
      %v8339 = vadd.f32 %v8033, %v8215
      %v8340 = vadd.f32 %v8034, %v8220
      %v8341 = vadd.f32 %v8035, %v8223
      %v8342 = vadd.f32 %v8036, %v8228
      %v8343 = vadd.f32 %v8037, %v8231
      %v8344 = vadd.f32 %v8038, %v8236
      %v8345 = vadd.f32 %v8039, %v8239
      %v8346 = vadd.f32 %v8040, %v8244
      %v8347 = vadd.f32 %v8041, %v8247
      %v8348 = vadd.f32 %v8042, %v8252
      %v8349 = vadd.f32 %v8043, %v8255
      %v8350 = vadd.f32 %v8044, %v8260
      %v8351 = vadd.f32 %v8045, %v8263
      %v8352 = vadd.f32 %v8046, %v8268
      %v8353 = vadd.f32 %v8047, %v8271
      %v8354 = vadd.f32 %v8048, %v8276
      %v8355 = vadd.f32 %v8049, %v8279
      %v8356 = vadd.f32 %v8050, %v8284
      %v8357 = vadd.f32 %v8051, %v8287
      %v8358 = vadd.f32 %v8052, %v8292
      %v8359 = vadd.f32 %v8053, %v8295
      %v8360 = vadd.f32 %v8054, %v8300
      %v8361 = vadd.f32 %v8055, %v8303
      %v8362 = vadd.f32 %v8056, %v8308
      %v8363 = vadd.f32 %v8057, %v8311
      %v8364 = vadd.f32 %v8058, %v8316
      %v8365 = vadd.f32 %v8059, %v8319
      %v8366 = vadd.f32 %v8060, %v8324
      %v8367 = vadd.f32 %v8061, %v8327
      %v8368 = vadd.f32 %v8062, %v8332
      %v8369 = vadd.f32 %v8063, %v8335
      %v8370 = vld [vmem:[%s4965 + $0x2] sm:$0xff]
      %v8371 = vld [vmem:[%s4965 + $0xa] sm:$0xff]
      %v8372 = vld [vmem:[%s4965 + $0x1a] sm:$0xff]
      %v8373 = vld [vmem:[%s4965 + $0x22] sm:$0xff]
      %v8374 = vld [vmem:[%s4965 + $0x32] sm:$0xff]
      %v8375 = vld [vmem:[%s4965 + $0x3a] sm:$0xff]
      %v8376 = vld [vmem:[%s4965 + $0x4a] sm:$0xff]
      %v8377 = vld [vmem:[%s4965 + $0x52] sm:$0xff]
      %v8378 = vld [vmem:[%s4965 + $0x62] sm:$0xff]
      %v8379 = vld [vmem:[%s4965 + $0x6a] sm:$0xff]
      %v8380 = vld [vmem:[%s4965 + $0x7a] sm:$0xff]
      %v8381 = vld [vmem:[%s4965 + $0x82] sm:$0xff]
      %v8382 = vld [vmem:[%s4965 + $0x92] sm:$0xff]
      %v8383 = vld [vmem:[%s4965 + $0x9a] sm:$0xff]
      %v8384 = vld [vmem:[%s4965 + $0xaa] sm:$0xff]
      %v8385 = vld [vmem:[%s4965 + $0xb2] sm:$0xff]
      %v8386 = vld [vmem:[%s4965 + $0xc2] sm:$0xff]
      %v8387 = vld [vmem:[%s4965 + $0xca] sm:$0xff]
      %v8388 = vld [vmem:[%s4965 + $0xda] sm:$0xff]
      %v8389 = vld [vmem:[%s4965 + $0xe2] sm:$0xff]
      %v8390 = vld [vmem:[%s4965 + $0xf2] sm:$0xff]
      %v8391 = vld [vmem:[%s4965 + $0xfa] sm:$0xff]
      %v8392 = vld [vmem:[%s4965 + $0x10a] sm:$0xff]
      %v8393 = vld [vmem:[%s4965 + $0x112] sm:$0xff]
      %v8394 = vld [vmem:[%s4965 + $0x122] sm:$0xff]
      %v8395 = vld [vmem:[%s4965 + $0x12a] sm:$0xff]
      %v8396 = vld [vmem:[%s4965 + $0x13a] sm:$0xff]
      %v8397 = vld [vmem:[%s4965 + $0x142] sm:$0xff]
      %v8398 = vld [vmem:[%s4965 + $0x152] sm:$0xff]
      %v8399 = vld [vmem:[%s4965 + $0x15a] sm:$0xff]
      %v8400 = vld [vmem:[%s4965 + $0x16a] sm:$0xff]
      %v8401 = vld [vmem:[%s4965 + $0x172] sm:$0xff]
      %v8402 = vpack.c.bf16 %v8371, %v8370
      %v8403 = vpack.c.bf16 %v8373, %v8372
      %v8404 = vpack.c.bf16 %v8375, %v8374
      %v8405 = vpack.c.bf16 %v8377, %v8376
      %v8406 = vpack.c.bf16 %v8379, %v8378
      %v8407 = vpack.c.bf16 %v8381, %v8380
      %v8408 = vpack.c.bf16 %v8383, %v8382
      %v8409 = vpack.c.bf16 %v8385, %v8384
      %v8410 = vpack.c.bf16 %v8387, %v8386
      %v8411 = vpack.c.bf16 %v8389, %v8388
      %v8412 = vpack.c.bf16 %v8391, %v8390
      %v8413 = vpack.c.bf16 %v8393, %v8392
      %v8414 = vpack.c.bf16 %v8395, %v8394
      %v8415 = vpack.c.bf16 %v8397, %v8396
      %v8416 = vpack.c.bf16 %v8399, %v8398
      %v8417 = vpack.c.bf16 %v8401, %v8400
      %s8418 = scalar_lea.vmem %s6, 128
      %v8419 = vld [vmem:[%s8418] sm:$0xf]
      %v8420 = vld [vmem:[%s8418 + $0x4] sm:$0xf]
      %v8421 = vld [vmem:[%s8418 + $0x8] sm:$0xf]
      %v8422 = vld [vmem:[%s8418 + $0xc] sm:$0xf]
      %v8427 = vunpack.c.l.b16 %v8419
      %v8428 = vunpack.c.l.b16 %v8420
      %v8429 = vunpack.c.l.b16 %v8421
      %v8430 = vunpack.c.l.b16 %v8422
      %v8431 = vpack.c.b16 %v8428, %v8427
      %v8432 = vpack.c.b16 %v8430, %v8429
      %v8436 = vsel %vm383, %v8402, 0
      %v8439 = vsel %vm383, %v8403, 0
      %v8442 = vsel %vm383, %v8404, 0
      %v8445 = vsel %vm383, %v8405, 0
      %v8448 = vsel %vm383, %v8406, 0
      %v8451 = vsel %vm383, %v8407, 0
      %v8454 = vsel %vm383, %v8408, 0
      %v8457 = vsel %vm383, %v8409, 0
      %v8460 = vsel %vm383, %v8410, 0
      %v8463 = vsel %vm383, %v8411, 0
      %v8466 = vsel %vm383, %v8412, 0
      %v8469 = vsel %vm383, %v8413, 0
      %v8472 = vsel %vm383, %v8414, 0
      %v8475 = vsel %vm383, %v8415, 0
      %v8478 = vsel %vm383, %v8416, 0
      %v8481 = vsel %vm383, %v8417, 0
      %8483 = vmatprep.subr.bf16.mxu0 0
      %8484 = vmatpush1.bf16.msra.mxu0 0
      %8485 = vmatprep.subr.bf16.mxu0 0
      %8486 = vmatpush1.bf16.msra.mxu0 0
      %8487 = vmatprep.subr.bf16.mxu0 0
      %8488 = vmatpush1.bf16.msra.mxu0 0
      %8489 = vmatprep.subr.bf16.mxu0 0
      %8490 = vmatpush1.bf16.msra.mxu0 0
      %8491 = vmatprep.subr.bf16.mxu0 0
      %8492 = vmatpush1.bf16.msra.mxu0 0
      %8493 = vmatprep.subr.bf16.mxu0 0
      %8494 = vmatpush1.bf16.msra.mxu0 0
      %8495 = vmatprep.subr.bf16.mxu0 0
      %8496 = vmatpush1.bf16.msra.mxu0 %v8432
      %8497 = vmatprep.subr.bf16.mxu0 0
      %8498 = vmatpush1.bf16.msra.mxu0 %v8431
      %8499 = vmatprep.subr.bf16.mxu0 0
      %8500 = vmatpush2.bf16.msra.mxu0 0
      %8501 = vmatprep.subr.bf16.mxu0 0
      %8502 = vmatpush2.bf16.msra.mxu0 0
      %8503 = vmatprep.subr.bf16.mxu0 0
      %8504 = vmatpush2.bf16.msra.mxu0 0
      %8505 = vmatprep.subr.bf16.mxu0 0
      %8506 = vmatpush2.bf16.msra.mxu0 0
      %8507 = vmatprep.subr.bf16.mxu0 0
      %8508 = vmatpush2.bf16.msra.mxu0 0
      %8509 = vmatprep.subr.bf16.mxu0 0
      %8510 = vmatpush2.bf16.msra.mxu0 0
      %8511 = vmatprep.subr.bf16.mxu0 0
      %8512 = vmatpush2.bf16.msra.mxu0 0
      %8513 = vmatprep.subr.bf16.mxu0 0
      %8514 = vmatpush2.bf16.msra.mxu0 0
      %8515 = vmatprep.mubr.bf16.mxu0 0
      %8516 = vmatmul.mubr.bf16.gmra.mxu0 %v8436
      %v8517 = vpop.f32.mrf.mxu0
      %v8518 = vadd.f32 0.0, %v8517
      %v8519 = vpop.f32.mrf.mxu0
      %v8520 = vpop.f32.mrf.mxu0
      %v8521 = vadd.f32 0.0, %v8520
      %v8522 = vpop.f32.mrf.mxu0
      %8523 = vmatprep.mubr.bf16.mxu0 0
      %8524 = vmatmul.mubr.bf16.gmra.mxu0 %v8439
      %v8525 = vpop.f32.mrf.mxu0
      %v8526 = vadd.f32 0.0, %v8525
      %v8527 = vpop.f32.mrf.mxu0
      %v8528 = vpop.f32.mrf.mxu0
      %v8529 = vadd.f32 0.0, %v8528
      %v8530 = vpop.f32.mrf.mxu0
      %8531 = vmatprep.mubr.bf16.mxu0 0
      %8532 = vmatmul.mubr.bf16.gmra.mxu0 %v8442
      %v8533 = vpop.f32.mrf.mxu0
      %v8534 = vadd.f32 0.0, %v8533
      %v8535 = vpop.f32.mrf.mxu0
      %v8536 = vpop.f32.mrf.mxu0
      %v8537 = vadd.f32 0.0, %v8536
      %v8538 = vpop.f32.mrf.mxu0
      %8539 = vmatprep.mubr.bf16.mxu0 0
      %8540 = vmatmul.mubr.bf16.gmra.mxu0 %v8445
      %v8541 = vpop.f32.mrf.mxu0
      %v8542 = vadd.f32 0.0, %v8541
      %v8543 = vpop.f32.mrf.mxu0
      %v8544 = vpop.f32.mrf.mxu0
      %v8545 = vadd.f32 0.0, %v8544
      %v8546 = vpop.f32.mrf.mxu0
      %8547 = vmatprep.mubr.bf16.mxu0 0
      %8548 = vmatmul.mubr.bf16.gmra.mxu0 %v8448
      %v8549 = vpop.f32.mrf.mxu0
      %v8550 = vadd.f32 0.0, %v8549
      %v8551 = vpop.f32.mrf.mxu0
      %v8552 = vpop.f32.mrf.mxu0
      %v8553 = vadd.f32 0.0, %v8552
      %v8554 = vpop.f32.mrf.mxu0
      %8555 = vmatprep.mubr.bf16.mxu0 0
      %8556 = vmatmul.mubr.bf16.gmra.mxu0 %v8451
      %v8557 = vpop.f32.mrf.mxu0
      %v8558 = vadd.f32 0.0, %v8557
      %v8559 = vpop.f32.mrf.mxu0
      %v8560 = vpop.f32.mrf.mxu0
      %v8561 = vadd.f32 0.0, %v8560
      %v8562 = vpop.f32.mrf.mxu0
      %8563 = vmatprep.mubr.bf16.mxu0 0
      %8564 = vmatmul.mubr.bf16.gmra.mxu0 %v8454
      %v8565 = vpop.f32.mrf.mxu0
      %v8566 = vadd.f32 0.0, %v8565
      %v8567 = vpop.f32.mrf.mxu0
      %v8568 = vpop.f32.mrf.mxu0
      %v8569 = vadd.f32 0.0, %v8568
      %v8570 = vpop.f32.mrf.mxu0
      %8571 = vmatprep.mubr.bf16.mxu0 0
      %8572 = vmatmul.mubr.bf16.gmra.mxu0 %v8457
      %v8573 = vpop.f32.mrf.mxu0
      %v8574 = vadd.f32 0.0, %v8573
      %v8575 = vpop.f32.mrf.mxu0
      %v8576 = vpop.f32.mrf.mxu0
      %v8577 = vadd.f32 0.0, %v8576
      %v8578 = vpop.f32.mrf.mxu0
      %8579 = vmatprep.mubr.bf16.mxu0 0
      %8580 = vmatmul.mubr.bf16.gmra.mxu0 %v8460
      %v8581 = vpop.f32.mrf.mxu0
      %v8582 = vadd.f32 0.0, %v8581
      %v8583 = vpop.f32.mrf.mxu0
      %v8584 = vpop.f32.mrf.mxu0
      %v8585 = vadd.f32 0.0, %v8584
      %v8586 = vpop.f32.mrf.mxu0
      %8587 = vmatprep.mubr.bf16.mxu0 0
      %8588 = vmatmul.mubr.bf16.gmra.mxu0 %v8463
      %v8589 = vpop.f32.mrf.mxu0
      %v8590 = vadd.f32 0.0, %v8589
      %v8591 = vpop.f32.mrf.mxu0
      %v8592 = vpop.f32.mrf.mxu0
      %v8593 = vadd.f32 0.0, %v8592
      %v8594 = vpop.f32.mrf.mxu0
      %8595 = vmatprep.mubr.bf16.mxu0 0
      %8596 = vmatmul.mubr.bf16.gmra.mxu0 %v8466
      %v8597 = vpop.f32.mrf.mxu0
      %v8598 = vadd.f32 0.0, %v8597
      %v8599 = vpop.f32.mrf.mxu0
      %v8600 = vpop.f32.mrf.mxu0
      %v8601 = vadd.f32 0.0, %v8600
      %v8602 = vpop.f32.mrf.mxu0
      %8603 = vmatprep.mubr.bf16.mxu0 0
      %8604 = vmatmul.mubr.bf16.gmra.mxu0 %v8469
      %v8605 = vpop.f32.mrf.mxu0
      %v8606 = vadd.f32 0.0, %v8605
      %v8607 = vpop.f32.mrf.mxu0
      %v8608 = vpop.f32.mrf.mxu0
      %v8609 = vadd.f32 0.0, %v8608
      %v8610 = vpop.f32.mrf.mxu0
      %8611 = vmatprep.mubr.bf16.mxu0 0
      %8612 = vmatmul.mubr.bf16.gmra.mxu0 %v8472
      %v8613 = vpop.f32.mrf.mxu0
      %v8614 = vadd.f32 0.0, %v8613
      %v8615 = vpop.f32.mrf.mxu0
      %v8616 = vpop.f32.mrf.mxu0
      %v8617 = vadd.f32 0.0, %v8616
      %v8618 = vpop.f32.mrf.mxu0
      %8619 = vmatprep.mubr.bf16.mxu0 0
      %8620 = vmatmul.mubr.bf16.gmra.mxu0 %v8475
      %v8621 = vpop.f32.mrf.mxu0
      %v8622 = vadd.f32 0.0, %v8621
      %v8623 = vpop.f32.mrf.mxu0
      %v8624 = vpop.f32.mrf.mxu0
      %v8625 = vadd.f32 0.0, %v8624
      %v8626 = vpop.f32.mrf.mxu0
      %8627 = vmatprep.mubr.bf16.mxu0 0
      %8628 = vmatmul.mubr.bf16.gmra.mxu0 %v8478
      %v8629 = vpop.f32.mrf.mxu0
      %v8630 = vadd.f32 0.0, %v8629
      %v8631 = vpop.f32.mrf.mxu0
      %v8632 = vpop.f32.mrf.mxu0
      %v8633 = vadd.f32 0.0, %v8632
      %v8634 = vpop.f32.mrf.mxu0
      %8635 = vmatprep.mubr.bf16.mxu0 0
      %8636 = vmatmul.mubr.bf16.gmra.mxu0 %v8481
      %v8637 = vpop.f32.mrf.mxu0
      %v8638 = vadd.f32 0.0, %v8637
      %v8639 = vpop.f32.mrf.mxu0
      %v8640 = vpop.f32.mrf.mxu0
      %v8641 = vadd.f32 0.0, %v8640
      %v8642 = vpop.f32.mrf.mxu0
      %8643 = vdwg.mxu0
      %v8644 = vadd.f32 %v8338, %v8518
      %v8645 = vadd.f32 %v8339, %v8521
      %v8646 = vadd.f32 %v8340, %v8526
      %v8647 = vadd.f32 %v8341, %v8529
      %v8648 = vadd.f32 %v8342, %v8534
      %v8649 = vadd.f32 %v8343, %v8537
      %v8650 = vadd.f32 %v8344, %v8542
      %v8651 = vadd.f32 %v8345, %v8545
      %v8652 = vadd.f32 %v8346, %v8550
      %v8653 = vadd.f32 %v8347, %v8553
      %v8654 = vadd.f32 %v8348, %v8558
      %v8655 = vadd.f32 %v8349, %v8561
      %v8656 = vadd.f32 %v8350, %v8566
      %v8657 = vadd.f32 %v8351, %v8569
      %v8658 = vadd.f32 %v8352, %v8574
      %v8659 = vadd.f32 %v8353, %v8577
      %v8660 = vadd.f32 %v8354, %v8582
      %v8661 = vadd.f32 %v8355, %v8585
      %v8662 = vadd.f32 %v8356, %v8590
      %v8663 = vadd.f32 %v8357, %v8593
      %v8664 = vadd.f32 %v8358, %v8598
      %v8665 = vadd.f32 %v8359, %v8601
      %v8666 = vadd.f32 %v8360, %v8606
      %v8667 = vadd.f32 %v8361, %v8609
      %v8668 = vadd.f32 %v8362, %v8614
      %v8669 = vadd.f32 %v8363, %v8617
      %v8670 = vadd.f32 %v8364, %v8622
      %v8671 = vadd.f32 %v8365, %v8625
      %v8672 = vadd.f32 %v8366, %v8630
      %v8673 = vadd.f32 %v8367, %v8633
      %v8674 = vadd.f32 %v8368, %v8638
      %v8675 = vadd.f32 %v8369, %v8641
      %v8676 = vld [vmem:[%s7] sm:$0x1]
      %v8678 = vlaneseq
      %v8679 = vshrl.u32 %v8678, 7
      %v8680 = vsub.s32 0, %v8679
      %v8681 = vrot.slane %v8676, %v8680
      %v8683 = vadd.f32 %v8644, %v8681
      %v8684 = vadd.f32 %v8645, %v8681
      %v8685 = vadd.f32 %v8646, %v8681
      %v8686 = vadd.f32 %v8647, %v8681
      %v8687 = vadd.f32 %v8648, %v8681
      %v8688 = vadd.f32 %v8649, %v8681
      %v8689 = vadd.f32 %v8650, %v8681
      %v8690 = vadd.f32 %v8651, %v8681
      %v8691 = vadd.f32 %v8652, %v8681
      %v8692 = vadd.f32 %v8653, %v8681
      %v8693 = vadd.f32 %v8654, %v8681
      %v8694 = vadd.f32 %v8655, %v8681
      %v8695 = vadd.f32 %v8656, %v8681
      %v8696 = vadd.f32 %v8657, %v8681
      %v8697 = vadd.f32 %v8658, %v8681
      %v8698 = vadd.f32 %v8659, %v8681
      %v8699 = vadd.f32 %v8660, %v8681
      %v8700 = vadd.f32 %v8661, %v8681
      %v8701 = vadd.f32 %v8662, %v8681
      %v8702 = vadd.f32 %v8663, %v8681
      %v8703 = vadd.f32 %v8664, %v8681
      %v8704 = vadd.f32 %v8665, %v8681
      %v8705 = vadd.f32 %v8666, %v8681
      %v8706 = vadd.f32 %v8667, %v8681
      %v8707 = vadd.f32 %v8668, %v8681
      %v8708 = vadd.f32 %v8669, %v8681
      %v8709 = vadd.f32 %v8670, %v8681
      %v8710 = vadd.f32 %v8671, %v8681
      %v8711 = vadd.f32 %v8672, %v8681
      %v8712 = vadd.f32 %v8673, %v8681
      %v8713 = vadd.f32 %v8674, %v8681
      %v8714 = vadd.f32 %v8675, %v8681
      %8715 = vxpose.xlu0.b32.start [1/16] %v8683, 128
      %8716 = vxpose.xlu0.b32.cont [2/16] %v8684, 128
      %8717 = vxpose.xlu0.b32.cont [3/16] %v8685, 128
      %8718 = vxpose.xlu0.b32.cont [4/16] %v8686, 128
      %8719 = vxpose.xlu0.b32.cont [5/16] %v8687, 128
      %8720 = vxpose.xlu0.b32.cont [6/16] %v8688, 128
      %8721 = vxpose.xlu0.b32.cont [7/16] %v8689, 128
      %8722 = vxpose.xlu0.b32.cont [8/16] %v8690, 128
      %8723 = vxpose.xlu0.b32.cont [9/16] %v8691, 128
      %8724 = vxpose.xlu0.b32.cont [10/16] %v8692, 128
      %8725 = vxpose.xlu0.b32.cont [11/16] %v8693, 128
      %8726 = vxpose.xlu0.b32.cont [12/16] %v8694, 128
      %8727 = vxpose.xlu0.b32.cont [13/16] %v8695, 128
      %8728 = vxpose.xlu0.b32.cont [14/16] %v8696, 128
      %8729 = vxpose.xlu0.b32.cont [15/16] %v8697, 128
      %8730 = vxpose.xlu0.b32.end [16/16] %v8698, 128
      %v8731 = vpop.trf.xlu0
      %v8732 = vpop.trf.xlu0
      %v8733 = vpop.trf.xlu0
      %v8734 = vpop.trf.xlu0
      %v8735 = vpop.trf.xlu0
      %v8736 = vpop.trf.xlu0
      %v8737 = vpop.trf.xlu0
      %v8738 = vpop.trf.xlu0
      %v8739 = vpop.trf.xlu0
      %v8740 = vpop.trf.xlu0
      %v8741 = vpop.trf.xlu0
      %v8742 = vpop.trf.xlu0
      %v8743 = vpop.trf.xlu0
      %v8744 = vpop.trf.xlu0
      %v8745 = vpop.trf.xlu0
      %v8746 = vpop.trf.xlu0
      %8747 = vxpose.xlu0.b32.start [1/16] %v8699, 128
      %8748 = vxpose.xlu0.b32.cont [2/16] %v8700, 128
      %8749 = vxpose.xlu0.b32.cont [3/16] %v8701, 128
      %8750 = vxpose.xlu0.b32.cont [4/16] %v8702, 128
      %8751 = vxpose.xlu0.b32.cont [5/16] %v8703, 128
      %8752 = vxpose.xlu0.b32.cont [6/16] %v8704, 128
      %8753 = vxpose.xlu0.b32.cont [7/16] %v8705, 128
      %8754 = vxpose.xlu0.b32.cont [8/16] %v8706, 128
      %8755 = vxpose.xlu0.b32.cont [9/16] %v8707, 128
      %8756 = vxpose.xlu0.b32.cont [10/16] %v8708, 128
      %8757 = vxpose.xlu0.b32.cont [11/16] %v8709, 128
      %8758 = vxpose.xlu0.b32.cont [12/16] %v8710, 128
      %8759 = vxpose.xlu0.b32.cont [13/16] %v8711, 128
      %8760 = vxpose.xlu0.b32.cont [14/16] %v8712, 128
      %8761 = vxpose.xlu0.b32.cont [15/16] %v8713, 128
      %8762 = vxpose.xlu0.b32.end [16/16] %v8714, 128
      %v8763 = vpop.trf.xlu0
      %v8764 = vpop.trf.xlu0
      %v8765 = vpop.trf.xlu0
      %v8766 = vpop.trf.xlu0
      %v8767 = vpop.trf.xlu0
      %v8768 = vpop.trf.xlu0
      %v8769 = vpop.trf.xlu0
      %v8770 = vpop.trf.xlu0
      %v8771 = vpop.trf.xlu0
      %v8772 = vpop.trf.xlu0
      %v8773 = vpop.trf.xlu0
      %v8774 = vpop.trf.xlu0
      %v8775 = vpop.trf.xlu0
      %v8776 = vpop.trf.xlu0
      %v8777 = vpop.trf.xlu0
      %v8778 = vpop.trf.xlu0
      %v8779 = vld [vmem:[%s315] sm:$0x77]
      %v8781 = vcombine.high %v8779, %v8779
      %v8785 = vrot.slane %v8731, 5
      %v8786 = vrot.slane %v8763, 5
      %vm8789 = vcmask 1042432
      %v8790 = vsel %vm8789, %v8779, %v8785
      %v8791 = vsel %vm8789, %v8781, %v8786
      %8792 = vst [vmem:[%s325] sm:$0xff] %v8790
      %8793 = vst [vmem:[%s325 + $0x8] sm:$0xff] %v8791
      %8794 = vst [vmem:[%s325 + $0x10] sm:$0x7] %v8785
      %8795 = vst [vmem:[%s325 + $0x18] sm:$0x7] %v8786
      %p8796 = scmp.lt.s32.totalorder %s19, 1
      %s8797 = scalar_select %p8796, %s19, 1
      %s8798 = smul.addr %s8797, 4
      %s8799 = smul.addr %s8798, 8
      %s8800 = scalar_lea.vmem %s8, %s8799
      // Predicated region
      $region53: #{feature_extraction_net.1} parent=51 // pred_check
        %p8801 = pneg %p215
      $region54: #{feature_extraction_net.1} parent=51 // pred_check_branch
        %8803 = sbr.rel (%p8801) target = $region56
      $region55: #{feature_extraction_net.1} parent=51 // pred_region
        _
      $region56: #{feature_extraction_net.1} parent=51 // pred_fallthru
        _
    $region52: #{feature_extraction_net.1} parent=5 // pred_fallthru
      _
    %p8804 = scmp.le.s32.totalorder 2, %s14
    // Predicated region
    $region57: #{feature_extraction_net.1} parent=5 // pred_check
      %p8805 = pneg %p8804
    $region58: #{feature_extraction_net.1} parent=5 // pred_check_branch
      %8807 = sbr.rel (%p8805) target = $region60
    $region59: #{feature_extraction_net.1} parent=5 // pred_region
      %s8808 = ssub.s32 %s14, 2
      // Predicated region
      $region61: #{feature_extraction_net.1} parent=59 // pred_check
        %p8809 = pneg %p221
      $region62: #{feature_extraction_net.1} parent=59 // pred_check_branch
        %8811 = sbr.rel (%p8809) target = $region64
      $region63: #{feature_extraction_net.1} parent=59 // pred_region
        %p8812 = scmp.lt.s32.totalorder %s20, 1
        %s8813 = scalar_select %p8812, %s20, 1
        %s8814 = smul.addr %s8813, 4
        %s8815 = smul.addr %s8814, 8
        %s8816 = scalar_lea.vmem %s8, %s8815
      $region64: #{feature_extraction_net.1} parent=59 // pred_fallthru
        _
    $region60: #{feature_extraction_net.1} parent=5 // pred_fallthru
      _
  $region6: #{feature_extraction_net.1} parent=0 // loop_footer
    %s18 = sadd.s32 1, %s14
  $region7: #{feature_extraction_net.1} parent=0 // loop_footer_branch
    %13 = sbr.rel target = $region3
  $region8: #{feature_extraction_net.1} parent=0 // loop_exit
    _

</llo_original>
